<compile_context>
chip_gen: v5e
topology: v5e:2x2
jax: 0.10.0
libtpu: 0.0.40
codegen_flags: <defaults>
</compile_context>

<pallas_src>
import functools

import jax
import jax.numpy as jnp
from jax.experimental import pallas as pl
from jax.experimental.pallas import tpu as pltpu

NEG_SLOPE = 0.01      # nn.LeakyReLU() default
_PAD_L = 8            # left halo width (keeps the interior scratch store sublane-aligned)


def _leaky_relu(x):
    return jnp.where(x >= 0, x, NEG_SLOPE * x)


# ----------------------------------------------------------------------------- kernel helpers

def _zero_halo_border(hp_ref):
    """Zero only the halo border strips of the (H+2, W+_PAD_L+1, C) scratch."""
    Hp, Wp, C = hp_ref.shape
    H = Hp - 2
    W = Wp - _PAD_L - 1
    z_row = jnp.zeros((1, Wp, C), hp_ref.dtype)
    z_col = jnp.zeros((Hp, 1, C), hp_ref.dtype)
    hp_ref[0:1, :, :] = z_row                                   # top halo row
    hp_ref[H + 1:H + 2, :, :] = z_row                           # bottom halo row
    hp_ref[:, _PAD_L - 1:_PAD_L, :] = z_col                     # left halo col
    hp_ref[:, _PAD_L + W:_PAD_L + W + 1, :] = z_col             # right halo col


def _resblock_chain(h2d, wb_ref, ssb_ref, out_refs, hp_ref, H, W, n_rnb):
    """n_rnb x VUnetResnetBlock: h <- h + NormConv3x3(leaky_relu(h)); store each h.

    h2d     : (H*W, C) float32 activation (row index = hh*W + ww).
    wb_ref  : (n_rnb, 9, C, C) bf16 per-tap weights, tap index t = kh*3 + kw.
    ssb_ref : (n_rnb, 2, C) f32 -> [gamma, gamma*bias + beta].
    out_refs: (1, C, H*W) f32 outputs (NCHW layout, lane-dense in H*W).
    hp_ref  : (H+2, W+_PAD_L+1, C) bf16 halo scratch (borders already zeroed).
    """
    C = h2d.shape[-1]
    for r in range(n_rnb):
        # conv input: zero-padded leaky_relu(h), written bf16 into the scratch interior.
        hp_ref[1:H + 1, _PAD_L:_PAD_L + W, :] = (
            _leaky_relu(h2d).reshape(H, W, C).astype(hp_ref.dtype))
        acc = None
        for a in range(3):
            for b in range(3):
                c0 = _PAD_L + b - 1
                blk = hp_ref[a:a + H, c0:c0 + W, :].reshape(H * W, C)   # bf16
                d = jnp.dot(blk, wb_ref[r, a * 3 + b, :, :],
                            preferred_element_type=jnp.float32)
                acc = d if acc is None else acc + d
        ss = ssb_ref[r]                                          # (2, C) f32
        h2d = h2d + (ss[0:1, :] * acc + ss[1:2, :])
        # lane-dense NCHW store: (C, H*W); wrapper reshape to (C, H, W) is free.
        out_refs[r][0] = jnp.transpose(h2d).astype(out_refs[r].dtype)
    return h2d


# ----------------------------------------------------------------------------- stage kernels

def _stage_first_kernel(x_ref, w1_ref, ss1_ref, wb_ref, ssb_ref, *rest,
                        n_rnb, emit_feed):
    out_refs = rest[:n_rnb]
    feed_ref = rest[n_rnb] if emit_feed else None
    hp_ref = rest[-1]
    _, H, W, cin = x_ref.shape

    # in_op: 1x1 NormConv2d as one (tiny-K) MXU dot.  Runs once per image on the
    # raw input, so the K=cin underfill is negligible.
    x2 = x_ref[0].reshape(H * W, cin).astype(jnp.bfloat16)
    y = jnp.dot(x2, w1_ref[...], preferred_element_type=jnp.float32)
    ss1 = ss1_ref[...]
    h2d = ss1[0:1, :] * y + ss1[1:2, :]                          # (H*W, C) f32

    _zero_halo_border(hp_ref)
    h2d = _resblock_chain(h2d, wb_ref, ssb_ref, out_refs, hp_ref, H, W, n_rnb)
    if emit_feed:
        # bf16 feed of the final h for the next stage's downsample (consumed via
        # a free wrapper reshape into W-pairs) -> no inter-stage strided slices.
        feed_ref[0] = h2d.astype(feed_ref.dtype)


def _stage_down_kernel(xp_ref, wd_ref, ssd_ref, wb_ref, ssb_ref, *rest,
                       n_rnb, emit_feed):
    out_refs = rest[:n_rnb]
    feed_ref = rest[n_rnb] if emit_feed else None
    dsc_ref = rest[-2]
    hp_ref = rest[-1]
    _, H, Wo, cin2 = xp_ref.shape            # xp: W-paired previous h, (H, W/2, 2*Cin)
    Ho = H // 2

    # ---- Downsample: NormConv2d(k=3, stride=2, pad=1) at output resolution.
    # The W stride is folded into the contraction dim by the pair layout; the
    # H stride is a leading-dim reshape+select on contiguous rows.  Only the
    # halo border strips are zeroed.
    dsc_ref[0:1, _PAD_L - 1:_PAD_L + Wo, :] = jnp.zeros(
        (1, Wo + 1, cin2), dsc_ref.dtype)                        # top halo row
    dsc_ref[:, _PAD_L - 1:_PAD_L, :] = jnp.zeros(
        (H + 1, 1, cin2), dsc_ref.dtype)                         # left halo pair
    dsc_ref[1:H + 1, _PAD_L:_PAD_L + Wo, :] = xp_ref[0]

    v_lo = dsc_ref[0:H, _PAD_L - 1:_PAD_L + Wo, :]               # padded rows 0..H-1
    v_hi = dsc_ref[1:H + 1, _PAD_L - 1:_PAD_L + Wo, :]           # padded rows 1..H
    acc = None
    for a in range(3):
        # output row i reads padded input row 2i + a
        if a == 0:
            rows = v_lo.reshape(Ho, 2, Wo + 1, cin2)[:, 0]
        elif a == 1:
            rows = v_lo.reshape(Ho, 2, Wo + 1, cin2)[:, 1]
        else:
            rows = v_hi.reshape(Ho, 2, Wo + 1, cin2)[:, 1]
        blk_a = rows[:, 1:1 + Wo, :].reshape(Ho * Wo, cin2)      # pair j   -> taps kw=1,2
        blk_b = rows[:, 0:Wo, :].reshape(Ho * Wo, cin2)          # pair j-1 -> tap  kw=0
        d = jnp.dot(blk_a, wd_ref[a, 0, :, :], preferred_element_type=jnp.float32)
        d = d + jnp.dot(blk_b, wd_ref[a, 1, :, :], preferred_element_type=jnp.float32)
        acc = d if acc is None else acc + d
    ssd = ssd_ref[...]
    h2d = ssd[0:1, :] * acc + ssd[1:2, :]                        # (Ho*Wo, Cout) f32

    # ---- n_rnb residual blocks at the downsampled resolution.
    _zero_halo_border(hp_ref)
    h2d = _resblock_chain(h2d, wb_ref, ssb_ref, out_refs, hp_ref, Ho, Wo, n_rnb)
    if emit_feed:
        feed_ref[0] = h2d.astype(feed_ref.dtype)


# ----------------------------------------------------------------------------- wrappers

_PARALLEL_BATCH = pltpu.CompilerParams(dimension_semantics=("parallel",))


def _run_stage_first(x, w1, ss1, wb, ssb, n_rnb, emit_feed):
    N, H, W, cin = x.shape
    C = w1.shape[1]
    HW = H * W
    out_shape = [jax.ShapeDtypeStruct((N, C, HW), jnp.float32) for _ in range(n_rnb)]
    out_specs = [pl.BlockSpec((1, C, HW), lambda n: (n, 0, 0)) for _ in range(n_rnb)]
    if emit_feed:
        out_shape.append(jax.ShapeDtypeStruct((N, HW, C), jnp.bfloat16))
        out_specs.append(pl.BlockSpec((1, HW, C), lambda n: (n, 0, 0)))
    kern = functools.partial(_stage_first_kernel, n_rnb=n_rnb, emit_feed=emit_feed)
    return pl.pallas_call(
        kern,
        out_shape=tuple(out_shape),
        grid=(N,),
        in_specs=[
            pl.BlockSpec((1, H, W, cin), lambda n: (n, 0, 0, 0)),
            pl.BlockSpec((cin, C), lambda n: (0, 0)),
            pl.BlockSpec((2, C), lambda n: (0, 0)),
            pl.BlockSpec((n_rnb, 9, C, C), lambda n: (0, 0, 0, 0)),
            pl.BlockSpec((n_rnb, 2, C), lambda n: (0, 0, 0)),
        ],
        out_specs=tuple(out_specs),
        scratch_shapes=[pltpu.VMEM((H + 2, W + _PAD_L + 1, C), jnp.bfloat16)],
        compiler_params=_PARALLEL_BATCH,
    )(x, w1, ss1, wb, ssb)


def _run_stage_down(xp, wd, ssd, wb, ssb, n_rnb, emit_feed):
    N, H, Wo, cin2 = xp.shape               # xp: (N, H, W/2, 2*Cin) bf16 pairs
    cout = wd.shape[-1]
    Ho = H // 2
    HWo = Ho * Wo
    out_shape = [jax.ShapeDtypeStruct((N, cout, HWo), jnp.float32) for _ in range(n_rnb)]
    out_specs = [pl.BlockSpec((1, cout, HWo), lambda n: (n, 0, 0)) for _ in range(n_rnb)]
    if emit_feed:
        out_shape.append(jax.ShapeDtypeStruct((N, HWo, cout), jnp.bfloat16))
        out_specs.append(pl.BlockSpec((1, HWo, cout), lambda n: (n, 0, 0)))
    kern = functools.partial(_stage_down_kernel, n_rnb=n_rnb, emit_feed=emit_feed)
    return pl.pallas_call(
        kern,
        out_shape=tuple(out_shape),
        grid=(N,),
        in_specs=[
            pl.BlockSpec((1, H, Wo, cin2), lambda n: (n, 0, 0, 0)),
            pl.BlockSpec((3, 2, cin2, cout), lambda n: (0, 0, 0, 0)),
            pl.BlockSpec((2, cout), lambda n: (0, 0)),
            pl.BlockSpec((n_rnb, 9, cout, cout), lambda n: (0, 0, 0, 0)),
            pl.BlockSpec((n_rnb, 2, cout), lambda n: (0, 0, 0)),
        ],
        out_specs=tuple(out_specs),
        scratch_shapes=[
            pltpu.VMEM((H + 1, Wo + _PAD_L, cin2), jnp.bfloat16),        # paired input + halos
            pltpu.VMEM((Ho + 2, Wo + _PAD_L + 1, cout), jnp.bfloat16),   # resblock halo
        ],
        compiler_params=_PARALLEL_BATCH,
    )(xp, wd, ssd, wb, ssb)


# ----------------------------------------------------------------------------- params

def _init_norm_conv(key, cin, cout, k):
    """NormConv2d params.  weight_norm(dim=0) with g = ||v|| at init -> weight == v."""
    kv, kb = jax.random.split(key)
    w_oihw = jax.random.normal(kv, (cout, cin, k, k), jnp.float32) * 0.1
    bias = jax.random.normal(kb, (cout,), jnp.float32) * 0.01
    gamma = jnp.ones((cout,), jnp.float32)    # NormConv2d.__init__
    beta = jnp.zeros((cout,), jnp.float32)    # NormConv2d.__init__
    w_hwio = jnp.transpose(w_oihw, (2, 3, 1, 0))          # (k, k, cin, cout)
    ss = jnp.stack([gamma, gamma * bias + beta])          # folded scale / shift
    return dict(w_hwio=w_hwio, bias=bias, gamma=gamma, beta=beta, ss=ss)


class VUnetEncoderPallas:
    """Pallas-TPU forward pass of VUnetEncoder (NCHW in / NCHW outputs, like PyTorch)."""

    def __init__(self, n_stages, nf_in=3, nf_start=64, nf_max=128, n_rnb=2,
                 dropout_prob=0.0, key=None):
        assert dropout_prob == 0.0, "dropout_prob=0.0 -> Dropout is the identity"
        self.n_stages = n_stages
        self.n_rnb = n_rnb
        key = jax.random.PRNGKey(0) if key is None else key
        n_keys = 1 + n_stages * n_rnb + max(n_stages - 1, 0)
        keys = iter(jax.random.split(key, max(n_keys, 2)))
        self.in_op = _init_norm_conv(next(keys), nf_in, nf_start, 1)
        nf = nf_start
        self.blocks, self.downs = {}, {}
        self._nf = []
        for i_s in range(n_stages):
            if i_s > 0:
                self.downs[f"s{i_s + 1}"] = _init_norm_conv(
                    next(keys), nf, min(2 * nf, nf_max), 3)
                nf = min(2 * nf, nf_max)
            self._nf.append(nf)
            for ir in range(n_rnb):
                self.blocks[f"s{i_s + 1}_{ir + 1}"] = _init_norm_conv(next(keys), nf, nf, 3)

        # ---- packed bf16 weights / f32 scale-shift for the kernels
        self._w1 = self.in_op["w_hwio"].reshape(nf_in, nf_start).astype(jnp.bfloat16)
        self._ss1 = self.in_op["ss"]
        self._stage_blocks = []
        for i_s in range(n_stages):
            C = self._nf[i_s]
            ws = jnp.stack([self.blocks[f"s{i_s + 1}_{ir + 1}"]["w_hwio"].reshape(9, C, C)
                            for ir in range(n_rnb)]).astype(jnp.bfloat16)   # (n_rnb, 9, C, C)
            sss = jnp.stack([self.blocks[f"s{i_s + 1}_{ir + 1}"]["ss"]
                             for ir in range(n_rnb)])                       # (n_rnb, 2, C)
            self._stage_blocks.append((ws, sss))
        self._stage_down = {}
        for i_s in range(1, n_stages):
            p = self.downs[f"s{i_s + 1}"]
            w = p["w_hwio"]                                                  # (3, 3, cin, cout)
            cin, cout = w.shape[2], w.shape[3]
            zero = jnp.zeros((cin, cout), jnp.float32)
            # pair-folded stride-2 weights: [a, 0] acts on pair j (taps kw=1,2),
            # [a, 1] acts on pair j-1 (tap kw=0 via the pair's second element).
            wd = jnp.stack([
                jnp.stack([jnp.concatenate([w[a, 1], w[a, 2]], axis=0),
                           jnp.concatenate([zero, w[a, 0]], axis=0)])
                for a in range(3)])                                          # (3, 2, 2*cin, cout)
            self._stage_down[i_s] = (wd.astype(jnp.bfloat16), p["ss"])

    def __call__(self, x_nchw):
        n_rnb = self.n_rnb
        N = x_nchw.shape[0]
        x = jnp.transpose(x_nchw, (0, 2, 3, 1)).astype(jnp.float32)          # NHWC, cin=3
        _, H, W, _ = x.shape
        out = {}

        emit = self.n_stages > 1
        wb, ssb = self._stage_blocks[0]
        res = _run_stage_first(x, self._w1, self._ss1, wb, ssb, n_rnb, emit)
        C = self._nf[0]
        for ir in range(n_rnb):
            out[f"s1_{ir + 1}"] = res[ir].reshape(N, C, H, W)                # free reshape
        feed = res[n_rnb] if emit else None

        for i_s in range(1, self.n_stages):
            cin = self._nf[i_s - 1]
            cout = self._nf[i_s]
            assert H % 2 == 0 and W % 2 == 0, "stride-2 downsample needs even H, W"
            xp = feed.reshape(N, H, W // 2, 2 * cin)                         # free W-pairing
            emit = i_s < self.n_stages - 1
            wd, ssd = self._stage_down[i_s]
            wb, ssb = self._stage_blocks[i_s]
            res = _run_stage_down(xp, wd, ssd, wb, ssb, n_rnb, emit)
            H, W = H // 2, W // 2
            for ir in range(n_rnb):
                out[f"s{i_s + 1}_{ir + 1}"] = res[ir].reshape(N, cout, H, W)
            feed = res[n_rnb] if emit else None
        return out


# ----------------------------------------------------------------------------- reference

def _norm_conv_ref(h, p, stride, pad):
    """NormConv2d reference.  Conv inputs are rounded to bf16 to mirror the kernel's
    MXU feed; vs. the pure-f32 PyTorch module the deviation is bounded by that rounding."""
    lhs = h.astype(jnp.bfloat16).astype(jnp.float32)
    rhs = p["w_hwio"].astype(jnp.bfloat16).astype(jnp.float32)
    y = jax.lax.conv_general_dilated(
        lhs, rhs, window_strides=(stride, stride),
        padding=[(pad, pad), (pad, pad)],
        dimension_numbers=("NHWC", "HWIO", "NHWC"),
        precision=jax.lax.Precision.HIGHEST)
    return p["gamma"] * (y + p["bias"]) + p["beta"]


def _encoder_ref(enc, x_nchw):
    """Pure-JAX (XLA conv) reference of the same forward pass; NCHW outputs."""
    h = jnp.transpose(x_nchw, (0, 2, 3, 1))
    out = {}
    h = _norm_conv_ref(h, enc.in_op, 1, 0)
    for i_s in range(enc.n_stages):
        if i_s > 0:
            h = _norm_conv_ref(h, enc.downs[f"s{i_s + 1}"], 2, 1)
        for ir in range(enc.n_rnb):
            p = enc.blocks[f"s{i_s + 1}_{ir + 1}"]
            h = h + _norm_conv_ref(_leaky_relu(h), p, 1, 1)
            out[f"s{i_s + 1}_{ir + 1}"] = jnp.transpose(h, (0, 3, 1, 2))
    return out


# ----------------------------------------------------------------------------- main

if __name__ == "__main__":
    key = jax.random.PRNGKey(0)
    kx, kp = jax.random.split(key)

    N, Cin, H, W = 2, 3, 16, 16
    n_stages, nf_start, nf_max, n_rnb = 3, 32, 64, 2

    x = jax.random.normal(kx, (N, Cin, H, W), jnp.float32)
    enc = VUnetEncoderPallas(n_stages=n_stages, nf_in=Cin, nf_start=nf_start,
                             nf_max=nf_max, n_rnb=n_rnb, key=kp)
    out = enc(x)
    jax.block_until_ready(out)

    # shape sanity checks (NCHW, matching the PyTorch module)
    assert out["s1_1"].shape == (N, nf_start, H, W)
    assert out["s1_2"].shape == (N, nf_start, H, W)
    assert out["s2_1"].shape == (N, min(2 * nf_start, nf_max), H // 2, W // 2)
    assert out["s2_2"].shape == (N, min(2 * nf_start, nf_max), H // 2, W // 2)
    assert out["s3_1"].shape == (N, nf_max, H // 4, W // 4)
    assert out["s3_2"].shape == (N, nf_max, H // 4, W // 4)
    assert all(bool(jnp.all(jnp.isfinite(v))) for v in out.values())

    # numerical check against a reference that mirrors the kernel's bf16 MXU
    # inputs (tight tolerance: remaining delta is f32 accumulation order only).
    ref = _encoder_ref(enc, x)
    for name, r in ref.items():
        p = out[name]
        err = float(jnp.max(jnp.abs(p - r)))
        scl = float(jnp.max(jnp.abs(r))) + 1e-6
        assert err <= 2e-2 * scl + 1e-5, f"{name}: max|err|={err:.3e} vs scale={scl:.3e}"

    print("KERNEL_OK")
</pallas_src>

<mosaic_0001>
module attributes {stable_mosaic.version = 11 : i64} {
  func.func @_stage_first_kernel(%arg0: i32, %arg1: memref<1x16x16x3xf32, #tpu.memory_space<vmem>>, %arg2: memref<3x32xbf16, #tpu.memory_space<vmem>>, %arg3: memref<2x32xf32, #tpu.memory_space<vmem>>, %arg4: memref<2x9x32x32xbf16, #tpu.memory_space<vmem>>, %arg5: memref<2x2x32xf32, #tpu.memory_space<vmem>>, %arg6: memref<1x32x256xf32, #tpu.memory_space<vmem>>, %arg7: memref<1x32x256xf32, #tpu.memory_space<vmem>>, %arg8: memref<1x256x32xbf16, #tpu.memory_space<vmem>>, %arg9: memref<18x25x32xbf16, #tpu.memory_space<vmem>>) attributes {dimension_semantics = [#tpu.dimension_semantics<parallel>], iteration_bounds = array<i64: 2>, scalar_prefetch = 0 : i64, scratch_operands = 1 : i64, tpu.core_type = #tpu.core_type<tc>, window_params = [{transform_indices = @transform_0, window_bounds = array<i64: 1, 16, 16, 3>}, {pipeline_mode = #tpu.pipeline_mode<synchronous>, transform_indices = @transform_1, window_bounds = array<i64: 3, 32>}, {pipeline_mode = #tpu.pipeline_mode<synchronous>, transform_indices = @transform_2, window_bounds = array<i64: 2, 32>}, {pipeline_mode = #tpu.pipeline_mode<synchronous>, transform_indices = @transform_3, window_bounds = array<i64: 2, 9, 32, 32>}, {pipeline_mode = #tpu.pipeline_mode<synchronous>, transform_indices = @transform_4, window_bounds = array<i64: 2, 2, 32>}, {transform_indices = @transform_5, window_bounds = array<i64: 1, 32, 256>}, {transform_indices = @transform_6, window_bounds = array<i64: 1, 32, 256>}, {transform_indices = @transform_7, window_bounds = array<i64: 1, 256, 32>}]} {
    %c0 = arith.constant 0 : index
    %c0_0 = arith.constant 0 : index
    %c0_1 = arith.constant 0 : index
    %c0_2 = arith.constant 0 : index
    %0 = vector.load %arg1[%c0, %c0_0, %c0_1, %c0_2] : memref<1x16x16x3xf32, #tpu.memory_space<vmem>>, vector<1x16x16x3xf32>
    %1 = vector.shape_cast %0 : vector<1x16x16x3xf32> to vector<16x16x3xf32>
    %2 = vector.shape_cast %1 : vector<16x16x3xf32> to vector<256x3xf32>
    %3 = arith.truncf %2 : vector<256x3xf32> to vector<256x3xbf16>
    %c0_3 = arith.constant 0 : index
    %c0_4 = arith.constant 0 : index
    %4 = vector.load %arg2[%c0_3, %c0_4] : memref<3x32xbf16, #tpu.memory_space<vmem>>, vector<3x32xbf16>
    %cst = arith.constant dense<0.000000e+00> : vector<256x32xf32>
    %5 = tpu.matmul %3, %4, %cst {dimension_numbers = #tpu.dot_dimension_numbers<[1], [0], [0], [1], [0, 0, 1, 1], [], []>} : vector<256x3xbf16>, vector<3x32xbf16>, vector<256x32xf32> -> vector<256x32xf32>
    %c0_5 = arith.constant 0 : index
    %c0_6 = arith.constant 0 : index
    %6 = vector.load %arg3[%c0_5, %c0_6] : memref<2x32xf32, #tpu.memory_space<vmem>>, vector<2x32xf32>
    %7 = vector.extract_strided_slice %6 {offsets = [0, 0], sizes = [1, 32], strides = [1, 1]} : vector<2x32xf32> to vector<1x32xf32>
    %8 = vector.broadcast %7 : vector<1x32xf32> to vector<256x32xf32>
    %9 = arith.mulf %8, %5 : vector<256x32xf32>
    %10 = vector.extract_strided_slice %6 {offsets = [1, 0], sizes = [1, 32], strides = [1, 1]} : vector<2x32xf32> to vector<1x32xf32>
    %11 = vector.broadcast %10 : vector<1x32xf32> to vector<256x32xf32>
    %12 = arith.addf %9, %11 : vector<256x32xf32>
    %cst_7 = arith.constant 0.000000e+00 : bf16
    %13 = vector.broadcast %cst_7 : bf16 to vector<1x25x32xbf16>
    %cst_8 = arith.constant 0.000000e+00 : bf16
    %14 = vector.broadcast %cst_8 : bf16 to vector<18x1x32xbf16>
    %c0_9 = arith.constant 0 : index
    %c0_10 = arith.constant 0 : index
    %c0_11 = arith.constant 0 : index
    %15 = vector.load %arg9[%c0_9, %c0_10, %c0_11] : memref<18x25x32xbf16, #tpu.memory_space<vmem>>, vector<1x25x32xbf16>
    tpu.vector_store %arg9[%c0_9, %c0_10, %c0_11], %13 {strides = array<i32>} : memref<18x25x32xbf16, #tpu.memory_space<vmem>>, vector<1x25x32xbf16>,
    %c17 = arith.constant 17 : index
    %c0_12 = arith.constant 0 : index
    %c0_13 = arith.constant 0 : index
    %16 = vector.load %arg9[%c17, %c0_12, %c0_13] : memref<18x25x32xbf16, #tpu.memory_space<vmem>>, vector<1x25x32xbf16>
    tpu.vector_store %arg9[%c17, %c0_12, %c0_13], %13 {strides = array<i32>} : memref<18x25x32xbf16, #tpu.memory_space<vmem>>, vector<1x25x32xbf16>,
    %c0_14 = arith.constant 0 : index
    %c7 = arith.constant 7 : index
    %c0_15 = arith.constant 0 : index
    %17 = vector.load %arg9[%c0_14, %c7, %c0_15] : memref<18x25x32xbf16, #tpu.memory_space<vmem>>, vector<18x1x32xbf16>
    tpu.vector_store %arg9[%c0_14, %c7, %c0_15], %14 {strides = array<i32>} : memref<18x25x32xbf16, #tpu.memory_space<vmem>>, vector<18x1x32xbf16>,
    %c0_16 = arith.constant 0 : index
    %c24 = arith.constant 24 : index
    %c0_17 = arith.constant 0 : index
    %18 = vector.load %arg9[%c0_16, %c24, %c0_17] : memref<18x25x32xbf16, #tpu.memory_space<vmem>>, vector<18x1x32xbf16>
    tpu.vector_store %arg9[%c0_16, %c24, %c0_17], %14 {strides = array<i32>} : memref<18x25x32xbf16, #tpu.memory_space<vmem>>, vector<18x1x32xbf16>,
    %cst_18 = arith.constant 0.000000e+00 : f32
    %19 = vector.broadcast %cst_18 : f32 to vector<256x32xf32>
    %20 = arith.cmpf oge, %12, %19 : vector<256x32xf32>
    %cst_19 = arith.constant 0.00999999977 : f32
    %21 = vector.broadcast %cst_19 : f32 to vector<256x32xf32>
    %22 = arith.mulf %21, %12 : vector<256x32xf32>
    %23 = arith.select %20, %12, %22 : vector<256x32xi1>, vector<256x32xf32>
    %24 = vector.shape_cast %23 : vector<256x32xf32> to vector<16x16x32xf32>
    %25 = arith.truncf %24 : vector<16x16x32xf32> to vector<16x16x32xbf16>
    %c1 = arith.constant 1 : index
    %c8 = arith.constant 8 : index
    %c0_20 = arith.constant 0 : index
    %26 = vector.load %arg9[%c1, %c8, %c0_20] : memref<18x25x32xbf16, #tpu.memory_space<vmem>>, vector<16x16x32xbf16>
    tpu.vector_store %arg9[%c1, %c8, %c0_20], %25 {strides = array<i32>} : memref<18x25x32xbf16, #tpu.memory_space<vmem>>, vector<16x16x32xbf16>,
    %c0_21 = arith.constant 0 : index
    %c7_22 = arith.constant 7 : index
    %c0_23 = arith.constant 0 : index
    %27 = vector.load %arg9[%c0_21, %c7_22, %c0_23] : memref<18x25x32xbf16, #tpu.memory_space<vmem>>, vector<16x16x32xbf16>
    %28 = vector.shape_cast %27 : vector<16x16x32xbf16> to vector<256x32xbf16>
    %c0_24 = arith.constant 0 : index
    %c0_25 = arith.constant 0 : index
    %c0_26 = arith.constant 0 : index
    %c0_27 = arith.constant 0 : index
    %29 = vector.load %arg4[%c0_24, %c0_25, %c0_26, %c0_27] : memref<2x9x32x32xbf16, #tpu.memory_space<vmem>>, vector<1x1x32x32xbf16>
    %30 = vector.shape_cast %29 : vector<1x1x32x32xbf16> to vector<32x32xbf16>
    %cst_28 = arith.constant dense<0.000000e+00> : vector<256x32xf32>
    %31 = tpu.matmul %28, %30, %cst_28 {dimension_numbers = #tpu.dot_dimension_numbers<[1], [0], [0], [1], [0, 0, 1, 1], [], []>} : vector<256x32xbf16>, vector<32x32xbf16>, vector<256x32xf32> -> vector<256x32xf32>
    %c0_29 = arith.constant 0 : index
    %c8_30 = arith.constant 8 : index
    %c0_31 = arith.constant 0 : index
    %32 = vector.load %arg9[%c0_29, %c8_30, %c0_31] : memref<18x25x32xbf16, #tpu.memory_space<vmem>>, vector<16x16x32xbf16>
    %33 = vector.shape_cast %32 : vector<16x16x32xbf16> to vector<256x32xbf16>
    %c0_32 = arith.constant 0 : index
    %c1_33 = arith.constant 1 : index
    %c0_34 = arith.constant 0 : index
    %c0_35 = arith.constant 0 : index
    %34 = vector.load %arg4[%c0_32, %c1_33, %c0_34, %c0_35] : memref<2x9x32x32xbf16, #tpu.memory_space<vmem>>, vector<1x1x32x32xbf16>
    %35 = vector.shape_cast %34 : vector<1x1x32x32xbf16> to vector<32x32xbf16>
    %cst_36 = arith.constant dense<0.000000e+00> : vector<256x32xf32>
    %36 = tpu.matmul %33, %35, %cst_36 {dimension_numbers = #tpu.dot_dimension_numbers<[1], [0], [0], [1], [0, 0, 1, 1], [], []>} : vector<256x32xbf16>, vector<32x32xbf16>, vector<256x32xf32> -> vector<256x32xf32>
    %37 = arith.addf %31, %36 : vector<256x32xf32>
    %c0_37 = arith.constant 0 : index
    %c9 = arith.constant 9 : index
    %c0_38 = arith.constant 0 : index
    %38 = vector.load %arg9[%c0_37, %c9, %c0_38] : memref<18x25x32xbf16, #tpu.memory_space<vmem>>, vector<16x16x32xbf16>
    %39 = vector.shape_cast %38 : vector<16x16x32xbf16> to vector<256x32xbf16>
    %c0_39 = arith.constant 0 : index
    %c2 = arith.constant 2 : index
    %c0_40 = arith.constant 0 : index
    %c0_41 = arith.constant 0 : index
    %40 = vector.load %arg4[%c0_39, %c2, %c0_40, %c0_41] : memref<2x9x32x32xbf16, #tpu.memory_space<vmem>>, vector<1x1x32x32xbf16>
    %41 = vector.shape_cast %40 : vector<1x1x32x32xbf16> to vector<32x32xbf16>
    %cst_42 = arith.constant dense<0.000000e+00> : vector<256x32xf32>
    %42 = tpu.matmul %39, %41, %cst_42 {dimension_numbers = #tpu.dot_dimension_numbers<[1], [0], [0], [1], [0, 0, 1, 1], [], []>} : vector<256x32xbf16>, vector<32x32xbf16>, vector<256x32xf32> -> vector<256x32xf32>
    %43 = arith.addf %37, %42 : vector<256x32xf32>
    %c1_43 = arith.constant 1 : index
    %c7_44 = arith.constant 7 : index
    %c0_45 = arith.constant 0 : index
    %44 = vector.load %arg9[%c1_43, %c7_44, %c0_45] : memref<18x25x32xbf16, #tpu.memory_space<vmem>>, vector<16x16x32xbf16>
    %45 = vector.shape_cast %44 : vector<16x16x32xbf16> to vector<256x32xbf16>
    %c0_46 = arith.constant 0 : index
    %c3 = arith.constant 3 : index
    %c0_47 = arith.constant 0 : index
    %c0_48 = arith.constant 0 : index
    %46 = vector.load %arg4[%c0_46, %c3, %c0_47, %c0_48] : memref<2x9x32x32xbf16, #tpu.memory_space<vmem>>, vector<1x1x32x32xbf16>
    %47 = vector.shape_cast %46 : vector<1x1x32x32xbf16> to vector<32x32xbf16>
    %cst_49 = arith.constant dense<0.000000e+00> : vector<256x32xf32>
    %48 = tpu.matmul %45, %47, %cst_49 {dimension_numbers = #tpu.dot_dimension_numbers<[1], [0], [0], [1], [0, 0, 1, 1], [], []>} : vector<256x32xbf16>, vector<32x32xbf16>, vector<256x32xf32> -> vector<256x32xf32>
    %49 = arith.addf %43, %48 : vector<256x32xf32>
    %c1_50 = arith.constant 1 : index
    %c8_51 = arith.constant 8 : index
    %c0_52 = arith.constant 0 : index
    %50 = vector.load %arg9[%c1_50, %c8_51, %c0_52] : memref<18x25x32xbf16, #tpu.memory_space<vmem>>, vector<16x16x32xbf16>
    %51 = vector.shape_cast %50 : vector<16x16x32xbf16> to vector<256x32xbf16>
    %c0_53 = arith.constant 0 : index
    %c4 = arith.constant 4 : index
    %c0_54 = arith.constant 0 : index
    %c0_55 = arith.constant 0 : index
    %52 = vector.load %arg4[%c0_53, %c4, %c0_54, %c0_55] : memref<2x9x32x32xbf16, #tpu.memory_space<vmem>>, vector<1x1x32x32xbf16>
    %53 = vector.shape_cast %52 : vector<1x1x32x32xbf16> to vector<32x32xbf16>
    %cst_56 = arith.constant dense<0.000000e+00> : vector<256x32xf32>
    %54 = tpu.matmul %51, %53, %cst_56 {dimension_numbers = #tpu.dot_dimension_numbers<[1], [0], [0], [1], [0, 0, 1, 1], [], []>} : vector<256x32xbf16>, vector<32x32xbf16>, vector<256x32xf32> -> vector<256x32xf32>
    %55 = arith.addf %49, %54 : vector<256x32xf32>
    %c1_57 = arith.constant 1 : index
    %c9_58 = arith.constant 9 : index
    %c0_59 = arith.constant 0 : index
    %56 = vector.load %arg9[%c1_57, %c9_58, %c0_59] : memref<18x25x32xbf16, #tpu.memory_space<vmem>>, vector<16x16x32xbf16>
    %57 = vector.shape_cast %56 : vector<16x16x32xbf16> to vector<256x32xbf16>
    %c0_60 = arith.constant 0 : index
    %c5 = arith.constant 5 : index
    %c0_61 = arith.constant 0 : index
    %c0_62 = arith.constant 0 : index
    %58 = vector.load %arg4[%c0_60, %c5, %c0_61, %c0_62] : memref<2x9x32x32xbf16, #tpu.memory_space<vmem>>, vector<1x1x32x32xbf16>
    %59 = vector.shape_cast %58 : vector<1x1x32x32xbf16> to vector<32x32xbf16>
    %cst_63 = arith.constant dense<0.000000e+00> : vector<256x32xf32>
    %60 = tpu.matmul %57, %59, %cst_63 {dimension_numbers = #tpu.dot_dimension_numbers<[1], [0], [0], [1], [0, 0, 1, 1], [], []>} : vector<256x32xbf16>, vector<32x32xbf16>, vector<256x32xf32> -> vector<256x32xf32>
    %61 = arith.addf %55, %60 : vector<256x32xf32>
    %c2_64 = arith.constant 2 : index
    %c7_65 = arith.constant 7 : index
    %c0_66 = arith.constant 0 : index
    %62 = vector.load %arg9[%c2_64, %c7_65, %c0_66] : memref<18x25x32xbf16, #tpu.memory_space<vmem>>, vector<16x16x32xbf16>
    %63 = vector.shape_cast %62 : vector<16x16x32xbf16> to vector<256x32xbf16>
    %c0_67 = arith.constant 0 : index
    %c6 = arith.constant 6 : index
    %c0_68 = arith.constant 0 : index
    %c0_69 = arith.constant 0 : index
    %64 = vector.load %arg4[%c0_67, %c6, %c0_68, %c0_69] : memref<2x9x32x32xbf16, #tpu.memory_space<vmem>>, vector<1x1x32x32xbf16>
    %65 = vector.shape_cast %64 : vector<1x1x32x32xbf16> to vector<32x32xbf16>
    %cst_70 = arith.constant dense<0.000000e+00> : vector<256x32xf32>
    %66 = tpu.matmul %63, %65, %cst_70 {dimension_numbers = #tpu.dot_dimension_numbers<[1], [0], [0], [1], [0, 0, 1, 1], [], []>} : vector<256x32xbf16>, vector<32x32xbf16>, vector<256x32xf32> -> vector<256x32xf32>
    %67 = arith.addf %61, %66 : vector<256x32xf32>
    %c2_71 = arith.constant 2 : index
    %c8_72 = arith.constant 8 : index
    %c0_73 = arith.constant 0 : index
    %68 = vector.load %arg9[%c2_71, %c8_72, %c0_73] : memref<18x25x32xbf16, #tpu.memory_space<vmem>>, vector<16x16x32xbf16>
    %69 = vector.shape_cast %68 : vector<16x16x32xbf16> to vector<256x32xbf16>
    %c0_74 = arith.constant 0 : index
    %c7_75 = arith.constant 7 : index
    %c0_76 = arith.constant 0 : index
    %c0_77 = arith.constant 0 : index
    %70 = vector.load %arg4[%c0_74, %c7_75, %c0_76, %c0_77] : memref<2x9x32x32xbf16, #tpu.memory_space<vmem>>, vector<1x1x32x32xbf16>
    %71 = vector.shape_cast %70 : vector<1x1x32x32xbf16> to vector<32x32xbf16>
    %cst_78 = arith.constant dense<0.000000e+00> : vector<256x32xf32>
    %72 = tpu.matmul %69, %71, %cst_78 {dimension_numbers = #tpu.dot_dimension_numbers<[1], [0], [0], [1], [0, 0, 1, 1], [], []>} : vector<256x32xbf16>, vector<32x32xbf16>, vector<256x32xf32> -> vector<256x32xf32>
    %73 = arith.addf %67, %72 : vector<256x32xf32>
    %c2_79 = arith.constant 2 : index
    %c9_80 = arith.constant 9 : index
    %c0_81 = arith.constant 0 : index
    %74 = vector.load %arg9[%c2_79, %c9_80, %c0_81] : memref<18x25x32xbf16, #tpu.memory_space<vmem>>, vector<16x16x32xbf16>
    %75 = vector.shape_cast %74 : vector<16x16x32xbf16> to vector<256x32xbf16>
    %c0_82 = arith.constant 0 : index
    %c8_83 = arith.constant 8 : index
    %c0_84 = arith.constant 0 : index
    %c0_85 = arith.constant 0 : index
    %76 = vector.load %arg4[%c0_82, %c8_83, %c0_84, %c0_85] : memref<2x9x32x32xbf16, #tpu.memory_space<vmem>>, vector<1x1x32x32xbf16>
    %77 = vector.shape_cast %76 : vector<1x1x32x32xbf16> to vector<32x32xbf16>
    %cst_86 = arith.constant dense<0.000000e+00> : vector<256x32xf32>
    %78 = tpu.matmul %75, %77, %cst_86 {dimension_numbers = #tpu.dot_dimension_numbers<[1], [0], [0], [1], [0, 0, 1, 1], [], []>} : vector<256x32xbf16>, vector<32x32xbf16>, vector<256x32xf32> -> vector<256x32xf32>
    %79 = arith.addf %73, %78 : vector<256x32xf32>
    %c0_87 = arith.constant 0 : index
    %c0_88 = arith.constant 0 : index
    %c0_89 = arith.constant 0 : index
    %80 = vector.load %arg5[%c0_87, %c0_88, %c0_89] : memref<2x2x32xf32, #tpu.memory_space<vmem>>, vector<1x2x32xf32>
    %81 = vector.shape_cast %80 : vector<1x2x32xf32> to vector<2x32xf32>
    %82 = vector.extract_strided_slice %81 {offsets = [0, 0], sizes = [1, 32], strides = [1, 1]} : vector<2x32xf32> to vector<1x32xf32>
    %83 = vector.broadcast %82 : vector<1x32xf32> to vector<256x32xf32>
    %84 = arith.mulf %83, %79 : vector<256x32xf32>
    %85 = vector.extract_strided_slice %81 {offsets = [1, 0], sizes = [1, 32], strides = [1, 1]} : vector<2x32xf32> to vector<1x32xf32>
    %86 = vector.broadcast %85 : vector<1x32xf32> to vector<256x32xf32>
    %87 = arith.addf %84, %86 : vector<256x32xf32>
    %88 = arith.addf %12, %87 : vector<256x32xf32>
    %89 = tpu.transpose %88, [1, 0] : vector<256x32xf32> -> vector<32x256xf32>
    %c0_90 = arith.constant 0 : index
    %c0_91 = arith.constant 0 : index
    %c0_92 = arith.constant 0 : index
    %90 = vector.load %arg6[%c0_90, %c0_91, %c0_92] : memref<1x32x256xf32, #tpu.memory_space<vmem>>, vector<1x32x256xf32>
    %91 = vector.shape_cast %90 : vector<1x32x256xf32> to vector<32x256xf32>
    %92 = vector.shape_cast %89 : vector<32x256xf32> to vector<1x32x256xf32>
    tpu.vector_store %arg6[%c0_90, %c0_91, %c0_92], %92 {strides = array<i32>} : memref<1x32x256xf32, #tpu.memory_space<vmem>>, vector<1x32x256xf32>,
    %cst_93 = arith.constant 0.000000e+00 : f32
    %93 = vector.broadcast %cst_93 : f32 to vector<256x32xf32>
    %94 = arith.cmpf oge, %88, %93 : vector<256x32xf32>
    %cst_94 = arith.constant 0.00999999977 : f32
    %95 = vector.broadcast %cst_94 : f32 to vector<256x32xf32>
    %96 = arith.mulf %95, %88 : vector<256x32xf32>
    %97 = arith.select %94, %88, %96 : vector<256x32xi1>, vector<256x32xf32>
    %98 = vector.shape_cast %97 : vector<256x32xf32> to vector<16x16x32xf32>
    %99 = arith.truncf %98 : vector<16x16x32xf32> to vector<16x16x32xbf16>
    %c1_95 = arith.constant 1 : index
    %c8_96 = arith.constant 8 : index
    %c0_97 = arith.constant 0 : index
    %100 = vector.load %arg9[%c1_95, %c8_96, %c0_97] : memref<18x25x32xbf16, #tpu.memory_space<vmem>>, vector<16x16x32xbf16>
    tpu.vector_store %arg9[%c1_95, %c8_96, %c0_97], %99 {strides = array<i32>} : memref<18x25x32xbf16, #tpu.memory_space<vmem>>, vector<16x16x32xbf16>,
    %c0_98 = arith.constant 0 : index
    %c7_99 = arith.constant 7 : index
    %c0_100 = arith.constant 0 : index
    %101 = vector.load %arg9[%c0_98, %c7_99, %c0_100] : memref<18x25x32xbf16, #tpu.memory_space<vmem>>, vector<16x16x32xbf16>
    %102 = vector.shape_cast %101 : vector<16x16x32xbf16> to vector<256x32xbf16>
    %c1_101 = arith.constant 1 : index
    %c0_102 = arith.constant 0 : index
    %c0_103 = arith.constant 0 : index
    %c0_104 = arith.constant 0 : index
    %103 = vector.load %arg4[%c1_101, %c0_102, %c0_103, %c0_104] : memref<2x9x32x32xbf16, #tpu.memory_space<vmem>>, vector<1x1x32x32xbf16>
    %104 = vector.shape_cast %103 : vector<1x1x32x32xbf16> to vector<32x32xbf16>
    %cst_105 = arith.constant dense<0.000000e+00> : vector<256x32xf32>
    %105 = tpu.matmul %102, %104, %cst_105 {dimension_numbers = #tpu.dot_dimension_numbers<[1], [0], [0], [1], [0, 0, 1, 1], [], []>} : vector<256x32xbf16>, vector<32x32xbf16>, vector<256x32xf32> -> vector<256x32xf32>
    %c0_106 = arith.constant 0 : index
    %c8_107 = arith.constant 8 : index
    %c0_108 = arith.constant 0 : index
    %106 = vector.load %arg9[%c0_106, %c8_107, %c0_108] : memref<18x25x32xbf16, #tpu.memory_space<vmem>>, vector<16x16x32xbf16>
    %107 = vector.shape_cast %106 : vector<16x16x32xbf16> to vector<256x32xbf16>
    %c1_109 = arith.constant 1 : index
    %c1_110 = arith.constant 1 : index
    %c0_111 = arith.constant 0 : index
    %c0_112 = arith.constant 0 : index
    %108 = vector.load %arg4[%c1_109, %c1_110, %c0_111, %c0_112] : memref<2x9x32x32xbf16, #tpu.memory_space<vmem>>, vector<1x1x32x32xbf16>
    %109 = vector.shape_cast %108 : vector<1x1x32x32xbf16> to vector<32x32xbf16>
    %cst_113 = arith.constant dense<0.000000e+00> : vector<256x32xf32>
    %110 = tpu.matmul %107, %109, %cst_113 {dimension_numbers = #tpu.dot_dimension_numbers<[1], [0], [0], [1], [0, 0, 1, 1], [], []>} : vector<256x32xbf16>, vector<32x32xbf16>, vector<256x32xf32> -> vector<256x32xf32>
    %111 = arith.addf %105, %110 : vector<256x32xf32>
    %c0_114 = arith.constant 0 : index
    %c9_115 = arith.constant 9 : index
    %c0_116 = arith.constant 0 : index
    %112 = vector.load %arg9[%c0_114, %c9_115, %c0_116] : memref<18x25x32xbf16, #tpu.memory_space<vmem>>, vector<16x16x32xbf16>
    %113 = vector.shape_cast %112 : vector<16x16x32xbf16> to vector<256x32xbf16>
    %c1_117 = arith.constant 1 : index
    %c2_118 = arith.constant 2 : index
    %c0_119 = arith.constant 0 : index
    %c0_120 = arith.constant 0 : index
    %114 = vector.load %arg4[%c1_117, %c2_118, %c0_119, %c0_120] : memref<2x9x32x32xbf16, #tpu.memory_space<vmem>>, vector<1x1x32x32xbf16>
    %115 = vector.shape_cast %114 : vector<1x1x32x32xbf16> to vector<32x32xbf16>
    %cst_121 = arith.constant dense<0.000000e+00> : vector<256x32xf32>
    %116 = tpu.matmul %113, %115, %cst_121 {dimension_numbers = #tpu.dot_dimension_numbers<[1], [0], [0], [1], [0, 0, 1, 1], [], []>} : vector<256x32xbf16>, vector<32x32xbf16>, vector<256x32xf32> -> vector<256x32xf32>
    %117 = arith.addf %111, %116 : vector<256x32xf32>
    %c1_122 = arith.constant 1 : index
    %c7_123 = arith.constant 7 : index
    %c0_124 = arith.constant 0 : index
    %118 = vector.load %arg9[%c1_122, %c7_123, %c0_124] : memref<18x25x32xbf16, #tpu.memory_space<vmem>>, vector<16x16x32xbf16>
    %119 = vector.shape_cast %118 : vector<16x16x32xbf16> to vector<256x32xbf16>
    %c1_125 = arith.constant 1 : index
    %c3_126 = arith.constant 3 : index
    %c0_127 = arith.constant 0 : index
    %c0_128 = arith.constant 0 : index
    %120 = vector.load %arg4[%c1_125, %c3_126, %c0_127, %c0_128] : memref<2x9x32x32xbf16, #tpu.memory_space<vmem>>, vector<1x1x32x32xbf16>
    %121 = vector.shape_cast %120 : vector<1x1x32x32xbf16> to vector<32x32xbf16>
    %cst_129 = arith.constant dense<0.000000e+00> : vector<256x32xf32>
    %122 = tpu.matmul %119, %121, %cst_129 {dimension_numbers = #tpu.dot_dimension_numbers<[1], [0], [0], [1], [0, 0, 1, 1], [], []>} : vector<256x32xbf16>, vector<32x32xbf16>, vector<256x32xf32> -> vector<256x32xf32>
    %123 = arith.addf %117, %122 : vector<256x32xf32>
    %c1_130 = arith.constant 1 : index
    %c8_131 = arith.constant 8 : index
    %c0_132 = arith.constant 0 : index
    %124 = vector.load %arg9[%c1_130, %c8_131, %c0_132] : memref<18x25x32xbf16, #tpu.memory_space<vmem>>, vector<16x16x32xbf16>
    %125 = vector.shape_cast %124 : vector<16x16x32xbf16> to vector<256x32xbf16>
    %c1_133 = arith.constant 1 : index
    %c4_134 = arith.constant 4 : index
    %c0_135 = arith.constant 0 : index
    %c0_136 = arith.constant 0 : index
    %126 = vector.load %arg4[%c1_133, %c4_134, %c0_135, %c0_136] : memref<2x9x32x32xbf16, #tpu.memory_space<vmem>>, vector<1x1x32x32xbf16>
    %127 = vector.shape_cast %126 : vector<1x1x32x32xbf16> to vector<32x32xbf16>
    %cst_137 = arith.constant dense<0.000000e+00> : vector<256x32xf32>
    %128 = tpu.matmul %125, %127, %cst_137 {dimension_numbers = #tpu.dot_dimension_numbers<[1], [0], [0], [1], [0, 0, 1, 1], [], []>} : vector<256x32xbf16>, vector<32x32xbf16>, vector<256x32xf32> -> vector<256x32xf32>
    %129 = arith.addf %123, %128 : vector<256x32xf32>
    %c1_138 = arith.constant 1 : index
    %c9_139 = arith.constant 9 : index
    %c0_140 = arith.constant 0 : index
    %130 = vector.load %arg9[%c1_138, %c9_139, %c0_140] : memref<18x25x32xbf16, #tpu.memory_space<vmem>>, vector<16x16x32xbf16>
    %131 = vector.shape_cast %130 : vector<16x16x32xbf16> to vector<256x32xbf16>
    %c1_141 = arith.constant 1 : index
    %c5_142 = arith.constant 5 : index
    %c0_143 = arith.constant 0 : index
    %c0_144 = arith.constant 0 : index
    %132 = vector.load %arg4[%c1_141, %c5_142, %c0_143, %c0_144] : memref<2x9x32x32xbf16, #tpu.memory_space<vmem>>, vector<1x1x32x32xbf16>
    %133 = vector.shape_cast %132 : vector<1x1x32x32xbf16> to vector<32x32xbf16>
    %cst_145 = arith.constant dense<0.000000e+00> : vector<256x32xf32>
    %134 = tpu.matmul %131, %133, %cst_145 {dimension_numbers = #tpu.dot_dimension_numbers<[1], [0], [0], [1], [0, 0, 1, 1], [], []>} : vector<256x32xbf16>, vector<32x32xbf16>, vector<256x32xf32> -> vector<256x32xf32>
    %135 = arith.addf %129, %134 : vector<256x32xf32>
    %c2_146 = arith.constant 2 : index
    %c7_147 = arith.constant 7 : index
    %c0_148 = arith.constant 0 : index
    %136 = vector.load %arg9[%c2_146, %c7_147, %c0_148] : memref<18x25x32xbf16, #tpu.memory_space<vmem>>, vector<16x16x32xbf16>
    %137 = vector.shape_cast %136 : vector<16x16x32xbf16> to vector<256x32xbf16>
    %c1_149 = arith.constant 1 : index
    %c6_150 = arith.constant 6 : index
    %c0_151 = arith.constant 0 : index
    %c0_152 = arith.constant 0 : index
    %138 = vector.load %arg4[%c1_149, %c6_150, %c0_151, %c0_152] : memref<2x9x32x32xbf16, #tpu.memory_space<vmem>>, vector<1x1x32x32xbf16>
    %139 = vector.shape_cast %138 : vector<1x1x32x32xbf16> to vector<32x32xbf16>
    %cst_153 = arith.constant dense<0.000000e+00> : vector<256x32xf32>
    %140 = tpu.matmul %137, %139, %cst_153 {dimension_numbers = #tpu.dot_dimension_numbers<[1], [0], [0], [1], [0, 0, 1, 1], [], []>} : vector<256x32xbf16>, vector<32x32xbf16>, vector<256x32xf32> -> vector<256x32xf32>
    %141 = arith.addf %135, %140 : vector<256x32xf32>
    %c2_154 = arith.constant 2 : index
    %c8_155 = arith.constant 8 : index
    %c0_156 = arith.constant 0 : index
    %142 = vector.load %arg9[%c2_154, %c8_155, %c0_156] : memref<18x25x32xbf16, #tpu.memory_space<vmem>>, vector<16x16x32xbf16>
    %143 = vector.shape_cast %142 : vector<16x16x32xbf16> to vector<256x32xbf16>
    %c1_157 = arith.constant 1 : index
    %c7_158 = arith.constant 7 : index
    %c0_159 = arith.constant 0 : index
    %c0_160 = arith.constant 0 : index
    %144 = vector.load %arg4[%c1_157, %c7_158, %c0_159, %c0_160] : memref<2x9x32x32xbf16, #tpu.memory_space<vmem>>, vector<1x1x32x32xbf16>
    %145 = vector.shape_cast %144 : vector<1x1x32x32xbf16> to vector<32x32xbf16>
    %cst_161 = arith.constant dense<0.000000e+00> : vector<256x32xf32>
    %146 = tpu.matmul %143, %145, %cst_161 {dimension_numbers = #tpu.dot_dimension_numbers<[1], [0], [0], [1], [0, 0, 1, 1], [], []>} : vector<256x32xbf16>, vector<32x32xbf16>, vector<256x32xf32> -> vector<256x32xf32>
    %147 = arith.addf %141, %146 : vector<256x32xf32>
    %c2_162 = arith.constant 2 : index
    %c9_163 = arith.constant 9 : index
    %c0_164 = arith.constant 0 : index
    %148 = vector.load %arg9[%c2_162, %c9_163, %c0_164] : memref<18x25x32xbf16, #tpu.memory_space<vmem>>, vector<16x16x32xbf16>
    %149 = vector.shape_cast %148 : vector<16x16x32xbf16> to vector<256x32xbf16>
    %c1_165 = arith.constant 1 : index
    %c8_166 = arith.constant 8 : index
    %c0_167 = arith.constant 0 : index
    %c0_168 = arith.constant 0 : index
    %150 = vector.load %arg4[%c1_165, %c8_166, %c0_167, %c0_168] : memref<2x9x32x32xbf16, #tpu.memory_space<vmem>>, vector<1x1x32x32xbf16>
    %151 = vector.shape_cast %150 : vector<1x1x32x32xbf16> to vector<32x32xbf16>
    %cst_169 = arith.constant dense<0.000000e+00> : vector<256x32xf32>
    %152 = tpu.matmul %149, %151, %cst_169 {dimension_numbers = #tpu.dot_dimension_numbers<[1], [0], [0], [1], [0, 0, 1, 1], [], []>} : vector<256x32xbf16>, vector<32x32xbf16>, vector<256x32xf32> -> vector<256x32xf32>
    %153 = arith.addf %147, %152 : vector<256x32xf32>
    %c1_170 = arith.constant 1 : index
    %c0_171 = arith.constant 0 : index
    %c0_172 = arith.constant 0 : index
    %154 = vector.load %arg5[%c1_170, %c0_171, %c0_172] : memref<2x2x32xf32, #tpu.memory_space<vmem>>, vector<1x2x32xf32>
    %155 = vector.shape_cast %154 : vector<1x2x32xf32> to vector<2x32xf32>
    %156 = vector.extract_strided_slice %155 {offsets = [0, 0], sizes = [1, 32], strides = [1, 1]} : vector<2x32xf32> to vector<1x32xf32>
    %157 = vector.broadcast %156 : vector<1x32xf32> to vector<256x32xf32>
    %158 = arith.mulf %157, %153 : vector<256x32xf32>
    %159 = vector.extract_strided_slice %155 {offsets = [1, 0], sizes = [1, 32], strides = [1, 1]} : vector<2x32xf32> to vector<1x32xf32>
    %160 = vector.broadcast %159 : vector<1x32xf32> to vector<256x32xf32>
    %161 = arith.addf %158, %160 : vector<256x32xf32>
    %162 = arith.addf %88, %161 : vector<256x32xf32>
    %163 = tpu.transpose %162, [1, 0] : vector<256x32xf32> -> vector<32x256xf32>
    %c0_173 = arith.constant 0 : index
    %c0_174 = arith.constant 0 : index
    %c0_175 = arith.constant 0 : index
    %164 = vector.load %arg7[%c0_173, %c0_174, %c0_175] : memref<1x32x256xf32, #tpu.memory_space<vmem>>, vector<1x32x256xf32>
    %165 = vector.shape_cast %164 : vector<1x32x256xf32> to vector<32x256xf32>
    %166 = vector.shape_cast %163 : vector<32x256xf32> to vector<1x32x256xf32>
    tpu.vector_store %arg7[%c0_173, %c0_174, %c0_175], %166 {strides = array<i32>} : memref<1x32x256xf32, #tpu.memory_space<vmem>>, vector<1x32x256xf32>,
    %167 = arith.truncf %162 : vector<256x32xf32> to vector<256x32xbf16>
    %c0_176 = arith.constant 0 : index
    %c0_177 = arith.constant 0 : index
    %c0_178 = arith.constant 0 : index
    %168 = vector.load %arg8[%c0_176, %c0_177, %c0_178] : memref<1x256x32xbf16, #tpu.memory_space<vmem>>, vector<1x256x32xbf16>
    %169 = vector.shape_cast %168 : vector<1x256x32xbf16> to vector<256x32xbf16>
    %170 = vector.shape_cast %167 : vector<256x32xbf16> to vector<1x256x32xbf16>
    tpu.vector_store %arg8[%c0_176, %c0_177, %c0_178], %170 {strides = array<i32>} : memref<1x256x32xbf16, #tpu.memory_space<vmem>>, vector<1x256x32xbf16>,
    return
  }
  func.func @transform_0(%arg0: i32) -> (i32, i32, i32, i32) {
    %c0_i32 = arith.constant 0 : i32
    %c0_i32_0 = arith.constant 0 : i32
    %c0_i32_1 = arith.constant 0 : i32
    %c0_i32_2 = arith.constant 0 : i32
    return %arg0, %c0_i32, %c0_i32_0, %c0_i32_1 : i32, i32, i32, i32
  }
  func.func @transform_1(%arg0: i32) -> (i32, i32) {
    %c0_i32 = arith.constant 0 : i32
    %c0_i32_0 = arith.constant 0 : i32
    %c0_i32_1 = arith.constant 0 : i32
    return %c0_i32, %c0_i32_0 : i32, i32
  }
  func.func @transform_2(%arg0: i32) -> (i32, i32) {
    %c0_i32 = arith.constant 0 : i32
    %c0_i32_0 = arith.constant 0 : i32
    %c0_i32_1 = arith.constant 0 : i32
    return %c0_i32, %c0_i32_0 : i32, i32
  }
  func.func @transform_3(%arg0: i32) -> (i32, i32, i32, i32) {
    %c0_i32 = arith.constant 0 : i32
    %c0_i32_0 = arith.constant 0 : i32
    %c0_i32_1 = arith.constant 0 : i32
    %c0_i32_2 = arith.constant 0 : i32
    %c0_i32_3 = arith.constant 0 : i32
    return %c0_i32, %c0_i32_0, %c0_i32_1, %c0_i32_2 : i32, i32, i32, i32
  }
  func.func @transform_4(%arg0: i32) -> (i32, i32, i32) {
    %c0_i32 = arith.constant 0 : i32
    %c0_i32_0 = arith.constant 0 : i32
    %c0_i32_1 = arith.constant 0 : i32
    %c0_i32_2 = arith.constant 0 : i32
    return %c0_i32, %c0_i32_0, %c0_i32_1 : i32, i32, i32
  }
  func.func @transform_5(%arg0: i32) -> (i32, i32, i32) {
    %c0_i32 = arith.constant 0 : i32
    %c0_i32_0 = arith.constant 0 : i32
    %c0_i32_1 = arith.constant 0 : i32
    return %arg0, %c0_i32, %c0_i32_0 : i32, i32, i32
  }
  func.func @transform_6(%arg0: i32) -> (i32, i32, i32) {
    %c0_i32 = arith.constant 0 : i32
    %c0_i32_0 = arith.constant 0 : i32
    %c0_i32_1 = arith.constant 0 : i32
    return %arg0, %c0_i32, %c0_i32_0 : i32, i32, i32
  }
  func.func @transform_7(%arg0: i32) -> (i32, i32, i32) {
    %c0_i32 = arith.constant 0 : i32
    %c0_i32_0 = arith.constant 0 : i32
    %c0_i32_1 = arith.constant 0 : i32
    return %arg0, %c0_i32, %c0_i32_0 : i32, i32, i32
  }
}

</mosaic_0001>

<llo_original>
// kernel: tpu_custom_call.1
$region0: #{tpu_custom_call.1}
  #allocation0 [shape = 'u32[]', space=smem, size = 0x4, offset = 0x4, fixed_abs, tag = 'smem constant byte address 0x4 - core index']
  #allocation1 [shape = 'u32[72,128]{1,0:T(1,128)}', space=vmem, size = 0x9000, scoped, tag = 'internal scratch']
  #allocation2 [shape = 'bf16[18,25,32]{2,1,0:T(8,128)(2,1)}', space=vmem, size = 0x24000, scoped, tag = 'scratch operand']
  %s0 = inlined_call_operand.vmem [shape: f32[2,16,16,3], index: 0, kind: input, shape index: {}]
  %s1 = inlined_call_operand.vmem [shape: bf16[3,32], index: 1, kind: input, shape index: {}]
  %s2 = inlined_call_operand.vmem [shape: f32[2,32], index: 2, kind: input, shape index: {}]
  %s3 = inlined_call_operand.vmem [shape: bf16[2,9,32,32], index: 3, kind: input, shape index: {}]
  %s4 = inlined_call_operand.vmem [shape: f32[2,2,32], index: 4, kind: input, shape index: {}]
  %s5 = inlined_call_operand.hbm [shape: f32[2,32,256], index: 5, kind: output, shape index: {0}]
  %s6 = inlined_call_operand.hbm [shape: f32[2,32,256], index: 6, kind: output, shape index: {1}]
  %s7 = inlined_call_operand.vmem [shape: bf16[2,256,32], index: 7, kind: output, shape index: {2}]
  %8 = xla_tuple %s5, %s6, %s7
  %s9 = sld [smem:[#allocation0]]
  $region69: #{tpu_custom_call.1} parent=0
    _
  %s11 = ssub.s32 1, %s9
  %s12 = scalar_select 0, %s11, %s9
  $region1: #{tpu_custom_call.1} parent=0
    #allocation3 [shape = 'u8[65536]{0}', space=vmem, size = 0x10000, scoped, tag = 'output window, operand 0']
    #allocation4 [shape = 's32[2]{0}', space=sflag, size = 0x8, scoped, tag = 'scoped memory for tpu_custom_call.1']
    #allocation5 [shape = 'u8[65536]{0}', space=vmem, size = 0x10000, scoped, tag = 'output window, operand 1']
    #allocation6 [shape = 's32[2]{0}', space=sflag, size = 0x8, scoped, tag = 'scoped memory for tpu_custom_call.1']
    %13 = vsyncpa [#allocation4], 0
    %s14 = scalar_lea.sflag [#allocation4], 1
    %15 = vsyncpa %s14, 0
    %16 = vsyncpa [#allocation6], 0
    %s17 = scalar_lea.sflag [#allocation6], 1
    %18 = vsyncpa %s17, 0
    loop: start=0, step=1, limit=4
    $region2: #{tpu_custom_call.1} parent=1 // loop_pre_header
      _
    $region3: #{tpu_custom_call.1} parent=1 // loop_header
      %s20 = sphi 0, %s24
      %p21 = scmp.ge.s32.totalorder %s20, 4
      %s30 = sphi 0, %s32
      %s33 = sphi 0, %s30
      %s34 = sphi 0, %s33
      %s50 = sphi 0, %s34
      %s54 = sphi 0, %s54
      %s56 = sphi 0, %s54
      %s57 = sphi 0, %s56
      %s71 = sphi 0, %s57
      %s75 = sphi 0, %s75
      %s77 = sphi 0, %s75
      %s78 = sphi 0, %s77
      %s92 = sphi 0, %s78
      %s96 = sphi 0, %s96
      %s98 = sphi 0, %s96
      %s99 = sphi 0, %s98
      %s113 = sphi 0, %s99
      %s117 = sphi 0, %s117
      %s119 = sphi 0, %s117
      %s120 = sphi 0, %s119
      %s134 = sphi 0, %s120
      %s140 = sphi 0, %s142
      %s143 = sphi 0, %s140
      %s144 = sphi 0, %s143
      %s160 = sphi 0, %s144
      %s166 = sphi 0, %s168
      %s169 = sphi 0, %s166
      %s170 = sphi 0, %s169
      %s186 = sphi 0, %s170
      %s192 = sphi 0, %s194
      %s195 = sphi 0, %s192
      %s196 = sphi 0, %s195
      %s212 = sphi 0, %s196
    $region4: #{tpu_custom_call.1} parent=1 // loop_header_branch
      %23 = sbr.rel (%p21) target = $region8
    $region5: #{tpu_custom_call.1} parent=1 // loop_body
      %s25 = ssub.s32 %s20, 1
      %s26 = ssub.s32 %s20, 2
      %s27 = sadd.s32 %s20, 1
      %s28 = ssub.s32 %s20, %s27
      %p29 = scmp.eq.s32.totalorder %s28, 0
      %s31 = sadd.s32 %s30, 1
      %s32 = scalar_select %p29, %s30, %s31
      %p35 = pneg %p29
      %p36 = scmp.eq.s32.totalorder %s20, 1
      %p37 = por %p35, %p36
      %p38 = scmp.ne.s32.totalorder %s30, %s33
      %p39 = scmp.eq.s32.totalorder %s20, 0
      %p40 = por %p38, %p39
      %p41 = scmp.ne.s32.totalorder %s30, %s33
      %p42 = scmp.eq.s32.totalorder %s25, 1
      %p43 = por %p41, %p42
      %p44 = scmp.ne.s32.totalorder %s33, %s34
      %p45 = scmp.eq.s32.totalorder %s25, 0
      %p46 = por %p44, %p45
      %p47 = scmp.ne.s32.totalorder %s33, %s34
      %p48 = scmp.eq.s32.totalorder %s26, 1
      %p49 = por %p47, %p48
      %p51 = scmp.ne.s32.totalorder %s34, %s50
      %p52 = scmp.eq.s32.totalorder %s26, 0
      %p53 = por %p51, %p52
      %s55 = sadd.s32 %s54, 1
      %p58 = scmp.eq.s32.totalorder %s20, 1
      %p59 = scmp.ne.s32.totalorder %s54, %s56
      %p60 = scmp.eq.s32.totalorder %s20, 0
      %p61 = por %p59, %p60
      %p62 = scmp.ne.s32.totalorder %s54, %s56
      %p63 = scmp.eq.s32.totalorder %s25, 1
      %p64 = por %p62, %p63
      %p65 = scmp.ne.s32.totalorder %s56, %s57
      %p66 = scmp.eq.s32.totalorder %s25, 0
      %p67 = por %p65, %p66
      %p68 = scmp.ne.s32.totalorder %s56, %s57
      %p69 = scmp.eq.s32.totalorder %s26, 1
      %p70 = por %p68, %p69
      %p72 = scmp.ne.s32.totalorder %s57, %s71
      %p73 = scmp.eq.s32.totalorder %s26, 0
      %p74 = por %p72, %p73
      %s76 = sadd.s32 %s75, 1
      %p79 = scmp.eq.s32.totalorder %s20, 1
      %p80 = scmp.ne.s32.totalorder %s75, %s77
      %p81 = scmp.eq.s32.totalorder %s20, 0
      %p82 = por %p80, %p81
      %p83 = scmp.ne.s32.totalorder %s75, %s77
      %p84 = scmp.eq.s32.totalorder %s25, 1
      %p85 = por %p83, %p84
      %p86 = scmp.ne.s32.totalorder %s77, %s78
      %p87 = scmp.eq.s32.totalorder %s25, 0
      %p88 = por %p86, %p87
      %p89 = scmp.ne.s32.totalorder %s77, %s78
      %p90 = scmp.eq.s32.totalorder %s26, 1
      %p91 = por %p89, %p90
      %p93 = scmp.ne.s32.totalorder %s78, %s92
      %p94 = scmp.eq.s32.totalorder %s26, 0
      %p95 = por %p93, %p94
      %s97 = sadd.s32 %s96, 1
      %p100 = scmp.eq.s32.totalorder %s20, 1
      %p101 = scmp.ne.s32.totalorder %s96, %s98
      %p102 = scmp.eq.s32.totalorder %s20, 0
      %p103 = por %p101, %p102
      %p104 = scmp.ne.s32.totalorder %s96, %s98
      %p105 = scmp.eq.s32.totalorder %s25, 1
      %p106 = por %p104, %p105
      %p107 = scmp.ne.s32.totalorder %s98, %s99
      %p108 = scmp.eq.s32.totalorder %s25, 0
      %p109 = por %p107, %p108
      %p110 = scmp.ne.s32.totalorder %s98, %s99
      %p111 = scmp.eq.s32.totalorder %s26, 1
      %p112 = por %p110, %p111
      %p114 = scmp.ne.s32.totalorder %s99, %s113
      %p115 = scmp.eq.s32.totalorder %s26, 0
      %p116 = por %p114, %p115
      %s118 = sadd.s32 %s117, 1
      %p121 = scmp.eq.s32.totalorder %s20, 1
      %p122 = scmp.ne.s32.totalorder %s117, %s119
      %p123 = scmp.eq.s32.totalorder %s20, 0
      %p124 = por %p122, %p123
      %p125 = scmp.ne.s32.totalorder %s117, %s119
      %p126 = scmp.eq.s32.totalorder %s25, 1
      %p127 = por %p125, %p126
      %p128 = scmp.ne.s32.totalorder %s119, %s120
      %p129 = scmp.eq.s32.totalorder %s25, 0
      %p130 = por %p128, %p129
      %p131 = scmp.ne.s32.totalorder %s119, %s120
      %p132 = scmp.eq.s32.totalorder %s26, 1
      %p133 = por %p131, %p132
      %p135 = scmp.ne.s32.totalorder %s120, %s134
      %p136 = scmp.eq.s32.totalorder %s26, 0
      %p137 = por %p135, %p136
      %s138 = ssub.s32 %s20, %s27
      %p139 = scmp.eq.s32.totalorder %s138, 0
      %s141 = sadd.s32 %s140, 1
      %s142 = scalar_select %p139, %s140, %s141
      %p145 = pneg %p139
      %p146 = scmp.eq.s32.totalorder %s20, 1
      %p147 = por %p145, %p146
      %p148 = scmp.ne.s32.totalorder %s140, %s143
      %p149 = scmp.eq.s32.totalorder %s20, 0
      %p150 = por %p148, %p149
      %p151 = scmp.ne.s32.totalorder %s140, %s143
      %p152 = scmp.eq.s32.totalorder %s25, 1
      %p153 = por %p151, %p152
      %p154 = scmp.ne.s32.totalorder %s143, %s144
      %p155 = scmp.eq.s32.totalorder %s25, 0
      %p156 = por %p154, %p155
      %p157 = scmp.ne.s32.totalorder %s143, %s144
      %p158 = scmp.eq.s32.totalorder %s26, 1
      %p159 = por %p157, %p158
      %p161 = scmp.ne.s32.totalorder %s144, %s160
      %p162 = scmp.eq.s32.totalorder %s26, 0
      %p163 = por %p161, %p162
      %s164 = ssub.s32 %s20, %s27
      %p165 = scmp.eq.s32.totalorder %s164, 0
      %s167 = sadd.s32 %s166, 1
      %s168 = scalar_select %p165, %s166, %s167
      %p171 = pneg %p165
      %p172 = scmp.eq.s32.totalorder %s20, 1
      %p173 = por %p171, %p172
      %p174 = scmp.ne.s32.totalorder %s166, %s169
      %p175 = scmp.eq.s32.totalorder %s20, 0
      %p176 = por %p174, %p175
      %p177 = scmp.ne.s32.totalorder %s166, %s169
      %p178 = scmp.eq.s32.totalorder %s25, 1
      %p179 = por %p177, %p178
      %p180 = scmp.ne.s32.totalorder %s169, %s170
      %p181 = scmp.eq.s32.totalorder %s25, 0
      %p182 = por %p180, %p181
      %p183 = scmp.ne.s32.totalorder %s169, %s170
      %p184 = scmp.eq.s32.totalorder %s26, 1
      %p185 = por %p183, %p184
      %p187 = scmp.ne.s32.totalorder %s170, %s186
      %p188 = scmp.eq.s32.totalorder %s26, 0
      %p189 = por %p187, %p188
      %s190 = ssub.s32 %s20, %s27
      %p191 = scmp.eq.s32.totalorder %s190, 0
      %s193 = sadd.s32 %s192, 1
      %s194 = scalar_select %p191, %s192, %s193
      %p197 = pneg %p191
      %p198 = scmp.eq.s32.totalorder %s20, 1
      %p199 = por %p197, %p198
      %p200 = scmp.ne.s32.totalorder %s192, %s195
      %p201 = scmp.eq.s32.totalorder %s20, 0
      %p202 = por %p200, %p201
      %p203 = scmp.ne.s32.totalorder %s192, %s195
      %p204 = scmp.eq.s32.totalorder %s25, 1
      %p205 = por %p203, %p204
      %p206 = scmp.ne.s32.totalorder %s195, %s196
      %p207 = scmp.eq.s32.totalorder %s25, 0
      %p208 = por %p206, %p207
      %p209 = scmp.ne.s32.totalorder %s195, %s196
      %p210 = scmp.eq.s32.totalorder %s26, 1
      %p211 = por %p209, %p210
      %p213 = scmp.ne.s32.totalorder %s196, %s212
      %p214 = scmp.eq.s32.totalorder %s26, 0
      %p215 = por %p213, %p214
      %p216 = scmp.le.s32.totalorder 1, %s20
      %p217 = scmp.lt.s32.totalorder %s20, 3
      %p218 = pnand %p216, %p217
      %p219 = pneg %p218
      // Predicated region
      $region9: #{tpu_custom_call.1} parent=5 // pred_check
        _
      $region10: #{tpu_custom_call.1} parent=5 // pred_check_branch
        %221 = sbr.rel (%p218) target = $region12
      $region11: #{tpu_custom_call.1} parent=5 // pred_region
        %s222 = ssub.s32 %s20, 1
        // Predicated region
        $region13: #{tpu_custom_call.1} parent=11 // pred_check
          %p223 = pneg %p67
        $region14: #{tpu_custom_call.1} parent=11 // pred_check_branch
          %225 = sbr.rel (%p223) target = $region16
        $region15: #{tpu_custom_call.1} parent=11 // pred_region
          _
        $region16: #{tpu_custom_call.1} parent=11 // pred_fallthru
          _
        // Predicated region
        $region17: #{tpu_custom_call.1} parent=11 // pred_check
          %p226 = pneg %p88
        $region18: #{tpu_custom_call.1} parent=11 // pred_check_branch
          %228 = sbr.rel (%p226) target = $region20
        $region19: #{tpu_custom_call.1} parent=11 // pred_region
          _
        $region20: #{tpu_custom_call.1} parent=11 // pred_fallthru
          _
        // Predicated region
        $region21: #{tpu_custom_call.1} parent=11 // pred_check
          %p229 = pneg %p109
        $region22: #{tpu_custom_call.1} parent=11 // pred_check_branch
          %231 = sbr.rel (%p229) target = $region24
        $region23: #{tpu_custom_call.1} parent=11 // pred_region
          _
        $region24: #{tpu_custom_call.1} parent=11 // pred_fallthru
          _
        // Predicated region
        $region25: #{tpu_custom_call.1} parent=11 // pred_check
          %p232 = pneg %p130
        $region26: #{tpu_custom_call.1} parent=11 // pred_check_branch
          %234 = sbr.rel (%p232) target = $region28
        $region27: #{tpu_custom_call.1} parent=11 // pred_region
          _
        $region28: #{tpu_custom_call.1} parent=11 // pred_fallthru
          _
      $region12: #{tpu_custom_call.1} parent=5 // pred_fallthru
        _
      %p235 = scmp.lt.s32.totalorder %s20, 2
      // Predicated region
      $region29: #{tpu_custom_call.1} parent=5 // pred_check
        %p236 = pneg %p235
      $region30: #{tpu_custom_call.1} parent=5 // pred_check_branch
        %238 = sbr.rel (%p236) target = $region32
      $region31: #{tpu_custom_call.1} parent=5 // pred_region
        // Predicated region
        $region33: #{tpu_custom_call.1} parent=31 // pred_check
          %p239 = pneg %p40
        $region34: #{tpu_custom_call.1} parent=31 // pred_check_branch
          %241 = sbr.rel (%p239) target = $region36
        $region35: #{tpu_custom_call.1} parent=31 // pred_region
          %p242 = scmp.lt.s32.totalorder %s20, 1
          %s243 = scalar_select %p242, %s20, 1
          %s244 = smul.addr %s243, 32
          %s245 = smul.addr %s244, 8
          %s246 = scalar_lea.vmem %s0, %s245
        $region36: #{tpu_custom_call.1} parent=31 // pred_fallthru
          _
      $region32: #{tpu_custom_call.1} parent=5 // pred_fallthru
        _
      %p247 = scmp.le.s32.totalorder 1, %s20
      %p248 = scmp.lt.s32.totalorder %s20, 3
      %p249 = pnand %p247, %p248
      %p250 = pneg %p249
      // Predicated region
      $region37: #{tpu_custom_call.1} parent=5 // pred_check
        _
      $region38: #{tpu_custom_call.1} parent=5 // pred_check_branch
        %252 = sbr.rel (%p249) target = $region40
      $region39: #{tpu_custom_call.1} parent=5 // pred_region
        %s253 = ssub.s32 %s20, 1
        %p254 = scmp.lt.s32.totalorder %s25, 1
        %s255 = scalar_select %p254, %s25, 1
        %s256 = smul.addr %s255, 32
        %s257 = smul.addr %s256, 8
        %s258 = scalar_lea.vmem %s0, %s257
        %p259 = pneg %p46
        %p260 = pneg %p43
        %p261 = pneg %p67
        %p262 = pneg %p64
        %p263 = pneg %p88
        %p264 = pneg %p85
        %p265 = pneg %p109
        %p266 = pneg %p106
        %p267 = pneg %p130
        %p268 = pneg %p127
        %p269 = pneg %p156
        %p270 = pneg %p153
        %s271 = sand.u32 %s143, 1
        %s272 = scalar_lea.sflag [#allocation4], %s271
        %s273 = sand.u32 %s143, 1
        %s274 = smul.addr %s273, 64
        %s275 = scalar_lea.vmem [#allocation3], %s274
        %p276 = pneg %p182
        %p277 = pneg %p179
        %s278 = sand.u32 %s169, 1
        %s279 = scalar_lea.sflag [#allocation6], %s278
        %s280 = sand.u32 %s169, 1
        %s281 = smul.addr %s280, 64
        %s282 = scalar_lea.vmem [#allocation5], %s281
        %p283 = pneg %p208
        %p284 = pneg %p205
        %p285 = scmp.lt.s32.totalorder %s25, 1
        %s286 = scalar_select %p285, %s25, 1
        %s287 = smul.addr %s286, 32
        %s288 = smul.addr %s287, 4
        %s289 = scalar_lea.vmem %s7, %s288
        %p290 = scmp.lt.s32.totalorder %s25, 1
        %s291 = scalar_select %p290, %s25, 1
        %s292 = smul.addr %s291, 32
        %s293 = smul.addr %s292, 8
        %s294 = scalar_lea.vmem %s0, %s293
        %p295 = scmp.lt.s32.totalorder %s25, 1
        %s296 = scalar_select %p295, %s25, 1
        %s297 = smul.addr %s296, 32
        %s298 = smul.addr %s297, 4
        %s299 = scalar_lea.vmem %s7, %s298
        %v301 = vld [vmem:[%s294] sm:$0xff]
        %v302 = vld [vmem:[%s294 + $0x8] sm:$0xff]
        %v303 = vld [vmem:[%s294 + $0x10] sm:$0xff]
        %v304 = vld [vmem:[%s294 + $0x18] sm:$0xff]
        %v305 = vld [vmem:[%s294 + $0x20] sm:$0xff]
        %v306 = vld [vmem:[%s294 + $0x28] sm:$0xff]
        %v307 = vld [vmem:[%s294 + $0x30] sm:$0xff]
        %v308 = vld [vmem:[%s294 + $0x38] sm:$0xff]
        %v309 = vld [vmem:[%s294 + $0x40] sm:$0xff]
        %v310 = vld [vmem:[%s294 + $0x48] sm:$0xff]
        %v311 = vld [vmem:[%s294 + $0x50] sm:$0xff]
        %v312 = vld [vmem:[%s294 + $0x58] sm:$0xff]
        %v313 = vld [vmem:[%s294 + $0x60] sm:$0xff]
        %v314 = vld [vmem:[%s294 + $0x68] sm:$0xff]
        %v315 = vld [vmem:[%s294 + $0x70] sm:$0xff]
        %v316 = vld [vmem:[%s294 + $0x78] sm:$0xff]
        %v317 = vld [vmem:[%s294 + $0x80] sm:$0xff]
        %v318 = vld [vmem:[%s294 + $0x88] sm:$0xff]
        %v319 = vld [vmem:[%s294 + $0x90] sm:$0xff]
        %v320 = vld [vmem:[%s294 + $0x98] sm:$0xff]
        %v321 = vld [vmem:[%s294 + $0xa0] sm:$0xff]
        %v322 = vld [vmem:[%s294 + $0xa8] sm:$0xff]
        %v323 = vld [vmem:[%s294 + $0xb0] sm:$0xff]
        %v324 = vld [vmem:[%s294 + $0xb8] sm:$0xff]
        %v325 = vld [vmem:[%s294 + $0xc0] sm:$0xff]
        %v326 = vld [vmem:[%s294 + $0xc8] sm:$0xff]
        %v327 = vld [vmem:[%s294 + $0xd0] sm:$0xff]
        %v328 = vld [vmem:[%s294 + $0xd8] sm:$0xff]
        %v329 = vld [vmem:[%s294 + $0xe0] sm:$0xff]
        %v330 = vld [vmem:[%s294 + $0xe8] sm:$0xff]
        %v331 = vld [vmem:[%s294 + $0xf0] sm:$0xff]
        %v332 = vld [vmem:[%s294 + $0xf8] sm:$0xff]
        %v333 = vpack.c.bf16 %v302, %v301
        %v334 = vpack.c.bf16 %v304, %v303
        %v335 = vpack.c.bf16 %v306, %v305
        %v336 = vpack.c.bf16 %v308, %v307
        %v337 = vpack.c.bf16 %v310, %v309
        %v338 = vpack.c.bf16 %v312, %v311
        %v339 = vpack.c.bf16 %v314, %v313
        %v340 = vpack.c.bf16 %v316, %v315
        %v341 = vpack.c.bf16 %v318, %v317
        %v342 = vpack.c.bf16 %v320, %v319
        %v343 = vpack.c.bf16 %v322, %v321
        %v344 = vpack.c.bf16 %v324, %v323
        %v345 = vpack.c.bf16 %v326, %v325
        %v346 = vpack.c.bf16 %v328, %v327
        %v347 = vpack.c.bf16 %v330, %v329
        %v348 = vpack.c.bf16 %v332, %v331
        %v349 = vld [vmem:[%s1] sm:$0x3]
        %vm350 = vcmask 23552
        %v352 = vsel %vm350, %v333, 0
        %v355 = vsel %vm350, %v334, 0
        %v358 = vsel %vm350, %v335, 0
        %v361 = vsel %vm350, %v336, 0
        %v364 = vsel %vm350, %v337, 0
        %v367 = vsel %vm350, %v338, 0
        %v370 = vsel %vm350, %v339, 0
        %v373 = vsel %vm350, %v340, 0
        %v376 = vsel %vm350, %v341, 0
        %v379 = vsel %vm350, %v342, 0
        %v382 = vsel %vm350, %v343, 0
        %v385 = vsel %vm350, %v344, 0
        %v388 = vsel %vm350, %v345, 0
        %v391 = vsel %vm350, %v346, 0
        %v394 = vsel %vm350, %v347, 0
        %v397 = vsel %vm350, %v348, 0
        %vm399 = vcmask 1040384
        %vm400 = vcmask 1041408
        %v401 = vsel %vm399, 4294967295, 65535
        %v402 = vsel %vm400, %v401, 0
        %v404 = vand.u32 %v349, %v402
        %406 = vmatpush.bf16.msra.mxu0 0
        %407 = vmatpush.bf16.msra.mxu0 0
        %408 = vmatpush.bf16.msra.mxu0 0
        %409 = vmatpush.bf16.msra.mxu0 0
        %410 = vmatpush.bf16.msra.mxu0 0
        %411 = vmatpush.bf16.msra.mxu0 0
        %412 = vmatpush.bf16.msra.mxu0 0
        %413 = vmatpush.bf16.msra.mxu0 %v404
        %414 = vmatmul.bf16.gmra.mxu0 %v352
        %v415 = vpop.f32.mrf.mxu0
        %v416 = vadd.f32 0.0, %v415
        %v417 = vpop.f32.mrf.mxu0
        %v418 = vadd.f32 0.0, %v417
        %419 = vmatmul.bf16.gmra.mxu0 %v355
        %v420 = vpop.f32.mrf.mxu0
        %v421 = vadd.f32 0.0, %v420
        %v422 = vpop.f32.mrf.mxu0
        %v423 = vadd.f32 0.0, %v422
        %424 = vmatmul.bf16.gmra.mxu0 %v358
        %v425 = vpop.f32.mrf.mxu0
        %v426 = vadd.f32 0.0, %v425
        %v427 = vpop.f32.mrf.mxu0
        %v428 = vadd.f32 0.0, %v427
        %429 = vmatmul.bf16.gmra.mxu0 %v361
        %v430 = vpop.f32.mrf.mxu0
        %v431 = vadd.f32 0.0, %v430
        %v432 = vpop.f32.mrf.mxu0
        %v433 = vadd.f32 0.0, %v432
        %434 = vmatmul.bf16.gmra.mxu0 %v364
        %v435 = vpop.f32.mrf.mxu0
        %v436 = vadd.f32 0.0, %v435
        %v437 = vpop.f32.mrf.mxu0
        %v438 = vadd.f32 0.0, %v437
        %439 = vmatmul.bf16.gmra.mxu0 %v367
        %v440 = vpop.f32.mrf.mxu0
        %v441 = vadd.f32 0.0, %v440
        %v442 = vpop.f32.mrf.mxu0
        %v443 = vadd.f32 0.0, %v442
        %444 = vmatmul.bf16.gmra.mxu0 %v370
        %v445 = vpop.f32.mrf.mxu0
        %v446 = vadd.f32 0.0, %v445
        %v447 = vpop.f32.mrf.mxu0
        %v448 = vadd.f32 0.0, %v447
        %449 = vmatmul.bf16.gmra.mxu0 %v373
        %v450 = vpop.f32.mrf.mxu0
        %v451 = vadd.f32 0.0, %v450
        %v452 = vpop.f32.mrf.mxu0
        %v453 = vadd.f32 0.0, %v452
        %454 = vmatmul.bf16.gmra.mxu0 %v376
        %v455 = vpop.f32.mrf.mxu0
        %v456 = vadd.f32 0.0, %v455
        %v457 = vpop.f32.mrf.mxu0
        %v458 = vadd.f32 0.0, %v457
        %459 = vmatmul.bf16.gmra.mxu0 %v379
        %v460 = vpop.f32.mrf.mxu0
        %v461 = vadd.f32 0.0, %v460
        %v462 = vpop.f32.mrf.mxu0
        %v463 = vadd.f32 0.0, %v462
        %464 = vmatmul.bf16.gmra.mxu0 %v382
        %v465 = vpop.f32.mrf.mxu0
        %v466 = vadd.f32 0.0, %v465
        %v467 = vpop.f32.mrf.mxu0
        %v468 = vadd.f32 0.0, %v467
        %469 = vmatmul.bf16.gmra.mxu0 %v385
        %v470 = vpop.f32.mrf.mxu0
        %v471 = vadd.f32 0.0, %v470
        %v472 = vpop.f32.mrf.mxu0
        %v473 = vadd.f32 0.0, %v472
        %474 = vmatmul.bf16.gmra.mxu0 %v388
        %v475 = vpop.f32.mrf.mxu0
        %v476 = vadd.f32 0.0, %v475
        %v477 = vpop.f32.mrf.mxu0
        %v478 = vadd.f32 0.0, %v477
        %479 = vmatmul.bf16.gmra.mxu0 %v391
        %v480 = vpop.f32.mrf.mxu0
        %v481 = vadd.f32 0.0, %v480
        %v482 = vpop.f32.mrf.mxu0
        %v483 = vadd.f32 0.0, %v482
        %484 = vmatmul.bf16.gmra.mxu0 %v394
        %v485 = vpop.f32.mrf.mxu0
        %v486 = vadd.f32 0.0, %v485
        %v487 = vpop.f32.mrf.mxu0
        %v488 = vadd.f32 0.0, %v487
        %489 = vmatmul.bf16.gmra.mxu0 %v397
        %v490 = vpop.f32.mrf.mxu0
        %v491 = vadd.f32 0.0, %v490
        %v492 = vpop.f32.mrf.mxu0
        %v493 = vadd.f32 0.0, %v492
        %494 = vdwg.mxu0
        %v495 = vld [vmem:[%s2] sm:$0x3]
        %v496 = vperm.slane %v495, 0
        %v497 = vmul.f32 %v496, %v416
        %v498 = vmul.f32 %v496, %v418
        %v499 = vmul.f32 %v496, %v421
        %v500 = vmul.f32 %v496, %v423
        %v501 = vmul.f32 %v496, %v426
        %v502 = vmul.f32 %v496, %v428
        %v503 = vmul.f32 %v496, %v431
        %v504 = vmul.f32 %v496, %v433
        %v505 = vmul.f32 %v496, %v436
        %v506 = vmul.f32 %v496, %v438
        %v507 = vmul.f32 %v496, %v441
        %v508 = vmul.f32 %v496, %v443
        %v509 = vmul.f32 %v496, %v446
        %v510 = vmul.f32 %v496, %v448
        %v511 = vmul.f32 %v496, %v451
        %v512 = vmul.f32 %v496, %v453
        %v513 = vmul.f32 %v496, %v456
        %v514 = vmul.f32 %v496, %v458
        %v515 = vmul.f32 %v496, %v461
        %v516 = vmul.f32 %v496, %v463
        %v517 = vmul.f32 %v496, %v466
        %v518 = vmul.f32 %v496, %v468
        %v519 = vmul.f32 %v496, %v471
        %v520 = vmul.f32 %v496, %v473
        %v521 = vmul.f32 %v496, %v476
        %v522 = vmul.f32 %v496, %v478
        %v523 = vmul.f32 %v496, %v481
        %v524 = vmul.f32 %v496, %v483
        %v525 = vmul.f32 %v496, %v486
        %v526 = vmul.f32 %v496, %v488
        %v527 = vmul.f32 %v496, %v491
        %v528 = vmul.f32 %v496, %v493
        %v529 = vperm.slane %v495, 1
        %v530 = vadd.f32 %v497, %v529
        %v531 = vadd.f32 %v498, %v529
        %v532 = vadd.f32 %v499, %v529
        %v533 = vadd.f32 %v500, %v529
        %v534 = vadd.f32 %v501, %v529
        %v535 = vadd.f32 %v502, %v529
        %v536 = vadd.f32 %v503, %v529
        %v537 = vadd.f32 %v504, %v529
        %v538 = vadd.f32 %v505, %v529
        %v539 = vadd.f32 %v506, %v529
        %v540 = vadd.f32 %v507, %v529
        %v541 = vadd.f32 %v508, %v529
        %v542 = vadd.f32 %v509, %v529
        %v543 = vadd.f32 %v510, %v529
        %v544 = vadd.f32 %v511, %v529
        %v545 = vadd.f32 %v512, %v529
        %v546 = vadd.f32 %v513, %v529
        %v547 = vadd.f32 %v514, %v529
        %v548 = vadd.f32 %v515, %v529
        %v549 = vadd.f32 %v516, %v529
        %v550 = vadd.f32 %v517, %v529
        %v551 = vadd.f32 %v518, %v529
        %v552 = vadd.f32 %v519, %v529
        %v553 = vadd.f32 %v520, %v529
        %v554 = vadd.f32 %v521, %v529
        %v555 = vadd.f32 %v522, %v529
        %v556 = vadd.f32 %v523, %v529
        %v557 = vadd.f32 %v524, %v529
        %v558 = vadd.f32 %v525, %v529
        %v559 = vadd.f32 %v526, %v529
        %v560 = vadd.f32 %v527, %v529
        %v561 = vadd.f32 %v528, %v529
        %vm562 = vcmask 257024
        %563 = vst.msk [vmem:[#allocation2] sm:$0xf] %vm562, 0
        %564 = vst.msk [vmem:[#allocation2 + $0x4] sm:$0xf] %vm562, 0
        %565 = vst.msk [vmem:[#allocation2 + $0x8] sm:$0xf] %vm562, 0
        %vm566 = vcmask 253952
        %vm567 = vsmask.f32 256
        %vm568 = vmand %vm566, %vm567
        %v569 = vld [vmem:[#allocation2 + $0xc] sm:$0x1]
        %v570 = vsel %vm568, 0, %v569
        %571 = vst [vmem:[#allocation2 + $0xc] sm:$0x1] %v570
        %s572 = scalar_lea.vmem [#allocation2], 272
        %573 = vst.msk [vmem:[%s572] sm:$0xf] %vm562, 0
        %574 = vst.msk [vmem:[%s572 + $0x4] sm:$0xf] %vm562, 0
        %575 = vst.msk [vmem:[%s572 + $0x8] sm:$0xf] %vm562, 0
        %v576 = vld [vmem:[%s572 + $0xc] sm:$0x1]
        %v577 = vsel %vm568, 0, %v576
        %578 = vst [vmem:[%s572 + $0xc] sm:$0x1] %v577
        %vm579 = vcmask 257027
        %vm580 = vsmask.f32 7950
        %vm581 = vmand %vm579, %vm580
        %v582 = vld [vmem:[#allocation2] sm:$0x8]
        %v583 = vsel %vm581, 0, %v582
        %584 = vst [vmem:[#allocation2] sm:$0x8] %v583
        %v585 = vld [vmem:[#allocation2 + $0x10] sm:$0x8]
        %v586 = vsel %vm581, 0, %v585
        %587 = vst [vmem:[#allocation2 + $0x10] sm:$0x8] %v586
        %v588 = vld [vmem:[#allocation2 + $0x20] sm:$0x8]
        %v589 = vsel %vm581, 0, %v588
        %590 = vst [vmem:[#allocation2 + $0x20] sm:$0x8] %v589
        %v591 = vld [vmem:[#allocation2 + $0x30] sm:$0x8]
        %v592 = vsel %vm581, 0, %v591
        %593 = vst [vmem:[#allocation2 + $0x30] sm:$0x8] %v592
        %v594 = vld [vmem:[#allocation2 + $0x40] sm:$0x8]
        %v595 = vsel %vm581, 0, %v594
        %596 = vst [vmem:[#allocation2 + $0x40] sm:$0x8] %v595
        %v597 = vld [vmem:[#allocation2 + $0x50] sm:$0x8]
        %v598 = vsel %vm581, 0, %v597
        %599 = vst [vmem:[#allocation2 + $0x50] sm:$0x8] %v598
        %v600 = vld [vmem:[#allocation2 + $0x60] sm:$0x8]
        %v601 = vsel %vm581, 0, %v600
        %602 = vst [vmem:[#allocation2 + $0x60] sm:$0x8] %v601
        %v603 = vld [vmem:[#allocation2 + $0x70] sm:$0x8]
        %v604 = vsel %vm581, 0, %v603
        %605 = vst [vmem:[#allocation2 + $0x70] sm:$0x8] %v604
        %v606 = vld [vmem:[#allocation2 + $0x80] sm:$0x8]
        %v607 = vsel %vm581, 0, %v606
        %608 = vst [vmem:[#allocation2 + $0x80] sm:$0x8] %v607
        %v609 = vld [vmem:[#allocation2 + $0x90] sm:$0x8]
        %v610 = vsel %vm581, 0, %v609
        %611 = vst [vmem:[#allocation2 + $0x90] sm:$0x8] %v610
        %v612 = vld [vmem:[#allocation2 + $0xa0] sm:$0x8]
        %v613 = vsel %vm581, 0, %v612
        %614 = vst [vmem:[#allocation2 + $0xa0] sm:$0x8] %v613
        %v615 = vld [vmem:[#allocation2 + $0xb0] sm:$0x8]
        %v616 = vsel %vm581, 0, %v615
        %617 = vst [vmem:[#allocation2 + $0xb0] sm:$0x8] %v616
        %v618 = vld [vmem:[#allocation2 + $0xc0] sm:$0x8]
        %v619 = vsel %vm581, 0, %v618
        %620 = vst [vmem:[#allocation2 + $0xc0] sm:$0x8] %v619
        %v621 = vld [vmem:[#allocation2 + $0xd0] sm:$0x8]
        %v622 = vsel %vm581, 0, %v621
        %623 = vst [vmem:[#allocation2 + $0xd0] sm:$0x8] %v622
        %v624 = vld [vmem:[#allocation2 + $0xe0] sm:$0x8]
        %v625 = vsel %vm581, 0, %v624
        %626 = vst [vmem:[#allocation2 + $0xe0] sm:$0x8] %v625
        %v627 = vld [vmem:[#allocation2 + $0xf0] sm:$0x8]
        %v628 = vsel %vm581, 0, %v627
        %629 = vst [vmem:[#allocation2 + $0xf0] sm:$0x8] %v628
        %v630 = vld [vmem:[#allocation2 + $0x100] sm:$0x8]
        %v631 = vsel %vm581, 0, %v630
        %632 = vst [vmem:[#allocation2 + $0x100] sm:$0x8] %v631
        %v633 = vld [vmem:[#allocation2 + $0x110] sm:$0x8]
        %v634 = vsel %vm581, 0, %v633
        %635 = vst [vmem:[#allocation2 + $0x110] sm:$0x8] %v634
        %v636 = vld [vmem:[#allocation2 + $0xc] sm:$0x1]
        %v637 = vsel %vm568, 0, %v636
        %638 = vst [vmem:[#allocation2 + $0xc] sm:$0x1] %v637
        %v639 = vld [vmem:[#allocation2 + $0x1c] sm:$0x1]
        %v640 = vsel %vm568, 0, %v639
        %641 = vst [vmem:[#allocation2 + $0x1c] sm:$0x1] %v640
        %v642 = vld [vmem:[#allocation2 + $0x2c] sm:$0x1]
        %v643 = vsel %vm568, 0, %v642
        %644 = vst [vmem:[#allocation2 + $0x2c] sm:$0x1] %v643
        %v645 = vld [vmem:[#allocation2 + $0x3c] sm:$0x1]
        %v646 = vsel %vm568, 0, %v645
        %647 = vst [vmem:[#allocation2 + $0x3c] sm:$0x1] %v646
        %v648 = vld [vmem:[#allocation2 + $0x4c] sm:$0x1]
        %v649 = vsel %vm568, 0, %v648
        %650 = vst [vmem:[#allocation2 + $0x4c] sm:$0x1] %v649
        %v651 = vld [vmem:[#allocation2 + $0x5c] sm:$0x1]
        %v652 = vsel %vm568, 0, %v651
        %653 = vst [vmem:[#allocation2 + $0x5c] sm:$0x1] %v652
        %v654 = vld [vmem:[#allocation2 + $0x6c] sm:$0x1]
        %v655 = vsel %vm568, 0, %v654
        %656 = vst [vmem:[#allocation2 + $0x6c] sm:$0x1] %v655
        %v657 = vld [vmem:[#allocation2 + $0x7c] sm:$0x1]
        %v658 = vsel %vm568, 0, %v657
        %659 = vst [vmem:[#allocation2 + $0x7c] sm:$0x1] %v658
        %v660 = vld [vmem:[#allocation2 + $0x8c] sm:$0x1]
        %v661 = vsel %vm568, 0, %v660
        %662 = vst [vmem:[#allocation2 + $0x8c] sm:$0x1] %v661
        %v663 = vld [vmem:[#allocation2 + $0x9c] sm:$0x1]
        %v664 = vsel %vm568, 0, %v663
        %665 = vst [vmem:[#allocation2 + $0x9c] sm:$0x1] %v664
        %v666 = vld [vmem:[#allocation2 + $0xac] sm:$0x1]
        %v667 = vsel %vm568, 0, %v666
        %668 = vst [vmem:[#allocation2 + $0xac] sm:$0x1] %v667
        %v669 = vld [vmem:[#allocation2 + $0xbc] sm:$0x1]
        %v670 = vsel %vm568, 0, %v669
        %671 = vst [vmem:[#allocation2 + $0xbc] sm:$0x1] %v670
        %v672 = vld [vmem:[#allocation2 + $0xcc] sm:$0x1]
        %v673 = vsel %vm568, 0, %v672
        %674 = vst [vmem:[#allocation2 + $0xcc] sm:$0x1] %v673
        %v675 = vld [vmem:[#allocation2 + $0xdc] sm:$0x1]
        %v676 = vsel %vm568, 0, %v675
        %677 = vst [vmem:[#allocation2 + $0xdc] sm:$0x1] %v676
        %v678 = vld [vmem:[#allocation2 + $0xec] sm:$0x1]
        %v679 = vsel %vm568, 0, %v678
        %680 = vst [vmem:[#allocation2 + $0xec] sm:$0x1] %v679
        %v681 = vld [vmem:[#allocation2 + $0xfc] sm:$0x1]
        %v682 = vsel %vm568, 0, %v681
        %683 = vst [vmem:[#allocation2 + $0xfc] sm:$0x1] %v682
        %v684 = vld [vmem:[#allocation2 + $0x10c] sm:$0x1]
        %v685 = vsel %vm568, 0, %v684
        %686 = vst [vmem:[#allocation2 + $0x10c] sm:$0x1] %v685
        %v687 = vld [vmem:[#allocation2 + $0x11c] sm:$0x1]
        %v688 = vsel %vm568, 0, %v687
        %689 = vst [vmem:[#allocation2 + $0x11c] sm:$0x1] %v688
        %vm690 = vcmp.ge.f32.partialorder %v530, 0.0
        %vm691 = vcmp.ge.f32.partialorder %v531, 0.0
        %vm692 = vcmp.ge.f32.partialorder %v532, 0.0
        %vm693 = vcmp.ge.f32.partialorder %v533, 0.0
        %vm694 = vcmp.ge.f32.partialorder %v534, 0.0
        %vm695 = vcmp.ge.f32.partialorder %v535, 0.0
        %vm696 = vcmp.ge.f32.partialorder %v536, 0.0
        %vm697 = vcmp.ge.f32.partialorder %v537, 0.0
        %vm698 = vcmp.ge.f32.partialorder %v538, 0.0
        %vm699 = vcmp.ge.f32.partialorder %v539, 0.0
        %vm700 = vcmp.ge.f32.partialorder %v540, 0.0
        %vm701 = vcmp.ge.f32.partialorder %v541, 0.0
        %vm702 = vcmp.ge.f32.partialorder %v542, 0.0
        %vm703 = vcmp.ge.f32.partialorder %v543, 0.0
        %vm704 = vcmp.ge.f32.partialorder %v544, 0.0
        %vm705 = vcmp.ge.f32.partialorder %v545, 0.0
        %vm706 = vcmp.ge.f32.partialorder %v546, 0.0
        %vm707 = vcmp.ge.f32.partialorder %v547, 0.0
        %vm708 = vcmp.ge.f32.partialorder %v548, 0.0
        %vm709 = vcmp.ge.f32.partialorder %v549, 0.0
        %vm710 = vcmp.ge.f32.partialorder %v550, 0.0
        %vm711 = vcmp.ge.f32.partialorder %v551, 0.0
        %vm712 = vcmp.ge.f32.partialorder %v552, 0.0
        %vm713 = vcmp.ge.f32.partialorder %v553, 0.0
        %vm714 = vcmp.ge.f32.partialorder %v554, 0.0
        %vm715 = vcmp.ge.f32.partialorder %v555, 0.0
        %vm716 = vcmp.ge.f32.partialorder %v556, 0.0
        %vm717 = vcmp.ge.f32.partialorder %v557, 0.0
        %vm718 = vcmp.ge.f32.partialorder %v558, 0.0
        %vm719 = vcmp.ge.f32.partialorder %v559, 0.0
        %vm720 = vcmp.ge.f32.partialorder %v560, 0.0
        %vm721 = vcmp.ge.f32.partialorder %v561, 0.0
        %v722 = vmul.f32 %v530, 0.01
        %v723 = vmul.f32 %v531, 0.01
        %v724 = vmul.f32 %v532, 0.01
        %v725 = vmul.f32 %v533, 0.01
        %v726 = vmul.f32 %v534, 0.01
        %v727 = vmul.f32 %v535, 0.01
        %v728 = vmul.f32 %v536, 0.01
        %v729 = vmul.f32 %v537, 0.01
        %v730 = vmul.f32 %v538, 0.01
        %v731 = vmul.f32 %v539, 0.01
        %v732 = vmul.f32 %v540, 0.01
        %v733 = vmul.f32 %v541, 0.01
        %v734 = vmul.f32 %v542, 0.01
        %v735 = vmul.f32 %v543, 0.01
        %v736 = vmul.f32 %v544, 0.01
        %v737 = vmul.f32 %v545, 0.01
        %v738 = vmul.f32 %v546, 0.01
        %v739 = vmul.f32 %v547, 0.01
        %v740 = vmul.f32 %v548, 0.01
        %v741 = vmul.f32 %v549, 0.01
        %v742 = vmul.f32 %v550, 0.01
        %v743 = vmul.f32 %v551, 0.01
        %v744 = vmul.f32 %v552, 0.01
        %v745 = vmul.f32 %v553, 0.01
        %v746 = vmul.f32 %v554, 0.01
        %v747 = vmul.f32 %v555, 0.01
        %v748 = vmul.f32 %v556, 0.01
        %v749 = vmul.f32 %v557, 0.01
        %v750 = vmul.f32 %v558, 0.01
        %v751 = vmul.f32 %v559, 0.01
        %v752 = vmul.f32 %v560, 0.01
        %v753 = vmul.f32 %v561, 0.01
        %v754 = vsel %vm690, %v530, %v722
        %v755 = vsel %vm691, %v531, %v723
        %v756 = vsel %vm692, %v532, %v724
        %v757 = vsel %vm693, %v533, %v725
        %v758 = vsel %vm694, %v534, %v726
        %v759 = vsel %vm695, %v535, %v727
        %v760 = vsel %vm696, %v536, %v728
        %v761 = vsel %vm697, %v537, %v729
        %v762 = vsel %vm698, %v538, %v730
        %v763 = vsel %vm699, %v539, %v731
        %v764 = vsel %vm700, %v540, %v732
        %v765 = vsel %vm701, %v541, %v733
        %v766 = vsel %vm702, %v542, %v734
        %v767 = vsel %vm703, %v543, %v735
        %v768 = vsel %vm704, %v544, %v736
        %v769 = vsel %vm705, %v545, %v737
        %v770 = vsel %vm706, %v546, %v738
        %v771 = vsel %vm707, %v547, %v739
        %v772 = vsel %vm708, %v548, %v740
        %v773 = vsel %vm709, %v549, %v741
        %v774 = vsel %vm710, %v550, %v742
        %v775 = vsel %vm711, %v551, %v743
        %v776 = vsel %vm712, %v552, %v744
        %v777 = vsel %vm713, %v553, %v745
        %v778 = vsel %vm714, %v554, %v746
        %v779 = vsel %vm715, %v555, %v747
        %v780 = vsel %vm716, %v556, %v748
        %v781 = vsel %vm717, %v557, %v749
        %v782 = vsel %vm718, %v558, %v750
        %v783 = vsel %vm719, %v559, %v751
        %v784 = vsel %vm720, %v560, %v752
        %v785 = vsel %vm721, %v561, %v753
        %v786 = vpack.c.bf16 %v754, %v754
        %v787 = vpack.c.bf16 %v755, %v755
        %v788 = vpack.c.bf16 %v756, %v756
        %v789 = vpack.c.bf16 %v757, %v757
        %v790 = vpack.c.bf16 %v758, %v758
        %v791 = vpack.c.bf16 %v759, %v759
        %v792 = vpack.c.bf16 %v760, %v760
        %v793 = vpack.c.bf16 %v761, %v761
        %v794 = vpack.c.bf16 %v762, %v762
        %v795 = vpack.c.bf16 %v763, %v763
        %v796 = vpack.c.bf16 %v764, %v764
        %v797 = vpack.c.bf16 %v765, %v765
        %v798 = vpack.c.bf16 %v766, %v766
        %v799 = vpack.c.bf16 %v767, %v767
        %v800 = vpack.c.bf16 %v768, %v768
        %v801 = vpack.c.bf16 %v769, %v769
        %v802 = vpack.c.bf16 %v770, %v770
        %v803 = vpack.c.bf16 %v771, %v771
        %v804 = vpack.c.bf16 %v772, %v772
        %v805 = vpack.c.bf16 %v773, %v773
        %v806 = vpack.c.bf16 %v774, %v774
        %v807 = vpack.c.bf16 %v775, %v775
        %v808 = vpack.c.bf16 %v776, %v776
        %v809 = vpack.c.bf16 %v777, %v777
        %v810 = vpack.c.bf16 %v778, %v778
        %v811 = vpack.c.bf16 %v779, %v779
        %v812 = vpack.c.bf16 %v780, %v780
        %v813 = vpack.c.bf16 %v781, %v781
        %v814 = vpack.c.bf16 %v782, %v782
        %v815 = vpack.c.bf16 %v783, %v783
        %v816 = vpack.c.bf16 %v784, %v784
        %v817 = vpack.c.bf16 %v785, %v785
        %s818 = scalar_lea.vmem [#allocation2], 16
        %819 = vst.msk [vmem:[%s818 + $0x4] sm:$0xf] %vm562, %v786
        %820 = vst.msk [vmem:[%s818 + $0x8] sm:$0xf] %vm562, %v787
        %821 = vst.msk [vmem:[%s818 + $0x14] sm:$0xf] %vm562, %v788
        %822 = vst.msk [vmem:[%s818 + $0x18] sm:$0xf] %vm562, %v789
        %823 = vst.msk [vmem:[%s818 + $0x24] sm:$0xf] %vm562, %v790
        %824 = vst.msk [vmem:[%s818 + $0x28] sm:$0xf] %vm562, %v791
        %825 = vst.msk [vmem:[%s818 + $0x34] sm:$0xf] %vm562, %v792
        %826 = vst.msk [vmem:[%s818 + $0x38] sm:$0xf] %vm562, %v793
        %827 = vst.msk [vmem:[%s818 + $0x44] sm:$0xf] %vm562, %v794
        %828 = vst.msk [vmem:[%s818 + $0x48] sm:$0xf] %vm562, %v795
        %829 = vst.msk [vmem:[%s818 + $0x54] sm:$0xf] %vm562, %v796
        %830 = vst.msk [vmem:[%s818 + $0x58] sm:$0xf] %vm562, %v797
        %831 = vst.msk [vmem:[%s818 + $0x64] sm:$0xf] %vm562, %v798
        %832 = vst.msk [vmem:[%s818 + $0x68] sm:$0xf] %vm562, %v799
        %833 = vst.msk [vmem:[%s818 + $0x74] sm:$0xf] %vm562, %v800
        %834 = vst.msk [vmem:[%s818 + $0x78] sm:$0xf] %vm562, %v801
        %835 = vst.msk [vmem:[%s818 + $0x84] sm:$0xf] %vm562, %v802
        %836 = vst.msk [vmem:[%s818 + $0x88] sm:$0xf] %vm562, %v803
        %837 = vst.msk [vmem:[%s818 + $0x94] sm:$0xf] %vm562, %v804
        %838 = vst.msk [vmem:[%s818 + $0x98] sm:$0xf] %vm562, %v805
        %839 = vst.msk [vmem:[%s818 + $0xa4] sm:$0xf] %vm562, %v806
        %840 = vst.msk [vmem:[%s818 + $0xa8] sm:$0xf] %vm562, %v807
        %841 = vst.msk [vmem:[%s818 + $0xb4] sm:$0xf] %vm562, %v808
        %842 = vst.msk [vmem:[%s818 + $0xb8] sm:$0xf] %vm562, %v809
        %843 = vst.msk [vmem:[%s818 + $0xc4] sm:$0xf] %vm562, %v810
        %844 = vst.msk [vmem:[%s818 + $0xc8] sm:$0xf] %vm562, %v811
        %845 = vst.msk [vmem:[%s818 + $0xd4] sm:$0xf] %vm562, %v812
        %846 = vst.msk [vmem:[%s818 + $0xd8] sm:$0xf] %vm562, %v813
        %847 = vst.msk [vmem:[%s818 + $0xe4] sm:$0xf] %vm562, %v814
        %848 = vst.msk [vmem:[%s818 + $0xe8] sm:$0xf] %vm562, %v815
        %849 = vst.msk [vmem:[%s818 + $0xf4] sm:$0xf] %vm562, %v816
        %850 = vst.msk [vmem:[%s818 + $0xf8] sm:$0xf] %vm562, %v817
        %v851 = vld [vmem:[#allocation2] sm:$0x8]
        %v852 = vld [vmem:[#allocation2 + $0x4] sm:$0xf]
        %v853 = vld [vmem:[#allocation2 + $0x8] sm:$0xf]
        %v854 = vld [vmem:[#allocation2 + $0x10] sm:$0x8]
        %v855 = vld [vmem:[#allocation2 + $0x14] sm:$0xf]
        %v856 = vld [vmem:[#allocation2 + $0x18] sm:$0xf]
        %v857 = vld [vmem:[#allocation2 + $0x20] sm:$0x8]
        %v858 = vld [vmem:[#allocation2 + $0x24] sm:$0xf]
        %v859 = vld [vmem:[#allocation2 + $0x28] sm:$0xf]
        %v860 = vld [vmem:[#allocation2 + $0x30] sm:$0x8]
        %v861 = vld [vmem:[#allocation2 + $0x34] sm:$0xf]
        %v862 = vld [vmem:[#allocation2 + $0x38] sm:$0xf]
        %v863 = vld [vmem:[#allocation2 + $0x40] sm:$0x8]
        %v864 = vld [vmem:[#allocation2 + $0x44] sm:$0xf]
        %v865 = vld [vmem:[#allocation2 + $0x48] sm:$0xf]
        %v866 = vld [vmem:[#allocation2 + $0x50] sm:$0x8]
        %v867 = vld [vmem:[#allocation2 + $0x54] sm:$0xf]
        %v868 = vld [vmem:[#allocation2 + $0x58] sm:$0xf]
        %v869 = vld [vmem:[#allocation2 + $0x60] sm:$0x8]
        %v870 = vld [vmem:[#allocation2 + $0x64] sm:$0xf]
        %v871 = vld [vmem:[#allocation2 + $0x68] sm:$0xf]
        %v872 = vld [vmem:[#allocation2 + $0x70] sm:$0x8]
        %v873 = vld [vmem:[#allocation2 + $0x74] sm:$0xf]
        %v874 = vld [vmem:[#allocation2 + $0x78] sm:$0xf]
        %v875 = vld [vmem:[#allocation2 + $0x80] sm:$0x8]
        %v876 = vld [vmem:[#allocation2 + $0x84] sm:$0xf]
        %v877 = vld [vmem:[#allocation2 + $0x88] sm:$0xf]
        %v878 = vld [vmem:[#allocation2 + $0x90] sm:$0x8]
        %v879 = vld [vmem:[#allocation2 + $0x94] sm:$0xf]
        %v880 = vld [vmem:[#allocation2 + $0x98] sm:$0xf]
        %v881 = vld [vmem:[#allocation2 + $0xa0] sm:$0x8]
        %v882 = vld [vmem:[#allocation2 + $0xa4] sm:$0xf]
        %v883 = vld [vmem:[#allocation2 + $0xa8] sm:$0xf]
        %v884 = vld [vmem:[#allocation2 + $0xb0] sm:$0x8]
        %v885 = vld [vmem:[#allocation2 + $0xb4] sm:$0xf]
        %v886 = vld [vmem:[#allocation2 + $0xb8] sm:$0xf]
        %v887 = vld [vmem:[#allocation2 + $0xc0] sm:$0x8]
        %v888 = vld [vmem:[#allocation2 + $0xc4] sm:$0xf]
        %v889 = vld [vmem:[#allocation2 + $0xc8] sm:$0xf]
        %v890 = vld [vmem:[#allocation2 + $0xd0] sm:$0x8]
        %v891 = vld [vmem:[#allocation2 + $0xd4] sm:$0xf]
        %v892 = vld [vmem:[#allocation2 + $0xd8] sm:$0xf]
        %v893 = vld [vmem:[#allocation2 + $0xe0] sm:$0x8]
        %v894 = vld [vmem:[#allocation2 + $0xe4] sm:$0xf]
        %v895 = vld [vmem:[#allocation2 + $0xe8] sm:$0xf]
        %v896 = vld [vmem:[#allocation2 + $0xf0] sm:$0x8]
        %v897 = vld [vmem:[#allocation2 + $0xf4] sm:$0xf]
        %v898 = vld [vmem:[#allocation2 + $0xf8] sm:$0xf]
        %vm899 = vsmask.f32 4368
        %vm900 = vmor %vm567, %vm899
        %v902 = vshrl.u32 %v851, 16
        %v904 = vrot.slane %v902, 7
        %v905 = vrot.slane %v904, 4
        %v907 = vshrl.u32 %v852, 16
        %v909 = vrot.slane %v907, 7
        %v910 = vshll.u32 %v852, 16
        %v912 = vor.u32 %v909, %v910
        %v913 = vsel %vm900, %v905, %v912
        %v914 = vrot.slane %v909, 4
        %v916 = vshrl.u32 %v853, 16
        %v918 = vrot.slane %v916, 7
        %v919 = vshll.u32 %v853, 16
        %v921 = vor.u32 %v918, %v919
        %v922 = vsel %vm900, %v914, %v921
        %v924 = vshrl.u32 %v854, 16
        %v926 = vrot.slane %v924, 7
        %v927 = vrot.slane %v926, 4
        %v929 = vshrl.u32 %v855, 16
        %v931 = vrot.slane %v929, 7
        %v932 = vshll.u32 %v855, 16
        %v934 = vor.u32 %v931, %v932
        %v935 = vsel %vm900, %v927, %v934
        %v936 = vrot.slane %v931, 4
        %v938 = vshrl.u32 %v856, 16
        %v940 = vrot.slane %v938, 7
        %v941 = vshll.u32 %v856, 16
        %v943 = vor.u32 %v940, %v941
        %v944 = vsel %vm900, %v936, %v943
        %v946 = vshrl.u32 %v857, 16
        %v948 = vrot.slane %v946, 7
        %v949 = vrot.slane %v948, 4
        %v951 = vshrl.u32 %v858, 16
        %v953 = vrot.slane %v951, 7
        %v954 = vshll.u32 %v858, 16
        %v956 = vor.u32 %v953, %v954
        %v957 = vsel %vm900, %v949, %v956
        %v958 = vrot.slane %v953, 4
        %v960 = vshrl.u32 %v859, 16
        %v962 = vrot.slane %v960, 7
        %v963 = vshll.u32 %v859, 16
        %v965 = vor.u32 %v962, %v963
        %v966 = vsel %vm900, %v958, %v965
        %v968 = vshrl.u32 %v860, 16
        %v970 = vrot.slane %v968, 7
        %v971 = vrot.slane %v970, 4
        %v973 = vshrl.u32 %v861, 16
        %v975 = vrot.slane %v973, 7
        %v976 = vshll.u32 %v861, 16
        %v978 = vor.u32 %v975, %v976
        %v979 = vsel %vm900, %v971, %v978
        %v980 = vrot.slane %v975, 4
        %v982 = vshrl.u32 %v862, 16
        %v984 = vrot.slane %v982, 7
        %v985 = vshll.u32 %v862, 16
        %v987 = vor.u32 %v984, %v985
        %v988 = vsel %vm900, %v980, %v987
        %v990 = vshrl.u32 %v863, 16
        %v992 = vrot.slane %v990, 7
        %v993 = vrot.slane %v992, 4
        %v995 = vshrl.u32 %v864, 16
        %v997 = vrot.slane %v995, 7
        %v998 = vshll.u32 %v864, 16
        %v1000 = vor.u32 %v997, %v998
        %v1001 = vsel %vm900, %v993, %v1000
        %v1002 = vrot.slane %v997, 4
        %v1004 = vshrl.u32 %v865, 16
        %v1006 = vrot.slane %v1004, 7
        %v1007 = vshll.u32 %v865, 16
        %v1009 = vor.u32 %v1006, %v1007
        %v1010 = vsel %vm900, %v1002, %v1009
        %v1012 = vshrl.u32 %v866, 16
        %v1014 = vrot.slane %v1012, 7
        %v1015 = vrot.slane %v1014, 4
        %v1017 = vshrl.u32 %v867, 16
        %v1019 = vrot.slane %v1017, 7
        %v1020 = vshll.u32 %v867, 16
        %v1022 = vor.u32 %v1019, %v1020
        %v1023 = vsel %vm900, %v1015, %v1022
        %v1024 = vrot.slane %v1019, 4
        %v1026 = vshrl.u32 %v868, 16
        %v1028 = vrot.slane %v1026, 7
        %v1029 = vshll.u32 %v868, 16
        %v1031 = vor.u32 %v1028, %v1029
        %v1032 = vsel %vm900, %v1024, %v1031
        %v1034 = vshrl.u32 %v869, 16
        %v1036 = vrot.slane %v1034, 7
        %v1037 = vrot.slane %v1036, 4
        %v1039 = vshrl.u32 %v870, 16
        %v1041 = vrot.slane %v1039, 7
        %v1042 = vshll.u32 %v870, 16
        %v1044 = vor.u32 %v1041, %v1042
        %v1045 = vsel %vm900, %v1037, %v1044
        %v1046 = vrot.slane %v1041, 4
        %v1048 = vshrl.u32 %v871, 16
        %v1050 = vrot.slane %v1048, 7
        %v1051 = vshll.u32 %v871, 16
        %v1053 = vor.u32 %v1050, %v1051
        %v1054 = vsel %vm900, %v1046, %v1053
        %v1056 = vshrl.u32 %v872, 16
        %v1058 = vrot.slane %v1056, 7
        %v1059 = vrot.slane %v1058, 4
        %v1061 = vshrl.u32 %v873, 16
        %v1063 = vrot.slane %v1061, 7
        %v1064 = vshll.u32 %v873, 16
        %v1066 = vor.u32 %v1063, %v1064
        %v1067 = vsel %vm900, %v1059, %v1066
        %v1068 = vrot.slane %v1063, 4
        %v1070 = vshrl.u32 %v874, 16
        %v1072 = vrot.slane %v1070, 7
        %v1073 = vshll.u32 %v874, 16
        %v1075 = vor.u32 %v1072, %v1073
        %v1076 = vsel %vm900, %v1068, %v1075
        %v1078 = vshrl.u32 %v875, 16
        %v1080 = vrot.slane %v1078, 7
        %v1081 = vrot.slane %v1080, 4
        %v1083 = vshrl.u32 %v876, 16
        %v1085 = vrot.slane %v1083, 7
        %v1086 = vshll.u32 %v876, 16
        %v1088 = vor.u32 %v1085, %v1086
        %v1089 = vsel %vm900, %v1081, %v1088
        %v1090 = vrot.slane %v1085, 4
        %v1092 = vshrl.u32 %v877, 16
        %v1094 = vrot.slane %v1092, 7
        %v1095 = vshll.u32 %v877, 16
        %v1097 = vor.u32 %v1094, %v1095
        %v1098 = vsel %vm900, %v1090, %v1097
        %v1100 = vshrl.u32 %v878, 16
        %v1102 = vrot.slane %v1100, 7
        %v1103 = vrot.slane %v1102, 4
        %v1105 = vshrl.u32 %v879, 16
        %v1107 = vrot.slane %v1105, 7
        %v1108 = vshll.u32 %v879, 16
        %v1110 = vor.u32 %v1107, %v1108
        %v1111 = vsel %vm900, %v1103, %v1110
        %v1112 = vrot.slane %v1107, 4
        %v1114 = vshrl.u32 %v880, 16
        %v1116 = vrot.slane %v1114, 7
        %v1117 = vshll.u32 %v880, 16
        %v1119 = vor.u32 %v1116, %v1117
        %v1120 = vsel %vm900, %v1112, %v1119
        %v1122 = vshrl.u32 %v881, 16
        %v1124 = vrot.slane %v1122, 7
        %v1125 = vrot.slane %v1124, 4
        %v1127 = vshrl.u32 %v882, 16
        %v1129 = vrot.slane %v1127, 7
        %v1130 = vshll.u32 %v882, 16
        %v1132 = vor.u32 %v1129, %v1130
        %v1133 = vsel %vm900, %v1125, %v1132
        %v1134 = vrot.slane %v1129, 4
        %v1136 = vshrl.u32 %v883, 16
        %v1138 = vrot.slane %v1136, 7
        %v1139 = vshll.u32 %v883, 16
        %v1141 = vor.u32 %v1138, %v1139
        %v1142 = vsel %vm900, %v1134, %v1141
        %v1144 = vshrl.u32 %v884, 16
        %v1146 = vrot.slane %v1144, 7
        %v1147 = vrot.slane %v1146, 4
        %v1149 = vshrl.u32 %v885, 16
        %v1151 = vrot.slane %v1149, 7
        %v1152 = vshll.u32 %v885, 16
        %v1154 = vor.u32 %v1151, %v1152
        %v1155 = vsel %vm900, %v1147, %v1154
        %v1156 = vrot.slane %v1151, 4
        %v1158 = vshrl.u32 %v886, 16
        %v1160 = vrot.slane %v1158, 7
        %v1161 = vshll.u32 %v886, 16
        %v1163 = vor.u32 %v1160, %v1161
        %v1164 = vsel %vm900, %v1156, %v1163
        %v1166 = vshrl.u32 %v887, 16
        %v1168 = vrot.slane %v1166, 7
        %v1169 = vrot.slane %v1168, 4
        %v1171 = vshrl.u32 %v888, 16
        %v1173 = vrot.slane %v1171, 7
        %v1174 = vshll.u32 %v888, 16
        %v1176 = vor.u32 %v1173, %v1174
        %v1177 = vsel %vm900, %v1169, %v1176
        %v1178 = vrot.slane %v1173, 4
        %v1180 = vshrl.u32 %v889, 16
        %v1182 = vrot.slane %v1180, 7
        %v1183 = vshll.u32 %v889, 16
        %v1185 = vor.u32 %v1182, %v1183
        %v1186 = vsel %vm900, %v1178, %v1185
        %v1188 = vshrl.u32 %v890, 16
        %v1190 = vrot.slane %v1188, 7
        %v1191 = vrot.slane %v1190, 4
        %v1193 = vshrl.u32 %v891, 16
        %v1195 = vrot.slane %v1193, 7
        %v1196 = vshll.u32 %v891, 16
        %v1198 = vor.u32 %v1195, %v1196
        %v1199 = vsel %vm900, %v1191, %v1198
        %v1200 = vrot.slane %v1195, 4
        %v1202 = vshrl.u32 %v892, 16
        %v1204 = vrot.slane %v1202, 7
        %v1205 = vshll.u32 %v892, 16
        %v1207 = vor.u32 %v1204, %v1205
        %v1208 = vsel %vm900, %v1200, %v1207
        %v1210 = vshrl.u32 %v893, 16
        %v1212 = vrot.slane %v1210, 7
        %v1213 = vrot.slane %v1212, 4
        %v1215 = vshrl.u32 %v894, 16
        %v1217 = vrot.slane %v1215, 7
        %v1218 = vshll.u32 %v894, 16
        %v1220 = vor.u32 %v1217, %v1218
        %v1221 = vsel %vm900, %v1213, %v1220
        %v1222 = vrot.slane %v1217, 4
        %v1224 = vshrl.u32 %v895, 16
        %v1226 = vrot.slane %v1224, 7
        %v1227 = vshll.u32 %v895, 16
        %v1229 = vor.u32 %v1226, %v1227
        %v1230 = vsel %vm900, %v1222, %v1229
        %v1232 = vshrl.u32 %v896, 16
        %v1234 = vrot.slane %v1232, 7
        %v1235 = vrot.slane %v1234, 4
        %v1237 = vshrl.u32 %v897, 16
        %v1239 = vrot.slane %v1237, 7
        %v1240 = vshll.u32 %v897, 16
        %v1242 = vor.u32 %v1239, %v1240
        %v1243 = vsel %vm900, %v1235, %v1242
        %v1244 = vrot.slane %v1239, 4
        %v1246 = vshrl.u32 %v898, 16
        %v1248 = vrot.slane %v1246, 7
        %v1249 = vshll.u32 %v898, 16
        %v1251 = vor.u32 %v1248, %v1249
        %v1252 = vsel %vm900, %v1244, %v1251
        %v1253 = vld [vmem:[%s3] sm:$0xf]
        %v1254 = vld [vmem:[%s3 + $0x4] sm:$0xf]
        %v1255 = vld [vmem:[%s3 + $0x8] sm:$0xf]
        %v1256 = vld [vmem:[%s3 + $0xc] sm:$0xf]
        %s1257 = scalar_lea.vmem %s3, 16
        %v1258 = vld [vmem:[%s1257] sm:$0xf]
        %v1259 = vld [vmem:[%s1257 + $0x4] sm:$0xf]
        %v1260 = vld [vmem:[%s1257 + $0x8] sm:$0xf]
        %v1261 = vld [vmem:[%s1257 + $0xc] sm:$0xf]
        %v1294 = vunpack.c.l.b16 %v852
        %v1295 = vunpack.c.l.b16 %v853
        %v1296 = vunpack.c.l.b16 %v855
        %v1297 = vunpack.c.l.b16 %v856
        %v1298 = vunpack.c.l.b16 %v858
        %v1299 = vunpack.c.l.b16 %v859
        %v1300 = vunpack.c.l.b16 %v861
        %v1301 = vunpack.c.l.b16 %v862
        %v1302 = vunpack.c.l.b16 %v864
        %v1303 = vunpack.c.l.b16 %v865
        %v1304 = vunpack.c.l.b16 %v867
        %v1305 = vunpack.c.l.b16 %v868
        %v1306 = vunpack.c.l.b16 %v870
        %v1307 = vunpack.c.l.b16 %v871
        %v1308 = vunpack.c.l.b16 %v873
        %v1309 = vunpack.c.l.b16 %v874
        %v1310 = vunpack.c.l.b16 %v876
        %v1311 = vunpack.c.l.b16 %v877
        %v1312 = vunpack.c.l.b16 %v879
        %v1313 = vunpack.c.l.b16 %v880
        %v1314 = vunpack.c.l.b16 %v882
        %v1315 = vunpack.c.l.b16 %v883
        %v1316 = vunpack.c.l.b16 %v885
        %v1317 = vunpack.c.l.b16 %v886
        %v1318 = vunpack.c.l.b16 %v888
        %v1319 = vunpack.c.l.b16 %v889
        %v1320 = vunpack.c.l.b16 %v891
        %v1321 = vunpack.c.l.b16 %v892
        %v1322 = vunpack.c.l.b16 %v894
        %v1323 = vunpack.c.l.b16 %v895
        %v1324 = vunpack.c.l.b16 %v897
        %v1325 = vunpack.c.l.b16 %v898
        %v1326 = vpack.c.b16 %v1295, %v1294
        %v1327 = vpack.c.b16 %v1297, %v1296
        %v1328 = vpack.c.b16 %v1299, %v1298
        %v1329 = vpack.c.b16 %v1301, %v1300
        %v1330 = vpack.c.b16 %v1303, %v1302
        %v1331 = vpack.c.b16 %v1305, %v1304
        %v1332 = vpack.c.b16 %v1307, %v1306
        %v1333 = vpack.c.b16 %v1309, %v1308
        %v1334 = vpack.c.b16 %v1311, %v1310
        %v1335 = vpack.c.b16 %v1313, %v1312
        %v1336 = vpack.c.b16 %v1315, %v1314
        %v1337 = vpack.c.b16 %v1317, %v1316
        %v1338 = vpack.c.b16 %v1319, %v1318
        %v1339 = vpack.c.b16 %v1321, %v1320
        %v1340 = vpack.c.b16 %v1323, %v1322
        %v1341 = vpack.c.b16 %v1325, %v1324
        %v1346 = vunpack.c.l.b16 %v1258
        %v1347 = vunpack.c.l.b16 %v1259
        %v1348 = vunpack.c.l.b16 %v1260
        %v1349 = vunpack.c.l.b16 %v1261
        %v1350 = vpack.c.b16 %v1347, %v1346
        %v1351 = vpack.c.b16 %v1349, %v1348
        %vm1354 = vcmask 261120
        %v1356 = vsel %vm1354, %v1326, 0
        %v1359 = vsel %vm1354, %v1327, 0
        %v1362 = vsel %vm1354, %v1328, 0
        %v1365 = vsel %vm1354, %v1329, 0
        %v1368 = vsel %vm1354, %v1330, 0
        %v1371 = vsel %vm1354, %v1331, 0
        %v1374 = vsel %vm1354, %v1332, 0
        %v1377 = vsel %vm1354, %v1333, 0
        %v1380 = vsel %vm1354, %v1334, 0
        %v1383 = vsel %vm1354, %v1335, 0
        %v1386 = vsel %vm1354, %v1336, 0
        %v1389 = vsel %vm1354, %v1337, 0
        %v1392 = vsel %vm1354, %v1338, 0
        %v1395 = vsel %vm1354, %v1339, 0
        %v1398 = vsel %vm1354, %v1340, 0
        %v1401 = vsel %vm1354, %v1341, 0
        %1403 = vmatpush.bf16.msra.mxu0 0
        %1404 = vmatpush.bf16.msra.mxu0 0
        %1405 = vmatpush.bf16.msra.mxu0 0
        %1406 = vmatpush.bf16.msra.mxu0 0
        %1407 = vmatpush.bf16.msra.mxu0 0
        %1408 = vmatpush.bf16.msra.mxu0 0
        %1409 = vmatpush.bf16.msra.mxu0 %v1351
        %1410 = vmatpush.bf16.msra.mxu0 %v1350
        %1411 = vmatmul.bf16.gmra.mxu0 %v1356
        %v1412 = vpop.f32.mrf.mxu0
        %v1413 = vadd.f32 0.0, %v1412
        %v1414 = vpop.f32.mrf.mxu0
        %v1415 = vadd.f32 0.0, %v1414
        %1416 = vmatmul.bf16.gmra.mxu0 %v1359
        %v1417 = vpop.f32.mrf.mxu0
        %v1418 = vadd.f32 0.0, %v1417
        %v1419 = vpop.f32.mrf.mxu0
        %v1420 = vadd.f32 0.0, %v1419
        %1421 = vmatmul.bf16.gmra.mxu0 %v1362
        %v1422 = vpop.f32.mrf.mxu0
        %v1423 = vadd.f32 0.0, %v1422
        %v1424 = vpop.f32.mrf.mxu0
        %v1425 = vadd.f32 0.0, %v1424
        %1426 = vmatmul.bf16.gmra.mxu0 %v1365
        %v1427 = vpop.f32.mrf.mxu0
        %v1428 = vadd.f32 0.0, %v1427
        %v1429 = vpop.f32.mrf.mxu0
        %v1430 = vadd.f32 0.0, %v1429
        %1431 = vmatmul.bf16.gmra.mxu0 %v1368
        %v1432 = vpop.f32.mrf.mxu0
        %v1433 = vadd.f32 0.0, %v1432
        %v1434 = vpop.f32.mrf.mxu0
        %v1435 = vadd.f32 0.0, %v1434
        %1436 = vmatmul.bf16.gmra.mxu0 %v1371
        %v1437 = vpop.f32.mrf.mxu0
        %v1438 = vadd.f32 0.0, %v1437
        %v1439 = vpop.f32.mrf.mxu0
        %v1440 = vadd.f32 0.0, %v1439
        %1441 = vmatmul.bf16.gmra.mxu0 %v1374
        %v1442 = vpop.f32.mrf.mxu0
        %v1443 = vadd.f32 0.0, %v1442
        %v1444 = vpop.f32.mrf.mxu0
        %v1445 = vadd.f32 0.0, %v1444
        %1446 = vmatmul.bf16.gmra.mxu0 %v1377
        %v1447 = vpop.f32.mrf.mxu0
        %v1448 = vadd.f32 0.0, %v1447
        %v1449 = vpop.f32.mrf.mxu0
        %v1450 = vadd.f32 0.0, %v1449
        %1451 = vmatmul.bf16.gmra.mxu0 %v1380
        %v1452 = vpop.f32.mrf.mxu0
        %v1453 = vadd.f32 0.0, %v1452
        %v1454 = vpop.f32.mrf.mxu0
        %v1455 = vadd.f32 0.0, %v1454
        %1456 = vmatmul.bf16.gmra.mxu0 %v1383
        %v1457 = vpop.f32.mrf.mxu0
        %v1458 = vadd.f32 0.0, %v1457
        %v1459 = vpop.f32.mrf.mxu0
        %v1460 = vadd.f32 0.0, %v1459
        %1461 = vmatmul.bf16.gmra.mxu0 %v1386
        %v1462 = vpop.f32.mrf.mxu0
        %v1463 = vadd.f32 0.0, %v1462
        %v1464 = vpop.f32.mrf.mxu0
        %v1465 = vadd.f32 0.0, %v1464
        %1466 = vmatmul.bf16.gmra.mxu0 %v1389
        %v1467 = vpop.f32.mrf.mxu0
        %v1468 = vadd.f32 0.0, %v1467
        %v1469 = vpop.f32.mrf.mxu0
        %v1470 = vadd.f32 0.0, %v1469
        %1471 = vmatmul.bf16.gmra.mxu0 %v1392
        %v1472 = vpop.f32.mrf.mxu0
        %v1473 = vadd.f32 0.0, %v1472
        %v1474 = vpop.f32.mrf.mxu0
        %v1475 = vadd.f32 0.0, %v1474
        %1476 = vmatmul.bf16.gmra.mxu0 %v1395
        %v1477 = vpop.f32.mrf.mxu0
        %v1478 = vadd.f32 0.0, %v1477
        %v1479 = vpop.f32.mrf.mxu0
        %v1480 = vadd.f32 0.0, %v1479
        %1481 = vmatmul.bf16.gmra.mxu0 %v1398
        %v1482 = vpop.f32.mrf.mxu0
        %v1483 = vadd.f32 0.0, %v1482
        %v1484 = vpop.f32.mrf.mxu0
        %v1485 = vadd.f32 0.0, %v1484
        %1486 = vmatmul.bf16.gmra.mxu0 %v1401
        %v1487 = vpop.f32.mrf.mxu0
        %v1488 = vadd.f32 0.0, %v1487
        %v1489 = vpop.f32.mrf.mxu0
        %v1490 = vadd.f32 0.0, %v1489
        %1491 = vdwg.mxu0
        %v1492 = vunpack.c.l.b16 %v913
        %v1493 = vunpack.c.l.b16 %v922
        %v1494 = vunpack.c.l.b16 %v935
        %v1495 = vunpack.c.l.b16 %v944
        %v1496 = vunpack.c.l.b16 %v957
        %v1497 = vunpack.c.l.b16 %v966
        %v1498 = vunpack.c.l.b16 %v979
        %v1499 = vunpack.c.l.b16 %v988
        %v1500 = vunpack.c.l.b16 %v1001
        %v1501 = vunpack.c.l.b16 %v1010
        %v1502 = vunpack.c.l.b16 %v1023
        %v1503 = vunpack.c.l.b16 %v1032
        %v1504 = vunpack.c.l.b16 %v1045
        %v1505 = vunpack.c.l.b16 %v1054
        %v1506 = vunpack.c.l.b16 %v1067
        %v1507 = vunpack.c.l.b16 %v1076
        %v1508 = vunpack.c.l.b16 %v1089
        %v1509 = vunpack.c.l.b16 %v1098
        %v1510 = vunpack.c.l.b16 %v1111
        %v1511 = vunpack.c.l.b16 %v1120
        %v1512 = vunpack.c.l.b16 %v1133
        %v1513 = vunpack.c.l.b16 %v1142
        %v1514 = vunpack.c.l.b16 %v1155
        %v1515 = vunpack.c.l.b16 %v1164
        %v1516 = vunpack.c.l.b16 %v1177
        %v1517 = vunpack.c.l.b16 %v1186
        %v1518 = vunpack.c.l.b16 %v1199
        %v1519 = vunpack.c.l.b16 %v1208
        %v1520 = vunpack.c.l.b16 %v1221
        %v1521 = vunpack.c.l.b16 %v1230
        %v1522 = vunpack.c.l.b16 %v1243
        %v1523 = vunpack.c.l.b16 %v1252
        %v1524 = vpack.c.b16 %v1493, %v1492
        %v1525 = vpack.c.b16 %v1495, %v1494
        %v1526 = vpack.c.b16 %v1497, %v1496
        %v1527 = vpack.c.b16 %v1499, %v1498
        %v1528 = vpack.c.b16 %v1501, %v1500
        %v1529 = vpack.c.b16 %v1503, %v1502
        %v1530 = vpack.c.b16 %v1505, %v1504
        %v1531 = vpack.c.b16 %v1507, %v1506
        %v1532 = vpack.c.b16 %v1509, %v1508
        %v1533 = vpack.c.b16 %v1511, %v1510
        %v1534 = vpack.c.b16 %v1513, %v1512
        %v1535 = vpack.c.b16 %v1515, %v1514
        %v1536 = vpack.c.b16 %v1517, %v1516
        %v1537 = vpack.c.b16 %v1519, %v1518
        %v1538 = vpack.c.b16 %v1521, %v1520
        %v1539 = vpack.c.b16 %v1523, %v1522
        %v1544 = vunpack.c.l.b16 %v1253
        %v1545 = vunpack.c.l.b16 %v1254
        %v1546 = vunpack.c.l.b16 %v1255
        %v1547 = vunpack.c.l.b16 %v1256
        %v1548 = vpack.c.b16 %v1545, %v1544
        %v1549 = vpack.c.b16 %v1547, %v1546
        %v1553 = vsel %vm1354, %v1524, 0
        %v1556 = vsel %vm1354, %v1525, 0
        %v1559 = vsel %vm1354, %v1526, 0
        %v1562 = vsel %vm1354, %v1527, 0
        %v1565 = vsel %vm1354, %v1528, 0
        %v1568 = vsel %vm1354, %v1529, 0
        %v1571 = vsel %vm1354, %v1530, 0
        %v1574 = vsel %vm1354, %v1531, 0
        %v1577 = vsel %vm1354, %v1532, 0
        %v1580 = vsel %vm1354, %v1533, 0
        %v1583 = vsel %vm1354, %v1534, 0
        %v1586 = vsel %vm1354, %v1535, 0
        %v1589 = vsel %vm1354, %v1536, 0
        %v1592 = vsel %vm1354, %v1537, 0
        %v1595 = vsel %vm1354, %v1538, 0
        %v1598 = vsel %vm1354, %v1539, 0
        %1600 = vmatpush.bf16.msra.mxu0 0
        %1601 = vmatpush.bf16.msra.mxu0 0
        %1602 = vmatpush.bf16.msra.mxu0 0
        %1603 = vmatpush.bf16.msra.mxu0 0
        %1604 = vmatpush.bf16.msra.mxu0 0
        %1605 = vmatpush.bf16.msra.mxu0 0
        %1606 = vmatpush.bf16.msra.mxu0 %v1549
        %1607 = vmatpush.bf16.msra.mxu0 %v1548
        %1608 = vmatmul.bf16.gmra.mxu0 %v1553
        %v1609 = vpop.f32.mrf.mxu0
        %v1610 = vadd.f32 %v1413, %v1609
        %v1611 = vpop.f32.mrf.mxu0
        %v1612 = vadd.f32 %v1415, %v1611
        %1613 = vmatmul.bf16.gmra.mxu0 %v1556
        %v1614 = vpop.f32.mrf.mxu0
        %v1615 = vadd.f32 %v1418, %v1614
        %v1616 = vpop.f32.mrf.mxu0
        %v1617 = vadd.f32 %v1420, %v1616
        %1618 = vmatmul.bf16.gmra.mxu0 %v1559
        %v1619 = vpop.f32.mrf.mxu0
        %v1620 = vadd.f32 %v1423, %v1619
        %v1621 = vpop.f32.mrf.mxu0
        %v1622 = vadd.f32 %v1425, %v1621
        %1623 = vmatmul.bf16.gmra.mxu0 %v1562
        %v1624 = vpop.f32.mrf.mxu0
        %v1625 = vadd.f32 %v1428, %v1624
        %v1626 = vpop.f32.mrf.mxu0
        %v1627 = vadd.f32 %v1430, %v1626
        %1628 = vmatmul.bf16.gmra.mxu0 %v1565
        %v1629 = vpop.f32.mrf.mxu0
        %v1630 = vadd.f32 %v1433, %v1629
        %v1631 = vpop.f32.mrf.mxu0
        %v1632 = vadd.f32 %v1435, %v1631
        %1633 = vmatmul.bf16.gmra.mxu0 %v1568
        %v1634 = vpop.f32.mrf.mxu0
        %v1635 = vadd.f32 %v1438, %v1634
        %v1636 = vpop.f32.mrf.mxu0
        %v1637 = vadd.f32 %v1440, %v1636
        %1638 = vmatmul.bf16.gmra.mxu0 %v1571
        %v1639 = vpop.f32.mrf.mxu0
        %v1640 = vadd.f32 %v1443, %v1639
        %v1641 = vpop.f32.mrf.mxu0
        %v1642 = vadd.f32 %v1445, %v1641
        %1643 = vmatmul.bf16.gmra.mxu0 %v1574
        %v1644 = vpop.f32.mrf.mxu0
        %v1645 = vadd.f32 %v1448, %v1644
        %v1646 = vpop.f32.mrf.mxu0
        %v1647 = vadd.f32 %v1450, %v1646
        %1648 = vmatmul.bf16.gmra.mxu0 %v1577
        %v1649 = vpop.f32.mrf.mxu0
        %v1650 = vadd.f32 %v1453, %v1649
        %v1651 = vpop.f32.mrf.mxu0
        %v1652 = vadd.f32 %v1455, %v1651
        %1653 = vmatmul.bf16.gmra.mxu0 %v1580
        %v1654 = vpop.f32.mrf.mxu0
        %v1655 = vadd.f32 %v1458, %v1654
        %v1656 = vpop.f32.mrf.mxu0
        %v1657 = vadd.f32 %v1460, %v1656
        %1658 = vmatmul.bf16.gmra.mxu0 %v1583
        %v1659 = vpop.f32.mrf.mxu0
        %v1660 = vadd.f32 %v1463, %v1659
        %v1661 = vpop.f32.mrf.mxu0
        %v1662 = vadd.f32 %v1465, %v1661
        %1663 = vmatmul.bf16.gmra.mxu0 %v1586
        %v1664 = vpop.f32.mrf.mxu0
        %v1665 = vadd.f32 %v1468, %v1664
        %v1666 = vpop.f32.mrf.mxu0
        %v1667 = vadd.f32 %v1470, %v1666
        %1668 = vmatmul.bf16.gmra.mxu0 %v1589
        %v1669 = vpop.f32.mrf.mxu0
        %v1670 = vadd.f32 %v1473, %v1669
        %v1671 = vpop.f32.mrf.mxu0
        %v1672 = vadd.f32 %v1475, %v1671
        %1673 = vmatmul.bf16.gmra.mxu0 %v1592
        %v1674 = vpop.f32.mrf.mxu0
        %v1675 = vadd.f32 %v1478, %v1674
        %v1676 = vpop.f32.mrf.mxu0
        %v1677 = vadd.f32 %v1480, %v1676
        %1678 = vmatmul.bf16.gmra.mxu0 %v1595
        %v1679 = vpop.f32.mrf.mxu0
        %v1680 = vadd.f32 %v1483, %v1679
        %v1681 = vpop.f32.mrf.mxu0
        %v1682 = vadd.f32 %v1485, %v1681
        %1683 = vmatmul.bf16.gmra.mxu0 %v1598
        %v1684 = vpop.f32.mrf.mxu0
        %v1685 = vadd.f32 %v1488, %v1684
        %v1686 = vpop.f32.mrf.mxu0
        %v1687 = vadd.f32 %v1490, %v1686
        %1688 = vdwg.mxu0
        %v1689 = vld [vmem:[#allocation2 + $0x4] sm:$0xf]
        %v1690 = vld [vmem:[#allocation2 + $0x8] sm:$0xf]
        %v1691 = vld [vmem:[#allocation2 + $0xc] sm:$0x1]
        %v1692 = vld [vmem:[#allocation2 + $0x14] sm:$0xf]
        %v1693 = vld [vmem:[#allocation2 + $0x18] sm:$0xf]
        %v1694 = vld [vmem:[#allocation2 + $0x1c] sm:$0x1]
        %v1695 = vld [vmem:[#allocation2 + $0x24] sm:$0xf]
        %v1696 = vld [vmem:[#allocation2 + $0x28] sm:$0xf]
        %v1697 = vld [vmem:[#allocation2 + $0x2c] sm:$0x1]
        %v1698 = vld [vmem:[#allocation2 + $0x34] sm:$0xf]
        %v1699 = vld [vmem:[#allocation2 + $0x38] sm:$0xf]
        %v1700 = vld [vmem:[#allocation2 + $0x3c] sm:$0x1]
        %v1701 = vld [vmem:[#allocation2 + $0x44] sm:$0xf]
        %v1702 = vld [vmem:[#allocation2 + $0x48] sm:$0xf]
        %v1703 = vld [vmem:[#allocation2 + $0x4c] sm:$0x1]
        %v1704 = vld [vmem:[#allocation2 + $0x54] sm:$0xf]
        %v1705 = vld [vmem:[#allocation2 + $0x58] sm:$0xf]
        %v1706 = vld [vmem:[#allocation2 + $0x5c] sm:$0x1]
        %v1707 = vld [vmem:[#allocation2 + $0x64] sm:$0xf]
        %v1708 = vld [vmem:[#allocation2 + $0x68] sm:$0xf]
        %v1709 = vld [vmem:[#allocation2 + $0x6c] sm:$0x1]
        %v1710 = vld [vmem:[#allocation2 + $0x74] sm:$0xf]
        %v1711 = vld [vmem:[#allocation2 + $0x78] sm:$0xf]
        %v1712 = vld [vmem:[#allocation2 + $0x7c] sm:$0x1]
        %v1713 = vld [vmem:[#allocation2 + $0x84] sm:$0xf]
        %v1714 = vld [vmem:[#allocation2 + $0x88] sm:$0xf]
        %v1715 = vld [vmem:[#allocation2 + $0x8c] sm:$0x1]
        %v1716 = vld [vmem:[#allocation2 + $0x94] sm:$0xf]
        %v1717 = vld [vmem:[#allocation2 + $0x98] sm:$0xf]
        %v1718 = vld [vmem:[#allocation2 + $0x9c] sm:$0x1]
        %v1719 = vld [vmem:[#allocation2 + $0xa4] sm:$0xf]
        %v1720 = vld [vmem:[#allocation2 + $0xa8] sm:$0xf]
        %v1721 = vld [vmem:[#allocation2 + $0xac] sm:$0x1]
        %v1722 = vld [vmem:[#allocation2 + $0xb4] sm:$0xf]
        %v1723 = vld [vmem:[#allocation2 + $0xb8] sm:$0xf]
        %v1724 = vld [vmem:[#allocation2 + $0xbc] sm:$0x1]
        %v1725 = vld [vmem:[#allocation2 + $0xc4] sm:$0xf]
        %v1726 = vld [vmem:[#allocation2 + $0xc8] sm:$0xf]
        %v1727 = vld [vmem:[#allocation2 + $0xcc] sm:$0x1]
        %v1728 = vld [vmem:[#allocation2 + $0xd4] sm:$0xf]
        %v1729 = vld [vmem:[#allocation2 + $0xd8] sm:$0xf]
        %v1730 = vld [vmem:[#allocation2 + $0xdc] sm:$0x1]
        %v1731 = vld [vmem:[#allocation2 + $0xe4] sm:$0xf]
        %v1732 = vld [vmem:[#allocation2 + $0xe8] sm:$0xf]
        %v1733 = vld [vmem:[#allocation2 + $0xec] sm:$0x1]
        %v1734 = vld [vmem:[#allocation2 + $0xf4] sm:$0xf]
        %v1735 = vld [vmem:[#allocation2 + $0xf8] sm:$0xf]
        %v1736 = vld [vmem:[#allocation2 + $0xfc] sm:$0x1]
        %vm1737 = vsmask.f32 3328
        %vm1738 = vsmask.f32 7440
        %vm1739 = vmor %vm1737, %vm1738
        %v1741 = vshrl.u32 %v1689, 16
        %v1743 = vrot.slane %v1741, 4
        %v1744 = vshll.u32 %v1689, 16
        %v1746 = vrot.slane %v1744, 5
        %v1747 = vor.u32 %v1743, %v1746
        %v1748 = vrot.slane %v1747, 4
        %v1750 = vshll.u32 %v1690, 16
        %v1752 = vrot.slane %v1750, 5
        %v1753 = vsel %vm1739, %v1748, %v1752
        %v1754 = vshrl.u32 %v1690, 16
        %v1756 = vrot.slane %v1754, 4
        %v1757 = vor.u32 %v1756, %v1752
        %v1758 = vrot.slane %v1757, 4
        %v1760 = vshll.u32 %v1691, 16
        %v1762 = vrot.slane %v1760, 5
        %v1763 = vsel %vm1739, %v1758, %v1762
        %v1765 = vshrl.u32 %v1692, 16
        %v1767 = vrot.slane %v1765, 4
        %v1768 = vshll.u32 %v1692, 16
        %v1770 = vrot.slane %v1768, 5
        %v1771 = vor.u32 %v1767, %v1770
        %v1772 = vrot.slane %v1771, 4
        %v1774 = vshll.u32 %v1693, 16
        %v1776 = vrot.slane %v1774, 5
        %v1777 = vsel %vm1739, %v1772, %v1776
        %v1778 = vshrl.u32 %v1693, 16
        %v1780 = vrot.slane %v1778, 4
        %v1781 = vor.u32 %v1780, %v1776
        %v1782 = vrot.slane %v1781, 4
        %v1784 = vshll.u32 %v1694, 16
        %v1786 = vrot.slane %v1784, 5
        %v1787 = vsel %vm1739, %v1782, %v1786
        %v1789 = vshrl.u32 %v1695, 16
        %v1791 = vrot.slane %v1789, 4
        %v1792 = vshll.u32 %v1695, 16
        %v1794 = vrot.slane %v1792, 5
        %v1795 = vor.u32 %v1791, %v1794
        %v1796 = vrot.slane %v1795, 4
        %v1798 = vshll.u32 %v1696, 16
        %v1800 = vrot.slane %v1798, 5
        %v1801 = vsel %vm1739, %v1796, %v1800
        %v1802 = vshrl.u32 %v1696, 16
        %v1804 = vrot.slane %v1802, 4
        %v1805 = vor.u32 %v1804, %v1800
        %v1806 = vrot.slane %v1805, 4
        %v1808 = vshll.u32 %v1697, 16
        %v1810 = vrot.slane %v1808, 5
        %v1811 = vsel %vm1739, %v1806, %v1810
        %v1813 = vshrl.u32 %v1698, 16
        %v1815 = vrot.slane %v1813, 4
        %v1816 = vshll.u32 %v1698, 16
        %v1818 = vrot.slane %v1816, 5
        %v1819 = vor.u32 %v1815, %v1818
        %v1820 = vrot.slane %v1819, 4
        %v1822 = vshll.u32 %v1699, 16
        %v1824 = vrot.slane %v1822, 5
        %v1825 = vsel %vm1739, %v1820, %v1824
        %v1826 = vshrl.u32 %v1699, 16
        %v1828 = vrot.slane %v1826, 4
        %v1829 = vor.u32 %v1828, %v1824
        %v1830 = vrot.slane %v1829, 4
        %v1832 = vshll.u32 %v1700, 16
        %v1834 = vrot.slane %v1832, 5
        %v1835 = vsel %vm1739, %v1830, %v1834
        %v1837 = vshrl.u32 %v1701, 16
        %v1839 = vrot.slane %v1837, 4
        %v1840 = vshll.u32 %v1701, 16
        %v1842 = vrot.slane %v1840, 5
        %v1843 = vor.u32 %v1839, %v1842
        %v1844 = vrot.slane %v1843, 4
        %v1846 = vshll.u32 %v1702, 16
        %v1848 = vrot.slane %v1846, 5
        %v1849 = vsel %vm1739, %v1844, %v1848
        %v1850 = vshrl.u32 %v1702, 16
        %v1852 = vrot.slane %v1850, 4
        %v1853 = vor.u32 %v1852, %v1848
        %v1854 = vrot.slane %v1853, 4
        %v1856 = vshll.u32 %v1703, 16
        %v1858 = vrot.slane %v1856, 5
        %v1859 = vsel %vm1739, %v1854, %v1858
        %v1861 = vshrl.u32 %v1704, 16
        %v1863 = vrot.slane %v1861, 4
        %v1864 = vshll.u32 %v1704, 16
        %v1866 = vrot.slane %v1864, 5
        %v1867 = vor.u32 %v1863, %v1866
        %v1868 = vrot.slane %v1867, 4
        %v1870 = vshll.u32 %v1705, 16
        %v1872 = vrot.slane %v1870, 5
        %v1873 = vsel %vm1739, %v1868, %v1872
        %v1874 = vshrl.u32 %v1705, 16
        %v1876 = vrot.slane %v1874, 4
        %v1877 = vor.u32 %v1876, %v1872
        %v1878 = vrot.slane %v1877, 4
        %v1880 = vshll.u32 %v1706, 16
        %v1882 = vrot.slane %v1880, 5
        %v1883 = vsel %vm1739, %v1878, %v1882
        %v1885 = vshrl.u32 %v1707, 16
        %v1887 = vrot.slane %v1885, 4
        %v1888 = vshll.u32 %v1707, 16
        %v1890 = vrot.slane %v1888, 5
        %v1891 = vor.u32 %v1887, %v1890
        %v1892 = vrot.slane %v1891, 4
        %v1894 = vshll.u32 %v1708, 16
        %v1896 = vrot.slane %v1894, 5
        %v1897 = vsel %vm1739, %v1892, %v1896
        %v1898 = vshrl.u32 %v1708, 16
        %v1900 = vrot.slane %v1898, 4
        %v1901 = vor.u32 %v1900, %v1896
        %v1902 = vrot.slane %v1901, 4
        %v1904 = vshll.u32 %v1709, 16
        %v1906 = vrot.slane %v1904, 5
        %v1907 = vsel %vm1739, %v1902, %v1906
        %v1909 = vshrl.u32 %v1710, 16
        %v1911 = vrot.slane %v1909, 4
        %v1912 = vshll.u32 %v1710, 16
        %v1914 = vrot.slane %v1912, 5
        %v1915 = vor.u32 %v1911, %v1914
        %v1916 = vrot.slane %v1915, 4
        %v1918 = vshll.u32 %v1711, 16
        %v1920 = vrot.slane %v1918, 5
        %v1921 = vsel %vm1739, %v1916, %v1920
        %v1922 = vshrl.u32 %v1711, 16
        %v1924 = vrot.slane %v1922, 4
        %v1925 = vor.u32 %v1924, %v1920
        %v1926 = vrot.slane %v1925, 4
        %v1928 = vshll.u32 %v1712, 16
        %v1930 = vrot.slane %v1928, 5
        %v1931 = vsel %vm1739, %v1926, %v1930
        %v1933 = vshrl.u32 %v1713, 16
        %v1935 = vrot.slane %v1933, 4
        %v1936 = vshll.u32 %v1713, 16
        %v1938 = vrot.slane %v1936, 5
        %v1939 = vor.u32 %v1935, %v1938
        %v1940 = vrot.slane %v1939, 4
        %v1942 = vshll.u32 %v1714, 16
        %v1944 = vrot.slane %v1942, 5
        %v1945 = vsel %vm1739, %v1940, %v1944
        %v1946 = vshrl.u32 %v1714, 16
        %v1948 = vrot.slane %v1946, 4
        %v1949 = vor.u32 %v1948, %v1944
        %v1950 = vrot.slane %v1949, 4
        %v1952 = vshll.u32 %v1715, 16
        %v1954 = vrot.slane %v1952, 5
        %v1955 = vsel %vm1739, %v1950, %v1954
        %v1957 = vshrl.u32 %v1716, 16
        %v1959 = vrot.slane %v1957, 4
        %v1960 = vshll.u32 %v1716, 16
        %v1962 = vrot.slane %v1960, 5
        %v1963 = vor.u32 %v1959, %v1962
        %v1964 = vrot.slane %v1963, 4
        %v1966 = vshll.u32 %v1717, 16
        %v1968 = vrot.slane %v1966, 5
        %v1969 = vsel %vm1739, %v1964, %v1968
        %v1970 = vshrl.u32 %v1717, 16
        %v1972 = vrot.slane %v1970, 4
        %v1973 = vor.u32 %v1972, %v1968
        %v1974 = vrot.slane %v1973, 4
        %v1976 = vshll.u32 %v1718, 16
        %v1978 = vrot.slane %v1976, 5
        %v1979 = vsel %vm1739, %v1974, %v1978
        %v1981 = vshrl.u32 %v1719, 16
        %v1983 = vrot.slane %v1981, 4
        %v1984 = vshll.u32 %v1719, 16
        %v1986 = vrot.slane %v1984, 5
        %v1987 = vor.u32 %v1983, %v1986
        %v1988 = vrot.slane %v1987, 4
        %v1990 = vshll.u32 %v1720, 16
        %v1992 = vrot.slane %v1990, 5
        %v1993 = vsel %vm1739, %v1988, %v1992
        %v1994 = vshrl.u32 %v1720, 16
        %v1996 = vrot.slane %v1994, 4
        %v1997 = vor.u32 %v1996, %v1992
        %v1998 = vrot.slane %v1997, 4
        %v2000 = vshll.u32 %v1721, 16
        %v2002 = vrot.slane %v2000, 5
        %v2003 = vsel %vm1739, %v1998, %v2002
        %v2005 = vshrl.u32 %v1722, 16
        %v2007 = vrot.slane %v2005, 4
        %v2008 = vshll.u32 %v1722, 16
        %v2010 = vrot.slane %v2008, 5
        %v2011 = vor.u32 %v2007, %v2010
        %v2012 = vrot.slane %v2011, 4
        %v2014 = vshll.u32 %v1723, 16
        %v2016 = vrot.slane %v2014, 5
        %v2017 = vsel %vm1739, %v2012, %v2016
        %v2018 = vshrl.u32 %v1723, 16
        %v2020 = vrot.slane %v2018, 4
        %v2021 = vor.u32 %v2020, %v2016
        %v2022 = vrot.slane %v2021, 4
        %v2024 = vshll.u32 %v1724, 16
        %v2026 = vrot.slane %v2024, 5
        %v2027 = vsel %vm1739, %v2022, %v2026
        %v2029 = vshrl.u32 %v1725, 16
        %v2031 = vrot.slane %v2029, 4
        %v2032 = vshll.u32 %v1725, 16
        %v2034 = vrot.slane %v2032, 5
        %v2035 = vor.u32 %v2031, %v2034
        %v2036 = vrot.slane %v2035, 4
        %v2038 = vshll.u32 %v1726, 16
        %v2040 = vrot.slane %v2038, 5
        %v2041 = vsel %vm1739, %v2036, %v2040
        %v2042 = vshrl.u32 %v1726, 16
        %v2044 = vrot.slane %v2042, 4
        %v2045 = vor.u32 %v2044, %v2040
        %v2046 = vrot.slane %v2045, 4
        %v2048 = vshll.u32 %v1727, 16
        %v2050 = vrot.slane %v2048, 5
        %v2051 = vsel %vm1739, %v2046, %v2050
        %v2053 = vshrl.u32 %v1728, 16
        %v2055 = vrot.slane %v2053, 4
        %v2056 = vshll.u32 %v1728, 16
        %v2058 = vrot.slane %v2056, 5
        %v2059 = vor.u32 %v2055, %v2058
        %v2060 = vrot.slane %v2059, 4
        %v2062 = vshll.u32 %v1729, 16
        %v2064 = vrot.slane %v2062, 5
        %v2065 = vsel %vm1739, %v2060, %v2064
        %v2066 = vshrl.u32 %v1729, 16
        %v2068 = vrot.slane %v2066, 4
        %v2069 = vor.u32 %v2068, %v2064
        %v2070 = vrot.slane %v2069, 4
        %v2072 = vshll.u32 %v1730, 16
        %v2074 = vrot.slane %v2072, 5
        %v2075 = vsel %vm1739, %v2070, %v2074
        %v2077 = vshrl.u32 %v1731, 16
        %v2079 = vrot.slane %v2077, 4
        %v2080 = vshll.u32 %v1731, 16
        %v2082 = vrot.slane %v2080, 5
        %v2083 = vor.u32 %v2079, %v2082
        %v2084 = vrot.slane %v2083, 4
        %v2086 = vshll.u32 %v1732, 16
        %v2088 = vrot.slane %v2086, 5
        %v2089 = vsel %vm1739, %v2084, %v2088
        %v2090 = vshrl.u32 %v1732, 16
        %v2092 = vrot.slane %v2090, 4
        %v2093 = vor.u32 %v2092, %v2088
        %v2094 = vrot.slane %v2093, 4
        %v2096 = vshll.u32 %v1733, 16
        %v2098 = vrot.slane %v2096, 5
        %v2099 = vsel %vm1739, %v2094, %v2098
        %v2101 = vshrl.u32 %v1734, 16
        %v2103 = vrot.slane %v2101, 4
        %v2104 = vshll.u32 %v1734, 16
        %v2106 = vrot.slane %v2104, 5
        %v2107 = vor.u32 %v2103, %v2106
        %v2108 = vrot.slane %v2107, 4
        %v2110 = vshll.u32 %v1735, 16
        %v2112 = vrot.slane %v2110, 5
        %v2113 = vsel %vm1739, %v2108, %v2112
        %v2114 = vshrl.u32 %v1735, 16
        %v2116 = vrot.slane %v2114, 4
        %v2117 = vor.u32 %v2116, %v2112
        %v2118 = vrot.slane %v2117, 4
        %v2120 = vshll.u32 %v1736, 16
        %v2122 = vrot.slane %v2120, 5
        %v2123 = vsel %vm1739, %v2118, %v2122
        %s2124 = scalar_lea.vmem %s3, 32
        %v2125 = vld [vmem:[%s2124] sm:$0xf]
        %v2126 = vld [vmem:[%s2124 + $0x4] sm:$0xf]
        %v2127 = vld [vmem:[%s2124 + $0x8] sm:$0xf]
        %v2128 = vld [vmem:[%s2124 + $0xc] sm:$0xf]
        %v2129 = vunpack.c.l.b16 %v1753
        %v2130 = vunpack.c.l.b16 %v1763
        %v2131 = vunpack.c.l.b16 %v1777
        %v2132 = vunpack.c.l.b16 %v1787
        %v2133 = vunpack.c.l.b16 %v1801
        %v2134 = vunpack.c.l.b16 %v1811
        %v2135 = vunpack.c.l.b16 %v1825
        %v2136 = vunpack.c.l.b16 %v1835
        %v2137 = vunpack.c.l.b16 %v1849
        %v2138 = vunpack.c.l.b16 %v1859
        %v2139 = vunpack.c.l.b16 %v1873
        %v2140 = vunpack.c.l.b16 %v1883
        %v2141 = vunpack.c.l.b16 %v1897
        %v2142 = vunpack.c.l.b16 %v1907
        %v2143 = vunpack.c.l.b16 %v1921
        %v2144 = vunpack.c.l.b16 %v1931
        %v2145 = vunpack.c.l.b16 %v1945
        %v2146 = vunpack.c.l.b16 %v1955
        %v2147 = vunpack.c.l.b16 %v1969
        %v2148 = vunpack.c.l.b16 %v1979
        %v2149 = vunpack.c.l.b16 %v1993
        %v2150 = vunpack.c.l.b16 %v2003
        %v2151 = vunpack.c.l.b16 %v2017
        %v2152 = vunpack.c.l.b16 %v2027
        %v2153 = vunpack.c.l.b16 %v2041
        %v2154 = vunpack.c.l.b16 %v2051
        %v2155 = vunpack.c.l.b16 %v2065
        %v2156 = vunpack.c.l.b16 %v2075
        %v2157 = vunpack.c.l.b16 %v2089
        %v2158 = vunpack.c.l.b16 %v2099
        %v2159 = vunpack.c.l.b16 %v2113
        %v2160 = vunpack.c.l.b16 %v2123
        %v2161 = vpack.c.b16 %v2130, %v2129
        %v2162 = vpack.c.b16 %v2132, %v2131
        %v2163 = vpack.c.b16 %v2134, %v2133
        %v2164 = vpack.c.b16 %v2136, %v2135
        %v2165 = vpack.c.b16 %v2138, %v2137
        %v2166 = vpack.c.b16 %v2140, %v2139
        %v2167 = vpack.c.b16 %v2142, %v2141
        %v2168 = vpack.c.b16 %v2144, %v2143
        %v2169 = vpack.c.b16 %v2146, %v2145
        %v2170 = vpack.c.b16 %v2148, %v2147
        %v2171 = vpack.c.b16 %v2150, %v2149
        %v2172 = vpack.c.b16 %v2152, %v2151
        %v2173 = vpack.c.b16 %v2154, %v2153
        %v2174 = vpack.c.b16 %v2156, %v2155
        %v2175 = vpack.c.b16 %v2158, %v2157
        %v2176 = vpack.c.b16 %v2160, %v2159
        %v2181 = vunpack.c.l.b16 %v2125
        %v2182 = vunpack.c.l.b16 %v2126
        %v2183 = vunpack.c.l.b16 %v2127
        %v2184 = vunpack.c.l.b16 %v2128
        %v2185 = vpack.c.b16 %v2182, %v2181
        %v2186 = vpack.c.b16 %v2184, %v2183
        %v2190 = vsel %vm1354, %v2161, 0
        %v2193 = vsel %vm1354, %v2162, 0
        %v2196 = vsel %vm1354, %v2163, 0
        %v2199 = vsel %vm1354, %v2164, 0
        %v2202 = vsel %vm1354, %v2165, 0
        %v2205 = vsel %vm1354, %v2166, 0
        %v2208 = vsel %vm1354, %v2167, 0
        %v2211 = vsel %vm1354, %v2168, 0
        %v2214 = vsel %vm1354, %v2169, 0
        %v2217 = vsel %vm1354, %v2170, 0
        %v2220 = vsel %vm1354, %v2171, 0
        %v2223 = vsel %vm1354, %v2172, 0
        %v2226 = vsel %vm1354, %v2173, 0
        %v2229 = vsel %vm1354, %v2174, 0
        %v2232 = vsel %vm1354, %v2175, 0
        %v2235 = vsel %vm1354, %v2176, 0
        %2237 = vmatpush.bf16.msra.mxu0 0
        %2238 = vmatpush.bf16.msra.mxu0 0
        %2239 = vmatpush.bf16.msra.mxu0 0
        %2240 = vmatpush.bf16.msra.mxu0 0
        %2241 = vmatpush.bf16.msra.mxu0 0
        %2242 = vmatpush.bf16.msra.mxu0 0
        %2243 = vmatpush.bf16.msra.mxu0 %v2186
        %2244 = vmatpush.bf16.msra.mxu0 %v2185
        %2245 = vmatmul.bf16.gmra.mxu0 %v2190
        %v2246 = vpop.f32.mrf.mxu0
        %v2247 = vadd.f32 0.0, %v2246
        %v2248 = vpop.f32.mrf.mxu0
        %v2249 = vadd.f32 0.0, %v2248
        %2250 = vmatmul.bf16.gmra.mxu0 %v2193
        %v2251 = vpop.f32.mrf.mxu0
        %v2252 = vadd.f32 0.0, %v2251
        %v2253 = vpop.f32.mrf.mxu0
        %v2254 = vadd.f32 0.0, %v2253
        %2255 = vmatmul.bf16.gmra.mxu0 %v2196
        %v2256 = vpop.f32.mrf.mxu0
        %v2257 = vadd.f32 0.0, %v2256
        %v2258 = vpop.f32.mrf.mxu0
        %v2259 = vadd.f32 0.0, %v2258
        %2260 = vmatmul.bf16.gmra.mxu0 %v2199
        %v2261 = vpop.f32.mrf.mxu0
        %v2262 = vadd.f32 0.0, %v2261
        %v2263 = vpop.f32.mrf.mxu0
        %v2264 = vadd.f32 0.0, %v2263
        %2265 = vmatmul.bf16.gmra.mxu0 %v2202
        %v2266 = vpop.f32.mrf.mxu0
        %v2267 = vadd.f32 0.0, %v2266
        %v2268 = vpop.f32.mrf.mxu0
        %v2269 = vadd.f32 0.0, %v2268
        %2270 = vmatmul.bf16.gmra.mxu0 %v2205
        %v2271 = vpop.f32.mrf.mxu0
        %v2272 = vadd.f32 0.0, %v2271
        %v2273 = vpop.f32.mrf.mxu0
        %v2274 = vadd.f32 0.0, %v2273
        %2275 = vmatmul.bf16.gmra.mxu0 %v2208
        %v2276 = vpop.f32.mrf.mxu0
        %v2277 = vadd.f32 0.0, %v2276
        %v2278 = vpop.f32.mrf.mxu0
        %v2279 = vadd.f32 0.0, %v2278
        %2280 = vmatmul.bf16.gmra.mxu0 %v2211
        %v2281 = vpop.f32.mrf.mxu0
        %v2282 = vadd.f32 0.0, %v2281
        %v2283 = vpop.f32.mrf.mxu0
        %v2284 = vadd.f32 0.0, %v2283
        %2285 = vmatmul.bf16.gmra.mxu0 %v2214
        %v2286 = vpop.f32.mrf.mxu0
        %v2287 = vadd.f32 0.0, %v2286
        %v2288 = vpop.f32.mrf.mxu0
        %v2289 = vadd.f32 0.0, %v2288
        %2290 = vmatmul.bf16.gmra.mxu0 %v2217
        %v2291 = vpop.f32.mrf.mxu0
        %v2292 = vadd.f32 0.0, %v2291
        %v2293 = vpop.f32.mrf.mxu0
        %v2294 = vadd.f32 0.0, %v2293
        %2295 = vmatmul.bf16.gmra.mxu0 %v2220
        %v2296 = vpop.f32.mrf.mxu0
        %v2297 = vadd.f32 0.0, %v2296
        %v2298 = vpop.f32.mrf.mxu0
        %v2299 = vadd.f32 0.0, %v2298
        %2300 = vmatmul.bf16.gmra.mxu0 %v2223
        %v2301 = vpop.f32.mrf.mxu0
        %v2302 = vadd.f32 0.0, %v2301
        %v2303 = vpop.f32.mrf.mxu0
        %v2304 = vadd.f32 0.0, %v2303
        %2305 = vmatmul.bf16.gmra.mxu0 %v2226
        %v2306 = vpop.f32.mrf.mxu0
        %v2307 = vadd.f32 0.0, %v2306
        %v2308 = vpop.f32.mrf.mxu0
        %v2309 = vadd.f32 0.0, %v2308
        %2310 = vmatmul.bf16.gmra.mxu0 %v2229
        %v2311 = vpop.f32.mrf.mxu0
        %v2312 = vadd.f32 0.0, %v2311
        %v2313 = vpop.f32.mrf.mxu0
        %v2314 = vadd.f32 0.0, %v2313
        %2315 = vmatmul.bf16.gmra.mxu0 %v2232
        %v2316 = vpop.f32.mrf.mxu0
        %v2317 = vadd.f32 0.0, %v2316
        %v2318 = vpop.f32.mrf.mxu0
        %v2319 = vadd.f32 0.0, %v2318
        %2320 = vmatmul.bf16.gmra.mxu0 %v2235
        %v2321 = vpop.f32.mrf.mxu0
        %v2322 = vadd.f32 0.0, %v2321
        %v2323 = vpop.f32.mrf.mxu0
        %v2324 = vadd.f32 0.0, %v2323
        %2325 = vdwg.mxu0
        %v2326 = vadd.f32 %v1610, %v2247
        %v2327 = vadd.f32 %v1612, %v2249
        %v2328 = vadd.f32 %v1615, %v2252
        %v2329 = vadd.f32 %v1617, %v2254
        %v2330 = vadd.f32 %v1620, %v2257
        %v2331 = vadd.f32 %v1622, %v2259
        %v2332 = vadd.f32 %v1625, %v2262
        %v2333 = vadd.f32 %v1627, %v2264
        %v2334 = vadd.f32 %v1630, %v2267
        %v2335 = vadd.f32 %v1632, %v2269
        %v2336 = vadd.f32 %v1635, %v2272
        %v2337 = vadd.f32 %v1637, %v2274
        %v2338 = vadd.f32 %v1640, %v2277
        %v2339 = vadd.f32 %v1642, %v2279
        %v2340 = vadd.f32 %v1645, %v2282
        %v2341 = vadd.f32 %v1647, %v2284
        %v2342 = vadd.f32 %v1650, %v2287
        %v2343 = vadd.f32 %v1652, %v2289
        %v2344 = vadd.f32 %v1655, %v2292
        %v2345 = vadd.f32 %v1657, %v2294
        %v2346 = vadd.f32 %v1660, %v2297
        %v2347 = vadd.f32 %v1662, %v2299
        %v2348 = vadd.f32 %v1665, %v2302
        %v2349 = vadd.f32 %v1667, %v2304
        %v2350 = vadd.f32 %v1670, %v2307
        %v2351 = vadd.f32 %v1672, %v2309
        %v2352 = vadd.f32 %v1675, %v2312
        %v2353 = vadd.f32 %v1677, %v2314
        %v2354 = vadd.f32 %v1680, %v2317
        %v2355 = vadd.f32 %v1682, %v2319
        %v2356 = vadd.f32 %v1685, %v2322
        %v2357 = vadd.f32 %v1687, %v2324
        %v2358 = vld [vmem:[%s818] sm:$0x8]
        %v2359 = vld [vmem:[%s818 + $0x4] sm:$0xf]
        %v2360 = vld [vmem:[%s818 + $0x8] sm:$0xf]
        %v2361 = vld [vmem:[%s818 + $0x10] sm:$0x8]
        %v2362 = vld [vmem:[%s818 + $0x14] sm:$0xf]
        %v2363 = vld [vmem:[%s818 + $0x18] sm:$0xf]
        %v2364 = vld [vmem:[%s818 + $0x20] sm:$0x8]
        %v2365 = vld [vmem:[%s818 + $0x24] sm:$0xf]
        %v2366 = vld [vmem:[%s818 + $0x28] sm:$0xf]
        %v2367 = vld [vmem:[%s818 + $0x30] sm:$0x8]
        %v2368 = vld [vmem:[%s818 + $0x34] sm:$0xf]
        %v2369 = vld [vmem:[%s818 + $0x38] sm:$0xf]
        %v2370 = vld [vmem:[%s818 + $0x40] sm:$0x8]
        %v2371 = vld [vmem:[%s818 + $0x44] sm:$0xf]
        %v2372 = vld [vmem:[%s818 + $0x48] sm:$0xf]
        %v2373 = vld [vmem:[%s818 + $0x50] sm:$0x8]
        %v2374 = vld [vmem:[%s818 + $0x54] sm:$0xf]
        %v2375 = vld [vmem:[%s818 + $0x58] sm:$0xf]
        %v2376 = vld [vmem:[%s818 + $0x60] sm:$0x8]
        %v2377 = vld [vmem:[%s818 + $0x64] sm:$0xf]
        %v2378 = vld [vmem:[%s818 + $0x68] sm:$0xf]
        %v2379 = vld [vmem:[%s818 + $0x70] sm:$0x8]
        %v2380 = vld [vmem:[%s818 + $0x74] sm:$0xf]
        %v2381 = vld [vmem:[%s818 + $0x78] sm:$0xf]
        %v2382 = vld [vmem:[%s818 + $0x80] sm:$0x8]
        %v2383 = vld [vmem:[%s818 + $0x84] sm:$0xf]
        %v2384 = vld [vmem:[%s818 + $0x88] sm:$0xf]
        %v2385 = vld [vmem:[%s818 + $0x90] sm:$0x8]
        %v2386 = vld [vmem:[%s818 + $0x94] sm:$0xf]
        %v2387 = vld [vmem:[%s818 + $0x98] sm:$0xf]
        %v2388 = vld [vmem:[%s818 + $0xa0] sm:$0x8]
        %v2389 = vld [vmem:[%s818 + $0xa4] sm:$0xf]
        %v2390 = vld [vmem:[%s818 + $0xa8] sm:$0xf]
        %v2391 = vld [vmem:[%s818 + $0xb0] sm:$0x8]
        %v2392 = vld [vmem:[%s818 + $0xb4] sm:$0xf]
        %v2393 = vld [vmem:[%s818 + $0xb8] sm:$0xf]
        %v2394 = vld [vmem:[%s818 + $0xc0] sm:$0x8]
        %v2395 = vld [vmem:[%s818 + $0xc4] sm:$0xf]
        %v2396 = vld [vmem:[%s818 + $0xc8] sm:$0xf]
        %v2397 = vld [vmem:[%s818 + $0xd0] sm:$0x8]
        %v2398 = vld [vmem:[%s818 + $0xd4] sm:$0xf]
        %v2399 = vld [vmem:[%s818 + $0xd8] sm:$0xf]
        %v2400 = vld [vmem:[%s818 + $0xe0] sm:$0x8]
        %v2401 = vld [vmem:[%s818 + $0xe4] sm:$0xf]
        %v2402 = vld [vmem:[%s818 + $0xe8] sm:$0xf]
        %v2403 = vld [vmem:[%s818 + $0xf0] sm:$0x8]
        %v2404 = vld [vmem:[%s818 + $0xf4] sm:$0xf]
        %v2405 = vld [vmem:[%s818 + $0xf8] sm:$0xf]
        %v2407 = vshrl.u32 %v2358, 16
        %v2409 = vrot.slane %v2407, 7
        %v2410 = vrot.slane %v2409, 4
        %v2412 = vshrl.u32 %v2359, 16
        %v2414 = vrot.slane %v2412, 7
        %v2415 = vshll.u32 %v2359, 16
        %v2417 = vor.u32 %v2414, %v2415
        %v2418 = vsel %vm900, %v2410, %v2417
        %v2419 = vrot.slane %v2414, 4
        %v2421 = vshrl.u32 %v2360, 16
        %v2423 = vrot.slane %v2421, 7
        %v2424 = vshll.u32 %v2360, 16
        %v2426 = vor.u32 %v2423, %v2424
        %v2427 = vsel %vm900, %v2419, %v2426
        %v2429 = vshrl.u32 %v2361, 16
        %v2431 = vrot.slane %v2429, 7
        %v2432 = vrot.slane %v2431, 4
        %v2434 = vshrl.u32 %v2362, 16
        %v2436 = vrot.slane %v2434, 7
        %v2437 = vshll.u32 %v2362, 16
        %v2439 = vor.u32 %v2436, %v2437
        %v2440 = vsel %vm900, %v2432, %v2439
        %v2441 = vrot.slane %v2436, 4
        %v2443 = vshrl.u32 %v2363, 16
        %v2445 = vrot.slane %v2443, 7
        %v2446 = vshll.u32 %v2363, 16
        %v2448 = vor.u32 %v2445, %v2446
        %v2449 = vsel %vm900, %v2441, %v2448
        %v2451 = vshrl.u32 %v2364, 16
        %v2453 = vrot.slane %v2451, 7
        %v2454 = vrot.slane %v2453, 4
        %v2456 = vshrl.u32 %v2365, 16
        %v2458 = vrot.slane %v2456, 7
        %v2459 = vshll.u32 %v2365, 16
        %v2461 = vor.u32 %v2458, %v2459
        %v2462 = vsel %vm900, %v2454, %v2461
        %v2463 = vrot.slane %v2458, 4
        %v2465 = vshrl.u32 %v2366, 16
        %v2467 = vrot.slane %v2465, 7
        %v2468 = vshll.u32 %v2366, 16
        %v2470 = vor.u32 %v2467, %v2468
        %v2471 = vsel %vm900, %v2463, %v2470
        %v2473 = vshrl.u32 %v2367, 16
        %v2475 = vrot.slane %v2473, 7
        %v2476 = vrot.slane %v2475, 4
        %v2478 = vshrl.u32 %v2368, 16
        %v2480 = vrot.slane %v2478, 7
        %v2481 = vshll.u32 %v2368, 16
        %v2483 = vor.u32 %v2480, %v2481
        %v2484 = vsel %vm900, %v2476, %v2483
        %v2485 = vrot.slane %v2480, 4
        %v2487 = vshrl.u32 %v2369, 16
        %v2489 = vrot.slane %v2487, 7
        %v2490 = vshll.u32 %v2369, 16
        %v2492 = vor.u32 %v2489, %v2490
        %v2493 = vsel %vm900, %v2485, %v2492
        %v2495 = vshrl.u32 %v2370, 16
        %v2497 = vrot.slane %v2495, 7
        %v2498 = vrot.slane %v2497, 4
        %v2500 = vshrl.u32 %v2371, 16
        %v2502 = vrot.slane %v2500, 7
        %v2503 = vshll.u32 %v2371, 16
        %v2505 = vor.u32 %v2502, %v2503
        %v2506 = vsel %vm900, %v2498, %v2505
        %v2507 = vrot.slane %v2502, 4
        %v2509 = vshrl.u32 %v2372, 16
        %v2511 = vrot.slane %v2509, 7
        %v2512 = vshll.u32 %v2372, 16
        %v2514 = vor.u32 %v2511, %v2512
        %v2515 = vsel %vm900, %v2507, %v2514
        %v2517 = vshrl.u32 %v2373, 16
        %v2519 = vrot.slane %v2517, 7
        %v2520 = vrot.slane %v2519, 4
        %v2522 = vshrl.u32 %v2374, 16
        %v2524 = vrot.slane %v2522, 7
        %v2525 = vshll.u32 %v2374, 16
        %v2527 = vor.u32 %v2524, %v2525
        %v2528 = vsel %vm900, %v2520, %v2527
        %v2529 = vrot.slane %v2524, 4
        %v2531 = vshrl.u32 %v2375, 16
        %v2533 = vrot.slane %v2531, 7
        %v2534 = vshll.u32 %v2375, 16
        %v2536 = vor.u32 %v2533, %v2534
        %v2537 = vsel %vm900, %v2529, %v2536
        %v2539 = vshrl.u32 %v2376, 16
        %v2541 = vrot.slane %v2539, 7
        %v2542 = vrot.slane %v2541, 4
        %v2544 = vshrl.u32 %v2377, 16
        %v2546 = vrot.slane %v2544, 7
        %v2547 = vshll.u32 %v2377, 16
        %v2549 = vor.u32 %v2546, %v2547
        %v2550 = vsel %vm900, %v2542, %v2549
        %v2551 = vrot.slane %v2546, 4
        %v2553 = vshrl.u32 %v2378, 16
        %v2555 = vrot.slane %v2553, 7
        %v2556 = vshll.u32 %v2378, 16
        %v2558 = vor.u32 %v2555, %v2556
        %v2559 = vsel %vm900, %v2551, %v2558
        %v2561 = vshrl.u32 %v2379, 16
        %v2563 = vrot.slane %v2561, 7
        %v2564 = vrot.slane %v2563, 4
        %v2566 = vshrl.u32 %v2380, 16
        %v2568 = vrot.slane %v2566, 7
        %v2569 = vshll.u32 %v2380, 16
        %v2571 = vor.u32 %v2568, %v2569
        %v2572 = vsel %vm900, %v2564, %v2571
        %v2573 = vrot.slane %v2568, 4
        %v2575 = vshrl.u32 %v2381, 16
        %v2577 = vrot.slane %v2575, 7
        %v2578 = vshll.u32 %v2381, 16
        %v2580 = vor.u32 %v2577, %v2578
        %v2581 = vsel %vm900, %v2573, %v2580
        %v2583 = vshrl.u32 %v2382, 16
        %v2585 = vrot.slane %v2583, 7
        %v2586 = vrot.slane %v2585, 4
        %v2588 = vshrl.u32 %v2383, 16
        %v2590 = vrot.slane %v2588, 7
        %v2591 = vshll.u32 %v2383, 16
        %v2593 = vor.u32 %v2590, %v2591
        %v2594 = vsel %vm900, %v2586, %v2593
        %v2595 = vrot.slane %v2590, 4
        %v2597 = vshrl.u32 %v2384, 16
        %v2599 = vrot.slane %v2597, 7
        %v2600 = vshll.u32 %v2384, 16
        %v2602 = vor.u32 %v2599, %v2600
        %v2603 = vsel %vm900, %v2595, %v2602
        %v2605 = vshrl.u32 %v2385, 16
        %v2607 = vrot.slane %v2605, 7
        %v2608 = vrot.slane %v2607, 4
        %v2610 = vshrl.u32 %v2386, 16
        %v2612 = vrot.slane %v2610, 7
        %v2613 = vshll.u32 %v2386, 16
        %v2615 = vor.u32 %v2612, %v2613
        %v2616 = vsel %vm900, %v2608, %v2615
        %v2617 = vrot.slane %v2612, 4
        %v2619 = vshrl.u32 %v2387, 16
        %v2621 = vrot.slane %v2619, 7
        %v2622 = vshll.u32 %v2387, 16
        %v2624 = vor.u32 %v2621, %v2622
        %v2625 = vsel %vm900, %v2617, %v2624
        %v2627 = vshrl.u32 %v2388, 16
        %v2629 = vrot.slane %v2627, 7
        %v2630 = vrot.slane %v2629, 4
        %v2632 = vshrl.u32 %v2389, 16
        %v2634 = vrot.slane %v2632, 7
        %v2635 = vshll.u32 %v2389, 16
        %v2637 = vor.u32 %v2634, %v2635
        %v2638 = vsel %vm900, %v2630, %v2637
        %v2639 = vrot.slane %v2634, 4
        %v2641 = vshrl.u32 %v2390, 16
        %v2643 = vrot.slane %v2641, 7
        %v2644 = vshll.u32 %v2390, 16
        %v2646 = vor.u32 %v2643, %v2644
        %v2647 = vsel %vm900, %v2639, %v2646
        %v2649 = vshrl.u32 %v2391, 16
        %v2651 = vrot.slane %v2649, 7
        %v2652 = vrot.slane %v2651, 4
        %v2654 = vshrl.u32 %v2392, 16
        %v2656 = vrot.slane %v2654, 7
        %v2657 = vshll.u32 %v2392, 16
        %v2659 = vor.u32 %v2656, %v2657
        %v2660 = vsel %vm900, %v2652, %v2659
        %v2661 = vrot.slane %v2656, 4
        %v2663 = vshrl.u32 %v2393, 16
        %v2665 = vrot.slane %v2663, 7
        %v2666 = vshll.u32 %v2393, 16
        %v2668 = vor.u32 %v2665, %v2666
        %v2669 = vsel %vm900, %v2661, %v2668
        %v2671 = vshrl.u32 %v2394, 16
        %v2673 = vrot.slane %v2671, 7
        %v2674 = vrot.slane %v2673, 4
        %v2676 = vshrl.u32 %v2395, 16
        %v2678 = vrot.slane %v2676, 7
        %v2679 = vshll.u32 %v2395, 16
        %v2681 = vor.u32 %v2678, %v2679
        %v2682 = vsel %vm900, %v2674, %v2681
        %v2683 = vrot.slane %v2678, 4
        %v2685 = vshrl.u32 %v2396, 16
        %v2687 = vrot.slane %v2685, 7
        %v2688 = vshll.u32 %v2396, 16
        %v2690 = vor.u32 %v2687, %v2688
        %v2691 = vsel %vm900, %v2683, %v2690
        %v2693 = vshrl.u32 %v2397, 16
        %v2695 = vrot.slane %v2693, 7
        %v2696 = vrot.slane %v2695, 4
        %v2698 = vshrl.u32 %v2398, 16
        %v2700 = vrot.slane %v2698, 7
        %v2701 = vshll.u32 %v2398, 16
        %v2703 = vor.u32 %v2700, %v2701
        %v2704 = vsel %vm900, %v2696, %v2703
        %v2705 = vrot.slane %v2700, 4
        %v2707 = vshrl.u32 %v2399, 16
        %v2709 = vrot.slane %v2707, 7
        %v2710 = vshll.u32 %v2399, 16
        %v2712 = vor.u32 %v2709, %v2710
        %v2713 = vsel %vm900, %v2705, %v2712
        %v2715 = vshrl.u32 %v2400, 16
        %v2717 = vrot.slane %v2715, 7
        %v2718 = vrot.slane %v2717, 4
        %v2720 = vshrl.u32 %v2401, 16
        %v2722 = vrot.slane %v2720, 7
        %v2723 = vshll.u32 %v2401, 16
        %v2725 = vor.u32 %v2722, %v2723
        %v2726 = vsel %vm900, %v2718, %v2725
        %v2727 = vrot.slane %v2722, 4
        %v2729 = vshrl.u32 %v2402, 16
        %v2731 = vrot.slane %v2729, 7
        %v2732 = vshll.u32 %v2402, 16
        %v2734 = vor.u32 %v2731, %v2732
        %v2735 = vsel %vm900, %v2727, %v2734
        %v2737 = vshrl.u32 %v2403, 16
        %v2739 = vrot.slane %v2737, 7
        %v2740 = vrot.slane %v2739, 4
        %v2742 = vshrl.u32 %v2404, 16
        %v2744 = vrot.slane %v2742, 7
        %v2745 = vshll.u32 %v2404, 16
        %v2747 = vor.u32 %v2744, %v2745
        %v2748 = vsel %vm900, %v2740, %v2747
        %v2749 = vrot.slane %v2744, 4
        %v2751 = vshrl.u32 %v2405, 16
        %v2753 = vrot.slane %v2751, 7
        %v2754 = vshll.u32 %v2405, 16
        %v2756 = vor.u32 %v2753, %v2754
        %v2757 = vsel %vm900, %v2749, %v2756
        %s2758 = scalar_lea.vmem %s3, 48
        %v2759 = vld [vmem:[%s2758] sm:$0xf]
        %v2760 = vld [vmem:[%s2758 + $0x4] sm:$0xf]
        %v2761 = vld [vmem:[%s2758 + $0x8] sm:$0xf]
        %v2762 = vld [vmem:[%s2758 + $0xc] sm:$0xf]
        %v2763 = vunpack.c.l.b16 %v2418
        %v2764 = vunpack.c.l.b16 %v2427
        %v2765 = vunpack.c.l.b16 %v2440
        %v2766 = vunpack.c.l.b16 %v2449
        %v2767 = vunpack.c.l.b16 %v2462
        %v2768 = vunpack.c.l.b16 %v2471
        %v2769 = vunpack.c.l.b16 %v2484
        %v2770 = vunpack.c.l.b16 %v2493
        %v2771 = vunpack.c.l.b16 %v2506
        %v2772 = vunpack.c.l.b16 %v2515
        %v2773 = vunpack.c.l.b16 %v2528
        %v2774 = vunpack.c.l.b16 %v2537
        %v2775 = vunpack.c.l.b16 %v2550
        %v2776 = vunpack.c.l.b16 %v2559
        %v2777 = vunpack.c.l.b16 %v2572
        %v2778 = vunpack.c.l.b16 %v2581
        %v2779 = vunpack.c.l.b16 %v2594
        %v2780 = vunpack.c.l.b16 %v2603
        %v2781 = vunpack.c.l.b16 %v2616
        %v2782 = vunpack.c.l.b16 %v2625
        %v2783 = vunpack.c.l.b16 %v2638
        %v2784 = vunpack.c.l.b16 %v2647
        %v2785 = vunpack.c.l.b16 %v2660
        %v2786 = vunpack.c.l.b16 %v2669
        %v2787 = vunpack.c.l.b16 %v2682
        %v2788 = vunpack.c.l.b16 %v2691
        %v2789 = vunpack.c.l.b16 %v2704
        %v2790 = vunpack.c.l.b16 %v2713
        %v2791 = vunpack.c.l.b16 %v2726
        %v2792 = vunpack.c.l.b16 %v2735
        %v2793 = vunpack.c.l.b16 %v2748
        %v2794 = vunpack.c.l.b16 %v2757
        %v2795 = vpack.c.b16 %v2764, %v2763
        %v2796 = vpack.c.b16 %v2766, %v2765
        %v2797 = vpack.c.b16 %v2768, %v2767
        %v2798 = vpack.c.b16 %v2770, %v2769
        %v2799 = vpack.c.b16 %v2772, %v2771
        %v2800 = vpack.c.b16 %v2774, %v2773
        %v2801 = vpack.c.b16 %v2776, %v2775
        %v2802 = vpack.c.b16 %v2778, %v2777
        %v2803 = vpack.c.b16 %v2780, %v2779
        %v2804 = vpack.c.b16 %v2782, %v2781
        %v2805 = vpack.c.b16 %v2784, %v2783
        %v2806 = vpack.c.b16 %v2786, %v2785
        %v2807 = vpack.c.b16 %v2788, %v2787
        %v2808 = vpack.c.b16 %v2790, %v2789
        %v2809 = vpack.c.b16 %v2792, %v2791
        %v2810 = vpack.c.b16 %v2794, %v2793
        %v2815 = vunpack.c.l.b16 %v2759
        %v2816 = vunpack.c.l.b16 %v2760
        %v2817 = vunpack.c.l.b16 %v2761
        %v2818 = vunpack.c.l.b16 %v2762
        %v2819 = vpack.c.b16 %v2816, %v2815
        %v2820 = vpack.c.b16 %v2818, %v2817
        %v2824 = vsel %vm1354, %v2795, 0
        %v2827 = vsel %vm1354, %v2796, 0
        %v2830 = vsel %vm1354, %v2797, 0
        %v2833 = vsel %vm1354, %v2798, 0
        %v2836 = vsel %vm1354, %v2799, 0
        %v2839 = vsel %vm1354, %v2800, 0
        %v2842 = vsel %vm1354, %v2801, 0
        %v2845 = vsel %vm1354, %v2802, 0
        %v2848 = vsel %vm1354, %v2803, 0
        %v2851 = vsel %vm1354, %v2804, 0
        %v2854 = vsel %vm1354, %v2805, 0
        %v2857 = vsel %vm1354, %v2806, 0
        %v2860 = vsel %vm1354, %v2807, 0
        %v2863 = vsel %vm1354, %v2808, 0
        %v2866 = vsel %vm1354, %v2809, 0
        %v2869 = vsel %vm1354, %v2810, 0
        %2871 = vmatpush.bf16.msra.mxu0 0
        %2872 = vmatpush.bf16.msra.mxu0 0
        %2873 = vmatpush.bf16.msra.mxu0 0
        %2874 = vmatpush.bf16.msra.mxu0 0
        %2875 = vmatpush.bf16.msra.mxu0 0
        %2876 = vmatpush.bf16.msra.mxu0 0
        %2877 = vmatpush.bf16.msra.mxu0 %v2820
        %2878 = vmatpush.bf16.msra.mxu0 %v2819
        %2879 = vmatmul.bf16.gmra.mxu0 %v2824
        %v2880 = vpop.f32.mrf.mxu0
        %v2881 = vadd.f32 0.0, %v2880
        %v2882 = vpop.f32.mrf.mxu0
        %v2883 = vadd.f32 0.0, %v2882
        %2884 = vmatmul.bf16.gmra.mxu0 %v2827
        %v2885 = vpop.f32.mrf.mxu0
        %v2886 = vadd.f32 0.0, %v2885
        %v2887 = vpop.f32.mrf.mxu0
        %v2888 = vadd.f32 0.0, %v2887
        %2889 = vmatmul.bf16.gmra.mxu0 %v2830
        %v2890 = vpop.f32.mrf.mxu0
        %v2891 = vadd.f32 0.0, %v2890
        %v2892 = vpop.f32.mrf.mxu0
        %v2893 = vadd.f32 0.0, %v2892
        %2894 = vmatmul.bf16.gmra.mxu0 %v2833
        %v2895 = vpop.f32.mrf.mxu0
        %v2896 = vadd.f32 0.0, %v2895
        %v2897 = vpop.f32.mrf.mxu0
        %v2898 = vadd.f32 0.0, %v2897
        %2899 = vmatmul.bf16.gmra.mxu0 %v2836
        %v2900 = vpop.f32.mrf.mxu0
        %v2901 = vadd.f32 0.0, %v2900
        %v2902 = vpop.f32.mrf.mxu0
        %v2903 = vadd.f32 0.0, %v2902
        %2904 = vmatmul.bf16.gmra.mxu0 %v2839
        %v2905 = vpop.f32.mrf.mxu0
        %v2906 = vadd.f32 0.0, %v2905
        %v2907 = vpop.f32.mrf.mxu0
        %v2908 = vadd.f32 0.0, %v2907
        %2909 = vmatmul.bf16.gmra.mxu0 %v2842
        %v2910 = vpop.f32.mrf.mxu0
        %v2911 = vadd.f32 0.0, %v2910
        %v2912 = vpop.f32.mrf.mxu0
        %v2913 = vadd.f32 0.0, %v2912
        %2914 = vmatmul.bf16.gmra.mxu0 %v2845
        %v2915 = vpop.f32.mrf.mxu0
        %v2916 = vadd.f32 0.0, %v2915
        %v2917 = vpop.f32.mrf.mxu0
        %v2918 = vadd.f32 0.0, %v2917
        %2919 = vmatmul.bf16.gmra.mxu0 %v2848
        %v2920 = vpop.f32.mrf.mxu0
        %v2921 = vadd.f32 0.0, %v2920
        %v2922 = vpop.f32.mrf.mxu0
        %v2923 = vadd.f32 0.0, %v2922
        %2924 = vmatmul.bf16.gmra.mxu0 %v2851
        %v2925 = vpop.f32.mrf.mxu0
        %v2926 = vadd.f32 0.0, %v2925
        %v2927 = vpop.f32.mrf.mxu0
        %v2928 = vadd.f32 0.0, %v2927
        %2929 = vmatmul.bf16.gmra.mxu0 %v2854
        %v2930 = vpop.f32.mrf.mxu0
        %v2931 = vadd.f32 0.0, %v2930
        %v2932 = vpop.f32.mrf.mxu0
        %v2933 = vadd.f32 0.0, %v2932
        %2934 = vmatmul.bf16.gmra.mxu0 %v2857
        %v2935 = vpop.f32.mrf.mxu0
        %v2936 = vadd.f32 0.0, %v2935
        %v2937 = vpop.f32.mrf.mxu0
        %v2938 = vadd.f32 0.0, %v2937
        %2939 = vmatmul.bf16.gmra.mxu0 %v2860
        %v2940 = vpop.f32.mrf.mxu0
        %v2941 = vadd.f32 0.0, %v2940
        %v2942 = vpop.f32.mrf.mxu0
        %v2943 = vadd.f32 0.0, %v2942
        %2944 = vmatmul.bf16.gmra.mxu0 %v2863
        %v2945 = vpop.f32.mrf.mxu0
        %v2946 = vadd.f32 0.0, %v2945
        %v2947 = vpop.f32.mrf.mxu0
        %v2948 = vadd.f32 0.0, %v2947
        %2949 = vmatmul.bf16.gmra.mxu0 %v2866
        %v2950 = vpop.f32.mrf.mxu0
        %v2951 = vadd.f32 0.0, %v2950
        %v2952 = vpop.f32.mrf.mxu0
        %v2953 = vadd.f32 0.0, %v2952
        %2954 = vmatmul.bf16.gmra.mxu0 %v2869
        %v2955 = vpop.f32.mrf.mxu0
        %v2956 = vadd.f32 0.0, %v2955
        %v2957 = vpop.f32.mrf.mxu0
        %v2958 = vadd.f32 0.0, %v2957
        %2959 = vdwg.mxu0
        %v2960 = vadd.f32 %v2326, %v2881
        %v2961 = vadd.f32 %v2327, %v2883
        %v2962 = vadd.f32 %v2328, %v2886
        %v2963 = vadd.f32 %v2329, %v2888
        %v2964 = vadd.f32 %v2330, %v2891
        %v2965 = vadd.f32 %v2331, %v2893
        %v2966 = vadd.f32 %v2332, %v2896
        %v2967 = vadd.f32 %v2333, %v2898
        %v2968 = vadd.f32 %v2334, %v2901
        %v2969 = vadd.f32 %v2335, %v2903
        %v2970 = vadd.f32 %v2336, %v2906
        %v2971 = vadd.f32 %v2337, %v2908
        %v2972 = vadd.f32 %v2338, %v2911
        %v2973 = vadd.f32 %v2339, %v2913
        %v2974 = vadd.f32 %v2340, %v2916
        %v2975 = vadd.f32 %v2341, %v2918
        %v2976 = vadd.f32 %v2342, %v2921
        %v2977 = vadd.f32 %v2343, %v2923
        %v2978 = vadd.f32 %v2344, %v2926
        %v2979 = vadd.f32 %v2345, %v2928
        %v2980 = vadd.f32 %v2346, %v2931
        %v2981 = vadd.f32 %v2347, %v2933
        %v2982 = vadd.f32 %v2348, %v2936
        %v2983 = vadd.f32 %v2349, %v2938
        %v2984 = vadd.f32 %v2350, %v2941
        %v2985 = vadd.f32 %v2351, %v2943
        %v2986 = vadd.f32 %v2352, %v2946
        %v2987 = vadd.f32 %v2353, %v2948
        %v2988 = vadd.f32 %v2354, %v2951
        %v2989 = vadd.f32 %v2355, %v2953
        %v2990 = vadd.f32 %v2356, %v2956
        %v2991 = vadd.f32 %v2357, %v2958
        %s2992 = scalar_lea.vmem %s3, 64
        %v2993 = vld [vmem:[%s2992] sm:$0xf]
        %v2994 = vld [vmem:[%s2992 + $0x4] sm:$0xf]
        %v2995 = vld [vmem:[%s2992 + $0x8] sm:$0xf]
        %v2996 = vld [vmem:[%s2992 + $0xc] sm:$0xf]
        %v3029 = vunpack.c.l.b16 %v2359
        %v3030 = vunpack.c.l.b16 %v2360
        %v3031 = vunpack.c.l.b16 %v2362
        %v3032 = vunpack.c.l.b16 %v2363
        %v3033 = vunpack.c.l.b16 %v2365
        %v3034 = vunpack.c.l.b16 %v2366
        %v3035 = vunpack.c.l.b16 %v2368
        %v3036 = vunpack.c.l.b16 %v2369
        %v3037 = vunpack.c.l.b16 %v2371
        %v3038 = vunpack.c.l.b16 %v2372
        %v3039 = vunpack.c.l.b16 %v2374
        %v3040 = vunpack.c.l.b16 %v2375
        %v3041 = vunpack.c.l.b16 %v2377
        %v3042 = vunpack.c.l.b16 %v2378
        %v3043 = vunpack.c.l.b16 %v2380
        %v3044 = vunpack.c.l.b16 %v2381
        %v3045 = vunpack.c.l.b16 %v2383
        %v3046 = vunpack.c.l.b16 %v2384
        %v3047 = vunpack.c.l.b16 %v2386
        %v3048 = vunpack.c.l.b16 %v2387
        %v3049 = vunpack.c.l.b16 %v2389
        %v3050 = vunpack.c.l.b16 %v2390
        %v3051 = vunpack.c.l.b16 %v2392
        %v3052 = vunpack.c.l.b16 %v2393
        %v3053 = vunpack.c.l.b16 %v2395
        %v3054 = vunpack.c.l.b16 %v2396
        %v3055 = vunpack.c.l.b16 %v2398
        %v3056 = vunpack.c.l.b16 %v2399
        %v3057 = vunpack.c.l.b16 %v2401
        %v3058 = vunpack.c.l.b16 %v2402
        %v3059 = vunpack.c.l.b16 %v2404
        %v3060 = vunpack.c.l.b16 %v2405
        %v3061 = vpack.c.b16 %v3030, %v3029
        %v3062 = vpack.c.b16 %v3032, %v3031
        %v3063 = vpack.c.b16 %v3034, %v3033
        %v3064 = vpack.c.b16 %v3036, %v3035
        %v3065 = vpack.c.b16 %v3038, %v3037
        %v3066 = vpack.c.b16 %v3040, %v3039
        %v3067 = vpack.c.b16 %v3042, %v3041
        %v3068 = vpack.c.b16 %v3044, %v3043
        %v3069 = vpack.c.b16 %v3046, %v3045
        %v3070 = vpack.c.b16 %v3048, %v3047
        %v3071 = vpack.c.b16 %v3050, %v3049
        %v3072 = vpack.c.b16 %v3052, %v3051
        %v3073 = vpack.c.b16 %v3054, %v3053
        %v3074 = vpack.c.b16 %v3056, %v3055
        %v3075 = vpack.c.b16 %v3058, %v3057
        %v3076 = vpack.c.b16 %v3060, %v3059
        %v3081 = vunpack.c.l.b16 %v2993
        %v3082 = vunpack.c.l.b16 %v2994
        %v3083 = vunpack.c.l.b16 %v2995
        %v3084 = vunpack.c.l.b16 %v2996
        %v3085 = vpack.c.b16 %v3082, %v3081
        %v3086 = vpack.c.b16 %v3084, %v3083
        %v3090 = vsel %vm1354, %v3061, 0
        %v3093 = vsel %vm1354, %v3062, 0
        %v3096 = vsel %vm1354, %v3063, 0
        %v3099 = vsel %vm1354, %v3064, 0
        %v3102 = vsel %vm1354, %v3065, 0
        %v3105 = vsel %vm1354, %v3066, 0
        %v3108 = vsel %vm1354, %v3067, 0
        %v3111 = vsel %vm1354, %v3068, 0
        %v3114 = vsel %vm1354, %v3069, 0
        %v3117 = vsel %vm1354, %v3070, 0
        %v3120 = vsel %vm1354, %v3071, 0
        %v3123 = vsel %vm1354, %v3072, 0
        %v3126 = vsel %vm1354, %v3073, 0
        %v3129 = vsel %vm1354, %v3074, 0
        %v3132 = vsel %vm1354, %v3075, 0
        %v3135 = vsel %vm1354, %v3076, 0
        %3137 = vmatpush.bf16.msra.mxu0 0
        %3138 = vmatpush.bf16.msra.mxu0 0
        %3139 = vmatpush.bf16.msra.mxu0 0
        %3140 = vmatpush.bf16.msra.mxu0 0
        %3141 = vmatpush.bf16.msra.mxu0 0
        %3142 = vmatpush.bf16.msra.mxu0 0
        %3143 = vmatpush.bf16.msra.mxu0 %v3086
        %3144 = vmatpush.bf16.msra.mxu0 %v3085
        %3145 = vmatmul.bf16.gmra.mxu0 %v3090
        %v3146 = vpop.f32.mrf.mxu0
        %v3147 = vadd.f32 0.0, %v3146
        %v3148 = vpop.f32.mrf.mxu0
        %v3149 = vadd.f32 0.0, %v3148
        %3150 = vmatmul.bf16.gmra.mxu0 %v3093
        %v3151 = vpop.f32.mrf.mxu0
        %v3152 = vadd.f32 0.0, %v3151
        %v3153 = vpop.f32.mrf.mxu0
        %v3154 = vadd.f32 0.0, %v3153
        %3155 = vmatmul.bf16.gmra.mxu0 %v3096
        %v3156 = vpop.f32.mrf.mxu0
        %v3157 = vadd.f32 0.0, %v3156
        %v3158 = vpop.f32.mrf.mxu0
        %v3159 = vadd.f32 0.0, %v3158
        %3160 = vmatmul.bf16.gmra.mxu0 %v3099
        %v3161 = vpop.f32.mrf.mxu0
        %v3162 = vadd.f32 0.0, %v3161
        %v3163 = vpop.f32.mrf.mxu0
        %v3164 = vadd.f32 0.0, %v3163
        %3165 = vmatmul.bf16.gmra.mxu0 %v3102
        %v3166 = vpop.f32.mrf.mxu0
        %v3167 = vadd.f32 0.0, %v3166
        %v3168 = vpop.f32.mrf.mxu0
        %v3169 = vadd.f32 0.0, %v3168
        %3170 = vmatmul.bf16.gmra.mxu0 %v3105
        %v3171 = vpop.f32.mrf.mxu0
        %v3172 = vadd.f32 0.0, %v3171
        %v3173 = vpop.f32.mrf.mxu0
        %v3174 = vadd.f32 0.0, %v3173
        %3175 = vmatmul.bf16.gmra.mxu0 %v3108
        %v3176 = vpop.f32.mrf.mxu0
        %v3177 = vadd.f32 0.0, %v3176
        %v3178 = vpop.f32.mrf.mxu0
        %v3179 = vadd.f32 0.0, %v3178
        %3180 = vmatmul.bf16.gmra.mxu0 %v3111
        %v3181 = vpop.f32.mrf.mxu0
        %v3182 = vadd.f32 0.0, %v3181
        %v3183 = vpop.f32.mrf.mxu0
        %v3184 = vadd.f32 0.0, %v3183
        %3185 = vmatmul.bf16.gmra.mxu0 %v3114
        %v3186 = vpop.f32.mrf.mxu0
        %v3187 = vadd.f32 0.0, %v3186
        %v3188 = vpop.f32.mrf.mxu0
        %v3189 = vadd.f32 0.0, %v3188
        %3190 = vmatmul.bf16.gmra.mxu0 %v3117
        %v3191 = vpop.f32.mrf.mxu0
        %v3192 = vadd.f32 0.0, %v3191
        %v3193 = vpop.f32.mrf.mxu0
        %v3194 = vadd.f32 0.0, %v3193
        %3195 = vmatmul.bf16.gmra.mxu0 %v3120
        %v3196 = vpop.f32.mrf.mxu0
        %v3197 = vadd.f32 0.0, %v3196
        %v3198 = vpop.f32.mrf.mxu0
        %v3199 = vadd.f32 0.0, %v3198
        %3200 = vmatmul.bf16.gmra.mxu0 %v3123
        %v3201 = vpop.f32.mrf.mxu0
        %v3202 = vadd.f32 0.0, %v3201
        %v3203 = vpop.f32.mrf.mxu0
        %v3204 = vadd.f32 0.0, %v3203
        %3205 = vmatmul.bf16.gmra.mxu0 %v3126
        %v3206 = vpop.f32.mrf.mxu0
        %v3207 = vadd.f32 0.0, %v3206
        %v3208 = vpop.f32.mrf.mxu0
        %v3209 = vadd.f32 0.0, %v3208
        %3210 = vmatmul.bf16.gmra.mxu0 %v3129
        %v3211 = vpop.f32.mrf.mxu0
        %v3212 = vadd.f32 0.0, %v3211
        %v3213 = vpop.f32.mrf.mxu0
        %v3214 = vadd.f32 0.0, %v3213
        %3215 = vmatmul.bf16.gmra.mxu0 %v3132
        %v3216 = vpop.f32.mrf.mxu0
        %v3217 = vadd.f32 0.0, %v3216
        %v3218 = vpop.f32.mrf.mxu0
        %v3219 = vadd.f32 0.0, %v3218
        %3220 = vmatmul.bf16.gmra.mxu0 %v3135
        %v3221 = vpop.f32.mrf.mxu0
        %v3222 = vadd.f32 0.0, %v3221
        %v3223 = vpop.f32.mrf.mxu0
        %v3224 = vadd.f32 0.0, %v3223
        %3225 = vdwg.mxu0
        %v3226 = vadd.f32 %v2960, %v3147
        %v3227 = vadd.f32 %v2961, %v3149
        %v3228 = vadd.f32 %v2962, %v3152
        %v3229 = vadd.f32 %v2963, %v3154
        %v3230 = vadd.f32 %v2964, %v3157
        %v3231 = vadd.f32 %v2965, %v3159
        %v3232 = vadd.f32 %v2966, %v3162
        %v3233 = vadd.f32 %v2967, %v3164
        %v3234 = vadd.f32 %v2968, %v3167
        %v3235 = vadd.f32 %v2969, %v3169
        %v3236 = vadd.f32 %v2970, %v3172
        %v3237 = vadd.f32 %v2971, %v3174
        %v3238 = vadd.f32 %v2972, %v3177
        %v3239 = vadd.f32 %v2973, %v3179
        %v3240 = vadd.f32 %v2974, %v3182
        %v3241 = vadd.f32 %v2975, %v3184
        %v3242 = vadd.f32 %v2976, %v3187
        %v3243 = vadd.f32 %v2977, %v3189
        %v3244 = vadd.f32 %v2978, %v3192
        %v3245 = vadd.f32 %v2979, %v3194
        %v3246 = vadd.f32 %v2980, %v3197
        %v3247 = vadd.f32 %v2981, %v3199
        %v3248 = vadd.f32 %v2982, %v3202
        %v3249 = vadd.f32 %v2983, %v3204
        %v3250 = vadd.f32 %v2984, %v3207
        %v3251 = vadd.f32 %v2985, %v3209
        %v3252 = vadd.f32 %v2986, %v3212
        %v3253 = vadd.f32 %v2987, %v3214
        %v3254 = vadd.f32 %v2988, %v3217
        %v3255 = vadd.f32 %v2989, %v3219
        %v3256 = vadd.f32 %v2990, %v3222
        %v3257 = vadd.f32 %v2991, %v3224
        %v3258 = vld [vmem:[%s818 + $0x4] sm:$0xf]
        %v3259 = vld [vmem:[%s818 + $0x8] sm:$0xf]
        %v3260 = vld [vmem:[%s818 + $0xc] sm:$0x1]
        %v3261 = vld [vmem:[%s818 + $0x14] sm:$0xf]
        %v3262 = vld [vmem:[%s818 + $0x18] sm:$0xf]
        %v3263 = vld [vmem:[%s818 + $0x1c] sm:$0x1]
        %v3264 = vld [vmem:[%s818 + $0x24] sm:$0xf]
        %v3265 = vld [vmem:[%s818 + $0x28] sm:$0xf]
        %v3266 = vld [vmem:[%s818 + $0x2c] sm:$0x1]
        %v3267 = vld [vmem:[%s818 + $0x34] sm:$0xf]
        %v3268 = vld [vmem:[%s818 + $0x38] sm:$0xf]
        %v3269 = vld [vmem:[%s818 + $0x3c] sm:$0x1]
        %v3270 = vld [vmem:[%s818 + $0x44] sm:$0xf]
        %v3271 = vld [vmem:[%s818 + $0x48] sm:$0xf]
        %v3272 = vld [vmem:[%s818 + $0x4c] sm:$0x1]
        %v3273 = vld [vmem:[%s818 + $0x54] sm:$0xf]
        %v3274 = vld [vmem:[%s818 + $0x58] sm:$0xf]
        %v3275 = vld [vmem:[%s818 + $0x5c] sm:$0x1]
        %v3276 = vld [vmem:[%s818 + $0x64] sm:$0xf]
        %v3277 = vld [vmem:[%s818 + $0x68] sm:$0xf]
        %v3278 = vld [vmem:[%s818 + $0x6c] sm:$0x1]
        %v3279 = vld [vmem:[%s818 + $0x74] sm:$0xf]
        %v3280 = vld [vmem:[%s818 + $0x78] sm:$0xf]
        %v3281 = vld [vmem:[%s818 + $0x7c] sm:$0x1]
        %v3282 = vld [vmem:[%s818 + $0x84] sm:$0xf]
        %v3283 = vld [vmem:[%s818 + $0x88] sm:$0xf]
        %v3284 = vld [vmem:[%s818 + $0x8c] sm:$0x1]
        %v3285 = vld [vmem:[%s818 + $0x94] sm:$0xf]
        %v3286 = vld [vmem:[%s818 + $0x98] sm:$0xf]
        %v3287 = vld [vmem:[%s818 + $0x9c] sm:$0x1]
        %v3288 = vld [vmem:[%s818 + $0xa4] sm:$0xf]
        %v3289 = vld [vmem:[%s818 + $0xa8] sm:$0xf]
        %v3290 = vld [vmem:[%s818 + $0xac] sm:$0x1]
        %v3291 = vld [vmem:[%s818 + $0xb4] sm:$0xf]
        %v3292 = vld [vmem:[%s818 + $0xb8] sm:$0xf]
        %v3293 = vld [vmem:[%s818 + $0xbc] sm:$0x1]
        %v3294 = vld [vmem:[%s818 + $0xc4] sm:$0xf]
        %v3295 = vld [vmem:[%s818 + $0xc8] sm:$0xf]
        %v3296 = vld [vmem:[%s818 + $0xcc] sm:$0x1]
        %v3297 = vld [vmem:[%s818 + $0xd4] sm:$0xf]
        %v3298 = vld [vmem:[%s818 + $0xd8] sm:$0xf]
        %v3299 = vld [vmem:[%s818 + $0xdc] sm:$0x1]
        %v3300 = vld [vmem:[%s818 + $0xe4] sm:$0xf]
        %v3301 = vld [vmem:[%s818 + $0xe8] sm:$0xf]
        %v3302 = vld [vmem:[%s818 + $0xec] sm:$0x1]
        %v3303 = vld [vmem:[%s818 + $0xf4] sm:$0xf]
        %v3304 = vld [vmem:[%s818 + $0xf8] sm:$0xf]
        %v3305 = vld [vmem:[%s818 + $0xfc] sm:$0x1]
        %v3307 = vshrl.u32 %v3258, 16
        %v3309 = vrot.slane %v3307, 4
        %v3310 = vshll.u32 %v3258, 16
        %v3312 = vrot.slane %v3310, 5
        %v3313 = vor.u32 %v3309, %v3312
        %v3314 = vrot.slane %v3313, 4
        %v3316 = vshll.u32 %v3259, 16
        %v3318 = vrot.slane %v3316, 5
        %v3319 = vsel %vm1739, %v3314, %v3318
        %v3320 = vshrl.u32 %v3259, 16
        %v3322 = vrot.slane %v3320, 4
        %v3323 = vor.u32 %v3322, %v3318
        %v3324 = vrot.slane %v3323, 4
        %v3326 = vshll.u32 %v3260, 16
        %v3328 = vrot.slane %v3326, 5
        %v3329 = vsel %vm1739, %v3324, %v3328
        %v3331 = vshrl.u32 %v3261, 16
        %v3333 = vrot.slane %v3331, 4
        %v3334 = vshll.u32 %v3261, 16
        %v3336 = vrot.slane %v3334, 5
        %v3337 = vor.u32 %v3333, %v3336
        %v3338 = vrot.slane %v3337, 4
        %v3340 = vshll.u32 %v3262, 16
        %v3342 = vrot.slane %v3340, 5
        %v3343 = vsel %vm1739, %v3338, %v3342
        %v3344 = vshrl.u32 %v3262, 16
        %v3346 = vrot.slane %v3344, 4
        %v3347 = vor.u32 %v3346, %v3342
        %v3348 = vrot.slane %v3347, 4
        %v3350 = vshll.u32 %v3263, 16
        %v3352 = vrot.slane %v3350, 5
        %v3353 = vsel %vm1739, %v3348, %v3352
        %v3355 = vshrl.u32 %v3264, 16
        %v3357 = vrot.slane %v3355, 4
        %v3358 = vshll.u32 %v3264, 16
        %v3360 = vrot.slane %v3358, 5
        %v3361 = vor.u32 %v3357, %v3360
        %v3362 = vrot.slane %v3361, 4
        %v3364 = vshll.u32 %v3265, 16
        %v3366 = vrot.slane %v3364, 5
        %v3367 = vsel %vm1739, %v3362, %v3366
        %v3368 = vshrl.u32 %v3265, 16
        %v3370 = vrot.slane %v3368, 4
        %v3371 = vor.u32 %v3370, %v3366
        %v3372 = vrot.slane %v3371, 4
        %v3374 = vshll.u32 %v3266, 16
        %v3376 = vrot.slane %v3374, 5
        %v3377 = vsel %vm1739, %v3372, %v3376
        %v3379 = vshrl.u32 %v3267, 16
        %v3381 = vrot.slane %v3379, 4
        %v3382 = vshll.u32 %v3267, 16
        %v3384 = vrot.slane %v3382, 5
        %v3385 = vor.u32 %v3381, %v3384
        %v3386 = vrot.slane %v3385, 4
        %v3388 = vshll.u32 %v3268, 16
        %v3390 = vrot.slane %v3388, 5
        %v3391 = vsel %vm1739, %v3386, %v3390
        %v3392 = vshrl.u32 %v3268, 16
        %v3394 = vrot.slane %v3392, 4
        %v3395 = vor.u32 %v3394, %v3390
        %v3396 = vrot.slane %v3395, 4
        %v3398 = vshll.u32 %v3269, 16
        %v3400 = vrot.slane %v3398, 5
        %v3401 = vsel %vm1739, %v3396, %v3400
        %v3403 = vshrl.u32 %v3270, 16
        %v3405 = vrot.slane %v3403, 4
        %v3406 = vshll.u32 %v3270, 16
        %v3408 = vrot.slane %v3406, 5
        %v3409 = vor.u32 %v3405, %v3408
        %v3410 = vrot.slane %v3409, 4
        %v3412 = vshll.u32 %v3271, 16
        %v3414 = vrot.slane %v3412, 5
        %v3415 = vsel %vm1739, %v3410, %v3414
        %v3416 = vshrl.u32 %v3271, 16
        %v3418 = vrot.slane %v3416, 4
        %v3419 = vor.u32 %v3418, %v3414
        %v3420 = vrot.slane %v3419, 4
        %v3422 = vshll.u32 %v3272, 16
        %v3424 = vrot.slane %v3422, 5
        %v3425 = vsel %vm1739, %v3420, %v3424
        %v3427 = vshrl.u32 %v3273, 16
        %v3429 = vrot.slane %v3427, 4
        %v3430 = vshll.u32 %v3273, 16
        %v3432 = vrot.slane %v3430, 5
        %v3433 = vor.u32 %v3429, %v3432
        %v3434 = vrot.slane %v3433, 4
        %v3436 = vshll.u32 %v3274, 16
        %v3438 = vrot.slane %v3436, 5
        %v3439 = vsel %vm1739, %v3434, %v3438
        %v3440 = vshrl.u32 %v3274, 16
        %v3442 = vrot.slane %v3440, 4
        %v3443 = vor.u32 %v3442, %v3438
        %v3444 = vrot.slane %v3443, 4
        %v3446 = vshll.u32 %v3275, 16
        %v3448 = vrot.slane %v3446, 5
        %v3449 = vsel %vm1739, %v3444, %v3448
        %v3451 = vshrl.u32 %v3276, 16
        %v3453 = vrot.slane %v3451, 4
        %v3454 = vshll.u32 %v3276, 16
        %v3456 = vrot.slane %v3454, 5
        %v3457 = vor.u32 %v3453, %v3456
        %v3458 = vrot.slane %v3457, 4
        %v3460 = vshll.u32 %v3277, 16
        %v3462 = vrot.slane %v3460, 5
        %v3463 = vsel %vm1739, %v3458, %v3462
        %v3464 = vshrl.u32 %v3277, 16
        %v3466 = vrot.slane %v3464, 4
        %v3467 = vor.u32 %v3466, %v3462
        %v3468 = vrot.slane %v3467, 4
        %v3470 = vshll.u32 %v3278, 16
        %v3472 = vrot.slane %v3470, 5
        %v3473 = vsel %vm1739, %v3468, %v3472
        %v3475 = vshrl.u32 %v3279, 16
        %v3477 = vrot.slane %v3475, 4
        %v3478 = vshll.u32 %v3279, 16
        %v3480 = vrot.slane %v3478, 5
        %v3481 = vor.u32 %v3477, %v3480
        %v3482 = vrot.slane %v3481, 4
        %v3484 = vshll.u32 %v3280, 16
        %v3486 = vrot.slane %v3484, 5
        %v3487 = vsel %vm1739, %v3482, %v3486
        %v3488 = vshrl.u32 %v3280, 16
        %v3490 = vrot.slane %v3488, 4
        %v3491 = vor.u32 %v3490, %v3486
        %v3492 = vrot.slane %v3491, 4
        %v3494 = vshll.u32 %v3281, 16
        %v3496 = vrot.slane %v3494, 5
        %v3497 = vsel %vm1739, %v3492, %v3496
        %v3499 = vshrl.u32 %v3282, 16
        %v3501 = vrot.slane %v3499, 4
        %v3502 = vshll.u32 %v3282, 16
        %v3504 = vrot.slane %v3502, 5
        %v3505 = vor.u32 %v3501, %v3504
        %v3506 = vrot.slane %v3505, 4
        %v3508 = vshll.u32 %v3283, 16
        %v3510 = vrot.slane %v3508, 5
        %v3511 = vsel %vm1739, %v3506, %v3510
        %v3512 = vshrl.u32 %v3283, 16
        %v3514 = vrot.slane %v3512, 4
        %v3515 = vor.u32 %v3514, %v3510
        %v3516 = vrot.slane %v3515, 4
        %v3518 = vshll.u32 %v3284, 16
        %v3520 = vrot.slane %v3518, 5
        %v3521 = vsel %vm1739, %v3516, %v3520
        %v3523 = vshrl.u32 %v3285, 16
        %v3525 = vrot.slane %v3523, 4
        %v3526 = vshll.u32 %v3285, 16
        %v3528 = vrot.slane %v3526, 5
        %v3529 = vor.u32 %v3525, %v3528
        %v3530 = vrot.slane %v3529, 4
        %v3532 = vshll.u32 %v3286, 16
        %v3534 = vrot.slane %v3532, 5
        %v3535 = vsel %vm1739, %v3530, %v3534
        %v3536 = vshrl.u32 %v3286, 16
        %v3538 = vrot.slane %v3536, 4
        %v3539 = vor.u32 %v3538, %v3534
        %v3540 = vrot.slane %v3539, 4
        %v3542 = vshll.u32 %v3287, 16
        %v3544 = vrot.slane %v3542, 5
        %v3545 = vsel %vm1739, %v3540, %v3544
        %v3547 = vshrl.u32 %v3288, 16
        %v3549 = vrot.slane %v3547, 4
        %v3550 = vshll.u32 %v3288, 16
        %v3552 = vrot.slane %v3550, 5
        %v3553 = vor.u32 %v3549, %v3552
        %v3554 = vrot.slane %v3553, 4
        %v3556 = vshll.u32 %v3289, 16
        %v3558 = vrot.slane %v3556, 5
        %v3559 = vsel %vm1739, %v3554, %v3558
        %v3560 = vshrl.u32 %v3289, 16
        %v3562 = vrot.slane %v3560, 4
        %v3563 = vor.u32 %v3562, %v3558
        %v3564 = vrot.slane %v3563, 4
        %v3566 = vshll.u32 %v3290, 16
        %v3568 = vrot.slane %v3566, 5
        %v3569 = vsel %vm1739, %v3564, %v3568
        %v3571 = vshrl.u32 %v3291, 16
        %v3573 = vrot.slane %v3571, 4
        %v3574 = vshll.u32 %v3291, 16
        %v3576 = vrot.slane %v3574, 5
        %v3577 = vor.u32 %v3573, %v3576
        %v3578 = vrot.slane %v3577, 4
        %v3580 = vshll.u32 %v3292, 16
        %v3582 = vrot.slane %v3580, 5
        %v3583 = vsel %vm1739, %v3578, %v3582
        %v3584 = vshrl.u32 %v3292, 16
        %v3586 = vrot.slane %v3584, 4
        %v3587 = vor.u32 %v3586, %v3582
        %v3588 = vrot.slane %v3587, 4
        %v3590 = vshll.u32 %v3293, 16
        %v3592 = vrot.slane %v3590, 5
        %v3593 = vsel %vm1739, %v3588, %v3592
        %v3595 = vshrl.u32 %v3294, 16
        %v3597 = vrot.slane %v3595, 4
        %v3598 = vshll.u32 %v3294, 16
        %v3600 = vrot.slane %v3598, 5
        %v3601 = vor.u32 %v3597, %v3600
        %v3602 = vrot.slane %v3601, 4
        %v3604 = vshll.u32 %v3295, 16
        %v3606 = vrot.slane %v3604, 5
        %v3607 = vsel %vm1739, %v3602, %v3606
        %v3608 = vshrl.u32 %v3295, 16
        %v3610 = vrot.slane %v3608, 4
        %v3611 = vor.u32 %v3610, %v3606
        %v3612 = vrot.slane %v3611, 4
        %v3614 = vshll.u32 %v3296, 16
        %v3616 = vrot.slane %v3614, 5
        %v3617 = vsel %vm1739, %v3612, %v3616
        %v3619 = vshrl.u32 %v3297, 16
        %v3621 = vrot.slane %v3619, 4
        %v3622 = vshll.u32 %v3297, 16
        %v3624 = vrot.slane %v3622, 5
        %v3625 = vor.u32 %v3621, %v3624
        %v3626 = vrot.slane %v3625, 4
        %v3628 = vshll.u32 %v3298, 16
        %v3630 = vrot.slane %v3628, 5
        %v3631 = vsel %vm1739, %v3626, %v3630
        %v3632 = vshrl.u32 %v3298, 16
        %v3634 = vrot.slane %v3632, 4
        %v3635 = vor.u32 %v3634, %v3630
        %v3636 = vrot.slane %v3635, 4
        %v3638 = vshll.u32 %v3299, 16
        %v3640 = vrot.slane %v3638, 5
        %v3641 = vsel %vm1739, %v3636, %v3640
        %v3643 = vshrl.u32 %v3300, 16
        %v3645 = vrot.slane %v3643, 4
        %v3646 = vshll.u32 %v3300, 16
        %v3648 = vrot.slane %v3646, 5
        %v3649 = vor.u32 %v3645, %v3648
        %v3650 = vrot.slane %v3649, 4
        %v3652 = vshll.u32 %v3301, 16
        %v3654 = vrot.slane %v3652, 5
        %v3655 = vsel %vm1739, %v3650, %v3654
        %v3656 = vshrl.u32 %v3301, 16
        %v3658 = vrot.slane %v3656, 4
        %v3659 = vor.u32 %v3658, %v3654
        %v3660 = vrot.slane %v3659, 4
        %v3662 = vshll.u32 %v3302, 16
        %v3664 = vrot.slane %v3662, 5
        %v3665 = vsel %vm1739, %v3660, %v3664
        %v3667 = vshrl.u32 %v3303, 16
        %v3669 = vrot.slane %v3667, 4
        %v3670 = vshll.u32 %v3303, 16
        %v3672 = vrot.slane %v3670, 5
        %v3673 = vor.u32 %v3669, %v3672
        %v3674 = vrot.slane %v3673, 4
        %v3676 = vshll.u32 %v3304, 16
        %v3678 = vrot.slane %v3676, 5
        %v3679 = vsel %vm1739, %v3674, %v3678
        %v3680 = vshrl.u32 %v3304, 16
        %v3682 = vrot.slane %v3680, 4
        %v3683 = vor.u32 %v3682, %v3678
        %v3684 = vrot.slane %v3683, 4
        %v3686 = vshll.u32 %v3305, 16
        %v3688 = vrot.slane %v3686, 5
        %v3689 = vsel %vm1739, %v3684, %v3688
        %s3690 = scalar_lea.vmem %s3, 80
        %v3691 = vld [vmem:[%s3690] sm:$0xf]
        %v3692 = vld [vmem:[%s3690 + $0x4] sm:$0xf]
        %v3693 = vld [vmem:[%s3690 + $0x8] sm:$0xf]
        %v3694 = vld [vmem:[%s3690 + $0xc] sm:$0xf]
        %v3695 = vunpack.c.l.b16 %v3319
        %v3696 = vunpack.c.l.b16 %v3329
        %v3697 = vunpack.c.l.b16 %v3343
        %v3698 = vunpack.c.l.b16 %v3353
        %v3699 = vunpack.c.l.b16 %v3367
        %v3700 = vunpack.c.l.b16 %v3377
        %v3701 = vunpack.c.l.b16 %v3391
        %v3702 = vunpack.c.l.b16 %v3401
        %v3703 = vunpack.c.l.b16 %v3415
        %v3704 = vunpack.c.l.b16 %v3425
        %v3705 = vunpack.c.l.b16 %v3439
        %v3706 = vunpack.c.l.b16 %v3449
        %v3707 = vunpack.c.l.b16 %v3463
        %v3708 = vunpack.c.l.b16 %v3473
        %v3709 = vunpack.c.l.b16 %v3487
        %v3710 = vunpack.c.l.b16 %v3497
        %v3711 = vunpack.c.l.b16 %v3511
        %v3712 = vunpack.c.l.b16 %v3521
        %v3713 = vunpack.c.l.b16 %v3535
        %v3714 = vunpack.c.l.b16 %v3545
        %v3715 = vunpack.c.l.b16 %v3559
        %v3716 = vunpack.c.l.b16 %v3569
        %v3717 = vunpack.c.l.b16 %v3583
        %v3718 = vunpack.c.l.b16 %v3593
        %v3719 = vunpack.c.l.b16 %v3607
        %v3720 = vunpack.c.l.b16 %v3617
        %v3721 = vunpack.c.l.b16 %v3631
        %v3722 = vunpack.c.l.b16 %v3641
        %v3723 = vunpack.c.l.b16 %v3655
        %v3724 = vunpack.c.l.b16 %v3665
        %v3725 = vunpack.c.l.b16 %v3679
        %v3726 = vunpack.c.l.b16 %v3689
        %v3727 = vpack.c.b16 %v3696, %v3695
        %v3728 = vpack.c.b16 %v3698, %v3697
        %v3729 = vpack.c.b16 %v3700, %v3699
        %v3730 = vpack.c.b16 %v3702, %v3701
        %v3731 = vpack.c.b16 %v3704, %v3703
        %v3732 = vpack.c.b16 %v3706, %v3705
        %v3733 = vpack.c.b16 %v3708, %v3707
        %v3734 = vpack.c.b16 %v3710, %v3709
        %v3735 = vpack.c.b16 %v3712, %v3711
        %v3736 = vpack.c.b16 %v3714, %v3713
        %v3737 = vpack.c.b16 %v3716, %v3715
        %v3738 = vpack.c.b16 %v3718, %v3717
        %v3739 = vpack.c.b16 %v3720, %v3719
        %v3740 = vpack.c.b16 %v3722, %v3721
        %v3741 = vpack.c.b16 %v3724, %v3723
        %v3742 = vpack.c.b16 %v3726, %v3725
        %v3747 = vunpack.c.l.b16 %v3691
        %v3748 = vunpack.c.l.b16 %v3692
        %v3749 = vunpack.c.l.b16 %v3693
        %v3750 = vunpack.c.l.b16 %v3694
        %v3751 = vpack.c.b16 %v3748, %v3747
        %v3752 = vpack.c.b16 %v3750, %v3749
        %v3756 = vsel %vm1354, %v3727, 0
        %v3759 = vsel %vm1354, %v3728, 0
        %v3762 = vsel %vm1354, %v3729, 0
        %v3765 = vsel %vm1354, %v3730, 0
        %v3768 = vsel %vm1354, %v3731, 0
        %v3771 = vsel %vm1354, %v3732, 0
        %v3774 = vsel %vm1354, %v3733, 0
        %v3777 = vsel %vm1354, %v3734, 0
        %v3780 = vsel %vm1354, %v3735, 0
        %v3783 = vsel %vm1354, %v3736, 0
        %v3786 = vsel %vm1354, %v3737, 0
        %v3789 = vsel %vm1354, %v3738, 0
        %v3792 = vsel %vm1354, %v3739, 0
        %v3795 = vsel %vm1354, %v3740, 0
        %v3798 = vsel %vm1354, %v3741, 0
        %v3801 = vsel %vm1354, %v3742, 0
        %3803 = vmatpush.bf16.msra.mxu0 0
        %3804 = vmatpush.bf16.msra.mxu0 0
        %3805 = vmatpush.bf16.msra.mxu0 0
        %3806 = vmatpush.bf16.msra.mxu0 0
        %3807 = vmatpush.bf16.msra.mxu0 0
        %3808 = vmatpush.bf16.msra.mxu0 0
        %3809 = vmatpush.bf16.msra.mxu0 %v3752
        %3810 = vmatpush.bf16.msra.mxu0 %v3751
        %3811 = vmatmul.bf16.gmra.mxu0 %v3756
        %v3812 = vpop.f32.mrf.mxu0
        %v3813 = vadd.f32 0.0, %v3812
        %v3814 = vpop.f32.mrf.mxu0
        %v3815 = vadd.f32 0.0, %v3814
        %3816 = vmatmul.bf16.gmra.mxu0 %v3759
        %v3817 = vpop.f32.mrf.mxu0
        %v3818 = vadd.f32 0.0, %v3817
        %v3819 = vpop.f32.mrf.mxu0
        %v3820 = vadd.f32 0.0, %v3819
        %3821 = vmatmul.bf16.gmra.mxu0 %v3762
        %v3822 = vpop.f32.mrf.mxu0
        %v3823 = vadd.f32 0.0, %v3822
        %v3824 = vpop.f32.mrf.mxu0
        %v3825 = vadd.f32 0.0, %v3824
        %3826 = vmatmul.bf16.gmra.mxu0 %v3765
        %v3827 = vpop.f32.mrf.mxu0
        %v3828 = vadd.f32 0.0, %v3827
        %v3829 = vpop.f32.mrf.mxu0
        %v3830 = vadd.f32 0.0, %v3829
        %3831 = vmatmul.bf16.gmra.mxu0 %v3768
        %v3832 = vpop.f32.mrf.mxu0
        %v3833 = vadd.f32 0.0, %v3832
        %v3834 = vpop.f32.mrf.mxu0
        %v3835 = vadd.f32 0.0, %v3834
        %3836 = vmatmul.bf16.gmra.mxu0 %v3771
        %v3837 = vpop.f32.mrf.mxu0
        %v3838 = vadd.f32 0.0, %v3837
        %v3839 = vpop.f32.mrf.mxu0
        %v3840 = vadd.f32 0.0, %v3839
        %3841 = vmatmul.bf16.gmra.mxu0 %v3774
        %v3842 = vpop.f32.mrf.mxu0
        %v3843 = vadd.f32 0.0, %v3842
        %v3844 = vpop.f32.mrf.mxu0
        %v3845 = vadd.f32 0.0, %v3844
        %3846 = vmatmul.bf16.gmra.mxu0 %v3777
        %v3847 = vpop.f32.mrf.mxu0
        %v3848 = vadd.f32 0.0, %v3847
        %v3849 = vpop.f32.mrf.mxu0
        %v3850 = vadd.f32 0.0, %v3849
        %3851 = vmatmul.bf16.gmra.mxu0 %v3780
        %v3852 = vpop.f32.mrf.mxu0
        %v3853 = vadd.f32 0.0, %v3852
        %v3854 = vpop.f32.mrf.mxu0
        %v3855 = vadd.f32 0.0, %v3854
        %3856 = vmatmul.bf16.gmra.mxu0 %v3783
        %v3857 = vpop.f32.mrf.mxu0
        %v3858 = vadd.f32 0.0, %v3857
        %v3859 = vpop.f32.mrf.mxu0
        %v3860 = vadd.f32 0.0, %v3859
        %3861 = vmatmul.bf16.gmra.mxu0 %v3786
        %v3862 = vpop.f32.mrf.mxu0
        %v3863 = vadd.f32 0.0, %v3862
        %v3864 = vpop.f32.mrf.mxu0
        %v3865 = vadd.f32 0.0, %v3864
        %3866 = vmatmul.bf16.gmra.mxu0 %v3789
        %v3867 = vpop.f32.mrf.mxu0
        %v3868 = vadd.f32 0.0, %v3867
        %v3869 = vpop.f32.mrf.mxu0
        %v3870 = vadd.f32 0.0, %v3869
        %3871 = vmatmul.bf16.gmra.mxu0 %v3792
        %v3872 = vpop.f32.mrf.mxu0
        %v3873 = vadd.f32 0.0, %v3872
        %v3874 = vpop.f32.mrf.mxu0
        %v3875 = vadd.f32 0.0, %v3874
        %3876 = vmatmul.bf16.gmra.mxu0 %v3795
        %v3877 = vpop.f32.mrf.mxu0
        %v3878 = vadd.f32 0.0, %v3877
        %v3879 = vpop.f32.mrf.mxu0
        %v3880 = vadd.f32 0.0, %v3879
        %3881 = vmatmul.bf16.gmra.mxu0 %v3798
        %v3882 = vpop.f32.mrf.mxu0
        %v3883 = vadd.f32 0.0, %v3882
        %v3884 = vpop.f32.mrf.mxu0
        %v3885 = vadd.f32 0.0, %v3884
        %3886 = vmatmul.bf16.gmra.mxu0 %v3801
        %v3887 = vpop.f32.mrf.mxu0
        %v3888 = vadd.f32 0.0, %v3887
        %v3889 = vpop.f32.mrf.mxu0
        %v3890 = vadd.f32 0.0, %v3889
        %3891 = vdwg.mxu0
        %v3892 = vadd.f32 %v3226, %v3813
        %v3893 = vadd.f32 %v3227, %v3815
        %v3894 = vadd.f32 %v3228, %v3818
        %v3895 = vadd.f32 %v3229, %v3820
        %v3896 = vadd.f32 %v3230, %v3823
        %v3897 = vadd.f32 %v3231, %v3825
        %v3898 = vadd.f32 %v3232, %v3828
        %v3899 = vadd.f32 %v3233, %v3830
        %v3900 = vadd.f32 %v3234, %v3833
        %v3901 = vadd.f32 %v3235, %v3835
        %v3902 = vadd.f32 %v3236, %v3838
        %v3903 = vadd.f32 %v3237, %v3840
        %v3904 = vadd.f32 %v3238, %v3843
        %v3905 = vadd.f32 %v3239, %v3845
        %v3906 = vadd.f32 %v3240, %v3848
        %v3907 = vadd.f32 %v3241, %v3850
        %v3908 = vadd.f32 %v3242, %v3853
        %v3909 = vadd.f32 %v3243, %v3855
        %v3910 = vadd.f32 %v3244, %v3858
        %v3911 = vadd.f32 %v3245, %v3860
        %v3912 = vadd.f32 %v3246, %v3863
        %v3913 = vadd.f32 %v3247, %v3865
        %v3914 = vadd.f32 %v3248, %v3868
        %v3915 = vadd.f32 %v3249, %v3870
        %v3916 = vadd.f32 %v3250, %v3873
        %v3917 = vadd.f32 %v3251, %v3875
        %v3918 = vadd.f32 %v3252, %v3878
        %v3919 = vadd.f32 %v3253, %v3880
        %v3920 = vadd.f32 %v3254, %v3883
        %v3921 = vadd.f32 %v3255, %v3885
        %v3922 = vadd.f32 %v3256, %v3888
        %v3923 = vadd.f32 %v3257, %v3890
        %s3924 = scalar_lea.vmem [#allocation2], 32
        %v3925 = vld [vmem:[%s3924] sm:$0x8]
        %v3926 = vld [vmem:[%s3924 + $0x4] sm:$0xf]
        %v3927 = vld [vmem:[%s3924 + $0x8] sm:$0xf]
        %v3928 = vld [vmem:[%s3924 + $0x10] sm:$0x8]
        %v3929 = vld [vmem:[%s3924 + $0x14] sm:$0xf]
        %v3930 = vld [vmem:[%s3924 + $0x18] sm:$0xf]
        %v3931 = vld [vmem:[%s3924 + $0x20] sm:$0x8]
        %v3932 = vld [vmem:[%s3924 + $0x24] sm:$0xf]
        %v3933 = vld [vmem:[%s3924 + $0x28] sm:$0xf]
        %v3934 = vld [vmem:[%s3924 + $0x30] sm:$0x8]
        %v3935 = vld [vmem:[%s3924 + $0x34] sm:$0xf]
        %v3936 = vld [vmem:[%s3924 + $0x38] sm:$0xf]
        %v3937 = vld [vmem:[%s3924 + $0x40] sm:$0x8]
        %v3938 = vld [vmem:[%s3924 + $0x44] sm:$0xf]
        %v3939 = vld [vmem:[%s3924 + $0x48] sm:$0xf]
        %v3940 = vld [vmem:[%s3924 + $0x50] sm:$0x8]
        %v3941 = vld [vmem:[%s3924 + $0x54] sm:$0xf]
        %v3942 = vld [vmem:[%s3924 + $0x58] sm:$0xf]
        %v3943 = vld [vmem:[%s3924 + $0x60] sm:$0x8]
        %v3944 = vld [vmem:[%s3924 + $0x64] sm:$0xf]
        %v3945 = vld [vmem:[%s3924 + $0x68] sm:$0xf]
        %v3946 = vld [vmem:[%s3924 + $0x70] sm:$0x8]
        %v3947 = vld [vmem:[%s3924 + $0x74] sm:$0xf]
        %v3948 = vld [vmem:[%s3924 + $0x78] sm:$0xf]
        %v3949 = vld [vmem:[%s3924 + $0x80] sm:$0x8]
        %v3950 = vld [vmem:[%s3924 + $0x84] sm:$0xf]
        %v3951 = vld [vmem:[%s3924 + $0x88] sm:$0xf]
        %v3952 = vld [vmem:[%s3924 + $0x90] sm:$0x8]
        %v3953 = vld [vmem:[%s3924 + $0x94] sm:$0xf]
        %v3954 = vld [vmem:[%s3924 + $0x98] sm:$0xf]
        %v3955 = vld [vmem:[%s3924 + $0xa0] sm:$0x8]
        %v3956 = vld [vmem:[%s3924 + $0xa4] sm:$0xf]
        %v3957 = vld [vmem:[%s3924 + $0xa8] sm:$0xf]
        %v3958 = vld [vmem:[%s3924 + $0xb0] sm:$0x8]
        %v3959 = vld [vmem:[%s3924 + $0xb4] sm:$0xf]
        %v3960 = vld [vmem:[%s3924 + $0xb8] sm:$0xf]
        %v3961 = vld [vmem:[%s3924 + $0xc0] sm:$0x8]
        %v3962 = vld [vmem:[%s3924 + $0xc4] sm:$0xf]
        %v3963 = vld [vmem:[%s3924 + $0xc8] sm:$0xf]
        %v3964 = vld [vmem:[%s3924 + $0xd0] sm:$0x8]
        %v3965 = vld [vmem:[%s3924 + $0xd4] sm:$0xf]
        %v3966 = vld [vmem:[%s3924 + $0xd8] sm:$0xf]
        %v3967 = vld [vmem:[%s3924 + $0xe0] sm:$0x8]
        %v3968 = vld [vmem:[%s3924 + $0xe4] sm:$0xf]
        %v3969 = vld [vmem:[%s3924 + $0xe8] sm:$0xf]
        %v3970 = vld [vmem:[%s3924 + $0xf0] sm:$0x8]
        %v3971 = vld [vmem:[%s3924 + $0xf4] sm:$0xf]
        %v3972 = vld [vmem:[%s3924 + $0xf8] sm:$0xf]
        %v3974 = vshrl.u32 %v3925, 16
        %v3976 = vrot.slane %v3974, 7
        %v3977 = vrot.slane %v3976, 4
        %v3979 = vshrl.u32 %v3926, 16
        %v3981 = vrot.slane %v3979, 7
        %v3982 = vshll.u32 %v3926, 16
        %v3984 = vor.u32 %v3981, %v3982
        %v3985 = vsel %vm900, %v3977, %v3984
        %v3986 = vrot.slane %v3981, 4
        %v3988 = vshrl.u32 %v3927, 16
        %v3990 = vrot.slane %v3988, 7
        %v3991 = vshll.u32 %v3927, 16
        %v3993 = vor.u32 %v3990, %v3991
        %v3994 = vsel %vm900, %v3986, %v3993
        %v3996 = vshrl.u32 %v3928, 16
        %v3998 = vrot.slane %v3996, 7
        %v3999 = vrot.slane %v3998, 4
        %v4001 = vshrl.u32 %v3929, 16
        %v4003 = vrot.slane %v4001, 7
        %v4004 = vshll.u32 %v3929, 16
        %v4006 = vor.u32 %v4003, %v4004
        %v4007 = vsel %vm900, %v3999, %v4006
        %v4008 = vrot.slane %v4003, 4
        %v4010 = vshrl.u32 %v3930, 16
        %v4012 = vrot.slane %v4010, 7
        %v4013 = vshll.u32 %v3930, 16
        %v4015 = vor.u32 %v4012, %v4013
        %v4016 = vsel %vm900, %v4008, %v4015
        %v4018 = vshrl.u32 %v3931, 16
        %v4020 = vrot.slane %v4018, 7
        %v4021 = vrot.slane %v4020, 4
        %v4023 = vshrl.u32 %v3932, 16
        %v4025 = vrot.slane %v4023, 7
        %v4026 = vshll.u32 %v3932, 16
        %v4028 = vor.u32 %v4025, %v4026
        %v4029 = vsel %vm900, %v4021, %v4028
        %v4030 = vrot.slane %v4025, 4
        %v4032 = vshrl.u32 %v3933, 16
        %v4034 = vrot.slane %v4032, 7
        %v4035 = vshll.u32 %v3933, 16
        %v4037 = vor.u32 %v4034, %v4035
        %v4038 = vsel %vm900, %v4030, %v4037
        %v4040 = vshrl.u32 %v3934, 16
        %v4042 = vrot.slane %v4040, 7
        %v4043 = vrot.slane %v4042, 4
        %v4045 = vshrl.u32 %v3935, 16
        %v4047 = vrot.slane %v4045, 7
        %v4048 = vshll.u32 %v3935, 16
        %v4050 = vor.u32 %v4047, %v4048
        %v4051 = vsel %vm900, %v4043, %v4050
        %v4052 = vrot.slane %v4047, 4
        %v4054 = vshrl.u32 %v3936, 16
        %v4056 = vrot.slane %v4054, 7
        %v4057 = vshll.u32 %v3936, 16
        %v4059 = vor.u32 %v4056, %v4057
        %v4060 = vsel %vm900, %v4052, %v4059
        %v4062 = vshrl.u32 %v3937, 16
        %v4064 = vrot.slane %v4062, 7
        %v4065 = vrot.slane %v4064, 4
        %v4067 = vshrl.u32 %v3938, 16
        %v4069 = vrot.slane %v4067, 7
        %v4070 = vshll.u32 %v3938, 16
        %v4072 = vor.u32 %v4069, %v4070
        %v4073 = vsel %vm900, %v4065, %v4072
        %v4074 = vrot.slane %v4069, 4
        %v4076 = vshrl.u32 %v3939, 16
        %v4078 = vrot.slane %v4076, 7
        %v4079 = vshll.u32 %v3939, 16
        %v4081 = vor.u32 %v4078, %v4079
        %v4082 = vsel %vm900, %v4074, %v4081
        %v4084 = vshrl.u32 %v3940, 16
        %v4086 = vrot.slane %v4084, 7
        %v4087 = vrot.slane %v4086, 4
        %v4089 = vshrl.u32 %v3941, 16
        %v4091 = vrot.slane %v4089, 7
        %v4092 = vshll.u32 %v3941, 16
        %v4094 = vor.u32 %v4091, %v4092
        %v4095 = vsel %vm900, %v4087, %v4094
        %v4096 = vrot.slane %v4091, 4
        %v4098 = vshrl.u32 %v3942, 16
        %v4100 = vrot.slane %v4098, 7
        %v4101 = vshll.u32 %v3942, 16
        %v4103 = vor.u32 %v4100, %v4101
        %v4104 = vsel %vm900, %v4096, %v4103
        %v4106 = vshrl.u32 %v3943, 16
        %v4108 = vrot.slane %v4106, 7
        %v4109 = vrot.slane %v4108, 4
        %v4111 = vshrl.u32 %v3944, 16
        %v4113 = vrot.slane %v4111, 7
        %v4114 = vshll.u32 %v3944, 16
        %v4116 = vor.u32 %v4113, %v4114
        %v4117 = vsel %vm900, %v4109, %v4116
        %v4118 = vrot.slane %v4113, 4
        %v4120 = vshrl.u32 %v3945, 16
        %v4122 = vrot.slane %v4120, 7
        %v4123 = vshll.u32 %v3945, 16
        %v4125 = vor.u32 %v4122, %v4123
        %v4126 = vsel %vm900, %v4118, %v4125
        %v4128 = vshrl.u32 %v3946, 16
        %v4130 = vrot.slane %v4128, 7
        %v4131 = vrot.slane %v4130, 4
        %v4133 = vshrl.u32 %v3947, 16
        %v4135 = vrot.slane %v4133, 7
        %v4136 = vshll.u32 %v3947, 16
        %v4138 = vor.u32 %v4135, %v4136
        %v4139 = vsel %vm900, %v4131, %v4138
        %v4140 = vrot.slane %v4135, 4
        %v4142 = vshrl.u32 %v3948, 16
        %v4144 = vrot.slane %v4142, 7
        %v4145 = vshll.u32 %v3948, 16
        %v4147 = vor.u32 %v4144, %v4145
        %v4148 = vsel %vm900, %v4140, %v4147
        %v4150 = vshrl.u32 %v3949, 16
        %v4152 = vrot.slane %v4150, 7
        %v4153 = vrot.slane %v4152, 4
        %v4155 = vshrl.u32 %v3950, 16
        %v4157 = vrot.slane %v4155, 7
        %v4158 = vshll.u32 %v3950, 16
        %v4160 = vor.u32 %v4157, %v4158
        %v4161 = vsel %vm900, %v4153, %v4160
        %v4162 = vrot.slane %v4157, 4
        %v4164 = vshrl.u32 %v3951, 16
        %v4166 = vrot.slane %v4164, 7
        %v4167 = vshll.u32 %v3951, 16
        %v4169 = vor.u32 %v4166, %v4167
        %v4170 = vsel %vm900, %v4162, %v4169
        %v4172 = vshrl.u32 %v3952, 16
        %v4174 = vrot.slane %v4172, 7
        %v4175 = vrot.slane %v4174, 4
        %v4177 = vshrl.u32 %v3953, 16
        %v4179 = vrot.slane %v4177, 7
        %v4180 = vshll.u32 %v3953, 16
        %v4182 = vor.u32 %v4179, %v4180
        %v4183 = vsel %vm900, %v4175, %v4182
        %v4184 = vrot.slane %v4179, 4
        %v4186 = vshrl.u32 %v3954, 16
        %v4188 = vrot.slane %v4186, 7
        %v4189 = vshll.u32 %v3954, 16
        %v4191 = vor.u32 %v4188, %v4189
        %v4192 = vsel %vm900, %v4184, %v4191
        %v4194 = vshrl.u32 %v3955, 16
        %v4196 = vrot.slane %v4194, 7
        %v4197 = vrot.slane %v4196, 4
        %v4199 = vshrl.u32 %v3956, 16
        %v4201 = vrot.slane %v4199, 7
        %v4202 = vshll.u32 %v3956, 16
        %v4204 = vor.u32 %v4201, %v4202
        %v4205 = vsel %vm900, %v4197, %v4204
        %v4206 = vrot.slane %v4201, 4
        %v4208 = vshrl.u32 %v3957, 16
        %v4210 = vrot.slane %v4208, 7
        %v4211 = vshll.u32 %v3957, 16
        %v4213 = vor.u32 %v4210, %v4211
        %v4214 = vsel %vm900, %v4206, %v4213
        %v4216 = vshrl.u32 %v3958, 16
        %v4218 = vrot.slane %v4216, 7
        %v4219 = vrot.slane %v4218, 4
        %v4221 = vshrl.u32 %v3959, 16
        %v4223 = vrot.slane %v4221, 7
        %v4224 = vshll.u32 %v3959, 16
        %v4226 = vor.u32 %v4223, %v4224
        %v4227 = vsel %vm900, %v4219, %v4226
        %v4228 = vrot.slane %v4223, 4
        %v4230 = vshrl.u32 %v3960, 16
        %v4232 = vrot.slane %v4230, 7
        %v4233 = vshll.u32 %v3960, 16
        %v4235 = vor.u32 %v4232, %v4233
        %v4236 = vsel %vm900, %v4228, %v4235
        %v4238 = vshrl.u32 %v3961, 16
        %v4240 = vrot.slane %v4238, 7
        %v4241 = vrot.slane %v4240, 4
        %v4243 = vshrl.u32 %v3962, 16
        %v4245 = vrot.slane %v4243, 7
        %v4246 = vshll.u32 %v3962, 16
        %v4248 = vor.u32 %v4245, %v4246
        %v4249 = vsel %vm900, %v4241, %v4248
        %v4250 = vrot.slane %v4245, 4
        %v4252 = vshrl.u32 %v3963, 16
        %v4254 = vrot.slane %v4252, 7
        %v4255 = vshll.u32 %v3963, 16
        %v4257 = vor.u32 %v4254, %v4255
        %v4258 = vsel %vm900, %v4250, %v4257
        %v4260 = vshrl.u32 %v3964, 16
        %v4262 = vrot.slane %v4260, 7
        %v4263 = vrot.slane %v4262, 4
        %v4265 = vshrl.u32 %v3965, 16
        %v4267 = vrot.slane %v4265, 7
        %v4268 = vshll.u32 %v3965, 16
        %v4270 = vor.u32 %v4267, %v4268
        %v4271 = vsel %vm900, %v4263, %v4270
        %v4272 = vrot.slane %v4267, 4
        %v4274 = vshrl.u32 %v3966, 16
        %v4276 = vrot.slane %v4274, 7
        %v4277 = vshll.u32 %v3966, 16
        %v4279 = vor.u32 %v4276, %v4277
        %v4280 = vsel %vm900, %v4272, %v4279
        %v4282 = vshrl.u32 %v3967, 16
        %v4284 = vrot.slane %v4282, 7
        %v4285 = vrot.slane %v4284, 4
        %v4287 = vshrl.u32 %v3968, 16
        %v4289 = vrot.slane %v4287, 7
        %v4290 = vshll.u32 %v3968, 16
        %v4292 = vor.u32 %v4289, %v4290
        %v4293 = vsel %vm900, %v4285, %v4292
        %v4294 = vrot.slane %v4289, 4
        %v4296 = vshrl.u32 %v3969, 16
        %v4298 = vrot.slane %v4296, 7
        %v4299 = vshll.u32 %v3969, 16
        %v4301 = vor.u32 %v4298, %v4299
        %v4302 = vsel %vm900, %v4294, %v4301
        %v4304 = vshrl.u32 %v3970, 16
        %v4306 = vrot.slane %v4304, 7
        %v4307 = vrot.slane %v4306, 4
        %v4309 = vshrl.u32 %v3971, 16
        %v4311 = vrot.slane %v4309, 7
        %v4312 = vshll.u32 %v3971, 16
        %v4314 = vor.u32 %v4311, %v4312
        %v4315 = vsel %vm900, %v4307, %v4314
        %v4316 = vrot.slane %v4311, 4
        %v4318 = vshrl.u32 %v3972, 16
        %v4320 = vrot.slane %v4318, 7
        %v4321 = vshll.u32 %v3972, 16
        %v4323 = vor.u32 %v4320, %v4321
        %v4324 = vsel %vm900, %v4316, %v4323
        %s4325 = scalar_lea.vmem %s3, 96
        %v4326 = vld [vmem:[%s4325] sm:$0xf]
        %v4327 = vld [vmem:[%s4325 + $0x4] sm:$0xf]
        %v4328 = vld [vmem:[%s4325 + $0x8] sm:$0xf]
        %v4329 = vld [vmem:[%s4325 + $0xc] sm:$0xf]
        %v4330 = vunpack.c.l.b16 %v3985
        %v4331 = vunpack.c.l.b16 %v3994
        %v4332 = vunpack.c.l.b16 %v4007
        %v4333 = vunpack.c.l.b16 %v4016
        %v4334 = vunpack.c.l.b16 %v4029
        %v4335 = vunpack.c.l.b16 %v4038
        %v4336 = vunpack.c.l.b16 %v4051
        %v4337 = vunpack.c.l.b16 %v4060
        %v4338 = vunpack.c.l.b16 %v4073
        %v4339 = vunpack.c.l.b16 %v4082
        %v4340 = vunpack.c.l.b16 %v4095
        %v4341 = vunpack.c.l.b16 %v4104
        %v4342 = vunpack.c.l.b16 %v4117
        %v4343 = vunpack.c.l.b16 %v4126
        %v4344 = vunpack.c.l.b16 %v4139
        %v4345 = vunpack.c.l.b16 %v4148
        %v4346 = vunpack.c.l.b16 %v4161
        %v4347 = vunpack.c.l.b16 %v4170
        %v4348 = vunpack.c.l.b16 %v4183
        %v4349 = vunpack.c.l.b16 %v4192
        %v4350 = vunpack.c.l.b16 %v4205
        %v4351 = vunpack.c.l.b16 %v4214
        %v4352 = vunpack.c.l.b16 %v4227
        %v4353 = vunpack.c.l.b16 %v4236
        %v4354 = vunpack.c.l.b16 %v4249
        %v4355 = vunpack.c.l.b16 %v4258
        %v4356 = vunpack.c.l.b16 %v4271
        %v4357 = vunpack.c.l.b16 %v4280
        %v4358 = vunpack.c.l.b16 %v4293
        %v4359 = vunpack.c.l.b16 %v4302
        %v4360 = vunpack.c.l.b16 %v4315
        %v4361 = vunpack.c.l.b16 %v4324
        %v4362 = vpack.c.b16 %v4331, %v4330
        %v4363 = vpack.c.b16 %v4333, %v4332
        %v4364 = vpack.c.b16 %v4335, %v4334
        %v4365 = vpack.c.b16 %v4337, %v4336
        %v4366 = vpack.c.b16 %v4339, %v4338
        %v4367 = vpack.c.b16 %v4341, %v4340
        %v4368 = vpack.c.b16 %v4343, %v4342
        %v4369 = vpack.c.b16 %v4345, %v4344
        %v4370 = vpack.c.b16 %v4347, %v4346
        %v4371 = vpack.c.b16 %v4349, %v4348
        %v4372 = vpack.c.b16 %v4351, %v4350
        %v4373 = vpack.c.b16 %v4353, %v4352
        %v4374 = vpack.c.b16 %v4355, %v4354
        %v4375 = vpack.c.b16 %v4357, %v4356
        %v4376 = vpack.c.b16 %v4359, %v4358
        %v4377 = vpack.c.b16 %v4361, %v4360
        %v4382 = vunpack.c.l.b16 %v4326
        %v4383 = vunpack.c.l.b16 %v4327
        %v4384 = vunpack.c.l.b16 %v4328
        %v4385 = vunpack.c.l.b16 %v4329
        %v4386 = vpack.c.b16 %v4383, %v4382
        %v4387 = vpack.c.b16 %v4385, %v4384
        %v4391 = vsel %vm1354, %v4362, 0
        %v4394 = vsel %vm1354, %v4363, 0
        %v4397 = vsel %vm1354, %v4364, 0
        %v4400 = vsel %vm1354, %v4365, 0
        %v4403 = vsel %vm1354, %v4366, 0
        %v4406 = vsel %vm1354, %v4367, 0
        %v4409 = vsel %vm1354, %v4368, 0
        %v4412 = vsel %vm1354, %v4369, 0
        %v4415 = vsel %vm1354, %v4370, 0
        %v4418 = vsel %vm1354, %v4371, 0
        %v4421 = vsel %vm1354, %v4372, 0
        %v4424 = vsel %vm1354, %v4373, 0
        %v4427 = vsel %vm1354, %v4374, 0
        %v4430 = vsel %vm1354, %v4375, 0
        %v4433 = vsel %vm1354, %v4376, 0
        %v4436 = vsel %vm1354, %v4377, 0
        %4438 = vmatpush.bf16.msra.mxu0 0
        %4439 = vmatpush.bf16.msra.mxu0 0
        %4440 = vmatpush.bf16.msra.mxu0 0
        %4441 = vmatpush.bf16.msra.mxu0 0
        %4442 = vmatpush.bf16.msra.mxu0 0
        %4443 = vmatpush.bf16.msra.mxu0 0
        %4444 = vmatpush.bf16.msra.mxu0 %v4387
        %4445 = vmatpush.bf16.msra.mxu0 %v4386
        %4446 = vmatmul.bf16.gmra.mxu0 %v4391
        %v4447 = vpop.f32.mrf.mxu0
        %v4448 = vadd.f32 0.0, %v4447
        %v4449 = vpop.f32.mrf.mxu0
        %v4450 = vadd.f32 0.0, %v4449
        %4451 = vmatmul.bf16.gmra.mxu0 %v4394
        %v4452 = vpop.f32.mrf.mxu0
        %v4453 = vadd.f32 0.0, %v4452
        %v4454 = vpop.f32.mrf.mxu0
        %v4455 = vadd.f32 0.0, %v4454
        %4456 = vmatmul.bf16.gmra.mxu0 %v4397
        %v4457 = vpop.f32.mrf.mxu0
        %v4458 = vadd.f32 0.0, %v4457
        %v4459 = vpop.f32.mrf.mxu0
        %v4460 = vadd.f32 0.0, %v4459
        %4461 = vmatmul.bf16.gmra.mxu0 %v4400
        %v4462 = vpop.f32.mrf.mxu0
        %v4463 = vadd.f32 0.0, %v4462
        %v4464 = vpop.f32.mrf.mxu0
        %v4465 = vadd.f32 0.0, %v4464
        %4466 = vmatmul.bf16.gmra.mxu0 %v4403
        %v4467 = vpop.f32.mrf.mxu0
        %v4468 = vadd.f32 0.0, %v4467
        %v4469 = vpop.f32.mrf.mxu0
        %v4470 = vadd.f32 0.0, %v4469
        %4471 = vmatmul.bf16.gmra.mxu0 %v4406
        %v4472 = vpop.f32.mrf.mxu0
        %v4473 = vadd.f32 0.0, %v4472
        %v4474 = vpop.f32.mrf.mxu0
        %v4475 = vadd.f32 0.0, %v4474
        %4476 = vmatmul.bf16.gmra.mxu0 %v4409
        %v4477 = vpop.f32.mrf.mxu0
        %v4478 = vadd.f32 0.0, %v4477
        %v4479 = vpop.f32.mrf.mxu0
        %v4480 = vadd.f32 0.0, %v4479
        %4481 = vmatmul.bf16.gmra.mxu0 %v4412
        %v4482 = vpop.f32.mrf.mxu0
        %v4483 = vadd.f32 0.0, %v4482
        %v4484 = vpop.f32.mrf.mxu0
        %v4485 = vadd.f32 0.0, %v4484
        %4486 = vmatmul.bf16.gmra.mxu0 %v4415
        %v4487 = vpop.f32.mrf.mxu0
        %v4488 = vadd.f32 0.0, %v4487
        %v4489 = vpop.f32.mrf.mxu0
        %v4490 = vadd.f32 0.0, %v4489
        %4491 = vmatmul.bf16.gmra.mxu0 %v4418
        %v4492 = vpop.f32.mrf.mxu0
        %v4493 = vadd.f32 0.0, %v4492
        %v4494 = vpop.f32.mrf.mxu0
        %v4495 = vadd.f32 0.0, %v4494
        %4496 = vmatmul.bf16.gmra.mxu0 %v4421
        %v4497 = vpop.f32.mrf.mxu0
        %v4498 = vadd.f32 0.0, %v4497
        %v4499 = vpop.f32.mrf.mxu0
        %v4500 = vadd.f32 0.0, %v4499
        %4501 = vmatmul.bf16.gmra.mxu0 %v4424
        %v4502 = vpop.f32.mrf.mxu0
        %v4503 = vadd.f32 0.0, %v4502
        %v4504 = vpop.f32.mrf.mxu0
        %v4505 = vadd.f32 0.0, %v4504
        %4506 = vmatmul.bf16.gmra.mxu0 %v4427
        %v4507 = vpop.f32.mrf.mxu0
        %v4508 = vadd.f32 0.0, %v4507
        %v4509 = vpop.f32.mrf.mxu0
        %v4510 = vadd.f32 0.0, %v4509
        %4511 = vmatmul.bf16.gmra.mxu0 %v4430
        %v4512 = vpop.f32.mrf.mxu0
        %v4513 = vadd.f32 0.0, %v4512
        %v4514 = vpop.f32.mrf.mxu0
        %v4515 = vadd.f32 0.0, %v4514
        %4516 = vmatmul.bf16.gmra.mxu0 %v4433
        %v4517 = vpop.f32.mrf.mxu0
        %v4518 = vadd.f32 0.0, %v4517
        %v4519 = vpop.f32.mrf.mxu0
        %v4520 = vadd.f32 0.0, %v4519
        %4521 = vmatmul.bf16.gmra.mxu0 %v4436
        %v4522 = vpop.f32.mrf.mxu0
        %v4523 = vadd.f32 0.0, %v4522
        %v4524 = vpop.f32.mrf.mxu0
        %v4525 = vadd.f32 0.0, %v4524
        %4526 = vdwg.mxu0
        %v4527 = vadd.f32 %v3892, %v4448
        %v4528 = vadd.f32 %v3893, %v4450
        %v4529 = vadd.f32 %v3894, %v4453
        %v4530 = vadd.f32 %v3895, %v4455
        %v4531 = vadd.f32 %v3896, %v4458
        %v4532 = vadd.f32 %v3897, %v4460
        %v4533 = vadd.f32 %v3898, %v4463
        %v4534 = vadd.f32 %v3899, %v4465
        %v4535 = vadd.f32 %v3900, %v4468
        %v4536 = vadd.f32 %v3901, %v4470
        %v4537 = vadd.f32 %v3902, %v4473
        %v4538 = vadd.f32 %v3903, %v4475
        %v4539 = vadd.f32 %v3904, %v4478
        %v4540 = vadd.f32 %v3905, %v4480
        %v4541 = vadd.f32 %v3906, %v4483
        %v4542 = vadd.f32 %v3907, %v4485
        %v4543 = vadd.f32 %v3908, %v4488
        %v4544 = vadd.f32 %v3909, %v4490
        %v4545 = vadd.f32 %v3910, %v4493
        %v4546 = vadd.f32 %v3911, %v4495
        %v4547 = vadd.f32 %v3912, %v4498
        %v4548 = vadd.f32 %v3913, %v4500
        %v4549 = vadd.f32 %v3914, %v4503
        %v4550 = vadd.f32 %v3915, %v4505
        %v4551 = vadd.f32 %v3916, %v4508
        %v4552 = vadd.f32 %v3917, %v4510
        %v4553 = vadd.f32 %v3918, %v4513
        %v4554 = vadd.f32 %v3919, %v4515
        %v4555 = vadd.f32 %v3920, %v4518
        %v4556 = vadd.f32 %v3921, %v4520
        %v4557 = vadd.f32 %v3922, %v4523
        %v4558 = vadd.f32 %v3923, %v4525
        %s4559 = scalar_lea.vmem %s3, 112
        %v4560 = vld [vmem:[%s4559] sm:$0xf]
        %v4561 = vld [vmem:[%s4559 + $0x4] sm:$0xf]
        %v4562 = vld [vmem:[%s4559 + $0x8] sm:$0xf]
        %v4563 = vld [vmem:[%s4559 + $0xc] sm:$0xf]
        %v4596 = vunpack.c.l.b16 %v3926
        %v4597 = vunpack.c.l.b16 %v3927
        %v4598 = vunpack.c.l.b16 %v3929
        %v4599 = vunpack.c.l.b16 %v3930
        %v4600 = vunpack.c.l.b16 %v3932
        %v4601 = vunpack.c.l.b16 %v3933
        %v4602 = vunpack.c.l.b16 %v3935
        %v4603 = vunpack.c.l.b16 %v3936
        %v4604 = vunpack.c.l.b16 %v3938
        %v4605 = vunpack.c.l.b16 %v3939
        %v4606 = vunpack.c.l.b16 %v3941
        %v4607 = vunpack.c.l.b16 %v3942
        %v4608 = vunpack.c.l.b16 %v3944
        %v4609 = vunpack.c.l.b16 %v3945
        %v4610 = vunpack.c.l.b16 %v3947
        %v4611 = vunpack.c.l.b16 %v3948
        %v4612 = vunpack.c.l.b16 %v3950
        %v4613 = vunpack.c.l.b16 %v3951
        %v4614 = vunpack.c.l.b16 %v3953
        %v4615 = vunpack.c.l.b16 %v3954
        %v4616 = vunpack.c.l.b16 %v3956
        %v4617 = vunpack.c.l.b16 %v3957
        %v4618 = vunpack.c.l.b16 %v3959
        %v4619 = vunpack.c.l.b16 %v3960
        %v4620 = vunpack.c.l.b16 %v3962
        %v4621 = vunpack.c.l.b16 %v3963
        %v4622 = vunpack.c.l.b16 %v3965
        %v4623 = vunpack.c.l.b16 %v3966
        %v4624 = vunpack.c.l.b16 %v3968
        %v4625 = vunpack.c.l.b16 %v3969
        %v4626 = vunpack.c.l.b16 %v3971
        %v4627 = vunpack.c.l.b16 %v3972
        %v4628 = vpack.c.b16 %v4597, %v4596
        %v4629 = vpack.c.b16 %v4599, %v4598
        %v4630 = vpack.c.b16 %v4601, %v4600
        %v4631 = vpack.c.b16 %v4603, %v4602
        %v4632 = vpack.c.b16 %v4605, %v4604
        %v4633 = vpack.c.b16 %v4607, %v4606
        %v4634 = vpack.c.b16 %v4609, %v4608
        %v4635 = vpack.c.b16 %v4611, %v4610
        %v4636 = vpack.c.b16 %v4613, %v4612
        %v4637 = vpack.c.b16 %v4615, %v4614
        %v4638 = vpack.c.b16 %v4617, %v4616
        %v4639 = vpack.c.b16 %v4619, %v4618
        %v4640 = vpack.c.b16 %v4621, %v4620
        %v4641 = vpack.c.b16 %v4623, %v4622
        %v4642 = vpack.c.b16 %v4625, %v4624
        %v4643 = vpack.c.b16 %v4627, %v4626
        %v4648 = vunpack.c.l.b16 %v4560
        %v4649 = vunpack.c.l.b16 %v4561
        %v4650 = vunpack.c.l.b16 %v4562
        %v4651 = vunpack.c.l.b16 %v4563
        %v4652 = vpack.c.b16 %v4649, %v4648
        %v4653 = vpack.c.b16 %v4651, %v4650
        %v4657 = vsel %vm1354, %v4628, 0
        %v4660 = vsel %vm1354, %v4629, 0
        %v4663 = vsel %vm1354, %v4630, 0
        %v4666 = vsel %vm1354, %v4631, 0
        %v4669 = vsel %vm1354, %v4632, 0
        %v4672 = vsel %vm1354, %v4633, 0
        %v4675 = vsel %vm1354, %v4634, 0
        %v4678 = vsel %vm1354, %v4635, 0
        %v4681 = vsel %vm1354, %v4636, 0
        %v4684 = vsel %vm1354, %v4637, 0
        %v4687 = vsel %vm1354, %v4638, 0
        %v4690 = vsel %vm1354, %v4639, 0
        %v4693 = vsel %vm1354, %v4640, 0
        %v4696 = vsel %vm1354, %v4641, 0
        %v4699 = vsel %vm1354, %v4642, 0
        %v4702 = vsel %vm1354, %v4643, 0
        %4704 = vmatpush.bf16.msra.mxu0 0
        %4705 = vmatpush.bf16.msra.mxu0 0
        %4706 = vmatpush.bf16.msra.mxu0 0
        %4707 = vmatpush.bf16.msra.mxu0 0
        %4708 = vmatpush.bf16.msra.mxu0 0
        %4709 = vmatpush.bf16.msra.mxu0 0
        %4710 = vmatpush.bf16.msra.mxu0 %v4653
        %4711 = vmatpush.bf16.msra.mxu0 %v4652
        %4712 = vmatmul.bf16.gmra.mxu0 %v4657
        %v4713 = vpop.f32.mrf.mxu0
        %v4714 = vadd.f32 0.0, %v4713
        %v4715 = vpop.f32.mrf.mxu0
        %v4716 = vadd.f32 0.0, %v4715
        %4717 = vmatmul.bf16.gmra.mxu0 %v4660
        %v4718 = vpop.f32.mrf.mxu0
        %v4719 = vadd.f32 0.0, %v4718
        %v4720 = vpop.f32.mrf.mxu0
        %v4721 = vadd.f32 0.0, %v4720
        %4722 = vmatmul.bf16.gmra.mxu0 %v4663
        %v4723 = vpop.f32.mrf.mxu0
        %v4724 = vadd.f32 0.0, %v4723
        %v4725 = vpop.f32.mrf.mxu0
        %v4726 = vadd.f32 0.0, %v4725
        %4727 = vmatmul.bf16.gmra.mxu0 %v4666
        %v4728 = vpop.f32.mrf.mxu0
        %v4729 = vadd.f32 0.0, %v4728
        %v4730 = vpop.f32.mrf.mxu0
        %v4731 = vadd.f32 0.0, %v4730
        %4732 = vmatmul.bf16.gmra.mxu0 %v4669
        %v4733 = vpop.f32.mrf.mxu0
        %v4734 = vadd.f32 0.0, %v4733
        %v4735 = vpop.f32.mrf.mxu0
        %v4736 = vadd.f32 0.0, %v4735
        %4737 = vmatmul.bf16.gmra.mxu0 %v4672
        %v4738 = vpop.f32.mrf.mxu0
        %v4739 = vadd.f32 0.0, %v4738
        %v4740 = vpop.f32.mrf.mxu0
        %v4741 = vadd.f32 0.0, %v4740
        %4742 = vmatmul.bf16.gmra.mxu0 %v4675
        %v4743 = vpop.f32.mrf.mxu0
        %v4744 = vadd.f32 0.0, %v4743
        %v4745 = vpop.f32.mrf.mxu0
        %v4746 = vadd.f32 0.0, %v4745
        %4747 = vmatmul.bf16.gmra.mxu0 %v4678
        %v4748 = vpop.f32.mrf.mxu0
        %v4749 = vadd.f32 0.0, %v4748
        %v4750 = vpop.f32.mrf.mxu0
        %v4751 = vadd.f32 0.0, %v4750
        %4752 = vmatmul.bf16.gmra.mxu0 %v4681
        %v4753 = vpop.f32.mrf.mxu0
        %v4754 = vadd.f32 0.0, %v4753
        %v4755 = vpop.f32.mrf.mxu0
        %v4756 = vadd.f32 0.0, %v4755
        %4757 = vmatmul.bf16.gmra.mxu0 %v4684
        %v4758 = vpop.f32.mrf.mxu0
        %v4759 = vadd.f32 0.0, %v4758
        %v4760 = vpop.f32.mrf.mxu0
        %v4761 = vadd.f32 0.0, %v4760
        %4762 = vmatmul.bf16.gmra.mxu0 %v4687
        %v4763 = vpop.f32.mrf.mxu0
        %v4764 = vadd.f32 0.0, %v4763
        %v4765 = vpop.f32.mrf.mxu0
        %v4766 = vadd.f32 0.0, %v4765
        %4767 = vmatmul.bf16.gmra.mxu0 %v4690
        %v4768 = vpop.f32.mrf.mxu0
        %v4769 = vadd.f32 0.0, %v4768
        %v4770 = vpop.f32.mrf.mxu0
        %v4771 = vadd.f32 0.0, %v4770
        %4772 = vmatmul.bf16.gmra.mxu0 %v4693
        %v4773 = vpop.f32.mrf.mxu0
        %v4774 = vadd.f32 0.0, %v4773
        %v4775 = vpop.f32.mrf.mxu0
        %v4776 = vadd.f32 0.0, %v4775
        %4777 = vmatmul.bf16.gmra.mxu0 %v4696
        %v4778 = vpop.f32.mrf.mxu0
        %v4779 = vadd.f32 0.0, %v4778
        %v4780 = vpop.f32.mrf.mxu0
        %v4781 = vadd.f32 0.0, %v4780
        %4782 = vmatmul.bf16.gmra.mxu0 %v4699
        %v4783 = vpop.f32.mrf.mxu0
        %v4784 = vadd.f32 0.0, %v4783
        %v4785 = vpop.f32.mrf.mxu0
        %v4786 = vadd.f32 0.0, %v4785
        %4787 = vmatmul.bf16.gmra.mxu0 %v4702
        %v4788 = vpop.f32.mrf.mxu0
        %v4789 = vadd.f32 0.0, %v4788
        %v4790 = vpop.f32.mrf.mxu0
        %v4791 = vadd.f32 0.0, %v4790
        %4792 = vdwg.mxu0
        %v4793 = vadd.f32 %v4527, %v4714
        %v4794 = vadd.f32 %v4528, %v4716
        %v4795 = vadd.f32 %v4529, %v4719
        %v4796 = vadd.f32 %v4530, %v4721
        %v4797 = vadd.f32 %v4531, %v4724
        %v4798 = vadd.f32 %v4532, %v4726
        %v4799 = vadd.f32 %v4533, %v4729
        %v4800 = vadd.f32 %v4534, %v4731
        %v4801 = vadd.f32 %v4535, %v4734
        %v4802 = vadd.f32 %v4536, %v4736
        %v4803 = vadd.f32 %v4537, %v4739
        %v4804 = vadd.f32 %v4538, %v4741
        %v4805 = vadd.f32 %v4539, %v4744
        %v4806 = vadd.f32 %v4540, %v4746
        %v4807 = vadd.f32 %v4541, %v4749
        %v4808 = vadd.f32 %v4542, %v4751
        %v4809 = vadd.f32 %v4543, %v4754
        %v4810 = vadd.f32 %v4544, %v4756
        %v4811 = vadd.f32 %v4545, %v4759
        %v4812 = vadd.f32 %v4546, %v4761
        %v4813 = vadd.f32 %v4547, %v4764
        %v4814 = vadd.f32 %v4548, %v4766
        %v4815 = vadd.f32 %v4549, %v4769
        %v4816 = vadd.f32 %v4550, %v4771
        %v4817 = vadd.f32 %v4551, %v4774
        %v4818 = vadd.f32 %v4552, %v4776
        %v4819 = vadd.f32 %v4553, %v4779
        %v4820 = vadd.f32 %v4554, %v4781
        %v4821 = vadd.f32 %v4555, %v4784
        %v4822 = vadd.f32 %v4556, %v4786
        %v4823 = vadd.f32 %v4557, %v4789
        %v4824 = vadd.f32 %v4558, %v4791
        %v4825 = vld [vmem:[%s3924 + $0x4] sm:$0xf]
        %v4826 = vld [vmem:[%s3924 + $0x8] sm:$0xf]
        %v4827 = vld [vmem:[%s3924 + $0xc] sm:$0x1]
        %v4828 = vld [vmem:[%s3924 + $0x14] sm:$0xf]
        %v4829 = vld [vmem:[%s3924 + $0x18] sm:$0xf]
        %v4830 = vld [vmem:[%s3924 + $0x1c] sm:$0x1]
        %v4831 = vld [vmem:[%s3924 + $0x24] sm:$0xf]
        %v4832 = vld [vmem:[%s3924 + $0x28] sm:$0xf]
        %v4833 = vld [vmem:[%s3924 + $0x2c] sm:$0x1]
        %v4834 = vld [vmem:[%s3924 + $0x34] sm:$0xf]
        %v4835 = vld [vmem:[%s3924 + $0x38] sm:$0xf]
        %v4836 = vld [vmem:[%s3924 + $0x3c] sm:$0x1]
        %v4837 = vld [vmem:[%s3924 + $0x44] sm:$0xf]
        %v4838 = vld [vmem:[%s3924 + $0x48] sm:$0xf]
        %v4839 = vld [vmem:[%s3924 + $0x4c] sm:$0x1]
        %v4840 = vld [vmem:[%s3924 + $0x54] sm:$0xf]
        %v4841 = vld [vmem:[%s3924 + $0x58] sm:$0xf]
        %v4842 = vld [vmem:[%s3924 + $0x5c] sm:$0x1]
        %v4843 = vld [vmem:[%s3924 + $0x64] sm:$0xf]
        %v4844 = vld [vmem:[%s3924 + $0x68] sm:$0xf]
        %v4845 = vld [vmem:[%s3924 + $0x6c] sm:$0x1]
        %v4846 = vld [vmem:[%s3924 + $0x74] sm:$0xf]
        %v4847 = vld [vmem:[%s3924 + $0x78] sm:$0xf]
        %v4848 = vld [vmem:[%s3924 + $0x7c] sm:$0x1]
        %v4849 = vld [vmem:[%s3924 + $0x84] sm:$0xf]
        %v4850 = vld [vmem:[%s3924 + $0x88] sm:$0xf]
        %v4851 = vld [vmem:[%s3924 + $0x8c] sm:$0x1]
        %v4852 = vld [vmem:[%s3924 + $0x94] sm:$0xf]
        %v4853 = vld [vmem:[%s3924 + $0x98] sm:$0xf]
        %v4854 = vld [vmem:[%s3924 + $0x9c] sm:$0x1]
        %v4855 = vld [vmem:[%s3924 + $0xa4] sm:$0xf]
        %v4856 = vld [vmem:[%s3924 + $0xa8] sm:$0xf]
        %v4857 = vld [vmem:[%s3924 + $0xac] sm:$0x1]
        %v4858 = vld [vmem:[%s3924 + $0xb4] sm:$0xf]
        %v4859 = vld [vmem:[%s3924 + $0xb8] sm:$0xf]
        %v4860 = vld [vmem:[%s3924 + $0xbc] sm:$0x1]
        %v4861 = vld [vmem:[%s3924 + $0xc4] sm:$0xf]
        %v4862 = vld [vmem:[%s3924 + $0xc8] sm:$0xf]
        %v4863 = vld [vmem:[%s3924 + $0xcc] sm:$0x1]
        %v4864 = vld [vmem:[%s3924 + $0xd4] sm:$0xf]
        %v4865 = vld [vmem:[%s3924 + $0xd8] sm:$0xf]
        %v4866 = vld [vmem:[%s3924 + $0xdc] sm:$0x1]
        %v4867 = vld [vmem:[%s3924 + $0xe4] sm:$0xf]
        %v4868 = vld [vmem:[%s3924 + $0xe8] sm:$0xf]
        %v4869 = vld [vmem:[%s3924 + $0xec] sm:$0x1]
        %v4870 = vld [vmem:[%s3924 + $0xf4] sm:$0xf]
        %v4871 = vld [vmem:[%s3924 + $0xf8] sm:$0xf]
        %v4872 = vld [vmem:[%s3924 + $0xfc] sm:$0x1]
        %v4874 = vshrl.u32 %v4825, 16
        %v4876 = vrot.slane %v4874, 4
        %v4877 = vshll.u32 %v4825, 16
        %v4879 = vrot.slane %v4877, 5
        %v4880 = vor.u32 %v4876, %v4879
        %v4881 = vrot.slane %v4880, 4
        %v4883 = vshll.u32 %v4826, 16
        %v4885 = vrot.slane %v4883, 5
        %v4886 = vsel %vm1739, %v4881, %v4885
        %v4887 = vshrl.u32 %v4826, 16
        %v4889 = vrot.slane %v4887, 4
        %v4890 = vor.u32 %v4889, %v4885
        %v4891 = vrot.slane %v4890, 4
        %v4893 = vshll.u32 %v4827, 16
        %v4895 = vrot.slane %v4893, 5
        %v4896 = vsel %vm1739, %v4891, %v4895
        %v4898 = vshrl.u32 %v4828, 16
        %v4900 = vrot.slane %v4898, 4
        %v4901 = vshll.u32 %v4828, 16
        %v4903 = vrot.slane %v4901, 5
        %v4904 = vor.u32 %v4900, %v4903
        %v4905 = vrot.slane %v4904, 4
        %v4907 = vshll.u32 %v4829, 16
        %v4909 = vrot.slane %v4907, 5
        %v4910 = vsel %vm1739, %v4905, %v4909
        %v4911 = vshrl.u32 %v4829, 16
        %v4913 = vrot.slane %v4911, 4
        %v4914 = vor.u32 %v4913, %v4909
        %v4915 = vrot.slane %v4914, 4
        %v4917 = vshll.u32 %v4830, 16
        %v4919 = vrot.slane %v4917, 5
        %v4920 = vsel %vm1739, %v4915, %v4919
        %v4922 = vshrl.u32 %v4831, 16
        %v4924 = vrot.slane %v4922, 4
        %v4925 = vshll.u32 %v4831, 16
        %v4927 = vrot.slane %v4925, 5
        %v4928 = vor.u32 %v4924, %v4927
        %v4929 = vrot.slane %v4928, 4
        %v4931 = vshll.u32 %v4832, 16
        %v4933 = vrot.slane %v4931, 5
        %v4934 = vsel %vm1739, %v4929, %v4933
        %v4935 = vshrl.u32 %v4832, 16
        %v4937 = vrot.slane %v4935, 4
        %v4938 = vor.u32 %v4937, %v4933
        %v4939 = vrot.slane %v4938, 4
        %v4941 = vshll.u32 %v4833, 16
        %v4943 = vrot.slane %v4941, 5
        %v4944 = vsel %vm1739, %v4939, %v4943
        %v4946 = vshrl.u32 %v4834, 16
        %v4948 = vrot.slane %v4946, 4
        %v4949 = vshll.u32 %v4834, 16
        %v4951 = vrot.slane %v4949, 5
        %v4952 = vor.u32 %v4948, %v4951
        %v4953 = vrot.slane %v4952, 4
        %v4955 = vshll.u32 %v4835, 16
        %v4957 = vrot.slane %v4955, 5
        %v4958 = vsel %vm1739, %v4953, %v4957
        %v4959 = vshrl.u32 %v4835, 16
        %v4961 = vrot.slane %v4959, 4
        %v4962 = vor.u32 %v4961, %v4957
        %v4963 = vrot.slane %v4962, 4
        %v4965 = vshll.u32 %v4836, 16
        %v4967 = vrot.slane %v4965, 5
        %v4968 = vsel %vm1739, %v4963, %v4967
        %v4970 = vshrl.u32 %v4837, 16
        %v4972 = vrot.slane %v4970, 4
        %v4973 = vshll.u32 %v4837, 16
        %v4975 = vrot.slane %v4973, 5
        %v4976 = vor.u32 %v4972, %v4975
        %v4977 = vrot.slane %v4976, 4
        %v4979 = vshll.u32 %v4838, 16
        %v4981 = vrot.slane %v4979, 5
        %v4982 = vsel %vm1739, %v4977, %v4981
        %v4983 = vshrl.u32 %v4838, 16
        %v4985 = vrot.slane %v4983, 4
        %v4986 = vor.u32 %v4985, %v4981
        %v4987 = vrot.slane %v4986, 4
        %v4989 = vshll.u32 %v4839, 16
        %v4991 = vrot.slane %v4989, 5
        %v4992 = vsel %vm1739, %v4987, %v4991
        %v4994 = vshrl.u32 %v4840, 16
        %v4996 = vrot.slane %v4994, 4
        %v4997 = vshll.u32 %v4840, 16
        %v4999 = vrot.slane %v4997, 5
        %v5000 = vor.u32 %v4996, %v4999
        %v5001 = vrot.slane %v5000, 4
        %v5003 = vshll.u32 %v4841, 16
        %v5005 = vrot.slane %v5003, 5
        %v5006 = vsel %vm1739, %v5001, %v5005
        %v5007 = vshrl.u32 %v4841, 16
        %v5009 = vrot.slane %v5007, 4
        %v5010 = vor.u32 %v5009, %v5005
        %v5011 = vrot.slane %v5010, 4
        %v5013 = vshll.u32 %v4842, 16
        %v5015 = vrot.slane %v5013, 5
        %v5016 = vsel %vm1739, %v5011, %v5015
        %v5018 = vshrl.u32 %v4843, 16
        %v5020 = vrot.slane %v5018, 4
        %v5021 = vshll.u32 %v4843, 16
        %v5023 = vrot.slane %v5021, 5
        %v5024 = vor.u32 %v5020, %v5023
        %v5025 = vrot.slane %v5024, 4
        %v5027 = vshll.u32 %v4844, 16
        %v5029 = vrot.slane %v5027, 5
        %v5030 = vsel %vm1739, %v5025, %v5029
        %v5031 = vshrl.u32 %v4844, 16
        %v5033 = vrot.slane %v5031, 4
        %v5034 = vor.u32 %v5033, %v5029
        %v5035 = vrot.slane %v5034, 4
        %v5037 = vshll.u32 %v4845, 16
        %v5039 = vrot.slane %v5037, 5
        %v5040 = vsel %vm1739, %v5035, %v5039
        %v5042 = vshrl.u32 %v4846, 16
        %v5044 = vrot.slane %v5042, 4
        %v5045 = vshll.u32 %v4846, 16
        %v5047 = vrot.slane %v5045, 5
        %v5048 = vor.u32 %v5044, %v5047
        %v5049 = vrot.slane %v5048, 4
        %v5051 = vshll.u32 %v4847, 16
        %v5053 = vrot.slane %v5051, 5
        %v5054 = vsel %vm1739, %v5049, %v5053
        %v5055 = vshrl.u32 %v4847, 16
        %v5057 = vrot.slane %v5055, 4
        %v5058 = vor.u32 %v5057, %v5053
        %v5059 = vrot.slane %v5058, 4
        %v5061 = vshll.u32 %v4848, 16
        %v5063 = vrot.slane %v5061, 5
        %v5064 = vsel %vm1739, %v5059, %v5063
        %v5066 = vshrl.u32 %v4849, 16
        %v5068 = vrot.slane %v5066, 4
        %v5069 = vshll.u32 %v4849, 16
        %v5071 = vrot.slane %v5069, 5
        %v5072 = vor.u32 %v5068, %v5071
        %v5073 = vrot.slane %v5072, 4
        %v5075 = vshll.u32 %v4850, 16
        %v5077 = vrot.slane %v5075, 5
        %v5078 = vsel %vm1739, %v5073, %v5077
        %v5079 = vshrl.u32 %v4850, 16
        %v5081 = vrot.slane %v5079, 4
        %v5082 = vor.u32 %v5081, %v5077
        %v5083 = vrot.slane %v5082, 4
        %v5085 = vshll.u32 %v4851, 16
        %v5087 = vrot.slane %v5085, 5
        %v5088 = vsel %vm1739, %v5083, %v5087
        %v5090 = vshrl.u32 %v4852, 16
        %v5092 = vrot.slane %v5090, 4
        %v5093 = vshll.u32 %v4852, 16
        %v5095 = vrot.slane %v5093, 5
        %v5096 = vor.u32 %v5092, %v5095
        %v5097 = vrot.slane %v5096, 4
        %v5099 = vshll.u32 %v4853, 16
        %v5101 = vrot.slane %v5099, 5
        %v5102 = vsel %vm1739, %v5097, %v5101
        %v5103 = vshrl.u32 %v4853, 16
        %v5105 = vrot.slane %v5103, 4
        %v5106 = vor.u32 %v5105, %v5101
        %v5107 = vrot.slane %v5106, 4
        %v5109 = vshll.u32 %v4854, 16
        %v5111 = vrot.slane %v5109, 5
        %v5112 = vsel %vm1739, %v5107, %v5111
        %v5114 = vshrl.u32 %v4855, 16
        %v5116 = vrot.slane %v5114, 4
        %v5117 = vshll.u32 %v4855, 16
        %v5119 = vrot.slane %v5117, 5
        %v5120 = vor.u32 %v5116, %v5119
        %v5121 = vrot.slane %v5120, 4
        %v5123 = vshll.u32 %v4856, 16
        %v5125 = vrot.slane %v5123, 5
        %v5126 = vsel %vm1739, %v5121, %v5125
        %v5127 = vshrl.u32 %v4856, 16
        %v5129 = vrot.slane %v5127, 4
        %v5130 = vor.u32 %v5129, %v5125
        %v5131 = vrot.slane %v5130, 4
        %v5133 = vshll.u32 %v4857, 16
        %v5135 = vrot.slane %v5133, 5
        %v5136 = vsel %vm1739, %v5131, %v5135
        %v5138 = vshrl.u32 %v4858, 16
        %v5140 = vrot.slane %v5138, 4
        %v5141 = vshll.u32 %v4858, 16
        %v5143 = vrot.slane %v5141, 5
        %v5144 = vor.u32 %v5140, %v5143
        %v5145 = vrot.slane %v5144, 4
        %v5147 = vshll.u32 %v4859, 16
        %v5149 = vrot.slane %v5147, 5
        %v5150 = vsel %vm1739, %v5145, %v5149
        %v5151 = vshrl.u32 %v4859, 16
        %v5153 = vrot.slane %v5151, 4
        %v5154 = vor.u32 %v5153, %v5149
        %v5155 = vrot.slane %v5154, 4
        %v5157 = vshll.u32 %v4860, 16
        %v5159 = vrot.slane %v5157, 5
        %v5160 = vsel %vm1739, %v5155, %v5159
        %v5162 = vshrl.u32 %v4861, 16
        %v5164 = vrot.slane %v5162, 4
        %v5165 = vshll.u32 %v4861, 16
        %v5167 = vrot.slane %v5165, 5
        %v5168 = vor.u32 %v5164, %v5167
        %v5169 = vrot.slane %v5168, 4
        %v5171 = vshll.u32 %v4862, 16
        %v5173 = vrot.slane %v5171, 5
        %v5174 = vsel %vm1739, %v5169, %v5173
        %v5175 = vshrl.u32 %v4862, 16
        %v5177 = vrot.slane %v5175, 4
        %v5178 = vor.u32 %v5177, %v5173
        %v5179 = vrot.slane %v5178, 4
        %v5181 = vshll.u32 %v4863, 16
        %v5183 = vrot.slane %v5181, 5
        %v5184 = vsel %vm1739, %v5179, %v5183
        %v5186 = vshrl.u32 %v4864, 16
        %v5188 = vrot.slane %v5186, 4
        %v5189 = vshll.u32 %v4864, 16
        %v5191 = vrot.slane %v5189, 5
        %v5192 = vor.u32 %v5188, %v5191
        %v5193 = vrot.slane %v5192, 4
        %v5195 = vshll.u32 %v4865, 16
        %v5197 = vrot.slane %v5195, 5
        %v5198 = vsel %vm1739, %v5193, %v5197
        %v5199 = vshrl.u32 %v4865, 16
        %v5201 = vrot.slane %v5199, 4
        %v5202 = vor.u32 %v5201, %v5197
        %v5203 = vrot.slane %v5202, 4
        %v5205 = vshll.u32 %v4866, 16
        %v5207 = vrot.slane %v5205, 5
        %v5208 = vsel %vm1739, %v5203, %v5207
        %v5210 = vshrl.u32 %v4867, 16
        %v5212 = vrot.slane %v5210, 4
        %v5213 = vshll.u32 %v4867, 16
        %v5215 = vrot.slane %v5213, 5
        %v5216 = vor.u32 %v5212, %v5215
        %v5217 = vrot.slane %v5216, 4
        %v5219 = vshll.u32 %v4868, 16
        %v5221 = vrot.slane %v5219, 5
        %v5222 = vsel %vm1739, %v5217, %v5221
        %v5223 = vshrl.u32 %v4868, 16
        %v5225 = vrot.slane %v5223, 4
        %v5226 = vor.u32 %v5225, %v5221
        %v5227 = vrot.slane %v5226, 4
        %v5229 = vshll.u32 %v4869, 16
        %v5231 = vrot.slane %v5229, 5
        %v5232 = vsel %vm1739, %v5227, %v5231
        %v5234 = vshrl.u32 %v4870, 16
        %v5236 = vrot.slane %v5234, 4
        %v5237 = vshll.u32 %v4870, 16
        %v5239 = vrot.slane %v5237, 5
        %v5240 = vor.u32 %v5236, %v5239
        %v5241 = vrot.slane %v5240, 4
        %v5243 = vshll.u32 %v4871, 16
        %v5245 = vrot.slane %v5243, 5
        %v5246 = vsel %vm1739, %v5241, %v5245
        %v5247 = vshrl.u32 %v4871, 16
        %v5249 = vrot.slane %v5247, 4
        %v5250 = vor.u32 %v5249, %v5245
        %v5251 = vrot.slane %v5250, 4
        %v5253 = vshll.u32 %v4872, 16
        %v5255 = vrot.slane %v5253, 5
        %v5256 = vsel %vm1739, %v5251, %v5255
        %s5257 = scalar_lea.vmem %s3, 128
        %v5258 = vld [vmem:[%s5257] sm:$0xf]
        %v5259 = vld [vmem:[%s5257 + $0x4] sm:$0xf]
        %v5260 = vld [vmem:[%s5257 + $0x8] sm:$0xf]
        %v5261 = vld [vmem:[%s5257 + $0xc] sm:$0xf]
        %v5262 = vunpack.c.l.b16 %v4886
        %v5263 = vunpack.c.l.b16 %v4896
        %v5264 = vunpack.c.l.b16 %v4910
        %v5265 = vunpack.c.l.b16 %v4920
        %v5266 = vunpack.c.l.b16 %v4934
        %v5267 = vunpack.c.l.b16 %v4944
        %v5268 = vunpack.c.l.b16 %v4958
        %v5269 = vunpack.c.l.b16 %v4968
        %v5270 = vunpack.c.l.b16 %v4982
        %v5271 = vunpack.c.l.b16 %v4992
        %v5272 = vunpack.c.l.b16 %v5006
        %v5273 = vunpack.c.l.b16 %v5016
        %v5274 = vunpack.c.l.b16 %v5030
        %v5275 = vunpack.c.l.b16 %v5040
        %v5276 = vunpack.c.l.b16 %v5054
        %v5277 = vunpack.c.l.b16 %v5064
        %v5278 = vunpack.c.l.b16 %v5078
        %v5279 = vunpack.c.l.b16 %v5088
        %v5280 = vunpack.c.l.b16 %v5102
        %v5281 = vunpack.c.l.b16 %v5112
        %v5282 = vunpack.c.l.b16 %v5126
        %v5283 = vunpack.c.l.b16 %v5136
        %v5284 = vunpack.c.l.b16 %v5150
        %v5285 = vunpack.c.l.b16 %v5160
        %v5286 = vunpack.c.l.b16 %v5174
        %v5287 = vunpack.c.l.b16 %v5184
        %v5288 = vunpack.c.l.b16 %v5198
        %v5289 = vunpack.c.l.b16 %v5208
        %v5290 = vunpack.c.l.b16 %v5222
        %v5291 = vunpack.c.l.b16 %v5232
        %v5292 = vunpack.c.l.b16 %v5246
        %v5293 = vunpack.c.l.b16 %v5256
        %v5294 = vpack.c.b16 %v5263, %v5262
        %v5295 = vpack.c.b16 %v5265, %v5264
        %v5296 = vpack.c.b16 %v5267, %v5266
        %v5297 = vpack.c.b16 %v5269, %v5268
        %v5298 = vpack.c.b16 %v5271, %v5270
        %v5299 = vpack.c.b16 %v5273, %v5272
        %v5300 = vpack.c.b16 %v5275, %v5274
        %v5301 = vpack.c.b16 %v5277, %v5276
        %v5302 = vpack.c.b16 %v5279, %v5278
        %v5303 = vpack.c.b16 %v5281, %v5280
        %v5304 = vpack.c.b16 %v5283, %v5282
        %v5305 = vpack.c.b16 %v5285, %v5284
        %v5306 = vpack.c.b16 %v5287, %v5286
        %v5307 = vpack.c.b16 %v5289, %v5288
        %v5308 = vpack.c.b16 %v5291, %v5290
        %v5309 = vpack.c.b16 %v5293, %v5292
        %v5314 = vunpack.c.l.b16 %v5258
        %v5315 = vunpack.c.l.b16 %v5259
        %v5316 = vunpack.c.l.b16 %v5260
        %v5317 = vunpack.c.l.b16 %v5261
        %v5318 = vpack.c.b16 %v5315, %v5314
        %v5319 = vpack.c.b16 %v5317, %v5316
        %v5323 = vsel %vm1354, %v5294, 0
        %v5326 = vsel %vm1354, %v5295, 0
        %v5329 = vsel %vm1354, %v5296, 0
        %v5332 = vsel %vm1354, %v5297, 0
        %v5335 = vsel %vm1354, %v5298, 0
        %v5338 = vsel %vm1354, %v5299, 0
        %v5341 = vsel %vm1354, %v5300, 0
        %v5344 = vsel %vm1354, %v5301, 0
        %v5347 = vsel %vm1354, %v5302, 0
        %v5350 = vsel %vm1354, %v5303, 0
        %v5353 = vsel %vm1354, %v5304, 0
        %v5356 = vsel %vm1354, %v5305, 0
        %v5359 = vsel %vm1354, %v5306, 0
        %v5362 = vsel %vm1354, %v5307, 0
        %v5365 = vsel %vm1354, %v5308, 0
        %v5368 = vsel %vm1354, %v5309, 0
        %5370 = vmatpush.bf16.msra.mxu0 0
        %5371 = vmatpush.bf16.msra.mxu0 0
        %5372 = vmatpush.bf16.msra.mxu0 0
        %5373 = vmatpush.bf16.msra.mxu0 0
        %5374 = vmatpush.bf16.msra.mxu0 0
        %5375 = vmatpush.bf16.msra.mxu0 0
        %5376 = vmatpush.bf16.msra.mxu0 %v5319
        %5377 = vmatpush.bf16.msra.mxu0 %v5318
        %5378 = vmatmul.bf16.gmra.mxu0 %v5323
        %v5379 = vpop.f32.mrf.mxu0
        %v5380 = vadd.f32 0.0, %v5379
        %v5381 = vpop.f32.mrf.mxu0
        %v5382 = vadd.f32 0.0, %v5381
        %5383 = vmatmul.bf16.gmra.mxu0 %v5326
        %v5384 = vpop.f32.mrf.mxu0
        %v5385 = vadd.f32 0.0, %v5384
        %v5386 = vpop.f32.mrf.mxu0
        %v5387 = vadd.f32 0.0, %v5386
        %5388 = vmatmul.bf16.gmra.mxu0 %v5329
        %v5389 = vpop.f32.mrf.mxu0
        %v5390 = vadd.f32 0.0, %v5389
        %v5391 = vpop.f32.mrf.mxu0
        %v5392 = vadd.f32 0.0, %v5391
        %5393 = vmatmul.bf16.gmra.mxu0 %v5332
        %v5394 = vpop.f32.mrf.mxu0
        %v5395 = vadd.f32 0.0, %v5394
        %v5396 = vpop.f32.mrf.mxu0
        %v5397 = vadd.f32 0.0, %v5396
        %5398 = vmatmul.bf16.gmra.mxu0 %v5335
        %v5399 = vpop.f32.mrf.mxu0
        %v5400 = vadd.f32 0.0, %v5399
        %v5401 = vpop.f32.mrf.mxu0
        %v5402 = vadd.f32 0.0, %v5401
        %5403 = vmatmul.bf16.gmra.mxu0 %v5338
        %v5404 = vpop.f32.mrf.mxu0
        %v5405 = vadd.f32 0.0, %v5404
        %v5406 = vpop.f32.mrf.mxu0
        %v5407 = vadd.f32 0.0, %v5406
        %5408 = vmatmul.bf16.gmra.mxu0 %v5341
        %v5409 = vpop.f32.mrf.mxu0
        %v5410 = vadd.f32 0.0, %v5409
        %v5411 = vpop.f32.mrf.mxu0
        %v5412 = vadd.f32 0.0, %v5411
        %5413 = vmatmul.bf16.gmra.mxu0 %v5344
        %v5414 = vpop.f32.mrf.mxu0
        %v5415 = vadd.f32 0.0, %v5414
        %v5416 = vpop.f32.mrf.mxu0
        %v5417 = vadd.f32 0.0, %v5416
        %5418 = vmatmul.bf16.gmra.mxu0 %v5347
        %v5419 = vpop.f32.mrf.mxu0
        %v5420 = vadd.f32 0.0, %v5419
        %v5421 = vpop.f32.mrf.mxu0
        %v5422 = vadd.f32 0.0, %v5421
        %5423 = vmatmul.bf16.gmra.mxu0 %v5350
        %v5424 = vpop.f32.mrf.mxu0
        %v5425 = vadd.f32 0.0, %v5424
        %v5426 = vpop.f32.mrf.mxu0
        %v5427 = vadd.f32 0.0, %v5426
        %5428 = vmatmul.bf16.gmra.mxu0 %v5353
        %v5429 = vpop.f32.mrf.mxu0
        %v5430 = vadd.f32 0.0, %v5429
        %v5431 = vpop.f32.mrf.mxu0
        %v5432 = vadd.f32 0.0, %v5431
        %5433 = vmatmul.bf16.gmra.mxu0 %v5356
        %v5434 = vpop.f32.mrf.mxu0
        %v5435 = vadd.f32 0.0, %v5434
        %v5436 = vpop.f32.mrf.mxu0
        %v5437 = vadd.f32 0.0, %v5436
        %5438 = vmatmul.bf16.gmra.mxu0 %v5359
        %v5439 = vpop.f32.mrf.mxu0
        %v5440 = vadd.f32 0.0, %v5439
        %v5441 = vpop.f32.mrf.mxu0
        %v5442 = vadd.f32 0.0, %v5441
        %5443 = vmatmul.bf16.gmra.mxu0 %v5362
        %v5444 = vpop.f32.mrf.mxu0
        %v5445 = vadd.f32 0.0, %v5444
        %v5446 = vpop.f32.mrf.mxu0
        %v5447 = vadd.f32 0.0, %v5446
        %5448 = vmatmul.bf16.gmra.mxu0 %v5365
        %v5449 = vpop.f32.mrf.mxu0
        %v5450 = vadd.f32 0.0, %v5449
        %v5451 = vpop.f32.mrf.mxu0
        %v5452 = vadd.f32 0.0, %v5451
        %5453 = vmatmul.bf16.gmra.mxu0 %v5368
        %v5454 = vpop.f32.mrf.mxu0
        %v5455 = vadd.f32 0.0, %v5454
        %v5456 = vpop.f32.mrf.mxu0
        %v5457 = vadd.f32 0.0, %v5456
        %5458 = vdwg.mxu0
        %v5459 = vadd.f32 %v4793, %v5380
        %v5460 = vadd.f32 %v4794, %v5382
        %v5461 = vadd.f32 %v4795, %v5385
        %v5462 = vadd.f32 %v4796, %v5387
        %v5463 = vadd.f32 %v4797, %v5390
        %v5464 = vadd.f32 %v4798, %v5392
        %v5465 = vadd.f32 %v4799, %v5395
        %v5466 = vadd.f32 %v4800, %v5397
        %v5467 = vadd.f32 %v4801, %v5400
        %v5468 = vadd.f32 %v4802, %v5402
        %v5469 = vadd.f32 %v4803, %v5405
        %v5470 = vadd.f32 %v4804, %v5407
        %v5471 = vadd.f32 %v4805, %v5410
        %v5472 = vadd.f32 %v4806, %v5412
        %v5473 = vadd.f32 %v4807, %v5415
        %v5474 = vadd.f32 %v4808, %v5417
        %v5475 = vadd.f32 %v4809, %v5420
        %v5476 = vadd.f32 %v4810, %v5422
        %v5477 = vadd.f32 %v4811, %v5425
        %v5478 = vadd.f32 %v4812, %v5427
        %v5479 = vadd.f32 %v4813, %v5430
        %v5480 = vadd.f32 %v4814, %v5432
        %v5481 = vadd.f32 %v4815, %v5435
        %v5482 = vadd.f32 %v4816, %v5437
        %v5483 = vadd.f32 %v4817, %v5440
        %v5484 = vadd.f32 %v4818, %v5442
        %v5485 = vadd.f32 %v4819, %v5445
        %v5486 = vadd.f32 %v4820, %v5447
        %v5487 = vadd.f32 %v4821, %v5450
        %v5488 = vadd.f32 %v4822, %v5452
        %v5489 = vadd.f32 %v4823, %v5455
        %v5490 = vadd.f32 %v4824, %v5457
        %v5491 = vld [vmem:[%s4] sm:$0x3]
        %v5492 = vperm.slane %v5491, 0
        %v5493 = vmul.f32 %v5492, %v5459
        %v5494 = vmul.f32 %v5492, %v5460
        %v5495 = vmul.f32 %v5492, %v5461
        %v5496 = vmul.f32 %v5492, %v5462
        %v5497 = vmul.f32 %v5492, %v5463
        %v5498 = vmul.f32 %v5492, %v5464
        %v5499 = vmul.f32 %v5492, %v5465
        %v5500 = vmul.f32 %v5492, %v5466
        %v5501 = vmul.f32 %v5492, %v5467
        %v5502 = vmul.f32 %v5492, %v5468
        %v5503 = vmul.f32 %v5492, %v5469
        %v5504 = vmul.f32 %v5492, %v5470
        %v5505 = vmul.f32 %v5492, %v5471
        %v5506 = vmul.f32 %v5492, %v5472
        %v5507 = vmul.f32 %v5492, %v5473
        %v5508 = vmul.f32 %v5492, %v5474
        %v5509 = vmul.f32 %v5492, %v5475
        %v5510 = vmul.f32 %v5492, %v5476
        %v5511 = vmul.f32 %v5492, %v5477
        %v5512 = vmul.f32 %v5492, %v5478
        %v5513 = vmul.f32 %v5492, %v5479
        %v5514 = vmul.f32 %v5492, %v5480
        %v5515 = vmul.f32 %v5492, %v5481
        %v5516 = vmul.f32 %v5492, %v5482
        %v5517 = vmul.f32 %v5492, %v5483
        %v5518 = vmul.f32 %v5492, %v5484
        %v5519 = vmul.f32 %v5492, %v5485
        %v5520 = vmul.f32 %v5492, %v5486
        %v5521 = vmul.f32 %v5492, %v5487
        %v5522 = vmul.f32 %v5492, %v5488
        %v5523 = vmul.f32 %v5492, %v5489
        %v5524 = vmul.f32 %v5492, %v5490
        %v5525 = vperm.slane %v5491, 1
        %v5526 = vadd.f32 %v5493, %v5525
        %v5527 = vadd.f32 %v5494, %v5525
        %v5528 = vadd.f32 %v5495, %v5525
        %v5529 = vadd.f32 %v5496, %v5525
        %v5530 = vadd.f32 %v5497, %v5525
        %v5531 = vadd.f32 %v5498, %v5525
        %v5532 = vadd.f32 %v5499, %v5525
        %v5533 = vadd.f32 %v5500, %v5525
        %v5534 = vadd.f32 %v5501, %v5525
        %v5535 = vadd.f32 %v5502, %v5525
        %v5536 = vadd.f32 %v5503, %v5525
        %v5537 = vadd.f32 %v5504, %v5525
        %v5538 = vadd.f32 %v5505, %v5525
        %v5539 = vadd.f32 %v5506, %v5525
        %v5540 = vadd.f32 %v5507, %v5525
        %v5541 = vadd.f32 %v5508, %v5525
        %v5542 = vadd.f32 %v5509, %v5525
        %v5543 = vadd.f32 %v5510, %v5525
        %v5544 = vadd.f32 %v5511, %v5525
        %v5545 = vadd.f32 %v5512, %v5525
        %v5546 = vadd.f32 %v5513, %v5525
        %v5547 = vadd.f32 %v5514, %v5525
        %v5548 = vadd.f32 %v5515, %v5525
        %v5549 = vadd.f32 %v5516, %v5525
        %v5550 = vadd.f32 %v5517, %v5525
        %v5551 = vadd.f32 %v5518, %v5525
        %v5552 = vadd.f32 %v5519, %v5525
        %v5553 = vadd.f32 %v5520, %v5525
        %v5554 = vadd.f32 %v5521, %v5525
        %v5555 = vadd.f32 %v5522, %v5525
        %v5556 = vadd.f32 %v5523, %v5525
        %v5557 = vadd.f32 %v5524, %v5525
        %v5558 = vadd.f32 %v530, %v5526
        %v5559 = vadd.f32 %v531, %v5527
        %v5560 = vadd.f32 %v532, %v5528
        %v5561 = vadd.f32 %v533, %v5529
        %v5562 = vadd.f32 %v534, %v5530
        %v5563 = vadd.f32 %v535, %v5531
        %v5564 = vadd.f32 %v536, %v5532
        %v5565 = vadd.f32 %v537, %v5533
        %v5566 = vadd.f32 %v538, %v5534
        %v5567 = vadd.f32 %v539, %v5535
        %v5568 = vadd.f32 %v540, %v5536
        %v5569 = vadd.f32 %v541, %v5537
        %v5570 = vadd.f32 %v542, %v5538
        %v5571 = vadd.f32 %v543, %v5539
        %v5572 = vadd.f32 %v544, %v5540
        %v5573 = vadd.f32 %v545, %v5541
        %v5574 = vadd.f32 %v546, %v5542
        %v5575 = vadd.f32 %v547, %v5543
        %v5576 = vadd.f32 %v548, %v5544
        %v5577 = vadd.f32 %v549, %v5545
        %v5578 = vadd.f32 %v550, %v5546
        %v5579 = vadd.f32 %v551, %v5547
        %v5580 = vadd.f32 %v552, %v5548
        %v5581 = vadd.f32 %v553, %v5549
        %v5582 = vadd.f32 %v554, %v5550
        %v5583 = vadd.f32 %v555, %v5551
        %v5584 = vadd.f32 %v556, %v5552
        %v5585 = vadd.f32 %v557, %v5553
        %v5586 = vadd.f32 %v558, %v5554
        %v5587 = vadd.f32 %v559, %v5555
        %v5588 = vadd.f32 %v560, %v5556
        %v5589 = vadd.f32 %v561, %v5557
        %5590 = vxpose.xlu0.b32.start [1/16] %v5558, 128
        %5591 = vxpose.xlu0.b32.cont [2/16] %v5559, 128
        %5592 = vxpose.xlu0.b32.cont [3/16] %v5560, 128
        %5593 = vxpose.xlu0.b32.cont [4/16] %v5561, 128
        %5594 = vxpose.xlu0.b32.cont [5/16] %v5562, 128
        %5595 = vxpose.xlu0.b32.cont [6/16] %v5563, 128
        %5596 = vxpose.xlu0.b32.cont [7/16] %v5564, 128
        %5597 = vxpose.xlu0.b32.cont [8/16] %v5565, 128
        %5598 = vxpose.xlu0.b32.cont [9/16] %v5566, 128
        %5599 = vxpose.xlu0.b32.cont [10/16] %v5567, 128
        %5600 = vxpose.xlu0.b32.cont [11/16] %v5568, 128
        %5601 = vxpose.xlu0.b32.cont [12/16] %v5569, 128
        %5602 = vxpose.xlu0.b32.cont [13/16] %v5570, 128
        %5603 = vxpose.xlu0.b32.cont [14/16] %v5571, 128
        %5604 = vxpose.xlu0.b32.cont [15/16] %v5572, 128
        %5605 = vxpose.xlu0.b32.end [16/16] %v5573, 128
        %v5606 = vpop.trf.xlu0
        %v5607 = vpop.trf.xlu0
        %v5608 = vpop.trf.xlu0
        %v5609 = vpop.trf.xlu0
        %v5610 = vpop.trf.xlu0
        %v5611 = vpop.trf.xlu0
        %v5612 = vpop.trf.xlu0
        %v5613 = vpop.trf.xlu0
        %v5614 = vpop.trf.xlu0
        %v5615 = vpop.trf.xlu0
        %v5616 = vpop.trf.xlu0
        %v5617 = vpop.trf.xlu0
        %v5618 = vpop.trf.xlu0
        %v5619 = vpop.trf.xlu0
        %v5620 = vpop.trf.xlu0
        %v5621 = vpop.trf.xlu0
        %5622 = vxpose.xlu0.b32.start [1/16] %v5574, 128
        %5623 = vxpose.xlu0.b32.cont [2/16] %v5575, 128
        %5624 = vxpose.xlu0.b32.cont [3/16] %v5576, 128
        %5625 = vxpose.xlu0.b32.cont [4/16] %v5577, 128
        %5626 = vxpose.xlu0.b32.cont [5/16] %v5578, 128
        %5627 = vxpose.xlu0.b32.cont [6/16] %v5579, 128
        %5628 = vxpose.xlu0.b32.cont [7/16] %v5580, 128
        %5629 = vxpose.xlu0.b32.cont [8/16] %v5581, 128
        %5630 = vxpose.xlu0.b32.cont [9/16] %v5582, 128
        %5631 = vxpose.xlu0.b32.cont [10/16] %v5583, 128
        %5632 = vxpose.xlu0.b32.cont [11/16] %v5584, 128
        %5633 = vxpose.xlu0.b32.cont [12/16] %v5585, 128
        %5634 = vxpose.xlu0.b32.cont [13/16] %v5586, 128
        %5635 = vxpose.xlu0.b32.cont [14/16] %v5587, 128
        %5636 = vxpose.xlu0.b32.cont [15/16] %v5588, 128
        %5637 = vxpose.xlu0.b32.end [16/16] %v5589, 128
        %v5638 = vpop.trf.xlu0
        %v5639 = vpop.trf.xlu0
        %v5640 = vpop.trf.xlu0
        %v5641 = vpop.trf.xlu0
        %v5642 = vpop.trf.xlu0
        %v5643 = vpop.trf.xlu0
        %v5644 = vpop.trf.xlu0
        %v5645 = vpop.trf.xlu0
        %v5646 = vpop.trf.xlu0
        %v5647 = vpop.trf.xlu0
        %v5648 = vpop.trf.xlu0
        %v5649 = vpop.trf.xlu0
        %v5650 = vpop.trf.xlu0
        %v5651 = vpop.trf.xlu0
        %v5652 = vpop.trf.xlu0
        %v5653 = vpop.trf.xlu0
        %5654 = vst [vmem:[%s275] sm:$0xff] %v5606
        %5655 = vst [vmem:[%s275 + $0x8] sm:$0xff] %v5638
        %5656 = vst [vmem:[%s275 + $0x10] sm:$0xff] %v5607
        %5657 = vst [vmem:[%s275 + $0x18] sm:$0xff] %v5639
        %5658 = vst [vmem:[%s275 + $0x20] sm:$0xff] %v5608
        %5659 = vst [vmem:[%s275 + $0x28] sm:$0xff] %v5640
        %5660 = vst [vmem:[%s275 + $0x30] sm:$0xff] %v5609
        %5661 = vst [vmem:[%s275 + $0x38] sm:$0xff] %v5641
        %vm5662 = vcmp.ge.f32.partialorder %v5558, 0.0
        %vm5663 = vcmp.ge.f32.partialorder %v5559, 0.0
        %vm5664 = vcmp.ge.f32.partialorder %v5560, 0.0
        %vm5665 = vcmp.ge.f32.partialorder %v5561, 0.0
        %vm5666 = vcmp.ge.f32.partialorder %v5562, 0.0
        %vm5667 = vcmp.ge.f32.partialorder %v5563, 0.0
        %vm5668 = vcmp.ge.f32.partialorder %v5564, 0.0
        %vm5669 = vcmp.ge.f32.partialorder %v5565, 0.0
        %vm5670 = vcmp.ge.f32.partialorder %v5566, 0.0
        %vm5671 = vcmp.ge.f32.partialorder %v5567, 0.0
        %vm5672 = vcmp.ge.f32.partialorder %v5568, 0.0
        %vm5673 = vcmp.ge.f32.partialorder %v5569, 0.0
        %vm5674 = vcmp.ge.f32.partialorder %v5570, 0.0
        %vm5675 = vcmp.ge.f32.partialorder %v5571, 0.0
        %vm5676 = vcmp.ge.f32.partialorder %v5572, 0.0
        %vm5677 = vcmp.ge.f32.partialorder %v5573, 0.0
        %vm5678 = vcmp.ge.f32.partialorder %v5574, 0.0
        %vm5679 = vcmp.ge.f32.partialorder %v5575, 0.0
        %vm5680 = vcmp.ge.f32.partialorder %v5576, 0.0
        %vm5681 = vcmp.ge.f32.partialorder %v5577, 0.0
        %vm5682 = vcmp.ge.f32.partialorder %v5578, 0.0
        %vm5683 = vcmp.ge.f32.partialorder %v5579, 0.0
        %vm5684 = vcmp.ge.f32.partialorder %v5580, 0.0
        %vm5685 = vcmp.ge.f32.partialorder %v5581, 0.0
        %vm5686 = vcmp.ge.f32.partialorder %v5582, 0.0
        %vm5687 = vcmp.ge.f32.partialorder %v5583, 0.0
        %vm5688 = vcmp.ge.f32.partialorder %v5584, 0.0
        %vm5689 = vcmp.ge.f32.partialorder %v5585, 0.0
        %vm5690 = vcmp.ge.f32.partialorder %v5586, 0.0
        %vm5691 = vcmp.ge.f32.partialorder %v5587, 0.0
        %vm5692 = vcmp.ge.f32.partialorder %v5588, 0.0
        %vm5693 = vcmp.ge.f32.partialorder %v5589, 0.0
        %v5694 = vmul.f32 %v5558, 0.01
        %v5695 = vmul.f32 %v5559, 0.01
        %v5696 = vmul.f32 %v5560, 0.01
        %v5697 = vmul.f32 %v5561, 0.01
        %v5698 = vmul.f32 %v5562, 0.01
        %v5699 = vmul.f32 %v5563, 0.01
        %v5700 = vmul.f32 %v5564, 0.01
        %v5701 = vmul.f32 %v5565, 0.01
        %v5702 = vmul.f32 %v5566, 0.01
        %v5703 = vmul.f32 %v5567, 0.01
        %v5704 = vmul.f32 %v5568, 0.01
        %v5705 = vmul.f32 %v5569, 0.01
        %v5706 = vmul.f32 %v5570, 0.01
        %v5707 = vmul.f32 %v5571, 0.01
        %v5708 = vmul.f32 %v5572, 0.01
        %v5709 = vmul.f32 %v5573, 0.01
        %v5710 = vmul.f32 %v5574, 0.01
        %v5711 = vmul.f32 %v5575, 0.01
        %v5712 = vmul.f32 %v5576, 0.01
        %v5713 = vmul.f32 %v5577, 0.01
        %v5714 = vmul.f32 %v5578, 0.01
        %v5715 = vmul.f32 %v5579, 0.01
        %v5716 = vmul.f32 %v5580, 0.01
        %v5717 = vmul.f32 %v5581, 0.01
        %v5718 = vmul.f32 %v5582, 0.01
        %v5719 = vmul.f32 %v5583, 0.01
        %v5720 = vmul.f32 %v5584, 0.01
        %v5721 = vmul.f32 %v5585, 0.01
        %v5722 = vmul.f32 %v5586, 0.01
        %v5723 = vmul.f32 %v5587, 0.01
        %v5724 = vmul.f32 %v5588, 0.01
        %v5725 = vmul.f32 %v5589, 0.01
        %v5726 = vsel %vm5662, %v5558, %v5694
        %v5727 = vsel %vm5663, %v5559, %v5695
        %v5728 = vsel %vm5664, %v5560, %v5696
        %v5729 = vsel %vm5665, %v5561, %v5697
        %v5730 = vsel %vm5666, %v5562, %v5698
        %v5731 = vsel %vm5667, %v5563, %v5699
        %v5732 = vsel %vm5668, %v5564, %v5700
        %v5733 = vsel %vm5669, %v5565, %v5701
        %v5734 = vsel %vm5670, %v5566, %v5702
        %v5735 = vsel %vm5671, %v5567, %v5703
        %v5736 = vsel %vm5672, %v5568, %v5704
        %v5737 = vsel %vm5673, %v5569, %v5705
        %v5738 = vsel %vm5674, %v5570, %v5706
        %v5739 = vsel %vm5675, %v5571, %v5707
        %v5740 = vsel %vm5676, %v5572, %v5708
        %v5741 = vsel %vm5677, %v5573, %v5709
        %v5742 = vsel %vm5678, %v5574, %v5710
        %v5743 = vsel %vm5679, %v5575, %v5711
        %v5744 = vsel %vm5680, %v5576, %v5712
        %v5745 = vsel %vm5681, %v5577, %v5713
        %v5746 = vsel %vm5682, %v5578, %v5714
        %v5747 = vsel %vm5683, %v5579, %v5715
        %v5748 = vsel %vm5684, %v5580, %v5716
        %v5749 = vsel %vm5685, %v5581, %v5717
        %v5750 = vsel %vm5686, %v5582, %v5718
        %v5751 = vsel %vm5687, %v5583, %v5719
        %v5752 = vsel %vm5688, %v5584, %v5720
        %v5753 = vsel %vm5689, %v5585, %v5721
        %v5754 = vsel %vm5690, %v5586, %v5722
        %v5755 = vsel %vm5691, %v5587, %v5723
        %v5756 = vsel %vm5692, %v5588, %v5724
        %v5757 = vsel %vm5693, %v5589, %v5725
        %v5758 = vpack.c.bf16 %v5726, %v5726
        %v5759 = vpack.c.bf16 %v5727, %v5727
        %v5760 = vpack.c.bf16 %v5728, %v5728
        %v5761 = vpack.c.bf16 %v5729, %v5729
        %v5762 = vpack.c.bf16 %v5730, %v5730
        %v5763 = vpack.c.bf16 %v5731, %v5731
        %v5764 = vpack.c.bf16 %v5732, %v5732
        %v5765 = vpack.c.bf16 %v5733, %v5733
        %v5766 = vpack.c.bf16 %v5734, %v5734
        %v5767 = vpack.c.bf16 %v5735, %v5735
        %v5768 = vpack.c.bf16 %v5736, %v5736
        %v5769 = vpack.c.bf16 %v5737, %v5737
        %v5770 = vpack.c.bf16 %v5738, %v5738
        %v5771 = vpack.c.bf16 %v5739, %v5739
        %v5772 = vpack.c.bf16 %v5740, %v5740
        %v5773 = vpack.c.bf16 %v5741, %v5741
        %v5774 = vpack.c.bf16 %v5742, %v5742
        %v5775 = vpack.c.bf16 %v5743, %v5743
        %v5776 = vpack.c.bf16 %v5744, %v5744
        %v5777 = vpack.c.bf16 %v5745, %v5745
        %v5778 = vpack.c.bf16 %v5746, %v5746
        %v5779 = vpack.c.bf16 %v5747, %v5747
        %v5780 = vpack.c.bf16 %v5748, %v5748
        %v5781 = vpack.c.bf16 %v5749, %v5749
        %v5782 = vpack.c.bf16 %v5750, %v5750
        %v5783 = vpack.c.bf16 %v5751, %v5751
        %v5784 = vpack.c.bf16 %v5752, %v5752
        %v5785 = vpack.c.bf16 %v5753, %v5753
        %v5786 = vpack.c.bf16 %v5754, %v5754
        %v5787 = vpack.c.bf16 %v5755, %v5755
        %v5788 = vpack.c.bf16 %v5756, %v5756
        %v5789 = vpack.c.bf16 %v5757, %v5757
        %5790 = vst.msk [vmem:[%s818 + $0x4] sm:$0xf] %vm562, %v5758
        %5791 = vst.msk [vmem:[%s818 + $0x8] sm:$0xf] %vm562, %v5759
        %5792 = vst.msk [vmem:[%s818 + $0x14] sm:$0xf] %vm562, %v5760
        %5793 = vst.msk [vmem:[%s818 + $0x18] sm:$0xf] %vm562, %v5761
        %5794 = vst.msk [vmem:[%s818 + $0x24] sm:$0xf] %vm562, %v5762
        %5795 = vst.msk [vmem:[%s818 + $0x28] sm:$0xf] %vm562, %v5763
        %5796 = vst.msk [vmem:[%s818 + $0x34] sm:$0xf] %vm562, %v5764
        %5797 = vst.msk [vmem:[%s818 + $0x38] sm:$0xf] %vm562, %v5765
        %5798 = vst.msk [vmem:[%s818 + $0x44] sm:$0xf] %vm562, %v5766
        %5799 = vst.msk [vmem:[%s818 + $0x48] sm:$0xf] %vm562, %v5767
        %5800 = vst.msk [vmem:[%s818 + $0x54] sm:$0xf] %vm562, %v5768
        %5801 = vst.msk [vmem:[%s818 + $0x58] sm:$0xf] %vm562, %v5769
        %5802 = vst.msk [vmem:[%s818 + $0x64] sm:$0xf] %vm562, %v5770
        %5803 = vst.msk [vmem:[%s818 + $0x68] sm:$0xf] %vm562, %v5771
        %5804 = vst.msk [vmem:[%s818 + $0x74] sm:$0xf] %vm562, %v5772
        %5805 = vst.msk [vmem:[%s818 + $0x78] sm:$0xf] %vm562, %v5773
        %5806 = vst.msk [vmem:[%s818 + $0x84] sm:$0xf] %vm562, %v5774
        %5807 = vst.msk [vmem:[%s818 + $0x88] sm:$0xf] %vm562, %v5775
        %5808 = vst.msk [vmem:[%s818 + $0x94] sm:$0xf] %vm562, %v5776
        %5809 = vst.msk [vmem:[%s818 + $0x98] sm:$0xf] %vm562, %v5777
        %5810 = vst.msk [vmem:[%s818 + $0xa4] sm:$0xf] %vm562, %v5778
        %5811 = vst.msk [vmem:[%s818 + $0xa8] sm:$0xf] %vm562, %v5779
        %5812 = vst.msk [vmem:[%s818 + $0xb4] sm:$0xf] %vm562, %v5780
        %5813 = vst.msk [vmem:[%s818 + $0xb8] sm:$0xf] %vm562, %v5781
        %5814 = vst.msk [vmem:[%s818 + $0xc4] sm:$0xf] %vm562, %v5782
        %5815 = vst.msk [vmem:[%s818 + $0xc8] sm:$0xf] %vm562, %v5783
        %5816 = vst.msk [vmem:[%s818 + $0xd4] sm:$0xf] %vm562, %v5784
        %5817 = vst.msk [vmem:[%s818 + $0xd8] sm:$0xf] %vm562, %v5785
        %5818 = vst.msk [vmem:[%s818 + $0xe4] sm:$0xf] %vm562, %v5786
        %5819 = vst.msk [vmem:[%s818 + $0xe8] sm:$0xf] %vm562, %v5787
        %5820 = vst.msk [vmem:[%s818 + $0xf4] sm:$0xf] %vm562, %v5788
        %5821 = vst.msk [vmem:[%s818 + $0xf8] sm:$0xf] %vm562, %v5789
        %v5822 = vld [vmem:[#allocation2] sm:$0x8]
        %v5823 = vld [vmem:[#allocation2 + $0x4] sm:$0xf]
        %v5824 = vld [vmem:[#allocation2 + $0x8] sm:$0xf]
        %v5825 = vld [vmem:[#allocation2 + $0x10] sm:$0x8]
        %v5826 = vld [vmem:[#allocation2 + $0x14] sm:$0xf]
        %v5827 = vld [vmem:[#allocation2 + $0x18] sm:$0xf]
        %v5828 = vld [vmem:[#allocation2 + $0x20] sm:$0x8]
        %v5829 = vld [vmem:[#allocation2 + $0x24] sm:$0xf]
        %v5830 = vld [vmem:[#allocation2 + $0x28] sm:$0xf]
        %v5831 = vld [vmem:[#allocation2 + $0x30] sm:$0x8]
        %v5832 = vld [vmem:[#allocation2 + $0x34] sm:$0xf]
        %v5833 = vld [vmem:[#allocation2 + $0x38] sm:$0xf]
        %v5834 = vld [vmem:[#allocation2 + $0x40] sm:$0x8]
        %v5835 = vld [vmem:[#allocation2 + $0x44] sm:$0xf]
        %v5836 = vld [vmem:[#allocation2 + $0x48] sm:$0xf]
        %v5837 = vld [vmem:[#allocation2 + $0x50] sm:$0x8]
        %v5838 = vld [vmem:[#allocation2 + $0x54] sm:$0xf]
        %v5839 = vld [vmem:[#allocation2 + $0x58] sm:$0xf]
        %v5840 = vld [vmem:[#allocation2 + $0x60] sm:$0x8]
        %v5841 = vld [vmem:[#allocation2 + $0x64] sm:$0xf]
        %v5842 = vld [vmem:[#allocation2 + $0x68] sm:$0xf]
        %v5843 = vld [vmem:[#allocation2 + $0x70] sm:$0x8]
        %v5844 = vld [vmem:[#allocation2 + $0x74] sm:$0xf]
        %v5845 = vld [vmem:[#allocation2 + $0x78] sm:$0xf]
        %v5846 = vld [vmem:[#allocation2 + $0x80] sm:$0x8]
        %v5847 = vld [vmem:[#allocation2 + $0x84] sm:$0xf]
        %v5848 = vld [vmem:[#allocation2 + $0x88] sm:$0xf]
        %v5849 = vld [vmem:[#allocation2 + $0x90] sm:$0x8]
        %v5850 = vld [vmem:[#allocation2 + $0x94] sm:$0xf]
        %v5851 = vld [vmem:[#allocation2 + $0x98] sm:$0xf]
        %v5852 = vld [vmem:[#allocation2 + $0xa0] sm:$0x8]
        %v5853 = vld [vmem:[#allocation2 + $0xa4] sm:$0xf]
        %v5854 = vld [vmem:[#allocation2 + $0xa8] sm:$0xf]
        %v5855 = vld [vmem:[#allocation2 + $0xb0] sm:$0x8]
        %v5856 = vld [vmem:[#allocation2 + $0xb4] sm:$0xf]
        %v5857 = vld [vmem:[#allocation2 + $0xb8] sm:$0xf]
        %v5858 = vld [vmem:[#allocation2 + $0xc0] sm:$0x8]
        %v5859 = vld [vmem:[#allocation2 + $0xc4] sm:$0xf]
        %v5860 = vld [vmem:[#allocation2 + $0xc8] sm:$0xf]
        %v5861 = vld [vmem:[#allocation2 + $0xd0] sm:$0x8]
        %v5862 = vld [vmem:[#allocation2 + $0xd4] sm:$0xf]
        %v5863 = vld [vmem:[#allocation2 + $0xd8] sm:$0xf]
        %v5864 = vld [vmem:[#allocation2 + $0xe0] sm:$0x8]
        %v5865 = vld [vmem:[#allocation2 + $0xe4] sm:$0xf]
        %v5866 = vld [vmem:[#allocation2 + $0xe8] sm:$0xf]
        %v5867 = vld [vmem:[#allocation2 + $0xf0] sm:$0x8]
        %v5868 = vld [vmem:[#allocation2 + $0xf4] sm:$0xf]
        %v5869 = vld [vmem:[#allocation2 + $0xf8] sm:$0xf]
        %v5871 = vshrl.u32 %v5822, 16
        %v5873 = vrot.slane %v5871, 7
        %v5874 = vrot.slane %v5873, 4
        %v5876 = vshrl.u32 %v5823, 16
        %v5878 = vrot.slane %v5876, 7
        %v5879 = vshll.u32 %v5823, 16
        %v5881 = vor.u32 %v5878, %v5879
        %v5882 = vsel %vm900, %v5874, %v5881
        %v5883 = vrot.slane %v5878, 4
        %v5885 = vshrl.u32 %v5824, 16
        %v5887 = vrot.slane %v5885, 7
        %v5888 = vshll.u32 %v5824, 16
        %v5890 = vor.u32 %v5887, %v5888
        %v5891 = vsel %vm900, %v5883, %v5890
        %v5893 = vshrl.u32 %v5825, 16
        %v5895 = vrot.slane %v5893, 7
        %v5896 = vrot.slane %v5895, 4
        %v5898 = vshrl.u32 %v5826, 16
        %v5900 = vrot.slane %v5898, 7
        %v5901 = vshll.u32 %v5826, 16
        %v5903 = vor.u32 %v5900, %v5901
        %v5904 = vsel %vm900, %v5896, %v5903
        %v5905 = vrot.slane %v5900, 4
        %v5907 = vshrl.u32 %v5827, 16
        %v5909 = vrot.slane %v5907, 7
        %v5910 = vshll.u32 %v5827, 16
        %v5912 = vor.u32 %v5909, %v5910
        %v5913 = vsel %vm900, %v5905, %v5912
        %v5915 = vshrl.u32 %v5828, 16
        %v5917 = vrot.slane %v5915, 7
        %v5918 = vrot.slane %v5917, 4
        %v5920 = vshrl.u32 %v5829, 16
        %v5922 = vrot.slane %v5920, 7
        %v5923 = vshll.u32 %v5829, 16
        %v5925 = vor.u32 %v5922, %v5923
        %v5926 = vsel %vm900, %v5918, %v5925
        %v5927 = vrot.slane %v5922, 4
        %v5929 = vshrl.u32 %v5830, 16
        %v5931 = vrot.slane %v5929, 7
        %v5932 = vshll.u32 %v5830, 16
        %v5934 = vor.u32 %v5931, %v5932
        %v5935 = vsel %vm900, %v5927, %v5934
        %v5937 = vshrl.u32 %v5831, 16
        %v5939 = vrot.slane %v5937, 7
        %v5940 = vrot.slane %v5939, 4
        %v5942 = vshrl.u32 %v5832, 16
        %v5944 = vrot.slane %v5942, 7
        %v5945 = vshll.u32 %v5832, 16
        %v5947 = vor.u32 %v5944, %v5945
        %v5948 = vsel %vm900, %v5940, %v5947
        %v5949 = vrot.slane %v5944, 4
        %v5951 = vshrl.u32 %v5833, 16
        %v5953 = vrot.slane %v5951, 7
        %v5954 = vshll.u32 %v5833, 16
        %v5956 = vor.u32 %v5953, %v5954
        %v5957 = vsel %vm900, %v5949, %v5956
        %v5959 = vshrl.u32 %v5834, 16
        %v5961 = vrot.slane %v5959, 7
        %v5962 = vrot.slane %v5961, 4
        %v5964 = vshrl.u32 %v5835, 16
        %v5966 = vrot.slane %v5964, 7
        %v5967 = vshll.u32 %v5835, 16
        %v5969 = vor.u32 %v5966, %v5967
        %v5970 = vsel %vm900, %v5962, %v5969
        %v5971 = vrot.slane %v5966, 4
        %v5973 = vshrl.u32 %v5836, 16
        %v5975 = vrot.slane %v5973, 7
        %v5976 = vshll.u32 %v5836, 16
        %v5978 = vor.u32 %v5975, %v5976
        %v5979 = vsel %vm900, %v5971, %v5978
        %v5981 = vshrl.u32 %v5837, 16
        %v5983 = vrot.slane %v5981, 7
        %v5984 = vrot.slane %v5983, 4
        %v5986 = vshrl.u32 %v5838, 16
        %v5988 = vrot.slane %v5986, 7
        %v5989 = vshll.u32 %v5838, 16
        %v5991 = vor.u32 %v5988, %v5989
        %v5992 = vsel %vm900, %v5984, %v5991
        %v5993 = vrot.slane %v5988, 4
        %v5995 = vshrl.u32 %v5839, 16
        %v5997 = vrot.slane %v5995, 7
        %v5998 = vshll.u32 %v5839, 16
        %v6000 = vor.u32 %v5997, %v5998
        %v6001 = vsel %vm900, %v5993, %v6000
        %v6003 = vshrl.u32 %v5840, 16
        %v6005 = vrot.slane %v6003, 7
        %v6006 = vrot.slane %v6005, 4
        %v6008 = vshrl.u32 %v5841, 16
        %v6010 = vrot.slane %v6008, 7
        %v6011 = vshll.u32 %v5841, 16
        %v6013 = vor.u32 %v6010, %v6011
        %v6014 = vsel %vm900, %v6006, %v6013
        %v6015 = vrot.slane %v6010, 4
        %v6017 = vshrl.u32 %v5842, 16
        %v6019 = vrot.slane %v6017, 7
        %v6020 = vshll.u32 %v5842, 16
        %v6022 = vor.u32 %v6019, %v6020
        %v6023 = vsel %vm900, %v6015, %v6022
        %v6025 = vshrl.u32 %v5843, 16
        %v6027 = vrot.slane %v6025, 7
        %v6028 = vrot.slane %v6027, 4
        %v6030 = vshrl.u32 %v5844, 16
        %v6032 = vrot.slane %v6030, 7
        %v6033 = vshll.u32 %v5844, 16
        %v6035 = vor.u32 %v6032, %v6033
        %v6036 = vsel %vm900, %v6028, %v6035
        %v6037 = vrot.slane %v6032, 4
        %v6039 = vshrl.u32 %v5845, 16
        %v6041 = vrot.slane %v6039, 7
        %v6042 = vshll.u32 %v5845, 16
        %v6044 = vor.u32 %v6041, %v6042
        %v6045 = vsel %vm900, %v6037, %v6044
        %v6047 = vshrl.u32 %v5846, 16
        %v6049 = vrot.slane %v6047, 7
        %v6050 = vrot.slane %v6049, 4
        %v6052 = vshrl.u32 %v5847, 16
        %v6054 = vrot.slane %v6052, 7
        %v6055 = vshll.u32 %v5847, 16
        %v6057 = vor.u32 %v6054, %v6055
        %v6058 = vsel %vm900, %v6050, %v6057
        %v6059 = vrot.slane %v6054, 4
        %v6061 = vshrl.u32 %v5848, 16
        %v6063 = vrot.slane %v6061, 7
        %v6064 = vshll.u32 %v5848, 16
        %v6066 = vor.u32 %v6063, %v6064
        %v6067 = vsel %vm900, %v6059, %v6066
        %v6069 = vshrl.u32 %v5849, 16
        %v6071 = vrot.slane %v6069, 7
        %v6072 = vrot.slane %v6071, 4
        %v6074 = vshrl.u32 %v5850, 16
        %v6076 = vrot.slane %v6074, 7
        %v6077 = vshll.u32 %v5850, 16
        %v6079 = vor.u32 %v6076, %v6077
        %v6080 = vsel %vm900, %v6072, %v6079
        %v6081 = vrot.slane %v6076, 4
        %v6083 = vshrl.u32 %v5851, 16
        %v6085 = vrot.slane %v6083, 7
        %v6086 = vshll.u32 %v5851, 16
        %v6088 = vor.u32 %v6085, %v6086
        %v6089 = vsel %vm900, %v6081, %v6088
        %v6091 = vshrl.u32 %v5852, 16
        %v6093 = vrot.slane %v6091, 7
        %v6094 = vrot.slane %v6093, 4
        %v6096 = vshrl.u32 %v5853, 16
        %v6098 = vrot.slane %v6096, 7
        %v6099 = vshll.u32 %v5853, 16
        %v6101 = vor.u32 %v6098, %v6099
        %v6102 = vsel %vm900, %v6094, %v6101
        %v6103 = vrot.slane %v6098, 4
        %v6105 = vshrl.u32 %v5854, 16
        %v6107 = vrot.slane %v6105, 7
        %v6108 = vshll.u32 %v5854, 16
        %v6110 = vor.u32 %v6107, %v6108
        %v6111 = vsel %vm900, %v6103, %v6110
        %v6113 = vshrl.u32 %v5855, 16
        %v6115 = vrot.slane %v6113, 7
        %v6116 = vrot.slane %v6115, 4
        %v6118 = vshrl.u32 %v5856, 16
        %v6120 = vrot.slane %v6118, 7
        %v6121 = vshll.u32 %v5856, 16
        %v6123 = vor.u32 %v6120, %v6121
        %v6124 = vsel %vm900, %v6116, %v6123
        %v6125 = vrot.slane %v6120, 4
        %v6127 = vshrl.u32 %v5857, 16
        %v6129 = vrot.slane %v6127, 7
        %v6130 = vshll.u32 %v5857, 16
        %v6132 = vor.u32 %v6129, %v6130
        %v6133 = vsel %vm900, %v6125, %v6132
        %v6135 = vshrl.u32 %v5858, 16
        %v6137 = vrot.slane %v6135, 7
        %v6138 = vrot.slane %v6137, 4
        %v6140 = vshrl.u32 %v5859, 16
        %v6142 = vrot.slane %v6140, 7
        %v6143 = vshll.u32 %v5859, 16
        %v6145 = vor.u32 %v6142, %v6143
        %v6146 = vsel %vm900, %v6138, %v6145
        %v6147 = vrot.slane %v6142, 4
        %v6149 = vshrl.u32 %v5860, 16
        %v6151 = vrot.slane %v6149, 7
        %v6152 = vshll.u32 %v5860, 16
        %v6154 = vor.u32 %v6151, %v6152
        %v6155 = vsel %vm900, %v6147, %v6154
        %v6157 = vshrl.u32 %v5861, 16
        %v6159 = vrot.slane %v6157, 7
        %v6160 = vrot.slane %v6159, 4
        %v6162 = vshrl.u32 %v5862, 16
        %v6164 = vrot.slane %v6162, 7
        %v6165 = vshll.u32 %v5862, 16
        %v6167 = vor.u32 %v6164, %v6165
        %v6168 = vsel %vm900, %v6160, %v6167
        %v6169 = vrot.slane %v6164, 4
        %v6171 = vshrl.u32 %v5863, 16
        %v6173 = vrot.slane %v6171, 7
        %v6174 = vshll.u32 %v5863, 16
        %v6176 = vor.u32 %v6173, %v6174
        %v6177 = vsel %vm900, %v6169, %v6176
        %v6179 = vshrl.u32 %v5864, 16
        %v6181 = vrot.slane %v6179, 7
        %v6182 = vrot.slane %v6181, 4
        %v6184 = vshrl.u32 %v5865, 16
        %v6186 = vrot.slane %v6184, 7
        %v6187 = vshll.u32 %v5865, 16
        %v6189 = vor.u32 %v6186, %v6187
        %v6190 = vsel %vm900, %v6182, %v6189
        %v6191 = vrot.slane %v6186, 4
        %v6193 = vshrl.u32 %v5866, 16
        %v6195 = vrot.slane %v6193, 7
        %v6196 = vshll.u32 %v5866, 16
        %v6198 = vor.u32 %v6195, %v6196
        %v6199 = vsel %vm900, %v6191, %v6198
        %v6201 = vshrl.u32 %v5867, 16
        %v6203 = vrot.slane %v6201, 7
        %v6204 = vrot.slane %v6203, 4
        %v6206 = vshrl.u32 %v5868, 16
        %v6208 = vrot.slane %v6206, 7
        %v6209 = vshll.u32 %v5868, 16
        %v6211 = vor.u32 %v6208, %v6209
        %v6212 = vsel %vm900, %v6204, %v6211
        %v6213 = vrot.slane %v6208, 4
        %v6215 = vshrl.u32 %v5869, 16
        %v6217 = vrot.slane %v6215, 7
        %v6218 = vshll.u32 %v5869, 16
        %v6220 = vor.u32 %v6217, %v6218
        %v6221 = vsel %vm900, %v6213, %v6220
        %s6222 = scalar_lea.vmem %s3, 144
        %v6223 = vld [vmem:[%s6222] sm:$0xf]
        %v6224 = vld [vmem:[%s6222 + $0x4] sm:$0xf]
        %v6225 = vld [vmem:[%s6222 + $0x8] sm:$0xf]
        %v6226 = vld [vmem:[%s6222 + $0xc] sm:$0xf]
        %s6227 = scalar_lea.vmem %s3, 160
        %v6228 = vld [vmem:[%s6227] sm:$0xf]
        %v6229 = vld [vmem:[%s6227 + $0x4] sm:$0xf]
        %v6230 = vld [vmem:[%s6227 + $0x8] sm:$0xf]
        %v6231 = vld [vmem:[%s6227 + $0xc] sm:$0xf]
        %v6264 = vunpack.c.l.b16 %v5823
        %v6265 = vunpack.c.l.b16 %v5824
        %v6266 = vunpack.c.l.b16 %v5826
        %v6267 = vunpack.c.l.b16 %v5827
        %v6268 = vunpack.c.l.b16 %v5829
        %v6269 = vunpack.c.l.b16 %v5830
        %v6270 = vunpack.c.l.b16 %v5832
        %v6271 = vunpack.c.l.b16 %v5833
        %v6272 = vunpack.c.l.b16 %v5835
        %v6273 = vunpack.c.l.b16 %v5836
        %v6274 = vunpack.c.l.b16 %v5838
        %v6275 = vunpack.c.l.b16 %v5839
        %v6276 = vunpack.c.l.b16 %v5841
        %v6277 = vunpack.c.l.b16 %v5842
        %v6278 = vunpack.c.l.b16 %v5844
        %v6279 = vunpack.c.l.b16 %v5845
        %v6280 = vunpack.c.l.b16 %v5847
        %v6281 = vunpack.c.l.b16 %v5848
        %v6282 = vunpack.c.l.b16 %v5850
        %v6283 = vunpack.c.l.b16 %v5851
        %v6284 = vunpack.c.l.b16 %v5853
        %v6285 = vunpack.c.l.b16 %v5854
        %v6286 = vunpack.c.l.b16 %v5856
        %v6287 = vunpack.c.l.b16 %v5857
        %v6288 = vunpack.c.l.b16 %v5859
        %v6289 = vunpack.c.l.b16 %v5860
        %v6290 = vunpack.c.l.b16 %v5862
        %v6291 = vunpack.c.l.b16 %v5863
        %v6292 = vunpack.c.l.b16 %v5865
        %v6293 = vunpack.c.l.b16 %v5866
        %v6294 = vunpack.c.l.b16 %v5868
        %v6295 = vunpack.c.l.b16 %v5869
        %v6296 = vpack.c.b16 %v6265, %v6264
        %v6297 = vpack.c.b16 %v6267, %v6266
        %v6298 = vpack.c.b16 %v6269, %v6268
        %v6299 = vpack.c.b16 %v6271, %v6270
        %v6300 = vpack.c.b16 %v6273, %v6272
        %v6301 = vpack.c.b16 %v6275, %v6274
        %v6302 = vpack.c.b16 %v6277, %v6276
        %v6303 = vpack.c.b16 %v6279, %v6278
        %v6304 = vpack.c.b16 %v6281, %v6280
        %v6305 = vpack.c.b16 %v6283, %v6282
        %v6306 = vpack.c.b16 %v6285, %v6284
        %v6307 = vpack.c.b16 %v6287, %v6286
        %v6308 = vpack.c.b16 %v6289, %v6288
        %v6309 = vpack.c.b16 %v6291, %v6290
        %v6310 = vpack.c.b16 %v6293, %v6292
        %v6311 = vpack.c.b16 %v6295, %v6294
        %v6316 = vunpack.c.l.b16 %v6228
        %v6317 = vunpack.c.l.b16 %v6229
        %v6318 = vunpack.c.l.b16 %v6230
        %v6319 = vunpack.c.l.b16 %v6231
        %v6320 = vpack.c.b16 %v6317, %v6316
        %v6321 = vpack.c.b16 %v6319, %v6318
        %v6325 = vsel %vm1354, %v6296, 0
        %v6328 = vsel %vm1354, %v6297, 0
        %v6331 = vsel %vm1354, %v6298, 0
        %v6334 = vsel %vm1354, %v6299, 0
        %v6337 = vsel %vm1354, %v6300, 0
        %v6340 = vsel %vm1354, %v6301, 0
        %v6343 = vsel %vm1354, %v6302, 0
        %v6346 = vsel %vm1354, %v6303, 0
        %v6349 = vsel %vm1354, %v6304, 0
        %v6352 = vsel %vm1354, %v6305, 0
        %v6355 = vsel %vm1354, %v6306, 0
        %v6358 = vsel %vm1354, %v6307, 0
        %v6361 = vsel %vm1354, %v6308, 0
        %v6364 = vsel %vm1354, %v6309, 0
        %v6367 = vsel %vm1354, %v6310, 0
        %v6370 = vsel %vm1354, %v6311, 0
        %6372 = vmatpush.bf16.msra.mxu0 0
        %6373 = vmatpush.bf16.msra.mxu0 0
        %6374 = vmatpush.bf16.msra.mxu0 0
        %6375 = vmatpush.bf16.msra.mxu0 0
        %6376 = vmatpush.bf16.msra.mxu0 0
        %6377 = vmatpush.bf16.msra.mxu0 0
        %6378 = vmatpush.bf16.msra.mxu0 %v6321
        %6379 = vmatpush.bf16.msra.mxu0 %v6320
        %6380 = vmatmul.bf16.gmra.mxu0 %v6325
        %v6381 = vpop.f32.mrf.mxu0
        %v6382 = vadd.f32 0.0, %v6381
        %v6383 = vpop.f32.mrf.mxu0
        %v6384 = vadd.f32 0.0, %v6383
        %6385 = vmatmul.bf16.gmra.mxu0 %v6328
        %v6386 = vpop.f32.mrf.mxu0
        %v6387 = vadd.f32 0.0, %v6386
        %v6388 = vpop.f32.mrf.mxu0
        %v6389 = vadd.f32 0.0, %v6388
        %6390 = vmatmul.bf16.gmra.mxu0 %v6331
        %v6391 = vpop.f32.mrf.mxu0
        %v6392 = vadd.f32 0.0, %v6391
        %v6393 = vpop.f32.mrf.mxu0
        %v6394 = vadd.f32 0.0, %v6393
        %6395 = vmatmul.bf16.gmra.mxu0 %v6334
        %v6396 = vpop.f32.mrf.mxu0
        %v6397 = vadd.f32 0.0, %v6396
        %v6398 = vpop.f32.mrf.mxu0
        %v6399 = vadd.f32 0.0, %v6398
        %6400 = vmatmul.bf16.gmra.mxu0 %v6337
        %v6401 = vpop.f32.mrf.mxu0
        %v6402 = vadd.f32 0.0, %v6401
        %v6403 = vpop.f32.mrf.mxu0
        %v6404 = vadd.f32 0.0, %v6403
        %6405 = vmatmul.bf16.gmra.mxu0 %v6340
        %v6406 = vpop.f32.mrf.mxu0
        %v6407 = vadd.f32 0.0, %v6406
        %v6408 = vpop.f32.mrf.mxu0
        %v6409 = vadd.f32 0.0, %v6408
        %6410 = vmatmul.bf16.gmra.mxu0 %v6343
        %v6411 = vpop.f32.mrf.mxu0
        %v6412 = vadd.f32 0.0, %v6411
        %v6413 = vpop.f32.mrf.mxu0
        %v6414 = vadd.f32 0.0, %v6413
        %6415 = vmatmul.bf16.gmra.mxu0 %v6346
        %v6416 = vpop.f32.mrf.mxu0
        %v6417 = vadd.f32 0.0, %v6416
        %v6418 = vpop.f32.mrf.mxu0
        %v6419 = vadd.f32 0.0, %v6418
        %6420 = vmatmul.bf16.gmra.mxu0 %v6349
        %v6421 = vpop.f32.mrf.mxu0
        %v6422 = vadd.f32 0.0, %v6421
        %v6423 = vpop.f32.mrf.mxu0
        %v6424 = vadd.f32 0.0, %v6423
        %6425 = vmatmul.bf16.gmra.mxu0 %v6352
        %v6426 = vpop.f32.mrf.mxu0
        %v6427 = vadd.f32 0.0, %v6426
        %v6428 = vpop.f32.mrf.mxu0
        %v6429 = vadd.f32 0.0, %v6428
        %6430 = vmatmul.bf16.gmra.mxu0 %v6355
        %v6431 = vpop.f32.mrf.mxu0
        %v6432 = vadd.f32 0.0, %v6431
        %v6433 = vpop.f32.mrf.mxu0
        %v6434 = vadd.f32 0.0, %v6433
        %6435 = vmatmul.bf16.gmra.mxu0 %v6358
        %v6436 = vpop.f32.mrf.mxu0
        %v6437 = vadd.f32 0.0, %v6436
        %v6438 = vpop.f32.mrf.mxu0
        %v6439 = vadd.f32 0.0, %v6438
        %6440 = vmatmul.bf16.gmra.mxu0 %v6361
        %v6441 = vpop.f32.mrf.mxu0
        %v6442 = vadd.f32 0.0, %v6441
        %v6443 = vpop.f32.mrf.mxu0
        %v6444 = vadd.f32 0.0, %v6443
        %6445 = vmatmul.bf16.gmra.mxu0 %v6364
        %v6446 = vpop.f32.mrf.mxu0
        %v6447 = vadd.f32 0.0, %v6446
        %v6448 = vpop.f32.mrf.mxu0
        %v6449 = vadd.f32 0.0, %v6448
        %6450 = vmatmul.bf16.gmra.mxu0 %v6367
        %v6451 = vpop.f32.mrf.mxu0
        %v6452 = vadd.f32 0.0, %v6451
        %v6453 = vpop.f32.mrf.mxu0
        %v6454 = vadd.f32 0.0, %v6453
        %6455 = vmatmul.bf16.gmra.mxu0 %v6370
        %v6456 = vpop.f32.mrf.mxu0
        %v6457 = vadd.f32 0.0, %v6456
        %v6458 = vpop.f32.mrf.mxu0
        %v6459 = vadd.f32 0.0, %v6458
        %6460 = vdwg.mxu0
        %v6461 = vunpack.c.l.b16 %v5882
        %v6462 = vunpack.c.l.b16 %v5891
        %v6463 = vunpack.c.l.b16 %v5904
        %v6464 = vunpack.c.l.b16 %v5913
        %v6465 = vunpack.c.l.b16 %v5926
        %v6466 = vunpack.c.l.b16 %v5935
        %v6467 = vunpack.c.l.b16 %v5948
        %v6468 = vunpack.c.l.b16 %v5957
        %v6469 = vunpack.c.l.b16 %v5970
        %v6470 = vunpack.c.l.b16 %v5979
        %v6471 = vunpack.c.l.b16 %v5992
        %v6472 = vunpack.c.l.b16 %v6001
        %v6473 = vunpack.c.l.b16 %v6014
        %v6474 = vunpack.c.l.b16 %v6023
        %v6475 = vunpack.c.l.b16 %v6036
        %v6476 = vunpack.c.l.b16 %v6045
        %v6477 = vunpack.c.l.b16 %v6058
        %v6478 = vunpack.c.l.b16 %v6067
        %v6479 = vunpack.c.l.b16 %v6080
        %v6480 = vunpack.c.l.b16 %v6089
        %v6481 = vunpack.c.l.b16 %v6102
        %v6482 = vunpack.c.l.b16 %v6111
        %v6483 = vunpack.c.l.b16 %v6124
        %v6484 = vunpack.c.l.b16 %v6133
        %v6485 = vunpack.c.l.b16 %v6146
        %v6486 = vunpack.c.l.b16 %v6155
        %v6487 = vunpack.c.l.b16 %v6168
        %v6488 = vunpack.c.l.b16 %v6177
        %v6489 = vunpack.c.l.b16 %v6190
        %v6490 = vunpack.c.l.b16 %v6199
        %v6491 = vunpack.c.l.b16 %v6212
        %v6492 = vunpack.c.l.b16 %v6221
        %v6493 = vpack.c.b16 %v6462, %v6461
        %v6494 = vpack.c.b16 %v6464, %v6463
        %v6495 = vpack.c.b16 %v6466, %v6465
        %v6496 = vpack.c.b16 %v6468, %v6467
        %v6497 = vpack.c.b16 %v6470, %v6469
        %v6498 = vpack.c.b16 %v6472, %v6471
        %v6499 = vpack.c.b16 %v6474, %v6473
        %v6500 = vpack.c.b16 %v6476, %v6475
        %v6501 = vpack.c.b16 %v6478, %v6477
        %v6502 = vpack.c.b16 %v6480, %v6479
        %v6503 = vpack.c.b16 %v6482, %v6481
        %v6504 = vpack.c.b16 %v6484, %v6483
        %v6505 = vpack.c.b16 %v6486, %v6485
        %v6506 = vpack.c.b16 %v6488, %v6487
        %v6507 = vpack.c.b16 %v6490, %v6489
        %v6508 = vpack.c.b16 %v6492, %v6491
        %v6513 = vunpack.c.l.b16 %v6223
        %v6514 = vunpack.c.l.b16 %v6224
        %v6515 = vunpack.c.l.b16 %v6225
        %v6516 = vunpack.c.l.b16 %v6226
        %v6517 = vpack.c.b16 %v6514, %v6513
        %v6518 = vpack.c.b16 %v6516, %v6515
        %v6522 = vsel %vm1354, %v6493, 0
        %v6525 = vsel %vm1354, %v6494, 0
        %v6528 = vsel %vm1354, %v6495, 0
        %v6531 = vsel %vm1354, %v6496, 0
        %v6534 = vsel %vm1354, %v6497, 0
        %v6537 = vsel %vm1354, %v6498, 0
        %v6540 = vsel %vm1354, %v6499, 0
        %v6543 = vsel %vm1354, %v6500, 0
        %v6546 = vsel %vm1354, %v6501, 0
        %v6549 = vsel %vm1354, %v6502, 0
        %v6552 = vsel %vm1354, %v6503, 0
        %v6555 = vsel %vm1354, %v6504, 0
        %v6558 = vsel %vm1354, %v6505, 0
        %v6561 = vsel %vm1354, %v6506, 0
        %v6564 = vsel %vm1354, %v6507, 0
        %v6567 = vsel %vm1354, %v6508, 0
        %6569 = vmatpush.bf16.msra.mxu0 0
        %6570 = vmatpush.bf16.msra.mxu0 0
        %6571 = vmatpush.bf16.msra.mxu0 0
        %6572 = vmatpush.bf16.msra.mxu0 0
        %6573 = vmatpush.bf16.msra.mxu0 0
        %6574 = vmatpush.bf16.msra.mxu0 0
        %6575 = vmatpush.bf16.msra.mxu0 %v6518
        %6576 = vmatpush.bf16.msra.mxu0 %v6517
        %6577 = vmatmul.bf16.gmra.mxu0 %v6522
        %v6578 = vpop.f32.mrf.mxu0
        %v6579 = vadd.f32 %v6382, %v6578
        %v6580 = vpop.f32.mrf.mxu0
        %v6581 = vadd.f32 %v6384, %v6580
        %6582 = vmatmul.bf16.gmra.mxu0 %v6525
        %v6583 = vpop.f32.mrf.mxu0
        %v6584 = vadd.f32 %v6387, %v6583
        %v6585 = vpop.f32.mrf.mxu0
        %v6586 = vadd.f32 %v6389, %v6585
        %6587 = vmatmul.bf16.gmra.mxu0 %v6528
        %v6588 = vpop.f32.mrf.mxu0
        %v6589 = vadd.f32 %v6392, %v6588
        %v6590 = vpop.f32.mrf.mxu0
        %v6591 = vadd.f32 %v6394, %v6590
        %6592 = vmatmul.bf16.gmra.mxu0 %v6531
        %v6593 = vpop.f32.mrf.mxu0
        %v6594 = vadd.f32 %v6397, %v6593
        %v6595 = vpop.f32.mrf.mxu0
        %v6596 = vadd.f32 %v6399, %v6595
        %6597 = vmatmul.bf16.gmra.mxu0 %v6534
        %v6598 = vpop.f32.mrf.mxu0
        %v6599 = vadd.f32 %v6402, %v6598
        %v6600 = vpop.f32.mrf.mxu0
        %v6601 = vadd.f32 %v6404, %v6600
        %6602 = vmatmul.bf16.gmra.mxu0 %v6537
        %v6603 = vpop.f32.mrf.mxu0
        %v6604 = vadd.f32 %v6407, %v6603
        %v6605 = vpop.f32.mrf.mxu0
        %v6606 = vadd.f32 %v6409, %v6605
        %6607 = vmatmul.bf16.gmra.mxu0 %v6540
        %v6608 = vpop.f32.mrf.mxu0
        %v6609 = vadd.f32 %v6412, %v6608
        %v6610 = vpop.f32.mrf.mxu0
        %v6611 = vadd.f32 %v6414, %v6610
        %6612 = vmatmul.bf16.gmra.mxu0 %v6543
        %v6613 = vpop.f32.mrf.mxu0
        %v6614 = vadd.f32 %v6417, %v6613
        %v6615 = vpop.f32.mrf.mxu0
        %v6616 = vadd.f32 %v6419, %v6615
        %6617 = vmatmul.bf16.gmra.mxu0 %v6546
        %v6618 = vpop.f32.mrf.mxu0
        %v6619 = vadd.f32 %v6422, %v6618
        %v6620 = vpop.f32.mrf.mxu0
        %v6621 = vadd.f32 %v6424, %v6620
        %6622 = vmatmul.bf16.gmra.mxu0 %v6549
        %v6623 = vpop.f32.mrf.mxu0
        %v6624 = vadd.f32 %v6427, %v6623
        %v6625 = vpop.f32.mrf.mxu0
        %v6626 = vadd.f32 %v6429, %v6625
        %6627 = vmatmul.bf16.gmra.mxu0 %v6552
        %v6628 = vpop.f32.mrf.mxu0
        %v6629 = vadd.f32 %v6432, %v6628
        %v6630 = vpop.f32.mrf.mxu0
        %v6631 = vadd.f32 %v6434, %v6630
        %6632 = vmatmul.bf16.gmra.mxu0 %v6555
        %v6633 = vpop.f32.mrf.mxu0
        %v6634 = vadd.f32 %v6437, %v6633
        %v6635 = vpop.f32.mrf.mxu0
        %v6636 = vadd.f32 %v6439, %v6635
        %6637 = vmatmul.bf16.gmra.mxu0 %v6558
        %v6638 = vpop.f32.mrf.mxu0
        %v6639 = vadd.f32 %v6442, %v6638
        %v6640 = vpop.f32.mrf.mxu0
        %v6641 = vadd.f32 %v6444, %v6640
        %6642 = vmatmul.bf16.gmra.mxu0 %v6561
        %v6643 = vpop.f32.mrf.mxu0
        %v6644 = vadd.f32 %v6447, %v6643
        %v6645 = vpop.f32.mrf.mxu0
        %v6646 = vadd.f32 %v6449, %v6645
        %6647 = vmatmul.bf16.gmra.mxu0 %v6564
        %v6648 = vpop.f32.mrf.mxu0
        %v6649 = vadd.f32 %v6452, %v6648
        %v6650 = vpop.f32.mrf.mxu0
        %v6651 = vadd.f32 %v6454, %v6650
        %6652 = vmatmul.bf16.gmra.mxu0 %v6567
        %v6653 = vpop.f32.mrf.mxu0
        %v6654 = vadd.f32 %v6457, %v6653
        %v6655 = vpop.f32.mrf.mxu0
        %v6656 = vadd.f32 %v6459, %v6655
        %6657 = vdwg.mxu0
        %v6658 = vld [vmem:[#allocation2 + $0x4] sm:$0xf]
        %v6659 = vld [vmem:[#allocation2 + $0x8] sm:$0xf]
        %v6660 = vld [vmem:[#allocation2 + $0xc] sm:$0x1]
        %v6661 = vld [vmem:[#allocation2 + $0x14] sm:$0xf]
        %v6662 = vld [vmem:[#allocation2 + $0x18] sm:$0xf]
        %v6663 = vld [vmem:[#allocation2 + $0x1c] sm:$0x1]
        %v6664 = vld [vmem:[#allocation2 + $0x24] sm:$0xf]
        %v6665 = vld [vmem:[#allocation2 + $0x28] sm:$0xf]
        %v6666 = vld [vmem:[#allocation2 + $0x2c] sm:$0x1]
        %v6667 = vld [vmem:[#allocation2 + $0x34] sm:$0xf]
        %v6668 = vld [vmem:[#allocation2 + $0x38] sm:$0xf]
        %v6669 = vld [vmem:[#allocation2 + $0x3c] sm:$0x1]
        %v6670 = vld [vmem:[#allocation2 + $0x44] sm:$0xf]
        %v6671 = vld [vmem:[#allocation2 + $0x48] sm:$0xf]
        %v6672 = vld [vmem:[#allocation2 + $0x4c] sm:$0x1]
        %v6673 = vld [vmem:[#allocation2 + $0x54] sm:$0xf]
        %v6674 = vld [vmem:[#allocation2 + $0x58] sm:$0xf]
        %v6675 = vld [vmem:[#allocation2 + $0x5c] sm:$0x1]
        %v6676 = vld [vmem:[#allocation2 + $0x64] sm:$0xf]
        %v6677 = vld [vmem:[#allocation2 + $0x68] sm:$0xf]
        %v6678 = vld [vmem:[#allocation2 + $0x6c] sm:$0x1]
        %v6679 = vld [vmem:[#allocation2 + $0x74] sm:$0xf]
        %v6680 = vld [vmem:[#allocation2 + $0x78] sm:$0xf]
        %v6681 = vld [vmem:[#allocation2 + $0x7c] sm:$0x1]
        %v6682 = vld [vmem:[#allocation2 + $0x84] sm:$0xf]
        %v6683 = vld [vmem:[#allocation2 + $0x88] sm:$0xf]
        %v6684 = vld [vmem:[#allocation2 + $0x8c] sm:$0x1]
        %v6685 = vld [vmem:[#allocation2 + $0x94] sm:$0xf]
        %v6686 = vld [vmem:[#allocation2 + $0x98] sm:$0xf]
        %v6687 = vld [vmem:[#allocation2 + $0x9c] sm:$0x1]
        %v6688 = vld [vmem:[#allocation2 + $0xa4] sm:$0xf]
        %v6689 = vld [vmem:[#allocation2 + $0xa8] sm:$0xf]
        %v6690 = vld [vmem:[#allocation2 + $0xac] sm:$0x1]
        %v6691 = vld [vmem:[#allocation2 + $0xb4] sm:$0xf]
        %v6692 = vld [vmem:[#allocation2 + $0xb8] sm:$0xf]
        %v6693 = vld [vmem:[#allocation2 + $0xbc] sm:$0x1]
        %v6694 = vld [vmem:[#allocation2 + $0xc4] sm:$0xf]
        %v6695 = vld [vmem:[#allocation2 + $0xc8] sm:$0xf]
        %v6696 = vld [vmem:[#allocation2 + $0xcc] sm:$0x1]
        %v6697 = vld [vmem:[#allocation2 + $0xd4] sm:$0xf]
        %v6698 = vld [vmem:[#allocation2 + $0xd8] sm:$0xf]
        %v6699 = vld [vmem:[#allocation2 + $0xdc] sm:$0x1]
        %v6700 = vld [vmem:[#allocation2 + $0xe4] sm:$0xf]
        %v6701 = vld [vmem:[#allocation2 + $0xe8] sm:$0xf]
        %v6702 = vld [vmem:[#allocation2 + $0xec] sm:$0x1]
        %v6703 = vld [vmem:[#allocation2 + $0xf4] sm:$0xf]
        %v6704 = vld [vmem:[#allocation2 + $0xf8] sm:$0xf]
        %v6705 = vld [vmem:[#allocation2 + $0xfc] sm:$0x1]
        %v6707 = vshrl.u32 %v6658, 16
        %v6709 = vrot.slane %v6707, 4
        %v6710 = vshll.u32 %v6658, 16
        %v6712 = vrot.slane %v6710, 5
        %v6713 = vor.u32 %v6709, %v6712
        %v6714 = vrot.slane %v6713, 4
        %v6716 = vshll.u32 %v6659, 16
        %v6718 = vrot.slane %v6716, 5
        %v6719 = vsel %vm1739, %v6714, %v6718
        %v6720 = vshrl.u32 %v6659, 16
        %v6722 = vrot.slane %v6720, 4
        %v6723 = vor.u32 %v6722, %v6718
        %v6724 = vrot.slane %v6723, 4
        %v6726 = vshll.u32 %v6660, 16
        %v6728 = vrot.slane %v6726, 5
        %v6729 = vsel %vm1739, %v6724, %v6728
        %v6731 = vshrl.u32 %v6661, 16
        %v6733 = vrot.slane %v6731, 4
        %v6734 = vshll.u32 %v6661, 16
        %v6736 = vrot.slane %v6734, 5
        %v6737 = vor.u32 %v6733, %v6736
        %v6738 = vrot.slane %v6737, 4
        %v6740 = vshll.u32 %v6662, 16
        %v6742 = vrot.slane %v6740, 5
        %v6743 = vsel %vm1739, %v6738, %v6742
        %v6744 = vshrl.u32 %v6662, 16
        %v6746 = vrot.slane %v6744, 4
        %v6747 = vor.u32 %v6746, %v6742
        %v6748 = vrot.slane %v6747, 4
        %v6750 = vshll.u32 %v6663, 16
        %v6752 = vrot.slane %v6750, 5
        %v6753 = vsel %vm1739, %v6748, %v6752
        %v6755 = vshrl.u32 %v6664, 16
        %v6757 = vrot.slane %v6755, 4
        %v6758 = vshll.u32 %v6664, 16
        %v6760 = vrot.slane %v6758, 5
        %v6761 = vor.u32 %v6757, %v6760
        %v6762 = vrot.slane %v6761, 4
        %v6764 = vshll.u32 %v6665, 16
        %v6766 = vrot.slane %v6764, 5
        %v6767 = vsel %vm1739, %v6762, %v6766
        %v6768 = vshrl.u32 %v6665, 16
        %v6770 = vrot.slane %v6768, 4
        %v6771 = vor.u32 %v6770, %v6766
        %v6772 = vrot.slane %v6771, 4
        %v6774 = vshll.u32 %v6666, 16
        %v6776 = vrot.slane %v6774, 5
        %v6777 = vsel %vm1739, %v6772, %v6776
        %v6779 = vshrl.u32 %v6667, 16
        %v6781 = vrot.slane %v6779, 4
        %v6782 = vshll.u32 %v6667, 16
        %v6784 = vrot.slane %v6782, 5
        %v6785 = vor.u32 %v6781, %v6784
        %v6786 = vrot.slane %v6785, 4
        %v6788 = vshll.u32 %v6668, 16
        %v6790 = vrot.slane %v6788, 5
        %v6791 = vsel %vm1739, %v6786, %v6790
        %v6792 = vshrl.u32 %v6668, 16
        %v6794 = vrot.slane %v6792, 4
        %v6795 = vor.u32 %v6794, %v6790
        %v6796 = vrot.slane %v6795, 4
        %v6798 = vshll.u32 %v6669, 16
        %v6800 = vrot.slane %v6798, 5
        %v6801 = vsel %vm1739, %v6796, %v6800
        %v6803 = vshrl.u32 %v6670, 16
        %v6805 = vrot.slane %v6803, 4
        %v6806 = vshll.u32 %v6670, 16
        %v6808 = vrot.slane %v6806, 5
        %v6809 = vor.u32 %v6805, %v6808
        %v6810 = vrot.slane %v6809, 4
        %v6812 = vshll.u32 %v6671, 16
        %v6814 = vrot.slane %v6812, 5
        %v6815 = vsel %vm1739, %v6810, %v6814
        %v6816 = vshrl.u32 %v6671, 16
        %v6818 = vrot.slane %v6816, 4
        %v6819 = vor.u32 %v6818, %v6814
        %v6820 = vrot.slane %v6819, 4
        %v6822 = vshll.u32 %v6672, 16
        %v6824 = vrot.slane %v6822, 5
        %v6825 = vsel %vm1739, %v6820, %v6824
        %v6827 = vshrl.u32 %v6673, 16
        %v6829 = vrot.slane %v6827, 4
        %v6830 = vshll.u32 %v6673, 16
        %v6832 = vrot.slane %v6830, 5
        %v6833 = vor.u32 %v6829, %v6832
        %v6834 = vrot.slane %v6833, 4
        %v6836 = vshll.u32 %v6674, 16
        %v6838 = vrot.slane %v6836, 5
        %v6839 = vsel %vm1739, %v6834, %v6838
        %v6840 = vshrl.u32 %v6674, 16
        %v6842 = vrot.slane %v6840, 4
        %v6843 = vor.u32 %v6842, %v6838
        %v6844 = vrot.slane %v6843, 4
        %v6846 = vshll.u32 %v6675, 16
        %v6848 = vrot.slane %v6846, 5
        %v6849 = vsel %vm1739, %v6844, %v6848
        %v6851 = vshrl.u32 %v6676, 16
        %v6853 = vrot.slane %v6851, 4
        %v6854 = vshll.u32 %v6676, 16
        %v6856 = vrot.slane %v6854, 5
        %v6857 = vor.u32 %v6853, %v6856
        %v6858 = vrot.slane %v6857, 4
        %v6860 = vshll.u32 %v6677, 16
        %v6862 = vrot.slane %v6860, 5
        %v6863 = vsel %vm1739, %v6858, %v6862
        %v6864 = vshrl.u32 %v6677, 16
        %v6866 = vrot.slane %v6864, 4
        %v6867 = vor.u32 %v6866, %v6862
        %v6868 = vrot.slane %v6867, 4
        %v6870 = vshll.u32 %v6678, 16
        %v6872 = vrot.slane %v6870, 5
        %v6873 = vsel %vm1739, %v6868, %v6872
        %v6875 = vshrl.u32 %v6679, 16
        %v6877 = vrot.slane %v6875, 4
        %v6878 = vshll.u32 %v6679, 16
        %v6880 = vrot.slane %v6878, 5
        %v6881 = vor.u32 %v6877, %v6880
        %v6882 = vrot.slane %v6881, 4
        %v6884 = vshll.u32 %v6680, 16
        %v6886 = vrot.slane %v6884, 5
        %v6887 = vsel %vm1739, %v6882, %v6886
        %v6888 = vshrl.u32 %v6680, 16
        %v6890 = vrot.slane %v6888, 4
        %v6891 = vor.u32 %v6890, %v6886
        %v6892 = vrot.slane %v6891, 4
        %v6894 = vshll.u32 %v6681, 16
        %v6896 = vrot.slane %v6894, 5
        %v6897 = vsel %vm1739, %v6892, %v6896
        %v6899 = vshrl.u32 %v6682, 16
        %v6901 = vrot.slane %v6899, 4
        %v6902 = vshll.u32 %v6682, 16
        %v6904 = vrot.slane %v6902, 5
        %v6905 = vor.u32 %v6901, %v6904
        %v6906 = vrot.slane %v6905, 4
        %v6908 = vshll.u32 %v6683, 16
        %v6910 = vrot.slane %v6908, 5
        %v6911 = vsel %vm1739, %v6906, %v6910
        %v6912 = vshrl.u32 %v6683, 16
        %v6914 = vrot.slane %v6912, 4
        %v6915 = vor.u32 %v6914, %v6910
        %v6916 = vrot.slane %v6915, 4
        %v6918 = vshll.u32 %v6684, 16
        %v6920 = vrot.slane %v6918, 5
        %v6921 = vsel %vm1739, %v6916, %v6920
        %v6923 = vshrl.u32 %v6685, 16
        %v6925 = vrot.slane %v6923, 4
        %v6926 = vshll.u32 %v6685, 16
        %v6928 = vrot.slane %v6926, 5
        %v6929 = vor.u32 %v6925, %v6928
        %v6930 = vrot.slane %v6929, 4
        %v6932 = vshll.u32 %v6686, 16
        %v6934 = vrot.slane %v6932, 5
        %v6935 = vsel %vm1739, %v6930, %v6934
        %v6936 = vshrl.u32 %v6686, 16
        %v6938 = vrot.slane %v6936, 4
        %v6939 = vor.u32 %v6938, %v6934
        %v6940 = vrot.slane %v6939, 4
        %v6942 = vshll.u32 %v6687, 16
        %v6944 = vrot.slane %v6942, 5
        %v6945 = vsel %vm1739, %v6940, %v6944
        %v6947 = vshrl.u32 %v6688, 16
        %v6949 = vrot.slane %v6947, 4
        %v6950 = vshll.u32 %v6688, 16
        %v6952 = vrot.slane %v6950, 5
        %v6953 = vor.u32 %v6949, %v6952
        %v6954 = vrot.slane %v6953, 4
        %v6956 = vshll.u32 %v6689, 16
        %v6958 = vrot.slane %v6956, 5
        %v6959 = vsel %vm1739, %v6954, %v6958
        %v6960 = vshrl.u32 %v6689, 16
        %v6962 = vrot.slane %v6960, 4
        %v6963 = vor.u32 %v6962, %v6958
        %v6964 = vrot.slane %v6963, 4
        %v6966 = vshll.u32 %v6690, 16
        %v6968 = vrot.slane %v6966, 5
        %v6969 = vsel %vm1739, %v6964, %v6968
        %v6971 = vshrl.u32 %v6691, 16
        %v6973 = vrot.slane %v6971, 4
        %v6974 = vshll.u32 %v6691, 16
        %v6976 = vrot.slane %v6974, 5
        %v6977 = vor.u32 %v6973, %v6976
        %v6978 = vrot.slane %v6977, 4
        %v6980 = vshll.u32 %v6692, 16
        %v6982 = vrot.slane %v6980, 5
        %v6983 = vsel %vm1739, %v6978, %v6982
        %v6984 = vshrl.u32 %v6692, 16
        %v6986 = vrot.slane %v6984, 4
        %v6987 = vor.u32 %v6986, %v6982
        %v6988 = vrot.slane %v6987, 4
        %v6990 = vshll.u32 %v6693, 16
        %v6992 = vrot.slane %v6990, 5
        %v6993 = vsel %vm1739, %v6988, %v6992
        %v6995 = vshrl.u32 %v6694, 16
        %v6997 = vrot.slane %v6995, 4
        %v6998 = vshll.u32 %v6694, 16
        %v7000 = vrot.slane %v6998, 5
        %v7001 = vor.u32 %v6997, %v7000
        %v7002 = vrot.slane %v7001, 4
        %v7004 = vshll.u32 %v6695, 16
        %v7006 = vrot.slane %v7004, 5
        %v7007 = vsel %vm1739, %v7002, %v7006
        %v7008 = vshrl.u32 %v6695, 16
        %v7010 = vrot.slane %v7008, 4
        %v7011 = vor.u32 %v7010, %v7006
        %v7012 = vrot.slane %v7011, 4
        %v7014 = vshll.u32 %v6696, 16
        %v7016 = vrot.slane %v7014, 5
        %v7017 = vsel %vm1739, %v7012, %v7016
        %v7019 = vshrl.u32 %v6697, 16
        %v7021 = vrot.slane %v7019, 4
        %v7022 = vshll.u32 %v6697, 16
        %v7024 = vrot.slane %v7022, 5
        %v7025 = vor.u32 %v7021, %v7024
        %v7026 = vrot.slane %v7025, 4
        %v7028 = vshll.u32 %v6698, 16
        %v7030 = vrot.slane %v7028, 5
        %v7031 = vsel %vm1739, %v7026, %v7030
        %v7032 = vshrl.u32 %v6698, 16
        %v7034 = vrot.slane %v7032, 4
        %v7035 = vor.u32 %v7034, %v7030
        %v7036 = vrot.slane %v7035, 4
        %v7038 = vshll.u32 %v6699, 16
        %v7040 = vrot.slane %v7038, 5
        %v7041 = vsel %vm1739, %v7036, %v7040
        %v7043 = vshrl.u32 %v6700, 16
        %v7045 = vrot.slane %v7043, 4
        %v7046 = vshll.u32 %v6700, 16
        %v7048 = vrot.slane %v7046, 5
        %v7049 = vor.u32 %v7045, %v7048
        %v7050 = vrot.slane %v7049, 4
        %v7052 = vshll.u32 %v6701, 16
        %v7054 = vrot.slane %v7052, 5
        %v7055 = vsel %vm1739, %v7050, %v7054
        %v7056 = vshrl.u32 %v6701, 16
        %v7058 = vrot.slane %v7056, 4
        %v7059 = vor.u32 %v7058, %v7054
        %v7060 = vrot.slane %v7059, 4
        %v7062 = vshll.u32 %v6702, 16
        %v7064 = vrot.slane %v7062, 5
        %v7065 = vsel %vm1739, %v7060, %v7064
        %v7067 = vshrl.u32 %v6703, 16
        %v7069 = vrot.slane %v7067, 4
        %v7070 = vshll.u32 %v6703, 16
        %v7072 = vrot.slane %v7070, 5
        %v7073 = vor.u32 %v7069, %v7072
        %v7074 = vrot.slane %v7073, 4
        %v7076 = vshll.u32 %v6704, 16
        %v7078 = vrot.slane %v7076, 5
        %v7079 = vsel %vm1739, %v7074, %v7078
        %v7080 = vshrl.u32 %v6704, 16
        %v7082 = vrot.slane %v7080, 4
        %v7083 = vor.u32 %v7082, %v7078
        %v7084 = vrot.slane %v7083, 4
        %v7086 = vshll.u32 %v6705, 16
        %v7088 = vrot.slane %v7086, 5
        %v7089 = vsel %vm1739, %v7084, %v7088
        %s7090 = scalar_lea.vmem %s3, 176
        %v7091 = vld [vmem:[%s7090] sm:$0xf]
        %v7092 = vld [vmem:[%s7090 + $0x4] sm:$0xf]
        %v7093 = vld [vmem:[%s7090 + $0x8] sm:$0xf]
        %v7094 = vld [vmem:[%s7090 + $0xc] sm:$0xf]
        %v7095 = vunpack.c.l.b16 %v6719
        %v7096 = vunpack.c.l.b16 %v6729
        %v7097 = vunpack.c.l.b16 %v6743
        %v7098 = vunpack.c.l.b16 %v6753
        %v7099 = vunpack.c.l.b16 %v6767
        %v7100 = vunpack.c.l.b16 %v6777
        %v7101 = vunpack.c.l.b16 %v6791
        %v7102 = vunpack.c.l.b16 %v6801
        %v7103 = vunpack.c.l.b16 %v6815
        %v7104 = vunpack.c.l.b16 %v6825
        %v7105 = vunpack.c.l.b16 %v6839
        %v7106 = vunpack.c.l.b16 %v6849
        %v7107 = vunpack.c.l.b16 %v6863
        %v7108 = vunpack.c.l.b16 %v6873
        %v7109 = vunpack.c.l.b16 %v6887
        %v7110 = vunpack.c.l.b16 %v6897
        %v7111 = vunpack.c.l.b16 %v6911
        %v7112 = vunpack.c.l.b16 %v6921
        %v7113 = vunpack.c.l.b16 %v6935
        %v7114 = vunpack.c.l.b16 %v6945
        %v7115 = vunpack.c.l.b16 %v6959
        %v7116 = vunpack.c.l.b16 %v6969
        %v7117 = vunpack.c.l.b16 %v6983
        %v7118 = vunpack.c.l.b16 %v6993
        %v7119 = vunpack.c.l.b16 %v7007
        %v7120 = vunpack.c.l.b16 %v7017
        %v7121 = vunpack.c.l.b16 %v7031
        %v7122 = vunpack.c.l.b16 %v7041
        %v7123 = vunpack.c.l.b16 %v7055
        %v7124 = vunpack.c.l.b16 %v7065
        %v7125 = vunpack.c.l.b16 %v7079
        %v7126 = vunpack.c.l.b16 %v7089
        %v7127 = vpack.c.b16 %v7096, %v7095
        %v7128 = vpack.c.b16 %v7098, %v7097
        %v7129 = vpack.c.b16 %v7100, %v7099
        %v7130 = vpack.c.b16 %v7102, %v7101
        %v7131 = vpack.c.b16 %v7104, %v7103
        %v7132 = vpack.c.b16 %v7106, %v7105
        %v7133 = vpack.c.b16 %v7108, %v7107
        %v7134 = vpack.c.b16 %v7110, %v7109
        %v7135 = vpack.c.b16 %v7112, %v7111
        %v7136 = vpack.c.b16 %v7114, %v7113
        %v7137 = vpack.c.b16 %v7116, %v7115
        %v7138 = vpack.c.b16 %v7118, %v7117
        %v7139 = vpack.c.b16 %v7120, %v7119
        %v7140 = vpack.c.b16 %v7122, %v7121
        %v7141 = vpack.c.b16 %v7124, %v7123
        %v7142 = vpack.c.b16 %v7126, %v7125
        %v7147 = vunpack.c.l.b16 %v7091
        %v7148 = vunpack.c.l.b16 %v7092
        %v7149 = vunpack.c.l.b16 %v7093
        %v7150 = vunpack.c.l.b16 %v7094
        %v7151 = vpack.c.b16 %v7148, %v7147
        %v7152 = vpack.c.b16 %v7150, %v7149
        %v7156 = vsel %vm1354, %v7127, 0
        %v7159 = vsel %vm1354, %v7128, 0
        %v7162 = vsel %vm1354, %v7129, 0
        %v7165 = vsel %vm1354, %v7130, 0
        %v7168 = vsel %vm1354, %v7131, 0
        %v7171 = vsel %vm1354, %v7132, 0
        %v7174 = vsel %vm1354, %v7133, 0
        %v7177 = vsel %vm1354, %v7134, 0
        %v7180 = vsel %vm1354, %v7135, 0
        %v7183 = vsel %vm1354, %v7136, 0
        %v7186 = vsel %vm1354, %v7137, 0
        %v7189 = vsel %vm1354, %v7138, 0
        %v7192 = vsel %vm1354, %v7139, 0
        %v7195 = vsel %vm1354, %v7140, 0
        %v7198 = vsel %vm1354, %v7141, 0
        %v7201 = vsel %vm1354, %v7142, 0
        %7203 = vmatpush.bf16.msra.mxu0 0
        %7204 = vmatpush.bf16.msra.mxu0 0
        %7205 = vmatpush.bf16.msra.mxu0 0
        %7206 = vmatpush.bf16.msra.mxu0 0
        %7207 = vmatpush.bf16.msra.mxu0 0
        %7208 = vmatpush.bf16.msra.mxu0 0
        %7209 = vmatpush.bf16.msra.mxu0 %v7152
        %7210 = vmatpush.bf16.msra.mxu0 %v7151
        %7211 = vmatmul.bf16.gmra.mxu0 %v7156
        %v7212 = vpop.f32.mrf.mxu0
        %v7213 = vadd.f32 0.0, %v7212
        %v7214 = vpop.f32.mrf.mxu0
        %v7215 = vadd.f32 0.0, %v7214
        %7216 = vmatmul.bf16.gmra.mxu0 %v7159
        %v7217 = vpop.f32.mrf.mxu0
        %v7218 = vadd.f32 0.0, %v7217
        %v7219 = vpop.f32.mrf.mxu0
        %v7220 = vadd.f32 0.0, %v7219
        %7221 = vmatmul.bf16.gmra.mxu0 %v7162
        %v7222 = vpop.f32.mrf.mxu0
        %v7223 = vadd.f32 0.0, %v7222
        %v7224 = vpop.f32.mrf.mxu0
        %v7225 = vadd.f32 0.0, %v7224
        %7226 = vmatmul.bf16.gmra.mxu0 %v7165
        %v7227 = vpop.f32.mrf.mxu0
        %v7228 = vadd.f32 0.0, %v7227
        %v7229 = vpop.f32.mrf.mxu0
        %v7230 = vadd.f32 0.0, %v7229
        %7231 = vmatmul.bf16.gmra.mxu0 %v7168
        %v7232 = vpop.f32.mrf.mxu0
        %v7233 = vadd.f32 0.0, %v7232
        %v7234 = vpop.f32.mrf.mxu0
        %v7235 = vadd.f32 0.0, %v7234
        %7236 = vmatmul.bf16.gmra.mxu0 %v7171
        %v7237 = vpop.f32.mrf.mxu0
        %v7238 = vadd.f32 0.0, %v7237
        %v7239 = vpop.f32.mrf.mxu0
        %v7240 = vadd.f32 0.0, %v7239
        %7241 = vmatmul.bf16.gmra.mxu0 %v7174
        %v7242 = vpop.f32.mrf.mxu0
        %v7243 = vadd.f32 0.0, %v7242
        %v7244 = vpop.f32.mrf.mxu0
        %v7245 = vadd.f32 0.0, %v7244
        %7246 = vmatmul.bf16.gmra.mxu0 %v7177
        %v7247 = vpop.f32.mrf.mxu0
        %v7248 = vadd.f32 0.0, %v7247
        %v7249 = vpop.f32.mrf.mxu0
        %v7250 = vadd.f32 0.0, %v7249
        %7251 = vmatmul.bf16.gmra.mxu0 %v7180
        %v7252 = vpop.f32.mrf.mxu0
        %v7253 = vadd.f32 0.0, %v7252
        %v7254 = vpop.f32.mrf.mxu0
        %v7255 = vadd.f32 0.0, %v7254
        %7256 = vmatmul.bf16.gmra.mxu0 %v7183
        %v7257 = vpop.f32.mrf.mxu0
        %v7258 = vadd.f32 0.0, %v7257
        %v7259 = vpop.f32.mrf.mxu0
        %v7260 = vadd.f32 0.0, %v7259
        %7261 = vmatmul.bf16.gmra.mxu0 %v7186
        %v7262 = vpop.f32.mrf.mxu0
        %v7263 = vadd.f32 0.0, %v7262
        %v7264 = vpop.f32.mrf.mxu0
        %v7265 = vadd.f32 0.0, %v7264
        %7266 = vmatmul.bf16.gmra.mxu0 %v7189
        %v7267 = vpop.f32.mrf.mxu0
        %v7268 = vadd.f32 0.0, %v7267
        %v7269 = vpop.f32.mrf.mxu0
        %v7270 = vadd.f32 0.0, %v7269
        %7271 = vmatmul.bf16.gmra.mxu0 %v7192
        %v7272 = vpop.f32.mrf.mxu0
        %v7273 = vadd.f32 0.0, %v7272
        %v7274 = vpop.f32.mrf.mxu0
        %v7275 = vadd.f32 0.0, %v7274
        %7276 = vmatmul.bf16.gmra.mxu0 %v7195
        %v7277 = vpop.f32.mrf.mxu0
        %v7278 = vadd.f32 0.0, %v7277
        %v7279 = vpop.f32.mrf.mxu0
        %v7280 = vadd.f32 0.0, %v7279
        %7281 = vmatmul.bf16.gmra.mxu0 %v7198
        %v7282 = vpop.f32.mrf.mxu0
        %v7283 = vadd.f32 0.0, %v7282
        %v7284 = vpop.f32.mrf.mxu0
        %v7285 = vadd.f32 0.0, %v7284
        %7286 = vmatmul.bf16.gmra.mxu0 %v7201
        %v7287 = vpop.f32.mrf.mxu0
        %v7288 = vadd.f32 0.0, %v7287
        %v7289 = vpop.f32.mrf.mxu0
        %v7290 = vadd.f32 0.0, %v7289
        %7291 = vdwg.mxu0
        %v7292 = vadd.f32 %v6579, %v7213
        %v7293 = vadd.f32 %v6581, %v7215
        %v7294 = vadd.f32 %v6584, %v7218
        %v7295 = vadd.f32 %v6586, %v7220
        %v7296 = vadd.f32 %v6589, %v7223
        %v7297 = vadd.f32 %v6591, %v7225
        %v7298 = vadd.f32 %v6594, %v7228
        %v7299 = vadd.f32 %v6596, %v7230
        %v7300 = vadd.f32 %v6599, %v7233
        %v7301 = vadd.f32 %v6601, %v7235
        %v7302 = vadd.f32 %v6604, %v7238
        %v7303 = vadd.f32 %v6606, %v7240
        %v7304 = vadd.f32 %v6609, %v7243
        %v7305 = vadd.f32 %v6611, %v7245
        %v7306 = vadd.f32 %v6614, %v7248
        %v7307 = vadd.f32 %v6616, %v7250
        %v7308 = vadd.f32 %v6619, %v7253
        %v7309 = vadd.f32 %v6621, %v7255
        %v7310 = vadd.f32 %v6624, %v7258
        %v7311 = vadd.f32 %v6626, %v7260
        %v7312 = vadd.f32 %v6629, %v7263
        %v7313 = vadd.f32 %v6631, %v7265
        %v7314 = vadd.f32 %v6634, %v7268
        %v7315 = vadd.f32 %v6636, %v7270
        %v7316 = vadd.f32 %v6639, %v7273
        %v7317 = vadd.f32 %v6641, %v7275
        %v7318 = vadd.f32 %v6644, %v7278
        %v7319 = vadd.f32 %v6646, %v7280
        %v7320 = vadd.f32 %v6649, %v7283
        %v7321 = vadd.f32 %v6651, %v7285
        %v7322 = vadd.f32 %v6654, %v7288
        %v7323 = vadd.f32 %v6656, %v7290
        %v7324 = vld [vmem:[%s818] sm:$0x8]
        %v7325 = vld [vmem:[%s818 + $0x4] sm:$0xf]
        %v7326 = vld [vmem:[%s818 + $0x8] sm:$0xf]
        %v7327 = vld [vmem:[%s818 + $0x10] sm:$0x8]
        %v7328 = vld [vmem:[%s818 + $0x14] sm:$0xf]
        %v7329 = vld [vmem:[%s818 + $0x18] sm:$0xf]
        %v7330 = vld [vmem:[%s818 + $0x20] sm:$0x8]
        %v7331 = vld [vmem:[%s818 + $0x24] sm:$0xf]
        %v7332 = vld [vmem:[%s818 + $0x28] sm:$0xf]
        %v7333 = vld [vmem:[%s818 + $0x30] sm:$0x8]
        %v7334 = vld [vmem:[%s818 + $0x34] sm:$0xf]
        %v7335 = vld [vmem:[%s818 + $0x38] sm:$0xf]
        %v7336 = vld [vmem:[%s818 + $0x40] sm:$0x8]
        %v7337 = vld [vmem:[%s818 + $0x44] sm:$0xf]
        %v7338 = vld [vmem:[%s818 + $0x48] sm:$0xf]
        %v7339 = vld [vmem:[%s818 + $0x50] sm:$0x8]
        %v7340 = vld [vmem:[%s818 + $0x54] sm:$0xf]
        %v7341 = vld [vmem:[%s818 + $0x58] sm:$0xf]
        %v7342 = vld [vmem:[%s818 + $0x60] sm:$0x8]
        %v7343 = vld [vmem:[%s818 + $0x64] sm:$0xf]
        %v7344 = vld [vmem:[%s818 + $0x68] sm:$0xf]
        %v7345 = vld [vmem:[%s818 + $0x70] sm:$0x8]
        %v7346 = vld [vmem:[%s818 + $0x74] sm:$0xf]
        %v7347 = vld [vmem:[%s818 + $0x78] sm:$0xf]
        %v7348 = vld [vmem:[%s818 + $0x80] sm:$0x8]
        %v7349 = vld [vmem:[%s818 + $0x84] sm:$0xf]
        %v7350 = vld [vmem:[%s818 + $0x88] sm:$0xf]
        %v7351 = vld [vmem:[%s818 + $0x90] sm:$0x8]
        %v7352 = vld [vmem:[%s818 + $0x94] sm:$0xf]
        %v7353 = vld [vmem:[%s818 + $0x98] sm:$0xf]
        %v7354 = vld [vmem:[%s818 + $0xa0] sm:$0x8]
        %v7355 = vld [vmem:[%s818 + $0xa4] sm:$0xf]
        %v7356 = vld [vmem:[%s818 + $0xa8] sm:$0xf]
        %v7357 = vld [vmem:[%s818 + $0xb0] sm:$0x8]
        %v7358 = vld [vmem:[%s818 + $0xb4] sm:$0xf]
        %v7359 = vld [vmem:[%s818 + $0xb8] sm:$0xf]
        %v7360 = vld [vmem:[%s818 + $0xc0] sm:$0x8]
        %v7361 = vld [vmem:[%s818 + $0xc4] sm:$0xf]
        %v7362 = vld [vmem:[%s818 + $0xc8] sm:$0xf]
        %v7363 = vld [vmem:[%s818 + $0xd0] sm:$0x8]
        %v7364 = vld [vmem:[%s818 + $0xd4] sm:$0xf]
        %v7365 = vld [vmem:[%s818 + $0xd8] sm:$0xf]
        %v7366 = vld [vmem:[%s818 + $0xe0] sm:$0x8]
        %v7367 = vld [vmem:[%s818 + $0xe4] sm:$0xf]
        %v7368 = vld [vmem:[%s818 + $0xe8] sm:$0xf]
        %v7369 = vld [vmem:[%s818 + $0xf0] sm:$0x8]
        %v7370 = vld [vmem:[%s818 + $0xf4] sm:$0xf]
        %v7371 = vld [vmem:[%s818 + $0xf8] sm:$0xf]
        %v7373 = vshrl.u32 %v7324, 16
        %v7375 = vrot.slane %v7373, 7
        %v7376 = vrot.slane %v7375, 4
        %v7378 = vshrl.u32 %v7325, 16
        %v7380 = vrot.slane %v7378, 7
        %v7381 = vshll.u32 %v7325, 16
        %v7383 = vor.u32 %v7380, %v7381
        %v7384 = vsel %vm900, %v7376, %v7383
        %v7385 = vrot.slane %v7380, 4
        %v7387 = vshrl.u32 %v7326, 16
        %v7389 = vrot.slane %v7387, 7
        %v7390 = vshll.u32 %v7326, 16
        %v7392 = vor.u32 %v7389, %v7390
        %v7393 = vsel %vm900, %v7385, %v7392
        %v7395 = vshrl.u32 %v7327, 16
        %v7397 = vrot.slane %v7395, 7
        %v7398 = vrot.slane %v7397, 4
        %v7400 = vshrl.u32 %v7328, 16
        %v7402 = vrot.slane %v7400, 7
        %v7403 = vshll.u32 %v7328, 16
        %v7405 = vor.u32 %v7402, %v7403
        %v7406 = vsel %vm900, %v7398, %v7405
        %v7407 = vrot.slane %v7402, 4
        %v7409 = vshrl.u32 %v7329, 16
        %v7411 = vrot.slane %v7409, 7
        %v7412 = vshll.u32 %v7329, 16
        %v7414 = vor.u32 %v7411, %v7412
        %v7415 = vsel %vm900, %v7407, %v7414
        %v7417 = vshrl.u32 %v7330, 16
        %v7419 = vrot.slane %v7417, 7
        %v7420 = vrot.slane %v7419, 4
        %v7422 = vshrl.u32 %v7331, 16
        %v7424 = vrot.slane %v7422, 7
        %v7425 = vshll.u32 %v7331, 16
        %v7427 = vor.u32 %v7424, %v7425
        %v7428 = vsel %vm900, %v7420, %v7427
        %v7429 = vrot.slane %v7424, 4
        %v7431 = vshrl.u32 %v7332, 16
        %v7433 = vrot.slane %v7431, 7
        %v7434 = vshll.u32 %v7332, 16
        %v7436 = vor.u32 %v7433, %v7434
        %v7437 = vsel %vm900, %v7429, %v7436
        %v7439 = vshrl.u32 %v7333, 16
        %v7441 = vrot.slane %v7439, 7
        %v7442 = vrot.slane %v7441, 4
        %v7444 = vshrl.u32 %v7334, 16
        %v7446 = vrot.slane %v7444, 7
        %v7447 = vshll.u32 %v7334, 16
        %v7449 = vor.u32 %v7446, %v7447
        %v7450 = vsel %vm900, %v7442, %v7449
        %v7451 = vrot.slane %v7446, 4
        %v7453 = vshrl.u32 %v7335, 16
        %v7455 = vrot.slane %v7453, 7
        %v7456 = vshll.u32 %v7335, 16
        %v7458 = vor.u32 %v7455, %v7456
        %v7459 = vsel %vm900, %v7451, %v7458
        %v7461 = vshrl.u32 %v7336, 16
        %v7463 = vrot.slane %v7461, 7
        %v7464 = vrot.slane %v7463, 4
        %v7466 = vshrl.u32 %v7337, 16
        %v7468 = vrot.slane %v7466, 7
        %v7469 = vshll.u32 %v7337, 16
        %v7471 = vor.u32 %v7468, %v7469
        %v7472 = vsel %vm900, %v7464, %v7471
        %v7473 = vrot.slane %v7468, 4
        %v7475 = vshrl.u32 %v7338, 16
        %v7477 = vrot.slane %v7475, 7
        %v7478 = vshll.u32 %v7338, 16
        %v7480 = vor.u32 %v7477, %v7478
        %v7481 = vsel %vm900, %v7473, %v7480
        %v7483 = vshrl.u32 %v7339, 16
        %v7485 = vrot.slane %v7483, 7
        %v7486 = vrot.slane %v7485, 4
        %v7488 = vshrl.u32 %v7340, 16
        %v7490 = vrot.slane %v7488, 7
        %v7491 = vshll.u32 %v7340, 16
        %v7493 = vor.u32 %v7490, %v7491
        %v7494 = vsel %vm900, %v7486, %v7493
        %v7495 = vrot.slane %v7490, 4
        %v7497 = vshrl.u32 %v7341, 16
        %v7499 = vrot.slane %v7497, 7
        %v7500 = vshll.u32 %v7341, 16
        %v7502 = vor.u32 %v7499, %v7500
        %v7503 = vsel %vm900, %v7495, %v7502
        %v7505 = vshrl.u32 %v7342, 16
        %v7507 = vrot.slane %v7505, 7
        %v7508 = vrot.slane %v7507, 4
        %v7510 = vshrl.u32 %v7343, 16
        %v7512 = vrot.slane %v7510, 7
        %v7513 = vshll.u32 %v7343, 16
        %v7515 = vor.u32 %v7512, %v7513
        %v7516 = vsel %vm900, %v7508, %v7515
        %v7517 = vrot.slane %v7512, 4
        %v7519 = vshrl.u32 %v7344, 16
        %v7521 = vrot.slane %v7519, 7
        %v7522 = vshll.u32 %v7344, 16
        %v7524 = vor.u32 %v7521, %v7522
        %v7525 = vsel %vm900, %v7517, %v7524
        %v7527 = vshrl.u32 %v7345, 16
        %v7529 = vrot.slane %v7527, 7
        %v7530 = vrot.slane %v7529, 4
        %v7532 = vshrl.u32 %v7346, 16
        %v7534 = vrot.slane %v7532, 7
        %v7535 = vshll.u32 %v7346, 16
        %v7537 = vor.u32 %v7534, %v7535
        %v7538 = vsel %vm900, %v7530, %v7537
        %v7539 = vrot.slane %v7534, 4
        %v7541 = vshrl.u32 %v7347, 16
        %v7543 = vrot.slane %v7541, 7
        %v7544 = vshll.u32 %v7347, 16
        %v7546 = vor.u32 %v7543, %v7544
        %v7547 = vsel %vm900, %v7539, %v7546
        %v7549 = vshrl.u32 %v7348, 16
        %v7551 = vrot.slane %v7549, 7
        %v7552 = vrot.slane %v7551, 4
        %v7554 = vshrl.u32 %v7349, 16
        %v7556 = vrot.slane %v7554, 7
        %v7557 = vshll.u32 %v7349, 16
        %v7559 = vor.u32 %v7556, %v7557
        %v7560 = vsel %vm900, %v7552, %v7559
        %v7561 = vrot.slane %v7556, 4
        %v7563 = vshrl.u32 %v7350, 16
        %v7565 = vrot.slane %v7563, 7
        %v7566 = vshll.u32 %v7350, 16
        %v7568 = vor.u32 %v7565, %v7566
        %v7569 = vsel %vm900, %v7561, %v7568
        %v7571 = vshrl.u32 %v7351, 16
        %v7573 = vrot.slane %v7571, 7
        %v7574 = vrot.slane %v7573, 4
        %v7576 = vshrl.u32 %v7352, 16
        %v7578 = vrot.slane %v7576, 7
        %v7579 = vshll.u32 %v7352, 16
        %v7581 = vor.u32 %v7578, %v7579
        %v7582 = vsel %vm900, %v7574, %v7581
        %v7583 = vrot.slane %v7578, 4
        %v7585 = vshrl.u32 %v7353, 16
        %v7587 = vrot.slane %v7585, 7
        %v7588 = vshll.u32 %v7353, 16
        %v7590 = vor.u32 %v7587, %v7588
        %v7591 = vsel %vm900, %v7583, %v7590
        %v7593 = vshrl.u32 %v7354, 16
        %v7595 = vrot.slane %v7593, 7
        %v7596 = vrot.slane %v7595, 4
        %v7598 = vshrl.u32 %v7355, 16
        %v7600 = vrot.slane %v7598, 7
        %v7601 = vshll.u32 %v7355, 16
        %v7603 = vor.u32 %v7600, %v7601
        %v7604 = vsel %vm900, %v7596, %v7603
        %v7605 = vrot.slane %v7600, 4
        %v7607 = vshrl.u32 %v7356, 16
        %v7609 = vrot.slane %v7607, 7
        %v7610 = vshll.u32 %v7356, 16
        %v7612 = vor.u32 %v7609, %v7610
        %v7613 = vsel %vm900, %v7605, %v7612
        %v7615 = vshrl.u32 %v7357, 16
        %v7617 = vrot.slane %v7615, 7
        %v7618 = vrot.slane %v7617, 4
        %v7620 = vshrl.u32 %v7358, 16
        %v7622 = vrot.slane %v7620, 7
        %v7623 = vshll.u32 %v7358, 16
        %v7625 = vor.u32 %v7622, %v7623
        %v7626 = vsel %vm900, %v7618, %v7625
        %v7627 = vrot.slane %v7622, 4
        %v7629 = vshrl.u32 %v7359, 16
        %v7631 = vrot.slane %v7629, 7
        %v7632 = vshll.u32 %v7359, 16
        %v7634 = vor.u32 %v7631, %v7632
        %v7635 = vsel %vm900, %v7627, %v7634
        %v7637 = vshrl.u32 %v7360, 16
        %v7639 = vrot.slane %v7637, 7
        %v7640 = vrot.slane %v7639, 4
        %v7642 = vshrl.u32 %v7361, 16
        %v7644 = vrot.slane %v7642, 7
        %v7645 = vshll.u32 %v7361, 16
        %v7647 = vor.u32 %v7644, %v7645
        %v7648 = vsel %vm900, %v7640, %v7647
        %v7649 = vrot.slane %v7644, 4
        %v7651 = vshrl.u32 %v7362, 16
        %v7653 = vrot.slane %v7651, 7
        %v7654 = vshll.u32 %v7362, 16
        %v7656 = vor.u32 %v7653, %v7654
        %v7657 = vsel %vm900, %v7649, %v7656
        %v7659 = vshrl.u32 %v7363, 16
        %v7661 = vrot.slane %v7659, 7
        %v7662 = vrot.slane %v7661, 4
        %v7664 = vshrl.u32 %v7364, 16
        %v7666 = vrot.slane %v7664, 7
        %v7667 = vshll.u32 %v7364, 16
        %v7669 = vor.u32 %v7666, %v7667
        %v7670 = vsel %vm900, %v7662, %v7669
        %v7671 = vrot.slane %v7666, 4
        %v7673 = vshrl.u32 %v7365, 16
        %v7675 = vrot.slane %v7673, 7
        %v7676 = vshll.u32 %v7365, 16
        %v7678 = vor.u32 %v7675, %v7676
        %v7679 = vsel %vm900, %v7671, %v7678
        %v7681 = vshrl.u32 %v7366, 16
        %v7683 = vrot.slane %v7681, 7
        %v7684 = vrot.slane %v7683, 4
        %v7686 = vshrl.u32 %v7367, 16
        %v7688 = vrot.slane %v7686, 7
        %v7689 = vshll.u32 %v7367, 16
        %v7691 = vor.u32 %v7688, %v7689
        %v7692 = vsel %vm900, %v7684, %v7691
        %v7693 = vrot.slane %v7688, 4
        %v7695 = vshrl.u32 %v7368, 16
        %v7697 = vrot.slane %v7695, 7
        %v7698 = vshll.u32 %v7368, 16
        %v7700 = vor.u32 %v7697, %v7698
        %v7701 = vsel %vm900, %v7693, %v7700
        %v7703 = vshrl.u32 %v7369, 16
        %v7705 = vrot.slane %v7703, 7
        %v7706 = vrot.slane %v7705, 4
        %v7708 = vshrl.u32 %v7370, 16
        %v7710 = vrot.slane %v7708, 7
        %v7711 = vshll.u32 %v7370, 16
        %v7713 = vor.u32 %v7710, %v7711
        %v7714 = vsel %vm900, %v7706, %v7713
        %v7715 = vrot.slane %v7710, 4
        %v7717 = vshrl.u32 %v7371, 16
        %v7719 = vrot.slane %v7717, 7
        %v7720 = vshll.u32 %v7371, 16
        %v7722 = vor.u32 %v7719, %v7720
        %v7723 = vsel %vm900, %v7715, %v7722
        %s7724 = scalar_lea.vmem %s3, 192
        %v7725 = vld [vmem:[%s7724] sm:$0xf]
        %v7726 = vld [vmem:[%s7724 + $0x4] sm:$0xf]
        %v7727 = vld [vmem:[%s7724 + $0x8] sm:$0xf]
        %v7728 = vld [vmem:[%s7724 + $0xc] sm:$0xf]
        %v7729 = vunpack.c.l.b16 %v7384
        %v7730 = vunpack.c.l.b16 %v7393
        %v7731 = vunpack.c.l.b16 %v7406
        %v7732 = vunpack.c.l.b16 %v7415
        %v7733 = vunpack.c.l.b16 %v7428
        %v7734 = vunpack.c.l.b16 %v7437
        %v7735 = vunpack.c.l.b16 %v7450
        %v7736 = vunpack.c.l.b16 %v7459
        %v7737 = vunpack.c.l.b16 %v7472
        %v7738 = vunpack.c.l.b16 %v7481
        %v7739 = vunpack.c.l.b16 %v7494
        %v7740 = vunpack.c.l.b16 %v7503
        %v7741 = vunpack.c.l.b16 %v7516
        %v7742 = vunpack.c.l.b16 %v7525
        %v7743 = vunpack.c.l.b16 %v7538
        %v7744 = vunpack.c.l.b16 %v7547
        %v7745 = vunpack.c.l.b16 %v7560
        %v7746 = vunpack.c.l.b16 %v7569
        %v7747 = vunpack.c.l.b16 %v7582
        %v7748 = vunpack.c.l.b16 %v7591
        %v7749 = vunpack.c.l.b16 %v7604
        %v7750 = vunpack.c.l.b16 %v7613
        %v7751 = vunpack.c.l.b16 %v7626
        %v7752 = vunpack.c.l.b16 %v7635
        %v7753 = vunpack.c.l.b16 %v7648
        %v7754 = vunpack.c.l.b16 %v7657
        %v7755 = vunpack.c.l.b16 %v7670
        %v7756 = vunpack.c.l.b16 %v7679
        %v7757 = vunpack.c.l.b16 %v7692
        %v7758 = vunpack.c.l.b16 %v7701
        %v7759 = vunpack.c.l.b16 %v7714
        %v7760 = vunpack.c.l.b16 %v7723
        %v7761 = vpack.c.b16 %v7730, %v7729
        %v7762 = vpack.c.b16 %v7732, %v7731
        %v7763 = vpack.c.b16 %v7734, %v7733
        %v7764 = vpack.c.b16 %v7736, %v7735
        %v7765 = vpack.c.b16 %v7738, %v7737
        %v7766 = vpack.c.b16 %v7740, %v7739
        %v7767 = vpack.c.b16 %v7742, %v7741
        %v7768 = vpack.c.b16 %v7744, %v7743
        %v7769 = vpack.c.b16 %v7746, %v7745
        %v7770 = vpack.c.b16 %v7748, %v7747
        %v7771 = vpack.c.b16 %v7750, %v7749
        %v7772 = vpack.c.b16 %v7752, %v7751
        %v7773 = vpack.c.b16 %v7754, %v7753
        %v7774 = vpack.c.b16 %v7756, %v7755
        %v7775 = vpack.c.b16 %v7758, %v7757
        %v7776 = vpack.c.b16 %v7760, %v7759
        %v7781 = vunpack.c.l.b16 %v7725
        %v7782 = vunpack.c.l.b16 %v7726
        %v7783 = vunpack.c.l.b16 %v7727
        %v7784 = vunpack.c.l.b16 %v7728
        %v7785 = vpack.c.b16 %v7782, %v7781
        %v7786 = vpack.c.b16 %v7784, %v7783
        %v7790 = vsel %vm1354, %v7761, 0
        %v7793 = vsel %vm1354, %v7762, 0
        %v7796 = vsel %vm1354, %v7763, 0
        %v7799 = vsel %vm1354, %v7764, 0
        %v7802 = vsel %vm1354, %v7765, 0
        %v7805 = vsel %vm1354, %v7766, 0
        %v7808 = vsel %vm1354, %v7767, 0
        %v7811 = vsel %vm1354, %v7768, 0
        %v7814 = vsel %vm1354, %v7769, 0
        %v7817 = vsel %vm1354, %v7770, 0
        %v7820 = vsel %vm1354, %v7771, 0
        %v7823 = vsel %vm1354, %v7772, 0
        %v7826 = vsel %vm1354, %v7773, 0
        %v7829 = vsel %vm1354, %v7774, 0
        %v7832 = vsel %vm1354, %v7775, 0
        %v7835 = vsel %vm1354, %v7776, 0
        %7837 = vmatpush.bf16.msra.mxu0 0
        %7838 = vmatpush.bf16.msra.mxu0 0
        %7839 = vmatpush.bf16.msra.mxu0 0
        %7840 = vmatpush.bf16.msra.mxu0 0
        %7841 = vmatpush.bf16.msra.mxu0 0
        %7842 = vmatpush.bf16.msra.mxu0 0
        %7843 = vmatpush.bf16.msra.mxu0 %v7786
        %7844 = vmatpush.bf16.msra.mxu0 %v7785
        %7845 = vmatmul.bf16.gmra.mxu0 %v7790
        %v7846 = vpop.f32.mrf.mxu0
        %v7847 = vadd.f32 0.0, %v7846
        %v7848 = vpop.f32.mrf.mxu0
        %v7849 = vadd.f32 0.0, %v7848
        %7850 = vmatmul.bf16.gmra.mxu0 %v7793
        %v7851 = vpop.f32.mrf.mxu0
        %v7852 = vadd.f32 0.0, %v7851
        %v7853 = vpop.f32.mrf.mxu0
        %v7854 = vadd.f32 0.0, %v7853
        %7855 = vmatmul.bf16.gmra.mxu0 %v7796
        %v7856 = vpop.f32.mrf.mxu0
        %v7857 = vadd.f32 0.0, %v7856
        %v7858 = vpop.f32.mrf.mxu0
        %v7859 = vadd.f32 0.0, %v7858
        %7860 = vmatmul.bf16.gmra.mxu0 %v7799
        %v7861 = vpop.f32.mrf.mxu0
        %v7862 = vadd.f32 0.0, %v7861
        %v7863 = vpop.f32.mrf.mxu0
        %v7864 = vadd.f32 0.0, %v7863
        %7865 = vmatmul.bf16.gmra.mxu0 %v7802
        %v7866 = vpop.f32.mrf.mxu0
        %v7867 = vadd.f32 0.0, %v7866
        %v7868 = vpop.f32.mrf.mxu0
        %v7869 = vadd.f32 0.0, %v7868
        %7870 = vmatmul.bf16.gmra.mxu0 %v7805
        %v7871 = vpop.f32.mrf.mxu0
        %v7872 = vadd.f32 0.0, %v7871
        %v7873 = vpop.f32.mrf.mxu0
        %v7874 = vadd.f32 0.0, %v7873
        %7875 = vmatmul.bf16.gmra.mxu0 %v7808
        %v7876 = vpop.f32.mrf.mxu0
        %v7877 = vadd.f32 0.0, %v7876
        %v7878 = vpop.f32.mrf.mxu0
        %v7879 = vadd.f32 0.0, %v7878
        %7880 = vmatmul.bf16.gmra.mxu0 %v7811
        %v7881 = vpop.f32.mrf.mxu0
        %v7882 = vadd.f32 0.0, %v7881
        %v7883 = vpop.f32.mrf.mxu0
        %v7884 = vadd.f32 0.0, %v7883
        %7885 = vmatmul.bf16.gmra.mxu0 %v7814
        %v7886 = vpop.f32.mrf.mxu0
        %v7887 = vadd.f32 0.0, %v7886
        %v7888 = vpop.f32.mrf.mxu0
        %v7889 = vadd.f32 0.0, %v7888
        %7890 = vmatmul.bf16.gmra.mxu0 %v7817
        %v7891 = vpop.f32.mrf.mxu0
        %v7892 = vadd.f32 0.0, %v7891
        %v7893 = vpop.f32.mrf.mxu0
        %v7894 = vadd.f32 0.0, %v7893
        %7895 = vmatmul.bf16.gmra.mxu0 %v7820
        %v7896 = vpop.f32.mrf.mxu0
        %v7897 = vadd.f32 0.0, %v7896
        %v7898 = vpop.f32.mrf.mxu0
        %v7899 = vadd.f32 0.0, %v7898
        %7900 = vmatmul.bf16.gmra.mxu0 %v7823
        %v7901 = vpop.f32.mrf.mxu0
        %v7902 = vadd.f32 0.0, %v7901
        %v7903 = vpop.f32.mrf.mxu0
        %v7904 = vadd.f32 0.0, %v7903
        %7905 = vmatmul.bf16.gmra.mxu0 %v7826
        %v7906 = vpop.f32.mrf.mxu0
        %v7907 = vadd.f32 0.0, %v7906
        %v7908 = vpop.f32.mrf.mxu0
        %v7909 = vadd.f32 0.0, %v7908
        %7910 = vmatmul.bf16.gmra.mxu0 %v7829
        %v7911 = vpop.f32.mrf.mxu0
        %v7912 = vadd.f32 0.0, %v7911
        %v7913 = vpop.f32.mrf.mxu0
        %v7914 = vadd.f32 0.0, %v7913
        %7915 = vmatmul.bf16.gmra.mxu0 %v7832
        %v7916 = vpop.f32.mrf.mxu0
        %v7917 = vadd.f32 0.0, %v7916
        %v7918 = vpop.f32.mrf.mxu0
        %v7919 = vadd.f32 0.0, %v7918
        %7920 = vmatmul.bf16.gmra.mxu0 %v7835
        %v7921 = vpop.f32.mrf.mxu0
        %v7922 = vadd.f32 0.0, %v7921
        %v7923 = vpop.f32.mrf.mxu0
        %v7924 = vadd.f32 0.0, %v7923
        %7925 = vdwg.mxu0
        %v7926 = vadd.f32 %v7292, %v7847
        %v7927 = vadd.f32 %v7293, %v7849
        %v7928 = vadd.f32 %v7294, %v7852
        %v7929 = vadd.f32 %v7295, %v7854
        %v7930 = vadd.f32 %v7296, %v7857
        %v7931 = vadd.f32 %v7297, %v7859
        %v7932 = vadd.f32 %v7298, %v7862
        %v7933 = vadd.f32 %v7299, %v7864
        %v7934 = vadd.f32 %v7300, %v7867
        %v7935 = vadd.f32 %v7301, %v7869
        %v7936 = vadd.f32 %v7302, %v7872
        %v7937 = vadd.f32 %v7303, %v7874
        %v7938 = vadd.f32 %v7304, %v7877
        %v7939 = vadd.f32 %v7305, %v7879
        %v7940 = vadd.f32 %v7306, %v7882
        %v7941 = vadd.f32 %v7307, %v7884
        %v7942 = vadd.f32 %v7308, %v7887
        %v7943 = vadd.f32 %v7309, %v7889
        %v7944 = vadd.f32 %v7310, %v7892
        %v7945 = vadd.f32 %v7311, %v7894
        %v7946 = vadd.f32 %v7312, %v7897
        %v7947 = vadd.f32 %v7313, %v7899
        %v7948 = vadd.f32 %v7314, %v7902
        %v7949 = vadd.f32 %v7315, %v7904
        %v7950 = vadd.f32 %v7316, %v7907
        %v7951 = vadd.f32 %v7317, %v7909
        %v7952 = vadd.f32 %v7318, %v7912
        %v7953 = vadd.f32 %v7319, %v7914
        %v7954 = vadd.f32 %v7320, %v7917
        %v7955 = vadd.f32 %v7321, %v7919
        %v7956 = vadd.f32 %v7322, %v7922
        %v7957 = vadd.f32 %v7323, %v7924
        %s7958 = scalar_lea.vmem %s3, 208
        %v7959 = vld [vmem:[%s7958] sm:$0xf]
        %v7960 = vld [vmem:[%s7958 + $0x4] sm:$0xf]
        %v7961 = vld [vmem:[%s7958 + $0x8] sm:$0xf]
        %v7962 = vld [vmem:[%s7958 + $0xc] sm:$0xf]
        %v7995 = vunpack.c.l.b16 %v7325
        %v7996 = vunpack.c.l.b16 %v7326
        %v7997 = vunpack.c.l.b16 %v7328
        %v7998 = vunpack.c.l.b16 %v7329
        %v7999 = vunpack.c.l.b16 %v7331
        %v8000 = vunpack.c.l.b16 %v7332
        %v8001 = vunpack.c.l.b16 %v7334
        %v8002 = vunpack.c.l.b16 %v7335
        %v8003 = vunpack.c.l.b16 %v7337
        %v8004 = vunpack.c.l.b16 %v7338
        %v8005 = vunpack.c.l.b16 %v7340
        %v8006 = vunpack.c.l.b16 %v7341
        %v8007 = vunpack.c.l.b16 %v7343
        %v8008 = vunpack.c.l.b16 %v7344
        %v8009 = vunpack.c.l.b16 %v7346
        %v8010 = vunpack.c.l.b16 %v7347
        %v8011 = vunpack.c.l.b16 %v7349
        %v8012 = vunpack.c.l.b16 %v7350
        %v8013 = vunpack.c.l.b16 %v7352
        %v8014 = vunpack.c.l.b16 %v7353
        %v8015 = vunpack.c.l.b16 %v7355
        %v8016 = vunpack.c.l.b16 %v7356
        %v8017 = vunpack.c.l.b16 %v7358
        %v8018 = vunpack.c.l.b16 %v7359
        %v8019 = vunpack.c.l.b16 %v7361
        %v8020 = vunpack.c.l.b16 %v7362
        %v8021 = vunpack.c.l.b16 %v7364
        %v8022 = vunpack.c.l.b16 %v7365
        %v8023 = vunpack.c.l.b16 %v7367
        %v8024 = vunpack.c.l.b16 %v7368
        %v8025 = vunpack.c.l.b16 %v7370
        %v8026 = vunpack.c.l.b16 %v7371
        %v8027 = vpack.c.b16 %v7996, %v7995
        %v8028 = vpack.c.b16 %v7998, %v7997
        %v8029 = vpack.c.b16 %v8000, %v7999
        %v8030 = vpack.c.b16 %v8002, %v8001
        %v8031 = vpack.c.b16 %v8004, %v8003
        %v8032 = vpack.c.b16 %v8006, %v8005
        %v8033 = vpack.c.b16 %v8008, %v8007
        %v8034 = vpack.c.b16 %v8010, %v8009
        %v8035 = vpack.c.b16 %v8012, %v8011
        %v8036 = vpack.c.b16 %v8014, %v8013
        %v8037 = vpack.c.b16 %v8016, %v8015
        %v8038 = vpack.c.b16 %v8018, %v8017
        %v8039 = vpack.c.b16 %v8020, %v8019
        %v8040 = vpack.c.b16 %v8022, %v8021
        %v8041 = vpack.c.b16 %v8024, %v8023
        %v8042 = vpack.c.b16 %v8026, %v8025
        %v8047 = vunpack.c.l.b16 %v7959
        %v8048 = vunpack.c.l.b16 %v7960
        %v8049 = vunpack.c.l.b16 %v7961
        %v8050 = vunpack.c.l.b16 %v7962
        %v8051 = vpack.c.b16 %v8048, %v8047
        %v8052 = vpack.c.b16 %v8050, %v8049
        %v8056 = vsel %vm1354, %v8027, 0
        %v8059 = vsel %vm1354, %v8028, 0
        %v8062 = vsel %vm1354, %v8029, 0
        %v8065 = vsel %vm1354, %v8030, 0
        %v8068 = vsel %vm1354, %v8031, 0
        %v8071 = vsel %vm1354, %v8032, 0
        %v8074 = vsel %vm1354, %v8033, 0
        %v8077 = vsel %vm1354, %v8034, 0
        %v8080 = vsel %vm1354, %v8035, 0
        %v8083 = vsel %vm1354, %v8036, 0
        %v8086 = vsel %vm1354, %v8037, 0
        %v8089 = vsel %vm1354, %v8038, 0
        %v8092 = vsel %vm1354, %v8039, 0
        %v8095 = vsel %vm1354, %v8040, 0
        %v8098 = vsel %vm1354, %v8041, 0
        %v8101 = vsel %vm1354, %v8042, 0
        %8103 = vmatpush.bf16.msra.mxu0 0
        %8104 = vmatpush.bf16.msra.mxu0 0
        %8105 = vmatpush.bf16.msra.mxu0 0
        %8106 = vmatpush.bf16.msra.mxu0 0
        %8107 = vmatpush.bf16.msra.mxu0 0
        %8108 = vmatpush.bf16.msra.mxu0 0
        %8109 = vmatpush.bf16.msra.mxu0 %v8052
        %8110 = vmatpush.bf16.msra.mxu0 %v8051
        %8111 = vmatmul.bf16.gmra.mxu0 %v8056
        %v8112 = vpop.f32.mrf.mxu0
        %v8113 = vadd.f32 0.0, %v8112
        %v8114 = vpop.f32.mrf.mxu0
        %v8115 = vadd.f32 0.0, %v8114
        %8116 = vmatmul.bf16.gmra.mxu0 %v8059
        %v8117 = vpop.f32.mrf.mxu0
        %v8118 = vadd.f32 0.0, %v8117
        %v8119 = vpop.f32.mrf.mxu0
        %v8120 = vadd.f32 0.0, %v8119
        %8121 = vmatmul.bf16.gmra.mxu0 %v8062
        %v8122 = vpop.f32.mrf.mxu0
        %v8123 = vadd.f32 0.0, %v8122
        %v8124 = vpop.f32.mrf.mxu0
        %v8125 = vadd.f32 0.0, %v8124
        %8126 = vmatmul.bf16.gmra.mxu0 %v8065
        %v8127 = vpop.f32.mrf.mxu0
        %v8128 = vadd.f32 0.0, %v8127
        %v8129 = vpop.f32.mrf.mxu0
        %v8130 = vadd.f32 0.0, %v8129
        %8131 = vmatmul.bf16.gmra.mxu0 %v8068
        %v8132 = vpop.f32.mrf.mxu0
        %v8133 = vadd.f32 0.0, %v8132
        %v8134 = vpop.f32.mrf.mxu0
        %v8135 = vadd.f32 0.0, %v8134
        %8136 = vmatmul.bf16.gmra.mxu0 %v8071
        %v8137 = vpop.f32.mrf.mxu0
        %v8138 = vadd.f32 0.0, %v8137
        %v8139 = vpop.f32.mrf.mxu0
        %v8140 = vadd.f32 0.0, %v8139
        %8141 = vmatmul.bf16.gmra.mxu0 %v8074
        %v8142 = vpop.f32.mrf.mxu0
        %v8143 = vadd.f32 0.0, %v8142
        %v8144 = vpop.f32.mrf.mxu0
        %v8145 = vadd.f32 0.0, %v8144
        %8146 = vmatmul.bf16.gmra.mxu0 %v8077
        %v8147 = vpop.f32.mrf.mxu0
        %v8148 = vadd.f32 0.0, %v8147
        %v8149 = vpop.f32.mrf.mxu0
        %v8150 = vadd.f32 0.0, %v8149
        %8151 = vmatmul.bf16.gmra.mxu0 %v8080
        %v8152 = vpop.f32.mrf.mxu0
        %v8153 = vadd.f32 0.0, %v8152
        %v8154 = vpop.f32.mrf.mxu0
        %v8155 = vadd.f32 0.0, %v8154
        %8156 = vmatmul.bf16.gmra.mxu0 %v8083
        %v8157 = vpop.f32.mrf.mxu0
        %v8158 = vadd.f32 0.0, %v8157
        %v8159 = vpop.f32.mrf.mxu0
        %v8160 = vadd.f32 0.0, %v8159
        %8161 = vmatmul.bf16.gmra.mxu0 %v8086
        %v8162 = vpop.f32.mrf.mxu0
        %v8163 = vadd.f32 0.0, %v8162
        %v8164 = vpop.f32.mrf.mxu0
        %v8165 = vadd.f32 0.0, %v8164
        %8166 = vmatmul.bf16.gmra.mxu0 %v8089
        %v8167 = vpop.f32.mrf.mxu0
        %v8168 = vadd.f32 0.0, %v8167
        %v8169 = vpop.f32.mrf.mxu0
        %v8170 = vadd.f32 0.0, %v8169
        %8171 = vmatmul.bf16.gmra.mxu0 %v8092
        %v8172 = vpop.f32.mrf.mxu0
        %v8173 = vadd.f32 0.0, %v8172
        %v8174 = vpop.f32.mrf.mxu0
        %v8175 = vadd.f32 0.0, %v8174
        %8176 = vmatmul.bf16.gmra.mxu0 %v8095
        %v8177 = vpop.f32.mrf.mxu0
        %v8178 = vadd.f32 0.0, %v8177
        %v8179 = vpop.f32.mrf.mxu0
        %v8180 = vadd.f32 0.0, %v8179
        %8181 = vmatmul.bf16.gmra.mxu0 %v8098
        %v8182 = vpop.f32.mrf.mxu0
        %v8183 = vadd.f32 0.0, %v8182
        %v8184 = vpop.f32.mrf.mxu0
        %v8185 = vadd.f32 0.0, %v8184
        %8186 = vmatmul.bf16.gmra.mxu0 %v8101
        %v8187 = vpop.f32.mrf.mxu0
        %v8188 = vadd.f32 0.0, %v8187
        %v8189 = vpop.f32.mrf.mxu0
        %v8190 = vadd.f32 0.0, %v8189
        %8191 = vdwg.mxu0
        %v8192 = vadd.f32 %v7926, %v8113
        %v8193 = vadd.f32 %v7927, %v8115
        %v8194 = vadd.f32 %v7928, %v8118
        %v8195 = vadd.f32 %v7929, %v8120
        %v8196 = vadd.f32 %v7930, %v8123
        %v8197 = vadd.f32 %v7931, %v8125
        %v8198 = vadd.f32 %v7932, %v8128
        %v8199 = vadd.f32 %v7933, %v8130
        %v8200 = vadd.f32 %v7934, %v8133
        %v8201 = vadd.f32 %v7935, %v8135
        %v8202 = vadd.f32 %v7936, %v8138
        %v8203 = vadd.f32 %v7937, %v8140
        %v8204 = vadd.f32 %v7938, %v8143
        %v8205 = vadd.f32 %v7939, %v8145
        %v8206 = vadd.f32 %v7940, %v8148
        %v8207 = vadd.f32 %v7941, %v8150
        %v8208 = vadd.f32 %v7942, %v8153
        %v8209 = vadd.f32 %v7943, %v8155
        %v8210 = vadd.f32 %v7944, %v8158
        %v8211 = vadd.f32 %v7945, %v8160
        %v8212 = vadd.f32 %v7946, %v8163
        %v8213 = vadd.f32 %v7947, %v8165
        %v8214 = vadd.f32 %v7948, %v8168
        %v8215 = vadd.f32 %v7949, %v8170
        %v8216 = vadd.f32 %v7950, %v8173
        %v8217 = vadd.f32 %v7951, %v8175
        %v8218 = vadd.f32 %v7952, %v8178
        %v8219 = vadd.f32 %v7953, %v8180
        %v8220 = vadd.f32 %v7954, %v8183
        %v8221 = vadd.f32 %v7955, %v8185
        %v8222 = vadd.f32 %v7956, %v8188
        %v8223 = vadd.f32 %v7957, %v8190
        %v8224 = vld [vmem:[%s818 + $0x4] sm:$0xf]
        %v8225 = vld [vmem:[%s818 + $0x8] sm:$0xf]
        %v8226 = vld [vmem:[%s818 + $0xc] sm:$0x1]
        %v8227 = vld [vmem:[%s818 + $0x14] sm:$0xf]
        %v8228 = vld [vmem:[%s818 + $0x18] sm:$0xf]
        %v8229 = vld [vmem:[%s818 + $0x1c] sm:$0x1]
        %v8230 = vld [vmem:[%s818 + $0x24] sm:$0xf]
        %v8231 = vld [vmem:[%s818 + $0x28] sm:$0xf]
        %v8232 = vld [vmem:[%s818 + $0x2c] sm:$0x1]
        %v8233 = vld [vmem:[%s818 + $0x34] sm:$0xf]
        %v8234 = vld [vmem:[%s818 + $0x38] sm:$0xf]
        %v8235 = vld [vmem:[%s818 + $0x3c] sm:$0x1]
        %v8236 = vld [vmem:[%s818 + $0x44] sm:$0xf]
        %v8237 = vld [vmem:[%s818 + $0x48] sm:$0xf]
        %v8238 = vld [vmem:[%s818 + $0x4c] sm:$0x1]
        %v8239 = vld [vmem:[%s818 + $0x54] sm:$0xf]
        %v8240 = vld [vmem:[%s818 + $0x58] sm:$0xf]
        %v8241 = vld [vmem:[%s818 + $0x5c] sm:$0x1]
        %v8242 = vld [vmem:[%s818 + $0x64] sm:$0xf]
        %v8243 = vld [vmem:[%s818 + $0x68] sm:$0xf]
        %v8244 = vld [vmem:[%s818 + $0x6c] sm:$0x1]
        %v8245 = vld [vmem:[%s818 + $0x74] sm:$0xf]
        %v8246 = vld [vmem:[%s818 + $0x78] sm:$0xf]
        %v8247 = vld [vmem:[%s818 + $0x7c] sm:$0x1]
        %v8248 = vld [vmem:[%s818 + $0x84] sm:$0xf]
        %v8249 = vld [vmem:[%s818 + $0x88] sm:$0xf]
        %v8250 = vld [vmem:[%s818 + $0x8c] sm:$0x1]
        %v8251 = vld [vmem:[%s818 + $0x94] sm:$0xf]
        %v8252 = vld [vmem:[%s818 + $0x98] sm:$0xf]
        %v8253 = vld [vmem:[%s818 + $0x9c] sm:$0x1]
        %v8254 = vld [vmem:[%s818 + $0xa4] sm:$0xf]
        %v8255 = vld [vmem:[%s818 + $0xa8] sm:$0xf]
        %v8256 = vld [vmem:[%s818 + $0xac] sm:$0x1]
        %v8257 = vld [vmem:[%s818 + $0xb4] sm:$0xf]
        %v8258 = vld [vmem:[%s818 + $0xb8] sm:$0xf]
        %v8259 = vld [vmem:[%s818 + $0xbc] sm:$0x1]
        %v8260 = vld [vmem:[%s818 + $0xc4] sm:$0xf]
        %v8261 = vld [vmem:[%s818 + $0xc8] sm:$0xf]
        %v8262 = vld [vmem:[%s818 + $0xcc] sm:$0x1]
        %v8263 = vld [vmem:[%s818 + $0xd4] sm:$0xf]
        %v8264 = vld [vmem:[%s818 + $0xd8] sm:$0xf]
        %v8265 = vld [vmem:[%s818 + $0xdc] sm:$0x1]
        %v8266 = vld [vmem:[%s818 + $0xe4] sm:$0xf]
        %v8267 = vld [vmem:[%s818 + $0xe8] sm:$0xf]
        %v8268 = vld [vmem:[%s818 + $0xec] sm:$0x1]
        %v8269 = vld [vmem:[%s818 + $0xf4] sm:$0xf]
        %v8270 = vld [vmem:[%s818 + $0xf8] sm:$0xf]
        %v8271 = vld [vmem:[%s818 + $0xfc] sm:$0x1]
        %v8273 = vshrl.u32 %v8224, 16
        %v8275 = vrot.slane %v8273, 4
        %v8276 = vshll.u32 %v8224, 16
        %v8278 = vrot.slane %v8276, 5
        %v8279 = vor.u32 %v8275, %v8278
        %v8280 = vrot.slane %v8279, 4
        %v8282 = vshll.u32 %v8225, 16
        %v8284 = vrot.slane %v8282, 5
        %v8285 = vsel %vm1739, %v8280, %v8284
        %v8286 = vshrl.u32 %v8225, 16
        %v8288 = vrot.slane %v8286, 4
        %v8289 = vor.u32 %v8288, %v8284
        %v8290 = vrot.slane %v8289, 4
        %v8292 = vshll.u32 %v8226, 16
        %v8294 = vrot.slane %v8292, 5
        %v8295 = vsel %vm1739, %v8290, %v8294
        %v8297 = vshrl.u32 %v8227, 16
        %v8299 = vrot.slane %v8297, 4
        %v8300 = vshll.u32 %v8227, 16
        %v8302 = vrot.slane %v8300, 5
        %v8303 = vor.u32 %v8299, %v8302
        %v8304 = vrot.slane %v8303, 4
        %v8306 = vshll.u32 %v8228, 16
        %v8308 = vrot.slane %v8306, 5
        %v8309 = vsel %vm1739, %v8304, %v8308
        %v8310 = vshrl.u32 %v8228, 16
        %v8312 = vrot.slane %v8310, 4
        %v8313 = vor.u32 %v8312, %v8308
        %v8314 = vrot.slane %v8313, 4
        %v8316 = vshll.u32 %v8229, 16
        %v8318 = vrot.slane %v8316, 5
        %v8319 = vsel %vm1739, %v8314, %v8318
        %v8321 = vshrl.u32 %v8230, 16
        %v8323 = vrot.slane %v8321, 4
        %v8324 = vshll.u32 %v8230, 16
        %v8326 = vrot.slane %v8324, 5
        %v8327 = vor.u32 %v8323, %v8326
        %v8328 = vrot.slane %v8327, 4
        %v8330 = vshll.u32 %v8231, 16
        %v8332 = vrot.slane %v8330, 5
        %v8333 = vsel %vm1739, %v8328, %v8332
        %v8334 = vshrl.u32 %v8231, 16
        %v8336 = vrot.slane %v8334, 4
        %v8337 = vor.u32 %v8336, %v8332
        %v8338 = vrot.slane %v8337, 4
        %v8340 = vshll.u32 %v8232, 16
        %v8342 = vrot.slane %v8340, 5
        %v8343 = vsel %vm1739, %v8338, %v8342
        %v8345 = vshrl.u32 %v8233, 16
        %v8347 = vrot.slane %v8345, 4
        %v8348 = vshll.u32 %v8233, 16
        %v8350 = vrot.slane %v8348, 5
        %v8351 = vor.u32 %v8347, %v8350
        %v8352 = vrot.slane %v8351, 4
        %v8354 = vshll.u32 %v8234, 16
        %v8356 = vrot.slane %v8354, 5
        %v8357 = vsel %vm1739, %v8352, %v8356
        %v8358 = vshrl.u32 %v8234, 16
        %v8360 = vrot.slane %v8358, 4
        %v8361 = vor.u32 %v8360, %v8356
        %v8362 = vrot.slane %v8361, 4
        %v8364 = vshll.u32 %v8235, 16
        %v8366 = vrot.slane %v8364, 5
        %v8367 = vsel %vm1739, %v8362, %v8366
        %v8369 = vshrl.u32 %v8236, 16
        %v8371 = vrot.slane %v8369, 4
        %v8372 = vshll.u32 %v8236, 16
        %v8374 = vrot.slane %v8372, 5
        %v8375 = vor.u32 %v8371, %v8374
        %v8376 = vrot.slane %v8375, 4
        %v8378 = vshll.u32 %v8237, 16
        %v8380 = vrot.slane %v8378, 5
        %v8381 = vsel %vm1739, %v8376, %v8380
        %v8382 = vshrl.u32 %v8237, 16
        %v8384 = vrot.slane %v8382, 4
        %v8385 = vor.u32 %v8384, %v8380
        %v8386 = vrot.slane %v8385, 4
        %v8388 = vshll.u32 %v8238, 16
        %v8390 = vrot.slane %v8388, 5
        %v8391 = vsel %vm1739, %v8386, %v8390
        %v8393 = vshrl.u32 %v8239, 16
        %v8395 = vrot.slane %v8393, 4
        %v8396 = vshll.u32 %v8239, 16
        %v8398 = vrot.slane %v8396, 5
        %v8399 = vor.u32 %v8395, %v8398
        %v8400 = vrot.slane %v8399, 4
        %v8402 = vshll.u32 %v8240, 16
        %v8404 = vrot.slane %v8402, 5
        %v8405 = vsel %vm1739, %v8400, %v8404
        %v8406 = vshrl.u32 %v8240, 16
        %v8408 = vrot.slane %v8406, 4
        %v8409 = vor.u32 %v8408, %v8404
        %v8410 = vrot.slane %v8409, 4
        %v8412 = vshll.u32 %v8241, 16
        %v8414 = vrot.slane %v8412, 5
        %v8415 = vsel %vm1739, %v8410, %v8414
        %v8417 = vshrl.u32 %v8242, 16
        %v8419 = vrot.slane %v8417, 4
        %v8420 = vshll.u32 %v8242, 16
        %v8422 = vrot.slane %v8420, 5
        %v8423 = vor.u32 %v8419, %v8422
        %v8424 = vrot.slane %v8423, 4
        %v8426 = vshll.u32 %v8243, 16
        %v8428 = vrot.slane %v8426, 5
        %v8429 = vsel %vm1739, %v8424, %v8428
        %v8430 = vshrl.u32 %v8243, 16
        %v8432 = vrot.slane %v8430, 4
        %v8433 = vor.u32 %v8432, %v8428
        %v8434 = vrot.slane %v8433, 4
        %v8436 = vshll.u32 %v8244, 16
        %v8438 = vrot.slane %v8436, 5
        %v8439 = vsel %vm1739, %v8434, %v8438
        %v8441 = vshrl.u32 %v8245, 16
        %v8443 = vrot.slane %v8441, 4
        %v8444 = vshll.u32 %v8245, 16
        %v8446 = vrot.slane %v8444, 5
        %v8447 = vor.u32 %v8443, %v8446
        %v8448 = vrot.slane %v8447, 4
        %v8450 = vshll.u32 %v8246, 16
        %v8452 = vrot.slane %v8450, 5
        %v8453 = vsel %vm1739, %v8448, %v8452
        %v8454 = vshrl.u32 %v8246, 16
        %v8456 = vrot.slane %v8454, 4
        %v8457 = vor.u32 %v8456, %v8452
        %v8458 = vrot.slane %v8457, 4
        %v8460 = vshll.u32 %v8247, 16
        %v8462 = vrot.slane %v8460, 5
        %v8463 = vsel %vm1739, %v8458, %v8462
        %v8465 = vshrl.u32 %v8248, 16
        %v8467 = vrot.slane %v8465, 4
        %v8468 = vshll.u32 %v8248, 16
        %v8470 = vrot.slane %v8468, 5
        %v8471 = vor.u32 %v8467, %v8470
        %v8472 = vrot.slane %v8471, 4
        %v8474 = vshll.u32 %v8249, 16
        %v8476 = vrot.slane %v8474, 5
        %v8477 = vsel %vm1739, %v8472, %v8476
        %v8478 = vshrl.u32 %v8249, 16
        %v8480 = vrot.slane %v8478, 4
        %v8481 = vor.u32 %v8480, %v8476
        %v8482 = vrot.slane %v8481, 4
        %v8484 = vshll.u32 %v8250, 16
        %v8486 = vrot.slane %v8484, 5
        %v8487 = vsel %vm1739, %v8482, %v8486
        %v8489 = vshrl.u32 %v8251, 16
        %v8491 = vrot.slane %v8489, 4
        %v8492 = vshll.u32 %v8251, 16
        %v8494 = vrot.slane %v8492, 5
        %v8495 = vor.u32 %v8491, %v8494
        %v8496 = vrot.slane %v8495, 4
        %v8498 = vshll.u32 %v8252, 16
        %v8500 = vrot.slane %v8498, 5
        %v8501 = vsel %vm1739, %v8496, %v8500
        %v8502 = vshrl.u32 %v8252, 16
        %v8504 = vrot.slane %v8502, 4
        %v8505 = vor.u32 %v8504, %v8500
        %v8506 = vrot.slane %v8505, 4
        %v8508 = vshll.u32 %v8253, 16
        %v8510 = vrot.slane %v8508, 5
        %v8511 = vsel %vm1739, %v8506, %v8510
        %v8513 = vshrl.u32 %v8254, 16
        %v8515 = vrot.slane %v8513, 4
        %v8516 = vshll.u32 %v8254, 16
        %v8518 = vrot.slane %v8516, 5
        %v8519 = vor.u32 %v8515, %v8518
        %v8520 = vrot.slane %v8519, 4
        %v8522 = vshll.u32 %v8255, 16
        %v8524 = vrot.slane %v8522, 5
        %v8525 = vsel %vm1739, %v8520, %v8524
        %v8526 = vshrl.u32 %v8255, 16
        %v8528 = vrot.slane %v8526, 4
        %v8529 = vor.u32 %v8528, %v8524
        %v8530 = vrot.slane %v8529, 4
        %v8532 = vshll.u32 %v8256, 16
        %v8534 = vrot.slane %v8532, 5
        %v8535 = vsel %vm1739, %v8530, %v8534
        %v8537 = vshrl.u32 %v8257, 16
        %v8539 = vrot.slane %v8537, 4
        %v8540 = vshll.u32 %v8257, 16
        %v8542 = vrot.slane %v8540, 5
        %v8543 = vor.u32 %v8539, %v8542
        %v8544 = vrot.slane %v8543, 4
        %v8546 = vshll.u32 %v8258, 16
        %v8548 = vrot.slane %v8546, 5
        %v8549 = vsel %vm1739, %v8544, %v8548
        %v8550 = vshrl.u32 %v8258, 16
        %v8552 = vrot.slane %v8550, 4
        %v8553 = vor.u32 %v8552, %v8548
        %v8554 = vrot.slane %v8553, 4
        %v8556 = vshll.u32 %v8259, 16
        %v8558 = vrot.slane %v8556, 5
        %v8559 = vsel %vm1739, %v8554, %v8558
        %v8561 = vshrl.u32 %v8260, 16
        %v8563 = vrot.slane %v8561, 4
        %v8564 = vshll.u32 %v8260, 16
        %v8566 = vrot.slane %v8564, 5
        %v8567 = vor.u32 %v8563, %v8566
        %v8568 = vrot.slane %v8567, 4
        %v8570 = vshll.u32 %v8261, 16
        %v8572 = vrot.slane %v8570, 5
        %v8573 = vsel %vm1739, %v8568, %v8572
        %v8574 = vshrl.u32 %v8261, 16
        %v8576 = vrot.slane %v8574, 4
        %v8577 = vor.u32 %v8576, %v8572
        %v8578 = vrot.slane %v8577, 4
        %v8580 = vshll.u32 %v8262, 16
        %v8582 = vrot.slane %v8580, 5
        %v8583 = vsel %vm1739, %v8578, %v8582
        %v8585 = vshrl.u32 %v8263, 16
        %v8587 = vrot.slane %v8585, 4
        %v8588 = vshll.u32 %v8263, 16
        %v8590 = vrot.slane %v8588, 5
        %v8591 = vor.u32 %v8587, %v8590
        %v8592 = vrot.slane %v8591, 4
        %v8594 = vshll.u32 %v8264, 16
        %v8596 = vrot.slane %v8594, 5
        %v8597 = vsel %vm1739, %v8592, %v8596
        %v8598 = vshrl.u32 %v8264, 16
        %v8600 = vrot.slane %v8598, 4
        %v8601 = vor.u32 %v8600, %v8596
        %v8602 = vrot.slane %v8601, 4
        %v8604 = vshll.u32 %v8265, 16
        %v8606 = vrot.slane %v8604, 5
        %v8607 = vsel %vm1739, %v8602, %v8606
        %v8609 = vshrl.u32 %v8266, 16
        %v8611 = vrot.slane %v8609, 4
        %v8612 = vshll.u32 %v8266, 16
        %v8614 = vrot.slane %v8612, 5
        %v8615 = vor.u32 %v8611, %v8614
        %v8616 = vrot.slane %v8615, 4
        %v8618 = vshll.u32 %v8267, 16
        %v8620 = vrot.slane %v8618, 5
        %v8621 = vsel %vm1739, %v8616, %v8620
        %v8622 = vshrl.u32 %v8267, 16
        %v8624 = vrot.slane %v8622, 4
        %v8625 = vor.u32 %v8624, %v8620
        %v8626 = vrot.slane %v8625, 4
        %v8628 = vshll.u32 %v8268, 16
        %v8630 = vrot.slane %v8628, 5
        %v8631 = vsel %vm1739, %v8626, %v8630
        %v8633 = vshrl.u32 %v8269, 16
        %v8635 = vrot.slane %v8633, 4
        %v8636 = vshll.u32 %v8269, 16
        %v8638 = vrot.slane %v8636, 5
        %v8639 = vor.u32 %v8635, %v8638
        %v8640 = vrot.slane %v8639, 4
        %v8642 = vshll.u32 %v8270, 16
        %v8644 = vrot.slane %v8642, 5
        %v8645 = vsel %vm1739, %v8640, %v8644
        %v8646 = vshrl.u32 %v8270, 16
        %v8648 = vrot.slane %v8646, 4
        %v8649 = vor.u32 %v8648, %v8644
        %v8650 = vrot.slane %v8649, 4
        %v8652 = vshll.u32 %v8271, 16
        %v8654 = vrot.slane %v8652, 5
        %v8655 = vsel %vm1739, %v8650, %v8654
        %s8656 = scalar_lea.vmem %s3, 224
        %v8657 = vld [vmem:[%s8656] sm:$0xf]
        %v8658 = vld [vmem:[%s8656 + $0x4] sm:$0xf]
        %v8659 = vld [vmem:[%s8656 + $0x8] sm:$0xf]
        %v8660 = vld [vmem:[%s8656 + $0xc] sm:$0xf]
        %v8661 = vunpack.c.l.b16 %v8285
        %v8662 = vunpack.c.l.b16 %v8295
        %v8663 = vunpack.c.l.b16 %v8309
        %v8664 = vunpack.c.l.b16 %v8319
        %v8665 = vunpack.c.l.b16 %v8333
        %v8666 = vunpack.c.l.b16 %v8343
        %v8667 = vunpack.c.l.b16 %v8357
        %v8668 = vunpack.c.l.b16 %v8367
        %v8669 = vunpack.c.l.b16 %v8381
        %v8670 = vunpack.c.l.b16 %v8391
        %v8671 = vunpack.c.l.b16 %v8405
        %v8672 = vunpack.c.l.b16 %v8415
        %v8673 = vunpack.c.l.b16 %v8429
        %v8674 = vunpack.c.l.b16 %v8439
        %v8675 = vunpack.c.l.b16 %v8453
        %v8676 = vunpack.c.l.b16 %v8463
        %v8677 = vunpack.c.l.b16 %v8477
        %v8678 = vunpack.c.l.b16 %v8487
        %v8679 = vunpack.c.l.b16 %v8501
        %v8680 = vunpack.c.l.b16 %v8511
        %v8681 = vunpack.c.l.b16 %v8525
        %v8682 = vunpack.c.l.b16 %v8535
        %v8683 = vunpack.c.l.b16 %v8549
        %v8684 = vunpack.c.l.b16 %v8559
        %v8685 = vunpack.c.l.b16 %v8573
        %v8686 = vunpack.c.l.b16 %v8583
        %v8687 = vunpack.c.l.b16 %v8597
        %v8688 = vunpack.c.l.b16 %v8607
        %v8689 = vunpack.c.l.b16 %v8621
        %v8690 = vunpack.c.l.b16 %v8631
        %v8691 = vunpack.c.l.b16 %v8645
        %v8692 = vunpack.c.l.b16 %v8655
        %v8693 = vpack.c.b16 %v8662, %v8661
        %v8694 = vpack.c.b16 %v8664, %v8663
        %v8695 = vpack.c.b16 %v8666, %v8665
        %v8696 = vpack.c.b16 %v8668, %v8667
        %v8697 = vpack.c.b16 %v8670, %v8669
        %v8698 = vpack.c.b16 %v8672, %v8671
        %v8699 = vpack.c.b16 %v8674, %v8673
        %v8700 = vpack.c.b16 %v8676, %v8675
        %v8701 = vpack.c.b16 %v8678, %v8677
        %v8702 = vpack.c.b16 %v8680, %v8679
        %v8703 = vpack.c.b16 %v8682, %v8681
        %v8704 = vpack.c.b16 %v8684, %v8683
        %v8705 = vpack.c.b16 %v8686, %v8685
        %v8706 = vpack.c.b16 %v8688, %v8687
        %v8707 = vpack.c.b16 %v8690, %v8689
        %v8708 = vpack.c.b16 %v8692, %v8691
        %v8713 = vunpack.c.l.b16 %v8657
        %v8714 = vunpack.c.l.b16 %v8658
        %v8715 = vunpack.c.l.b16 %v8659
        %v8716 = vunpack.c.l.b16 %v8660
        %v8717 = vpack.c.b16 %v8714, %v8713
        %v8718 = vpack.c.b16 %v8716, %v8715
        %v8722 = vsel %vm1354, %v8693, 0
        %v8725 = vsel %vm1354, %v8694, 0
        %v8728 = vsel %vm1354, %v8695, 0
        %v8731 = vsel %vm1354, %v8696, 0
        %v8734 = vsel %vm1354, %v8697, 0
        %v8737 = vsel %vm1354, %v8698, 0
        %v8740 = vsel %vm1354, %v8699, 0
        %v8743 = vsel %vm1354, %v8700, 0
        %v8746 = vsel %vm1354, %v8701, 0
        %v8749 = vsel %vm1354, %v8702, 0
        %v8752 = vsel %vm1354, %v8703, 0
        %v8755 = vsel %vm1354, %v8704, 0
        %v8758 = vsel %vm1354, %v8705, 0
        %v8761 = vsel %vm1354, %v8706, 0
        %v8764 = vsel %vm1354, %v8707, 0
        %v8767 = vsel %vm1354, %v8708, 0
        %8769 = vmatpush.bf16.msra.mxu0 0
        %8770 = vmatpush.bf16.msra.mxu0 0
        %8771 = vmatpush.bf16.msra.mxu0 0
        %8772 = vmatpush.bf16.msra.mxu0 0
        %8773 = vmatpush.bf16.msra.mxu0 0
        %8774 = vmatpush.bf16.msra.mxu0 0
        %8775 = vmatpush.bf16.msra.mxu0 %v8718
        %8776 = vmatpush.bf16.msra.mxu0 %v8717
        %8777 = vmatmul.bf16.gmra.mxu0 %v8722
        %v8778 = vpop.f32.mrf.mxu0
        %v8779 = vadd.f32 0.0, %v8778
        %v8780 = vpop.f32.mrf.mxu0
        %v8781 = vadd.f32 0.0, %v8780
        %8782 = vmatmul.bf16.gmra.mxu0 %v8725
        %v8783 = vpop.f32.mrf.mxu0
        %v8784 = vadd.f32 0.0, %v8783
        %v8785 = vpop.f32.mrf.mxu0
        %v8786 = vadd.f32 0.0, %v8785
        %8787 = vmatmul.bf16.gmra.mxu0 %v8728
        %v8788 = vpop.f32.mrf.mxu0
        %v8789 = vadd.f32 0.0, %v8788
        %v8790 = vpop.f32.mrf.mxu0
        %v8791 = vadd.f32 0.0, %v8790
        %8792 = vmatmul.bf16.gmra.mxu0 %v8731
        %v8793 = vpop.f32.mrf.mxu0
        %v8794 = vadd.f32 0.0, %v8793
        %v8795 = vpop.f32.mrf.mxu0
        %v8796 = vadd.f32 0.0, %v8795
        %8797 = vmatmul.bf16.gmra.mxu0 %v8734
        %v8798 = vpop.f32.mrf.mxu0
        %v8799 = vadd.f32 0.0, %v8798
        %v8800 = vpop.f32.mrf.mxu0
        %v8801 = vadd.f32 0.0, %v8800
        %8802 = vmatmul.bf16.gmra.mxu0 %v8737
        %v8803 = vpop.f32.mrf.mxu0
        %v8804 = vadd.f32 0.0, %v8803
        %v8805 = vpop.f32.mrf.mxu0
        %v8806 = vadd.f32 0.0, %v8805
        %8807 = vmatmul.bf16.gmra.mxu0 %v8740
        %v8808 = vpop.f32.mrf.mxu0
        %v8809 = vadd.f32 0.0, %v8808
        %v8810 = vpop.f32.mrf.mxu0
        %v8811 = vadd.f32 0.0, %v8810
        %8812 = vmatmul.bf16.gmra.mxu0 %v8743
        %v8813 = vpop.f32.mrf.mxu0
        %v8814 = vadd.f32 0.0, %v8813
        %v8815 = vpop.f32.mrf.mxu0
        %v8816 = vadd.f32 0.0, %v8815
        %8817 = vmatmul.bf16.gmra.mxu0 %v8746
        %v8818 = vpop.f32.mrf.mxu0
        %v8819 = vadd.f32 0.0, %v8818
        %v8820 = vpop.f32.mrf.mxu0
        %v8821 = vadd.f32 0.0, %v8820
        %8822 = vmatmul.bf16.gmra.mxu0 %v8749
        %v8823 = vpop.f32.mrf.mxu0
        %v8824 = vadd.f32 0.0, %v8823
        %v8825 = vpop.f32.mrf.mxu0
        %v8826 = vadd.f32 0.0, %v8825
        %8827 = vmatmul.bf16.gmra.mxu0 %v8752
        %v8828 = vpop.f32.mrf.mxu0
        %v8829 = vadd.f32 0.0, %v8828
        %v8830 = vpop.f32.mrf.mxu0
        %v8831 = vadd.f32 0.0, %v8830
        %8832 = vmatmul.bf16.gmra.mxu0 %v8755
        %v8833 = vpop.f32.mrf.mxu0
        %v8834 = vadd.f32 0.0, %v8833
        %v8835 = vpop.f32.mrf.mxu0
        %v8836 = vadd.f32 0.0, %v8835
        %8837 = vmatmul.bf16.gmra.mxu0 %v8758
        %v8838 = vpop.f32.mrf.mxu0
        %v8839 = vadd.f32 0.0, %v8838
        %v8840 = vpop.f32.mrf.mxu0
        %v8841 = vadd.f32 0.0, %v8840
        %8842 = vmatmul.bf16.gmra.mxu0 %v8761
        %v8843 = vpop.f32.mrf.mxu0
        %v8844 = vadd.f32 0.0, %v8843
        %v8845 = vpop.f32.mrf.mxu0
        %v8846 = vadd.f32 0.0, %v8845
        %8847 = vmatmul.bf16.gmra.mxu0 %v8764
        %v8848 = vpop.f32.mrf.mxu0
        %v8849 = vadd.f32 0.0, %v8848
        %v8850 = vpop.f32.mrf.mxu0
        %v8851 = vadd.f32 0.0, %v8850
        %8852 = vmatmul.bf16.gmra.mxu0 %v8767
        %v8853 = vpop.f32.mrf.mxu0
        %v8854 = vadd.f32 0.0, %v8853
        %v8855 = vpop.f32.mrf.mxu0
        %v8856 = vadd.f32 0.0, %v8855
        %8857 = vdwg.mxu0
        %v8858 = vadd.f32 %v8192, %v8779
        %v8859 = vadd.f32 %v8193, %v8781
        %v8860 = vadd.f32 %v8194, %v8784
        %v8861 = vadd.f32 %v8195, %v8786
        %v8862 = vadd.f32 %v8196, %v8789
        %v8863 = vadd.f32 %v8197, %v8791
        %v8864 = vadd.f32 %v8198, %v8794
        %v8865 = vadd.f32 %v8199, %v8796
        %v8866 = vadd.f32 %v8200, %v8799
        %v8867 = vadd.f32 %v8201, %v8801
        %v8868 = vadd.f32 %v8202, %v8804
        %v8869 = vadd.f32 %v8203, %v8806
        %v8870 = vadd.f32 %v8204, %v8809
        %v8871 = vadd.f32 %v8205, %v8811
        %v8872 = vadd.f32 %v8206, %v8814
        %v8873 = vadd.f32 %v8207, %v8816
        %v8874 = vadd.f32 %v8208, %v8819
        %v8875 = vadd.f32 %v8209, %v8821
        %v8876 = vadd.f32 %v8210, %v8824
        %v8877 = vadd.f32 %v8211, %v8826
        %v8878 = vadd.f32 %v8212, %v8829
        %v8879 = vadd.f32 %v8213, %v8831
        %v8880 = vadd.f32 %v8214, %v8834
        %v8881 = vadd.f32 %v8215, %v8836
        %v8882 = vadd.f32 %v8216, %v8839
        %v8883 = vadd.f32 %v8217, %v8841
        %v8884 = vadd.f32 %v8218, %v8844
        %v8885 = vadd.f32 %v8219, %v8846
        %v8886 = vadd.f32 %v8220, %v8849
        %v8887 = vadd.f32 %v8221, %v8851
        %v8888 = vadd.f32 %v8222, %v8854
        %v8889 = vadd.f32 %v8223, %v8856
        %v8890 = vld [vmem:[%s3924] sm:$0x8]
        %v8891 = vld [vmem:[%s3924 + $0x4] sm:$0xf]
        %v8892 = vld [vmem:[%s3924 + $0x8] sm:$0xf]
        %v8893 = vld [vmem:[%s3924 + $0x10] sm:$0x8]
        %v8894 = vld [vmem:[%s3924 + $0x14] sm:$0xf]
        %v8895 = vld [vmem:[%s3924 + $0x18] sm:$0xf]
        %v8896 = vld [vmem:[%s3924 + $0x20] sm:$0x8]
        %v8897 = vld [vmem:[%s3924 + $0x24] sm:$0xf]
        %v8898 = vld [vmem:[%s3924 + $0x28] sm:$0xf]
        %v8899 = vld [vmem:[%s3924 + $0x30] sm:$0x8]
        %v8900 = vld [vmem:[%s3924 + $0x34] sm:$0xf]
        %v8901 = vld [vmem:[%s3924 + $0x38] sm:$0xf]
        %v8902 = vld [vmem:[%s3924 + $0x40] sm:$0x8]
        %v8903 = vld [vmem:[%s3924 + $0x44] sm:$0xf]
        %v8904 = vld [vmem:[%s3924 + $0x48] sm:$0xf]
        %v8905 = vld [vmem:[%s3924 + $0x50] sm:$0x8]
        %v8906 = vld [vmem:[%s3924 + $0x54] sm:$0xf]
        %v8907 = vld [vmem:[%s3924 + $0x58] sm:$0xf]
        %v8908 = vld [vmem:[%s3924 + $0x60] sm:$0x8]
        %v8909 = vld [vmem:[%s3924 + $0x64] sm:$0xf]
        %v8910 = vld [vmem:[%s3924 + $0x68] sm:$0xf]
        %v8911 = vld [vmem:[%s3924 + $0x70] sm:$0x8]
        %v8912 = vld [vmem:[%s3924 + $0x74] sm:$0xf]
        %v8913 = vld [vmem:[%s3924 + $0x78] sm:$0xf]
        %v8914 = vld [vmem:[%s3924 + $0x80] sm:$0x8]
        %v8915 = vld [vmem:[%s3924 + $0x84] sm:$0xf]
        %v8916 = vld [vmem:[%s3924 + $0x88] sm:$0xf]
        %v8917 = vld [vmem:[%s3924 + $0x90] sm:$0x8]
        %v8918 = vld [vmem:[%s3924 + $0x94] sm:$0xf]
        %v8919 = vld [vmem:[%s3924 + $0x98] sm:$0xf]
        %v8920 = vld [vmem:[%s3924 + $0xa0] sm:$0x8]
        %v8921 = vld [vmem:[%s3924 + $0xa4] sm:$0xf]
        %v8922 = vld [vmem:[%s3924 + $0xa8] sm:$0xf]
        %v8923 = vld [vmem:[%s3924 + $0xb0] sm:$0x8]
        %v8924 = vld [vmem:[%s3924 + $0xb4] sm:$0xf]
        %v8925 = vld [vmem:[%s3924 + $0xb8] sm:$0xf]
        %v8926 = vld [vmem:[%s3924 + $0xc0] sm:$0x8]
        %v8927 = vld [vmem:[%s3924 + $0xc4] sm:$0xf]
        %v8928 = vld [vmem:[%s3924 + $0xc8] sm:$0xf]
        %v8929 = vld [vmem:[%s3924 + $0xd0] sm:$0x8]
        %v8930 = vld [vmem:[%s3924 + $0xd4] sm:$0xf]
        %v8931 = vld [vmem:[%s3924 + $0xd8] sm:$0xf]
        %v8932 = vld [vmem:[%s3924 + $0xe0] sm:$0x8]
        %v8933 = vld [vmem:[%s3924 + $0xe4] sm:$0xf]
        %v8934 = vld [vmem:[%s3924 + $0xe8] sm:$0xf]
        %v8935 = vld [vmem:[%s3924 + $0xf0] sm:$0x8]
        %v8936 = vld [vmem:[%s3924 + $0xf4] sm:$0xf]
        %v8937 = vld [vmem:[%s3924 + $0xf8] sm:$0xf]
        %v8939 = vshrl.u32 %v8890, 16
        %v8941 = vrot.slane %v8939, 7
        %v8942 = vrot.slane %v8941, 4
        %v8944 = vshrl.u32 %v8891, 16
        %v8946 = vrot.slane %v8944, 7
        %v8947 = vshll.u32 %v8891, 16
        %v8949 = vor.u32 %v8946, %v8947
        %v8950 = vsel %vm900, %v8942, %v8949
        %v8951 = vrot.slane %v8946, 4
        %v8953 = vshrl.u32 %v8892, 16
        %v8955 = vrot.slane %v8953, 7
        %v8956 = vshll.u32 %v8892, 16
        %v8958 = vor.u32 %v8955, %v8956
        %v8959 = vsel %vm900, %v8951, %v8958
        %v8961 = vshrl.u32 %v8893, 16
        %v8963 = vrot.slane %v8961, 7
        %v8964 = vrot.slane %v8963, 4
        %v8966 = vshrl.u32 %v8894, 16
        %v8968 = vrot.slane %v8966, 7
        %v8969 = vshll.u32 %v8894, 16
        %v8971 = vor.u32 %v8968, %v8969
        %v8972 = vsel %vm900, %v8964, %v8971
        %v8973 = vrot.slane %v8968, 4
        %v8975 = vshrl.u32 %v8895, 16
        %v8977 = vrot.slane %v8975, 7
        %v8978 = vshll.u32 %v8895, 16
        %v8980 = vor.u32 %v8977, %v8978
        %v8981 = vsel %vm900, %v8973, %v8980
        %v8983 = vshrl.u32 %v8896, 16
        %v8985 = vrot.slane %v8983, 7
        %v8986 = vrot.slane %v8985, 4
        %v8988 = vshrl.u32 %v8897, 16
        %v8990 = vrot.slane %v8988, 7
        %v8991 = vshll.u32 %v8897, 16
        %v8993 = vor.u32 %v8990, %v8991
        %v8994 = vsel %vm900, %v8986, %v8993
        %v8995 = vrot.slane %v8990, 4
        %v8997 = vshrl.u32 %v8898, 16
        %v8999 = vrot.slane %v8997, 7
        %v9000 = vshll.u32 %v8898, 16
        %v9002 = vor.u32 %v8999, %v9000
        %v9003 = vsel %vm900, %v8995, %v9002
        %v9005 = vshrl.u32 %v8899, 16
        %v9007 = vrot.slane %v9005, 7
        %v9008 = vrot.slane %v9007, 4
        %v9010 = vshrl.u32 %v8900, 16
        %v9012 = vrot.slane %v9010, 7
        %v9013 = vshll.u32 %v8900, 16
        %v9015 = vor.u32 %v9012, %v9013
        %v9016 = vsel %vm900, %v9008, %v9015
        %v9017 = vrot.slane %v9012, 4
        %v9019 = vshrl.u32 %v8901, 16
        %v9021 = vrot.slane %v9019, 7
        %v9022 = vshll.u32 %v8901, 16
        %v9024 = vor.u32 %v9021, %v9022
        %v9025 = vsel %vm900, %v9017, %v9024
        %v9027 = vshrl.u32 %v8902, 16
        %v9029 = vrot.slane %v9027, 7
        %v9030 = vrot.slane %v9029, 4
        %v9032 = vshrl.u32 %v8903, 16
        %v9034 = vrot.slane %v9032, 7
        %v9035 = vshll.u32 %v8903, 16
        %v9037 = vor.u32 %v9034, %v9035
        %v9038 = vsel %vm900, %v9030, %v9037
        %v9039 = vrot.slane %v9034, 4
        %v9041 = vshrl.u32 %v8904, 16
        %v9043 = vrot.slane %v9041, 7
        %v9044 = vshll.u32 %v8904, 16
        %v9046 = vor.u32 %v9043, %v9044
        %v9047 = vsel %vm900, %v9039, %v9046
        %v9049 = vshrl.u32 %v8905, 16
        %v9051 = vrot.slane %v9049, 7
        %v9052 = vrot.slane %v9051, 4
        %v9054 = vshrl.u32 %v8906, 16
        %v9056 = vrot.slane %v9054, 7
        %v9057 = vshll.u32 %v8906, 16
        %v9059 = vor.u32 %v9056, %v9057
        %v9060 = vsel %vm900, %v9052, %v9059
        %v9061 = vrot.slane %v9056, 4
        %v9063 = vshrl.u32 %v8907, 16
        %v9065 = vrot.slane %v9063, 7
        %v9066 = vshll.u32 %v8907, 16
        %v9068 = vor.u32 %v9065, %v9066
        %v9069 = vsel %vm900, %v9061, %v9068
        %v9071 = vshrl.u32 %v8908, 16
        %v9073 = vrot.slane %v9071, 7
        %v9074 = vrot.slane %v9073, 4
        %v9076 = vshrl.u32 %v8909, 16
        %v9078 = vrot.slane %v9076, 7
        %v9079 = vshll.u32 %v8909, 16
        %v9081 = vor.u32 %v9078, %v9079
        %v9082 = vsel %vm900, %v9074, %v9081
        %v9083 = vrot.slane %v9078, 4
        %v9085 = vshrl.u32 %v8910, 16
        %v9087 = vrot.slane %v9085, 7
        %v9088 = vshll.u32 %v8910, 16
        %v9090 = vor.u32 %v9087, %v9088
        %v9091 = vsel %vm900, %v9083, %v9090
        %v9093 = vshrl.u32 %v8911, 16
        %v9095 = vrot.slane %v9093, 7
        %v9096 = vrot.slane %v9095, 4
        %v9098 = vshrl.u32 %v8912, 16
        %v9100 = vrot.slane %v9098, 7
        %v9101 = vshll.u32 %v8912, 16
        %v9103 = vor.u32 %v9100, %v9101
        %v9104 = vsel %vm900, %v9096, %v9103
        %v9105 = vrot.slane %v9100, 4
        %v9107 = vshrl.u32 %v8913, 16
        %v9109 = vrot.slane %v9107, 7
        %v9110 = vshll.u32 %v8913, 16
        %v9112 = vor.u32 %v9109, %v9110
        %v9113 = vsel %vm900, %v9105, %v9112
        %v9115 = vshrl.u32 %v8914, 16
        %v9117 = vrot.slane %v9115, 7
        %v9118 = vrot.slane %v9117, 4
        %v9120 = vshrl.u32 %v8915, 16
        %v9122 = vrot.slane %v9120, 7
        %v9123 = vshll.u32 %v8915, 16
        %v9125 = vor.u32 %v9122, %v9123
        %v9126 = vsel %vm900, %v9118, %v9125
        %v9127 = vrot.slane %v9122, 4
        %v9129 = vshrl.u32 %v8916, 16
        %v9131 = vrot.slane %v9129, 7
        %v9132 = vshll.u32 %v8916, 16
        %v9134 = vor.u32 %v9131, %v9132
        %v9135 = vsel %vm900, %v9127, %v9134
        %v9137 = vshrl.u32 %v8917, 16
        %v9139 = vrot.slane %v9137, 7
        %v9140 = vrot.slane %v9139, 4
        %v9142 = vshrl.u32 %v8918, 16
        %v9144 = vrot.slane %v9142, 7
        %v9145 = vshll.u32 %v8918, 16
        %v9147 = vor.u32 %v9144, %v9145
        %v9148 = vsel %vm900, %v9140, %v9147
        %v9149 = vrot.slane %v9144, 4
        %v9151 = vshrl.u32 %v8919, 16
        %v9153 = vrot.slane %v9151, 7
        %v9154 = vshll.u32 %v8919, 16
        %v9156 = vor.u32 %v9153, %v9154
        %v9157 = vsel %vm900, %v9149, %v9156
        %v9159 = vshrl.u32 %v8920, 16
        %v9161 = vrot.slane %v9159, 7
        %v9162 = vrot.slane %v9161, 4
        %v9164 = vshrl.u32 %v8921, 16
        %v9166 = vrot.slane %v9164, 7
        %v9167 = vshll.u32 %v8921, 16
        %v9169 = vor.u32 %v9166, %v9167
        %v9170 = vsel %vm900, %v9162, %v9169
        %v9171 = vrot.slane %v9166, 4
        %v9173 = vshrl.u32 %v8922, 16
        %v9175 = vrot.slane %v9173, 7
        %v9176 = vshll.u32 %v8922, 16
        %v9178 = vor.u32 %v9175, %v9176
        %v9179 = vsel %vm900, %v9171, %v9178
        %v9181 = vshrl.u32 %v8923, 16
        %v9183 = vrot.slane %v9181, 7
        %v9184 = vrot.slane %v9183, 4
        %v9186 = vshrl.u32 %v8924, 16
        %v9188 = vrot.slane %v9186, 7
        %v9189 = vshll.u32 %v8924, 16
        %v9191 = vor.u32 %v9188, %v9189
        %v9192 = vsel %vm900, %v9184, %v9191
        %v9193 = vrot.slane %v9188, 4
        %v9195 = vshrl.u32 %v8925, 16
        %v9197 = vrot.slane %v9195, 7
        %v9198 = vshll.u32 %v8925, 16
        %v9200 = vor.u32 %v9197, %v9198
        %v9201 = vsel %vm900, %v9193, %v9200
        %v9203 = vshrl.u32 %v8926, 16
        %v9205 = vrot.slane %v9203, 7
        %v9206 = vrot.slane %v9205, 4
        %v9208 = vshrl.u32 %v8927, 16
        %v9210 = vrot.slane %v9208, 7
        %v9211 = vshll.u32 %v8927, 16
        %v9213 = vor.u32 %v9210, %v9211
        %v9214 = vsel %vm900, %v9206, %v9213
        %v9215 = vrot.slane %v9210, 4
        %v9217 = vshrl.u32 %v8928, 16
        %v9219 = vrot.slane %v9217, 7
        %v9220 = vshll.u32 %v8928, 16
        %v9222 = vor.u32 %v9219, %v9220
        %v9223 = vsel %vm900, %v9215, %v9222
        %v9225 = vshrl.u32 %v8929, 16
        %v9227 = vrot.slane %v9225, 7
        %v9228 = vrot.slane %v9227, 4
        %v9230 = vshrl.u32 %v8930, 16
        %v9232 = vrot.slane %v9230, 7
        %v9233 = vshll.u32 %v8930, 16
        %v9235 = vor.u32 %v9232, %v9233
        %v9236 = vsel %vm900, %v9228, %v9235
        %v9237 = vrot.slane %v9232, 4
        %v9239 = vshrl.u32 %v8931, 16
        %v9241 = vrot.slane %v9239, 7
        %v9242 = vshll.u32 %v8931, 16
        %v9244 = vor.u32 %v9241, %v9242
        %v9245 = vsel %vm900, %v9237, %v9244
        %v9247 = vshrl.u32 %v8932, 16
        %v9249 = vrot.slane %v9247, 7
        %v9250 = vrot.slane %v9249, 4
        %v9252 = vshrl.u32 %v8933, 16
        %v9254 = vrot.slane %v9252, 7
        %v9255 = vshll.u32 %v8933, 16
        %v9257 = vor.u32 %v9254, %v9255
        %v9258 = vsel %vm900, %v9250, %v9257
        %v9259 = vrot.slane %v9254, 4
        %v9261 = vshrl.u32 %v8934, 16
        %v9263 = vrot.slane %v9261, 7
        %v9264 = vshll.u32 %v8934, 16
        %v9266 = vor.u32 %v9263, %v9264
        %v9267 = vsel %vm900, %v9259, %v9266
        %v9269 = vshrl.u32 %v8935, 16
        %v9271 = vrot.slane %v9269, 7
        %v9272 = vrot.slane %v9271, 4
        %v9274 = vshrl.u32 %v8936, 16
        %v9276 = vrot.slane %v9274, 7
        %v9277 = vshll.u32 %v8936, 16
        %v9279 = vor.u32 %v9276, %v9277
        %v9280 = vsel %vm900, %v9272, %v9279
        %v9281 = vrot.slane %v9276, 4
        %v9283 = vshrl.u32 %v8937, 16
        %v9285 = vrot.slane %v9283, 7
        %v9286 = vshll.u32 %v8937, 16
        %v9288 = vor.u32 %v9285, %v9286
        %v9289 = vsel %vm900, %v9281, %v9288
        %s9290 = scalar_lea.vmem %s3, 240
        %v9291 = vld [vmem:[%s9290] sm:$0xf]
        %v9292 = vld [vmem:[%s9290 + $0x4] sm:$0xf]
        %v9293 = vld [vmem:[%s9290 + $0x8] sm:$0xf]
        %v9294 = vld [vmem:[%s9290 + $0xc] sm:$0xf]
        %v9295 = vunpack.c.l.b16 %v8950
        %v9296 = vunpack.c.l.b16 %v8959
        %v9297 = vunpack.c.l.b16 %v8972
        %v9298 = vunpack.c.l.b16 %v8981
        %v9299 = vunpack.c.l.b16 %v8994
        %v9300 = vunpack.c.l.b16 %v9003
        %v9301 = vunpack.c.l.b16 %v9016
        %v9302 = vunpack.c.l.b16 %v9025
        %v9303 = vunpack.c.l.b16 %v9038
        %v9304 = vunpack.c.l.b16 %v9047
        %v9305 = vunpack.c.l.b16 %v9060
        %v9306 = vunpack.c.l.b16 %v9069
        %v9307 = vunpack.c.l.b16 %v9082
        %v9308 = vunpack.c.l.b16 %v9091
        %v9309 = vunpack.c.l.b16 %v9104
        %v9310 = vunpack.c.l.b16 %v9113
        %v9311 = vunpack.c.l.b16 %v9126
        %v9312 = vunpack.c.l.b16 %v9135
        %v9313 = vunpack.c.l.b16 %v9148
        %v9314 = vunpack.c.l.b16 %v9157
        %v9315 = vunpack.c.l.b16 %v9170
        %v9316 = vunpack.c.l.b16 %v9179
        %v9317 = vunpack.c.l.b16 %v9192
        %v9318 = vunpack.c.l.b16 %v9201
        %v9319 = vunpack.c.l.b16 %v9214
        %v9320 = vunpack.c.l.b16 %v9223
        %v9321 = vunpack.c.l.b16 %v9236
        %v9322 = vunpack.c.l.b16 %v9245
        %v9323 = vunpack.c.l.b16 %v9258
        %v9324 = vunpack.c.l.b16 %v9267
        %v9325 = vunpack.c.l.b16 %v9280
        %v9326 = vunpack.c.l.b16 %v9289
        %v9327 = vpack.c.b16 %v9296, %v9295
        %v9328 = vpack.c.b16 %v9298, %v9297
        %v9329 = vpack.c.b16 %v9300, %v9299
        %v9330 = vpack.c.b16 %v9302, %v9301
        %v9331 = vpack.c.b16 %v9304, %v9303
        %v9332 = vpack.c.b16 %v9306, %v9305
        %v9333 = vpack.c.b16 %v9308, %v9307
        %v9334 = vpack.c.b16 %v9310, %v9309
        %v9335 = vpack.c.b16 %v9312, %v9311
        %v9336 = vpack.c.b16 %v9314, %v9313
        %v9337 = vpack.c.b16 %v9316, %v9315
        %v9338 = vpack.c.b16 %v9318, %v9317
        %v9339 = vpack.c.b16 %v9320, %v9319
        %v9340 = vpack.c.b16 %v9322, %v9321
        %v9341 = vpack.c.b16 %v9324, %v9323
        %v9342 = vpack.c.b16 %v9326, %v9325
        %v9347 = vunpack.c.l.b16 %v9291
        %v9348 = vunpack.c.l.b16 %v9292
        %v9349 = vunpack.c.l.b16 %v9293
        %v9350 = vunpack.c.l.b16 %v9294
        %v9351 = vpack.c.b16 %v9348, %v9347
        %v9352 = vpack.c.b16 %v9350, %v9349
        %v9356 = vsel %vm1354, %v9327, 0
        %v9359 = vsel %vm1354, %v9328, 0
        %v9362 = vsel %vm1354, %v9329, 0
        %v9365 = vsel %vm1354, %v9330, 0
        %v9368 = vsel %vm1354, %v9331, 0
        %v9371 = vsel %vm1354, %v9332, 0
        %v9374 = vsel %vm1354, %v9333, 0
        %v9377 = vsel %vm1354, %v9334, 0
        %v9380 = vsel %vm1354, %v9335, 0
        %v9383 = vsel %vm1354, %v9336, 0
        %v9386 = vsel %vm1354, %v9337, 0
        %v9389 = vsel %vm1354, %v9338, 0
        %v9392 = vsel %vm1354, %v9339, 0
        %v9395 = vsel %vm1354, %v9340, 0
        %v9398 = vsel %vm1354, %v9341, 0
        %v9401 = vsel %vm1354, %v9342, 0
        %9403 = vmatpush.bf16.msra.mxu0 0
        %9404 = vmatpush.bf16.msra.mxu0 0
        %9405 = vmatpush.bf16.msra.mxu0 0
        %9406 = vmatpush.bf16.msra.mxu0 0
        %9407 = vmatpush.bf16.msra.mxu0 0
        %9408 = vmatpush.bf16.msra.mxu0 0
        %9409 = vmatpush.bf16.msra.mxu0 %v9352
        %9410 = vmatpush.bf16.msra.mxu0 %v9351
        %9411 = vmatmul.bf16.gmra.mxu0 %v9356
        %v9412 = vpop.f32.mrf.mxu0
        %v9413 = vadd.f32 0.0, %v9412
        %v9414 = vpop.f32.mrf.mxu0
        %v9415 = vadd.f32 0.0, %v9414
        %9416 = vmatmul.bf16.gmra.mxu0 %v9359
        %v9417 = vpop.f32.mrf.mxu0
        %v9418 = vadd.f32 0.0, %v9417
        %v9419 = vpop.f32.mrf.mxu0
        %v9420 = vadd.f32 0.0, %v9419
        %9421 = vmatmul.bf16.gmra.mxu0 %v9362
        %v9422 = vpop.f32.mrf.mxu0
        %v9423 = vadd.f32 0.0, %v9422
        %v9424 = vpop.f32.mrf.mxu0
        %v9425 = vadd.f32 0.0, %v9424
        %9426 = vmatmul.bf16.gmra.mxu0 %v9365
        %v9427 = vpop.f32.mrf.mxu0
        %v9428 = vadd.f32 0.0, %v9427
        %v9429 = vpop.f32.mrf.mxu0
        %v9430 = vadd.f32 0.0, %v9429
        %9431 = vmatmul.bf16.gmra.mxu0 %v9368
        %v9432 = vpop.f32.mrf.mxu0
        %v9433 = vadd.f32 0.0, %v9432
        %v9434 = vpop.f32.mrf.mxu0
        %v9435 = vadd.f32 0.0, %v9434
        %9436 = vmatmul.bf16.gmra.mxu0 %v9371
        %v9437 = vpop.f32.mrf.mxu0
        %v9438 = vadd.f32 0.0, %v9437
        %v9439 = vpop.f32.mrf.mxu0
        %v9440 = vadd.f32 0.0, %v9439
        %9441 = vmatmul.bf16.gmra.mxu0 %v9374
        %v9442 = vpop.f32.mrf.mxu0
        %v9443 = vadd.f32 0.0, %v9442
        %v9444 = vpop.f32.mrf.mxu0
        %v9445 = vadd.f32 0.0, %v9444
        %9446 = vmatmul.bf16.gmra.mxu0 %v9377
        %v9447 = vpop.f32.mrf.mxu0
        %v9448 = vadd.f32 0.0, %v9447
        %v9449 = vpop.f32.mrf.mxu0
        %v9450 = vadd.f32 0.0, %v9449
        %9451 = vmatmul.bf16.gmra.mxu0 %v9380
        %v9452 = vpop.f32.mrf.mxu0
        %v9453 = vadd.f32 0.0, %v9452
        %v9454 = vpop.f32.mrf.mxu0
        %v9455 = vadd.f32 0.0, %v9454
        %9456 = vmatmul.bf16.gmra.mxu0 %v9383
        %v9457 = vpop.f32.mrf.mxu0
        %v9458 = vadd.f32 0.0, %v9457
        %v9459 = vpop.f32.mrf.mxu0
        %v9460 = vadd.f32 0.0, %v9459
        %9461 = vmatmul.bf16.gmra.mxu0 %v9386
        %v9462 = vpop.f32.mrf.mxu0
        %v9463 = vadd.f32 0.0, %v9462
        %v9464 = vpop.f32.mrf.mxu0
        %v9465 = vadd.f32 0.0, %v9464
        %9466 = vmatmul.bf16.gmra.mxu0 %v9389
        %v9467 = vpop.f32.mrf.mxu0
        %v9468 = vadd.f32 0.0, %v9467
        %v9469 = vpop.f32.mrf.mxu0
        %v9470 = vadd.f32 0.0, %v9469
        %9471 = vmatmul.bf16.gmra.mxu0 %v9392
        %v9472 = vpop.f32.mrf.mxu0
        %v9473 = vadd.f32 0.0, %v9472
        %v9474 = vpop.f32.mrf.mxu0
        %v9475 = vadd.f32 0.0, %v9474
        %9476 = vmatmul.bf16.gmra.mxu0 %v9395
        %v9477 = vpop.f32.mrf.mxu0
        %v9478 = vadd.f32 0.0, %v9477
        %v9479 = vpop.f32.mrf.mxu0
        %v9480 = vadd.f32 0.0, %v9479
        %9481 = vmatmul.bf16.gmra.mxu0 %v9398
        %v9482 = vpop.f32.mrf.mxu0
        %v9483 = vadd.f32 0.0, %v9482
        %v9484 = vpop.f32.mrf.mxu0
        %v9485 = vadd.f32 0.0, %v9484
        %9486 = vmatmul.bf16.gmra.mxu0 %v9401
        %v9487 = vpop.f32.mrf.mxu0
        %v9488 = vadd.f32 0.0, %v9487
        %v9489 = vpop.f32.mrf.mxu0
        %v9490 = vadd.f32 0.0, %v9489
        %9491 = vdwg.mxu0
        %v9492 = vadd.f32 %v8858, %v9413
        %v9493 = vadd.f32 %v8859, %v9415
        %v9494 = vadd.f32 %v8860, %v9418
        %v9495 = vadd.f32 %v8861, %v9420
        %v9496 = vadd.f32 %v8862, %v9423
        %v9497 = vadd.f32 %v8863, %v9425
        %v9498 = vadd.f32 %v8864, %v9428
        %v9499 = vadd.f32 %v8865, %v9430
        %v9500 = vadd.f32 %v8866, %v9433
        %v9501 = vadd.f32 %v8867, %v9435
        %v9502 = vadd.f32 %v8868, %v9438
        %v9503 = vadd.f32 %v8869, %v9440
        %v9504 = vadd.f32 %v8870, %v9443
        %v9505 = vadd.f32 %v8871, %v9445
        %v9506 = vadd.f32 %v8872, %v9448
        %v9507 = vadd.f32 %v8873, %v9450
        %v9508 = vadd.f32 %v8874, %v9453
        %v9509 = vadd.f32 %v8875, %v9455
        %v9510 = vadd.f32 %v8876, %v9458
        %v9511 = vadd.f32 %v8877, %v9460
        %v9512 = vadd.f32 %v8878, %v9463
        %v9513 = vadd.f32 %v8879, %v9465
        %v9514 = vadd.f32 %v8880, %v9468
        %v9515 = vadd.f32 %v8881, %v9470
        %v9516 = vadd.f32 %v8882, %v9473
        %v9517 = vadd.f32 %v8883, %v9475
        %v9518 = vadd.f32 %v8884, %v9478
        %v9519 = vadd.f32 %v8885, %v9480
        %v9520 = vadd.f32 %v8886, %v9483
        %v9521 = vadd.f32 %v8887, %v9485
        %v9522 = vadd.f32 %v8888, %v9488
        %v9523 = vadd.f32 %v8889, %v9490
        %s9524 = scalar_lea.vmem %s3, 256
        %v9525 = vld [vmem:[%s9524] sm:$0xf]
        %v9526 = vld [vmem:[%s9524 + $0x4] sm:$0xf]
        %v9527 = vld [vmem:[%s9524 + $0x8] sm:$0xf]
        %v9528 = vld [vmem:[%s9524 + $0xc] sm:$0xf]
        %v9561 = vunpack.c.l.b16 %v8891
        %v9562 = vunpack.c.l.b16 %v8892
        %v9563 = vunpack.c.l.b16 %v8894
        %v9564 = vunpack.c.l.b16 %v8895
        %v9565 = vunpack.c.l.b16 %v8897
        %v9566 = vunpack.c.l.b16 %v8898
        %v9567 = vunpack.c.l.b16 %v8900
        %v9568 = vunpack.c.l.b16 %v8901
        %v9569 = vunpack.c.l.b16 %v8903
        %v9570 = vunpack.c.l.b16 %v8904
        %v9571 = vunpack.c.l.b16 %v8906
        %v9572 = vunpack.c.l.b16 %v8907
        %v9573 = vunpack.c.l.b16 %v8909
        %v9574 = vunpack.c.l.b16 %v8910
        %v9575 = vunpack.c.l.b16 %v8912
        %v9576 = vunpack.c.l.b16 %v8913
        %v9577 = vunpack.c.l.b16 %v8915
        %v9578 = vunpack.c.l.b16 %v8916
        %v9579 = vunpack.c.l.b16 %v8918
        %v9580 = vunpack.c.l.b16 %v8919
        %v9581 = vunpack.c.l.b16 %v8921
        %v9582 = vunpack.c.l.b16 %v8922
        %v9583 = vunpack.c.l.b16 %v8924
        %v9584 = vunpack.c.l.b16 %v8925
        %v9585 = vunpack.c.l.b16 %v8927
        %v9586 = vunpack.c.l.b16 %v8928
        %v9587 = vunpack.c.l.b16 %v8930
        %v9588 = vunpack.c.l.b16 %v8931
        %v9589 = vunpack.c.l.b16 %v8933
        %v9590 = vunpack.c.l.b16 %v8934
        %v9591 = vunpack.c.l.b16 %v8936
        %v9592 = vunpack.c.l.b16 %v8937
        %v9593 = vpack.c.b16 %v9562, %v9561
        %v9594 = vpack.c.b16 %v9564, %v9563
        %v9595 = vpack.c.b16 %v9566, %v9565
        %v9596 = vpack.c.b16 %v9568, %v9567
        %v9597 = vpack.c.b16 %v9570, %v9569
        %v9598 = vpack.c.b16 %v9572, %v9571
        %v9599 = vpack.c.b16 %v9574, %v9573
        %v9600 = vpack.c.b16 %v9576, %v9575
        %v9601 = vpack.c.b16 %v9578, %v9577
        %v9602 = vpack.c.b16 %v9580, %v9579
        %v9603 = vpack.c.b16 %v9582, %v9581
        %v9604 = vpack.c.b16 %v9584, %v9583
        %v9605 = vpack.c.b16 %v9586, %v9585
        %v9606 = vpack.c.b16 %v9588, %v9587
        %v9607 = vpack.c.b16 %v9590, %v9589
        %v9608 = vpack.c.b16 %v9592, %v9591
        %v9613 = vunpack.c.l.b16 %v9525
        %v9614 = vunpack.c.l.b16 %v9526
        %v9615 = vunpack.c.l.b16 %v9527
        %v9616 = vunpack.c.l.b16 %v9528
        %v9617 = vpack.c.b16 %v9614, %v9613
        %v9618 = vpack.c.b16 %v9616, %v9615
        %v9622 = vsel %vm1354, %v9593, 0
        %v9625 = vsel %vm1354, %v9594, 0
        %v9628 = vsel %vm1354, %v9595, 0
        %v9631 = vsel %vm1354, %v9596, 0
        %v9634 = vsel %vm1354, %v9597, 0
        %v9637 = vsel %vm1354, %v9598, 0
        %v9640 = vsel %vm1354, %v9599, 0
        %v9643 = vsel %vm1354, %v9600, 0
        %v9646 = vsel %vm1354, %v9601, 0
        %v9649 = vsel %vm1354, %v9602, 0
        %v9652 = vsel %vm1354, %v9603, 0
        %v9655 = vsel %vm1354, %v9604, 0
        %v9658 = vsel %vm1354, %v9605, 0
        %v9661 = vsel %vm1354, %v9606, 0
        %v9664 = vsel %vm1354, %v9607, 0
        %v9667 = vsel %vm1354, %v9608, 0
        %9669 = vmatpush.bf16.msra.mxu0 0
        %9670 = vmatpush.bf16.msra.mxu0 0
        %9671 = vmatpush.bf16.msra.mxu0 0
        %9672 = vmatpush.bf16.msra.mxu0 0
        %9673 = vmatpush.bf16.msra.mxu0 0
        %9674 = vmatpush.bf16.msra.mxu0 0
        %9675 = vmatpush.bf16.msra.mxu0 %v9618
        %9676 = vmatpush.bf16.msra.mxu0 %v9617
        %9677 = vmatmul.bf16.gmra.mxu0 %v9622
        %v9678 = vpop.f32.mrf.mxu0
        %v9679 = vadd.f32 0.0, %v9678
        %v9680 = vpop.f32.mrf.mxu0
        %v9681 = vadd.f32 0.0, %v9680
        %9682 = vmatmul.bf16.gmra.mxu0 %v9625
        %v9683 = vpop.f32.mrf.mxu0
        %v9684 = vadd.f32 0.0, %v9683
        %v9685 = vpop.f32.mrf.mxu0
        %v9686 = vadd.f32 0.0, %v9685
        %9687 = vmatmul.bf16.gmra.mxu0 %v9628
        %v9688 = vpop.f32.mrf.mxu0
        %v9689 = vadd.f32 0.0, %v9688
        %v9690 = vpop.f32.mrf.mxu0
        %v9691 = vadd.f32 0.0, %v9690
        %9692 = vmatmul.bf16.gmra.mxu0 %v9631
        %v9693 = vpop.f32.mrf.mxu0
        %v9694 = vadd.f32 0.0, %v9693
        %v9695 = vpop.f32.mrf.mxu0
        %v9696 = vadd.f32 0.0, %v9695
        %9697 = vmatmul.bf16.gmra.mxu0 %v9634
        %v9698 = vpop.f32.mrf.mxu0
        %v9699 = vadd.f32 0.0, %v9698
        %v9700 = vpop.f32.mrf.mxu0
        %v9701 = vadd.f32 0.0, %v9700
        %9702 = vmatmul.bf16.gmra.mxu0 %v9637
        %v9703 = vpop.f32.mrf.mxu0
        %v9704 = vadd.f32 0.0, %v9703
        %v9705 = vpop.f32.mrf.mxu0
        %v9706 = vadd.f32 0.0, %v9705
        %9707 = vmatmul.bf16.gmra.mxu0 %v9640
        %v9708 = vpop.f32.mrf.mxu0
        %v9709 = vadd.f32 0.0, %v9708
        %v9710 = vpop.f32.mrf.mxu0
        %v9711 = vadd.f32 0.0, %v9710
        %9712 = vmatmul.bf16.gmra.mxu0 %v9643
        %v9713 = vpop.f32.mrf.mxu0
        %v9714 = vadd.f32 0.0, %v9713
        %v9715 = vpop.f32.mrf.mxu0
        %v9716 = vadd.f32 0.0, %v9715
        %9717 = vmatmul.bf16.gmra.mxu0 %v9646
        %v9718 = vpop.f32.mrf.mxu0
        %v9719 = vadd.f32 0.0, %v9718
        %v9720 = vpop.f32.mrf.mxu0
        %v9721 = vadd.f32 0.0, %v9720
        %9722 = vmatmul.bf16.gmra.mxu0 %v9649
        %v9723 = vpop.f32.mrf.mxu0
        %v9724 = vadd.f32 0.0, %v9723
        %v9725 = vpop.f32.mrf.mxu0
        %v9726 = vadd.f32 0.0, %v9725
        %9727 = vmatmul.bf16.gmra.mxu0 %v9652
        %v9728 = vpop.f32.mrf.mxu0
        %v9729 = vadd.f32 0.0, %v9728
        %v9730 = vpop.f32.mrf.mxu0
        %v9731 = vadd.f32 0.0, %v9730
        %9732 = vmatmul.bf16.gmra.mxu0 %v9655
        %v9733 = vpop.f32.mrf.mxu0
        %v9734 = vadd.f32 0.0, %v9733
        %v9735 = vpop.f32.mrf.mxu0
        %v9736 = vadd.f32 0.0, %v9735
        %9737 = vmatmul.bf16.gmra.mxu0 %v9658
        %v9738 = vpop.f32.mrf.mxu0
        %v9739 = vadd.f32 0.0, %v9738
        %v9740 = vpop.f32.mrf.mxu0
        %v9741 = vadd.f32 0.0, %v9740
        %9742 = vmatmul.bf16.gmra.mxu0 %v9661
        %v9743 = vpop.f32.mrf.mxu0
        %v9744 = vadd.f32 0.0, %v9743
        %v9745 = vpop.f32.mrf.mxu0
        %v9746 = vadd.f32 0.0, %v9745
        %9747 = vmatmul.bf16.gmra.mxu0 %v9664
        %v9748 = vpop.f32.mrf.mxu0
        %v9749 = vadd.f32 0.0, %v9748
        %v9750 = vpop.f32.mrf.mxu0
        %v9751 = vadd.f32 0.0, %v9750
        %9752 = vmatmul.bf16.gmra.mxu0 %v9667
        %v9753 = vpop.f32.mrf.mxu0
        %v9754 = vadd.f32 0.0, %v9753
        %v9755 = vpop.f32.mrf.mxu0
        %v9756 = vadd.f32 0.0, %v9755
        %9757 = vdwg.mxu0
        %v9758 = vadd.f32 %v9492, %v9679
        %v9759 = vadd.f32 %v9493, %v9681
        %v9760 = vadd.f32 %v9494, %v9684
        %v9761 = vadd.f32 %v9495, %v9686
        %v9762 = vadd.f32 %v9496, %v9689
        %v9763 = vadd.f32 %v9497, %v9691
        %v9764 = vadd.f32 %v9498, %v9694
        %v9765 = vadd.f32 %v9499, %v9696
        %v9766 = vadd.f32 %v9500, %v9699
        %v9767 = vadd.f32 %v9501, %v9701
        %v9768 = vadd.f32 %v9502, %v9704
        %v9769 = vadd.f32 %v9503, %v9706
        %v9770 = vadd.f32 %v9504, %v9709
        %v9771 = vadd.f32 %v9505, %v9711
        %v9772 = vadd.f32 %v9506, %v9714
        %v9773 = vadd.f32 %v9507, %v9716
        %v9774 = vadd.f32 %v9508, %v9719
        %v9775 = vadd.f32 %v9509, %v9721
        %v9776 = vadd.f32 %v9510, %v9724
        %v9777 = vadd.f32 %v9511, %v9726
        %v9778 = vadd.f32 %v9512, %v9729
        %v9779 = vadd.f32 %v9513, %v9731
        %v9780 = vadd.f32 %v9514, %v9734
        %v9781 = vadd.f32 %v9515, %v9736
        %v9782 = vadd.f32 %v9516, %v9739
        %v9783 = vadd.f32 %v9517, %v9741
        %v9784 = vadd.f32 %v9518, %v9744
        %v9785 = vadd.f32 %v9519, %v9746
        %v9786 = vadd.f32 %v9520, %v9749
        %v9787 = vadd.f32 %v9521, %v9751
        %v9788 = vadd.f32 %v9522, %v9754
        %v9789 = vadd.f32 %v9523, %v9756
        %v9790 = vld [vmem:[%s3924 + $0x4] sm:$0xf]
        %v9791 = vld [vmem:[%s3924 + $0x8] sm:$0xf]
        %v9792 = vld [vmem:[%s3924 + $0xc] sm:$0x1]
        %v9793 = vld [vmem:[%s3924 + $0x14] sm:$0xf]
        %v9794 = vld [vmem:[%s3924 + $0x18] sm:$0xf]
        %v9795 = vld [vmem:[%s3924 + $0x1c] sm:$0x1]
        %v9796 = vld [vmem:[%s3924 + $0x24] sm:$0xf]
        %v9797 = vld [vmem:[%s3924 + $0x28] sm:$0xf]
        %v9798 = vld [vmem:[%s3924 + $0x2c] sm:$0x1]
        %v9799 = vld [vmem:[%s3924 + $0x34] sm:$0xf]
        %v9800 = vld [vmem:[%s3924 + $0x38] sm:$0xf]
        %v9801 = vld [vmem:[%s3924 + $0x3c] sm:$0x1]
        %v9802 = vld [vmem:[%s3924 + $0x44] sm:$0xf]
        %v9803 = vld [vmem:[%s3924 + $0x48] sm:$0xf]
        %v9804 = vld [vmem:[%s3924 + $0x4c] sm:$0x1]
        %v9805 = vld [vmem:[%s3924 + $0x54] sm:$0xf]
        %v9806 = vld [vmem:[%s3924 + $0x58] sm:$0xf]
        %v9807 = vld [vmem:[%s3924 + $0x5c] sm:$0x1]
        %v9808 = vld [vmem:[%s3924 + $0x64] sm:$0xf]
        %v9809 = vld [vmem:[%s3924 + $0x68] sm:$0xf]
        %v9810 = vld [vmem:[%s3924 + $0x6c] sm:$0x1]
        %v9811 = vld [vmem:[%s3924 + $0x74] sm:$0xf]
        %v9812 = vld [vmem:[%s3924 + $0x78] sm:$0xf]
        %v9813 = vld [vmem:[%s3924 + $0x7c] sm:$0x1]
        %v9814 = vld [vmem:[%s3924 + $0x84] sm:$0xf]
        %v9815 = vld [vmem:[%s3924 + $0x88] sm:$0xf]
        %v9816 = vld [vmem:[%s3924 + $0x8c] sm:$0x1]
        %v9817 = vld [vmem:[%s3924 + $0x94] sm:$0xf]
        %v9818 = vld [vmem:[%s3924 + $0x98] sm:$0xf]
        %v9819 = vld [vmem:[%s3924 + $0x9c] sm:$0x1]
        %v9820 = vld [vmem:[%s3924 + $0xa4] sm:$0xf]
        %v9821 = vld [vmem:[%s3924 + $0xa8] sm:$0xf]
        %v9822 = vld [vmem:[%s3924 + $0xac] sm:$0x1]
        %v9823 = vld [vmem:[%s3924 + $0xb4] sm:$0xf]
        %v9824 = vld [vmem:[%s3924 + $0xb8] sm:$0xf]
        %v9825 = vld [vmem:[%s3924 + $0xbc] sm:$0x1]
        %v9826 = vld [vmem:[%s3924 + $0xc4] sm:$0xf]
        %v9827 = vld [vmem:[%s3924 + $0xc8] sm:$0xf]
        %v9828 = vld [vmem:[%s3924 + $0xcc] sm:$0x1]
        %v9829 = vld [vmem:[%s3924 + $0xd4] sm:$0xf]
        %v9830 = vld [vmem:[%s3924 + $0xd8] sm:$0xf]
        %v9831 = vld [vmem:[%s3924 + $0xdc] sm:$0x1]
        %v9832 = vld [vmem:[%s3924 + $0xe4] sm:$0xf]
        %v9833 = vld [vmem:[%s3924 + $0xe8] sm:$0xf]
        %v9834 = vld [vmem:[%s3924 + $0xec] sm:$0x1]
        %v9835 = vld [vmem:[%s3924 + $0xf4] sm:$0xf]
        %v9836 = vld [vmem:[%s3924 + $0xf8] sm:$0xf]
        %v9837 = vld [vmem:[%s3924 + $0xfc] sm:$0x1]
        %v9839 = vshrl.u32 %v9790, 16
        %v9841 = vrot.slane %v9839, 4
        %v9842 = vshll.u32 %v9790, 16
        %v9844 = vrot.slane %v9842, 5
        %v9845 = vor.u32 %v9841, %v9844
        %v9846 = vrot.slane %v9845, 4
        %v9848 = vshll.u32 %v9791, 16
        %v9850 = vrot.slane %v9848, 5
        %v9851 = vsel %vm1739, %v9846, %v9850
        %v9852 = vshrl.u32 %v9791, 16
        %v9854 = vrot.slane %v9852, 4
        %v9855 = vor.u32 %v9854, %v9850
        %v9856 = vrot.slane %v9855, 4
        %v9858 = vshll.u32 %v9792, 16
        %v9860 = vrot.slane %v9858, 5
        %v9861 = vsel %vm1739, %v9856, %v9860
        %v9863 = vshrl.u32 %v9793, 16
        %v9865 = vrot.slane %v9863, 4
        %v9866 = vshll.u32 %v9793, 16
        %v9868 = vrot.slane %v9866, 5
        %v9869 = vor.u32 %v9865, %v9868
        %v9870 = vrot.slane %v9869, 4
        %v9872 = vshll.u32 %v9794, 16
        %v9874 = vrot.slane %v9872, 5
        %v9875 = vsel %vm1739, %v9870, %v9874
        %v9876 = vshrl.u32 %v9794, 16
        %v9878 = vrot.slane %v9876, 4
        %v9879 = vor.u32 %v9878, %v9874
        %v9880 = vrot.slane %v9879, 4
        %v9882 = vshll.u32 %v9795, 16
        %v9884 = vrot.slane %v9882, 5
        %v9885 = vsel %vm1739, %v9880, %v9884
        %v9887 = vshrl.u32 %v9796, 16
        %v9889 = vrot.slane %v9887, 4
        %v9890 = vshll.u32 %v9796, 16
        %v9892 = vrot.slane %v9890, 5
        %v9893 = vor.u32 %v9889, %v9892
        %v9894 = vrot.slane %v9893, 4
        %v9896 = vshll.u32 %v9797, 16
        %v9898 = vrot.slane %v9896, 5
        %v9899 = vsel %vm1739, %v9894, %v9898
        %v9900 = vshrl.u32 %v9797, 16
        %v9902 = vrot.slane %v9900, 4
        %v9903 = vor.u32 %v9902, %v9898
        %v9904 = vrot.slane %v9903, 4
        %v9906 = vshll.u32 %v9798, 16
        %v9908 = vrot.slane %v9906, 5
        %v9909 = vsel %vm1739, %v9904, %v9908
        %v9911 = vshrl.u32 %v9799, 16
        %v9913 = vrot.slane %v9911, 4
        %v9914 = vshll.u32 %v9799, 16
        %v9916 = vrot.slane %v9914, 5
        %v9917 = vor.u32 %v9913, %v9916
        %v9918 = vrot.slane %v9917, 4
        %v9920 = vshll.u32 %v9800, 16
        %v9922 = vrot.slane %v9920, 5
        %v9923 = vsel %vm1739, %v9918, %v9922
        %v9924 = vshrl.u32 %v9800, 16
        %v9926 = vrot.slane %v9924, 4
        %v9927 = vor.u32 %v9926, %v9922
        %v9928 = vrot.slane %v9927, 4
        %v9930 = vshll.u32 %v9801, 16
        %v9932 = vrot.slane %v9930, 5
        %v9933 = vsel %vm1739, %v9928, %v9932
        %v9935 = vshrl.u32 %v9802, 16
        %v9937 = vrot.slane %v9935, 4
        %v9938 = vshll.u32 %v9802, 16
        %v9940 = vrot.slane %v9938, 5
        %v9941 = vor.u32 %v9937, %v9940
        %v9942 = vrot.slane %v9941, 4
        %v9944 = vshll.u32 %v9803, 16
        %v9946 = vrot.slane %v9944, 5
        %v9947 = vsel %vm1739, %v9942, %v9946
        %v9948 = vshrl.u32 %v9803, 16
        %v9950 = vrot.slane %v9948, 4
        %v9951 = vor.u32 %v9950, %v9946
        %v9952 = vrot.slane %v9951, 4
        %v9954 = vshll.u32 %v9804, 16
        %v9956 = vrot.slane %v9954, 5
        %v9957 = vsel %vm1739, %v9952, %v9956
        %v9959 = vshrl.u32 %v9805, 16
        %v9961 = vrot.slane %v9959, 4
        %v9962 = vshll.u32 %v9805, 16
        %v9964 = vrot.slane %v9962, 5
        %v9965 = vor.u32 %v9961, %v9964
        %v9966 = vrot.slane %v9965, 4
        %v9968 = vshll.u32 %v9806, 16
        %v9970 = vrot.slane %v9968, 5
        %v9971 = vsel %vm1739, %v9966, %v9970
        %v9972 = vshrl.u32 %v9806, 16
        %v9974 = vrot.slane %v9972, 4
        %v9975 = vor.u32 %v9974, %v9970
        %v9976 = vrot.slane %v9975, 4
        %v9978 = vshll.u32 %v9807, 16
        %v9980 = vrot.slane %v9978, 5
        %v9981 = vsel %vm1739, %v9976, %v9980
        %v9983 = vshrl.u32 %v9808, 16
        %v9985 = vrot.slane %v9983, 4
        %v9986 = vshll.u32 %v9808, 16
        %v9988 = vrot.slane %v9986, 5
        %v9989 = vor.u32 %v9985, %v9988
        %v9990 = vrot.slane %v9989, 4
        %v9992 = vshll.u32 %v9809, 16
        %v9994 = vrot.slane %v9992, 5
        %v9995 = vsel %vm1739, %v9990, %v9994
        %v9996 = vshrl.u32 %v9809, 16
        %v9998 = vrot.slane %v9996, 4
        %v9999 = vor.u32 %v9998, %v9994
        %v10000 = vrot.slane %v9999, 4
        %v10002 = vshll.u32 %v9810, 16
        %v10004 = vrot.slane %v10002, 5
        %v10005 = vsel %vm1739, %v10000, %v10004
        %v10007 = vshrl.u32 %v9811, 16
        %v10009 = vrot.slane %v10007, 4
        %v10010 = vshll.u32 %v9811, 16
        %v10012 = vrot.slane %v10010, 5
        %v10013 = vor.u32 %v10009, %v10012
        %v10014 = vrot.slane %v10013, 4
        %v10016 = vshll.u32 %v9812, 16
        %v10018 = vrot.slane %v10016, 5
        %v10019 = vsel %vm1739, %v10014, %v10018
        %v10020 = vshrl.u32 %v9812, 16
        %v10022 = vrot.slane %v10020, 4
        %v10023 = vor.u32 %v10022, %v10018
        %v10024 = vrot.slane %v10023, 4
        %v10026 = vshll.u32 %v9813, 16
        %v10028 = vrot.slane %v10026, 5
        %v10029 = vsel %vm1739, %v10024, %v10028
        %v10031 = vshrl.u32 %v9814, 16
        %v10033 = vrot.slane %v10031, 4
        %v10034 = vshll.u32 %v9814, 16
        %v10036 = vrot.slane %v10034, 5
        %v10037 = vor.u32 %v10033, %v10036
        %v10038 = vrot.slane %v10037, 4
        %v10040 = vshll.u32 %v9815, 16
        %v10042 = vrot.slane %v10040, 5
        %v10043 = vsel %vm1739, %v10038, %v10042
        %v10044 = vshrl.u32 %v9815, 16
        %v10046 = vrot.slane %v10044, 4
        %v10047 = vor.u32 %v10046, %v10042
        %v10048 = vrot.slane %v10047, 4
        %v10050 = vshll.u32 %v9816, 16
        %v10052 = vrot.slane %v10050, 5
        %v10053 = vsel %vm1739, %v10048, %v10052
        %v10055 = vshrl.u32 %v9817, 16
        %v10057 = vrot.slane %v10055, 4
        %v10058 = vshll.u32 %v9817, 16
        %v10060 = vrot.slane %v10058, 5
        %v10061 = vor.u32 %v10057, %v10060
        %v10062 = vrot.slane %v10061, 4
        %v10064 = vshll.u32 %v9818, 16
        %v10066 = vrot.slane %v10064, 5
        %v10067 = vsel %vm1739, %v10062, %v10066
        %v10068 = vshrl.u32 %v9818, 16
        %v10070 = vrot.slane %v10068, 4
        %v10071 = vor.u32 %v10070, %v10066
        %v10072 = vrot.slane %v10071, 4
        %v10074 = vshll.u32 %v9819, 16
        %v10076 = vrot.slane %v10074, 5
        %v10077 = vsel %vm1739, %v10072, %v10076
        %v10079 = vshrl.u32 %v9820, 16
        %v10081 = vrot.slane %v10079, 4
        %v10082 = vshll.u32 %v9820, 16
        %v10084 = vrot.slane %v10082, 5
        %v10085 = vor.u32 %v10081, %v10084
        %v10086 = vrot.slane %v10085, 4
        %v10088 = vshll.u32 %v9821, 16
        %v10090 = vrot.slane %v10088, 5
        %v10091 = vsel %vm1739, %v10086, %v10090
        %v10092 = vshrl.u32 %v9821, 16
        %v10094 = vrot.slane %v10092, 4
        %v10095 = vor.u32 %v10094, %v10090
        %v10096 = vrot.slane %v10095, 4
        %v10098 = vshll.u32 %v9822, 16
        %v10100 = vrot.slane %v10098, 5
        %v10101 = vsel %vm1739, %v10096, %v10100
        %v10103 = vshrl.u32 %v9823, 16
        %v10105 = vrot.slane %v10103, 4
        %v10106 = vshll.u32 %v9823, 16
        %v10108 = vrot.slane %v10106, 5
        %v10109 = vor.u32 %v10105, %v10108
        %v10110 = vrot.slane %v10109, 4
        %v10112 = vshll.u32 %v9824, 16
        %v10114 = vrot.slane %v10112, 5
        %v10115 = vsel %vm1739, %v10110, %v10114
        %v10116 = vshrl.u32 %v9824, 16
        %v10118 = vrot.slane %v10116, 4
        %v10119 = vor.u32 %v10118, %v10114
        %v10120 = vrot.slane %v10119, 4
        %v10122 = vshll.u32 %v9825, 16
        %v10124 = vrot.slane %v10122, 5
        %v10125 = vsel %vm1739, %v10120, %v10124
        %v10127 = vshrl.u32 %v9826, 16
        %v10129 = vrot.slane %v10127, 4
        %v10130 = vshll.u32 %v9826, 16
        %v10132 = vrot.slane %v10130, 5
        %v10133 = vor.u32 %v10129, %v10132
        %v10134 = vrot.slane %v10133, 4
        %v10136 = vshll.u32 %v9827, 16
        %v10138 = vrot.slane %v10136, 5
        %v10139 = vsel %vm1739, %v10134, %v10138
        %v10140 = vshrl.u32 %v9827, 16
        %v10142 = vrot.slane %v10140, 4
        %v10143 = vor.u32 %v10142, %v10138
        %v10144 = vrot.slane %v10143, 4
        %v10146 = vshll.u32 %v9828, 16
        %v10148 = vrot.slane %v10146, 5
        %v10149 = vsel %vm1739, %v10144, %v10148
        %v10151 = vshrl.u32 %v9829, 16
        %v10153 = vrot.slane %v10151, 4
        %v10154 = vshll.u32 %v9829, 16
        %v10156 = vrot.slane %v10154, 5
        %v10157 = vor.u32 %v10153, %v10156
        %v10158 = vrot.slane %v10157, 4
        %v10160 = vshll.u32 %v9830, 16
        %v10162 = vrot.slane %v10160, 5
        %v10163 = vsel %vm1739, %v10158, %v10162
        %v10164 = vshrl.u32 %v9830, 16
        %v10166 = vrot.slane %v10164, 4
        %v10167 = vor.u32 %v10166, %v10162
        %v10168 = vrot.slane %v10167, 4
        %v10170 = vshll.u32 %v9831, 16
        %v10172 = vrot.slane %v10170, 5
        %v10173 = vsel %vm1739, %v10168, %v10172
        %v10175 = vshrl.u32 %v9832, 16
        %v10177 = vrot.slane %v10175, 4
        %v10178 = vshll.u32 %v9832, 16
        %v10180 = vrot.slane %v10178, 5
        %v10181 = vor.u32 %v10177, %v10180
        %v10182 = vrot.slane %v10181, 4
        %v10184 = vshll.u32 %v9833, 16
        %v10186 = vrot.slane %v10184, 5
        %v10187 = vsel %vm1739, %v10182, %v10186
        %v10188 = vshrl.u32 %v9833, 16
        %v10190 = vrot.slane %v10188, 4
        %v10191 = vor.u32 %v10190, %v10186
        %v10192 = vrot.slane %v10191, 4
        %v10194 = vshll.u32 %v9834, 16
        %v10196 = vrot.slane %v10194, 5
        %v10197 = vsel %vm1739, %v10192, %v10196
        %v10199 = vshrl.u32 %v9835, 16
        %v10201 = vrot.slane %v10199, 4
        %v10202 = vshll.u32 %v9835, 16
        %v10204 = vrot.slane %v10202, 5
        %v10205 = vor.u32 %v10201, %v10204
        %v10206 = vrot.slane %v10205, 4
        %v10208 = vshll.u32 %v9836, 16
        %v10210 = vrot.slane %v10208, 5
        %v10211 = vsel %vm1739, %v10206, %v10210
        %v10212 = vshrl.u32 %v9836, 16
        %v10214 = vrot.slane %v10212, 4
        %v10215 = vor.u32 %v10214, %v10210
        %v10216 = vrot.slane %v10215, 4
        %v10218 = vshll.u32 %v9837, 16
        %v10220 = vrot.slane %v10218, 5
        %v10221 = vsel %vm1739, %v10216, %v10220
        %s10222 = scalar_lea.vmem %s3, 272
        %v10223 = vld [vmem:[%s10222] sm:$0xf]
        %v10224 = vld [vmem:[%s10222 + $0x4] sm:$0xf]
        %v10225 = vld [vmem:[%s10222 + $0x8] sm:$0xf]
        %v10226 = vld [vmem:[%s10222 + $0xc] sm:$0xf]
        %v10227 = vunpack.c.l.b16 %v9851
        %v10228 = vunpack.c.l.b16 %v9861
        %v10229 = vunpack.c.l.b16 %v9875
        %v10230 = vunpack.c.l.b16 %v9885
        %v10231 = vunpack.c.l.b16 %v9899
        %v10232 = vunpack.c.l.b16 %v9909
        %v10233 = vunpack.c.l.b16 %v9923
        %v10234 = vunpack.c.l.b16 %v9933
        %v10235 = vunpack.c.l.b16 %v9947
        %v10236 = vunpack.c.l.b16 %v9957
        %v10237 = vunpack.c.l.b16 %v9971
        %v10238 = vunpack.c.l.b16 %v9981
        %v10239 = vunpack.c.l.b16 %v9995
        %v10240 = vunpack.c.l.b16 %v10005
        %v10241 = vunpack.c.l.b16 %v10019
        %v10242 = vunpack.c.l.b16 %v10029
        %v10243 = vunpack.c.l.b16 %v10043
        %v10244 = vunpack.c.l.b16 %v10053
        %v10245 = vunpack.c.l.b16 %v10067
        %v10246 = vunpack.c.l.b16 %v10077
        %v10247 = vunpack.c.l.b16 %v10091
        %v10248 = vunpack.c.l.b16 %v10101
        %v10249 = vunpack.c.l.b16 %v10115
        %v10250 = vunpack.c.l.b16 %v10125
        %v10251 = vunpack.c.l.b16 %v10139
        %v10252 = vunpack.c.l.b16 %v10149
        %v10253 = vunpack.c.l.b16 %v10163
        %v10254 = vunpack.c.l.b16 %v10173
        %v10255 = vunpack.c.l.b16 %v10187
        %v10256 = vunpack.c.l.b16 %v10197
        %v10257 = vunpack.c.l.b16 %v10211
        %v10258 = vunpack.c.l.b16 %v10221
        %v10259 = vpack.c.b16 %v10228, %v10227
        %v10260 = vpack.c.b16 %v10230, %v10229
        %v10261 = vpack.c.b16 %v10232, %v10231
        %v10262 = vpack.c.b16 %v10234, %v10233
        %v10263 = vpack.c.b16 %v10236, %v10235
        %v10264 = vpack.c.b16 %v10238, %v10237
        %v10265 = vpack.c.b16 %v10240, %v10239
        %v10266 = vpack.c.b16 %v10242, %v10241
        %v10267 = vpack.c.b16 %v10244, %v10243
        %v10268 = vpack.c.b16 %v10246, %v10245
        %v10269 = vpack.c.b16 %v10248, %v10247
        %v10270 = vpack.c.b16 %v10250, %v10249
        %v10271 = vpack.c.b16 %v10252, %v10251
        %v10272 = vpack.c.b16 %v10254, %v10253
        %v10273 = vpack.c.b16 %v10256, %v10255
        %v10274 = vpack.c.b16 %v10258, %v10257
        %v10279 = vunpack.c.l.b16 %v10223
        %v10280 = vunpack.c.l.b16 %v10224
        %v10281 = vunpack.c.l.b16 %v10225
        %v10282 = vunpack.c.l.b16 %v10226
        %v10283 = vpack.c.b16 %v10280, %v10279
        %v10284 = vpack.c.b16 %v10282, %v10281
        %v10288 = vsel %vm1354, %v10259, 0
        %v10291 = vsel %vm1354, %v10260, 0
        %v10294 = vsel %vm1354, %v10261, 0
        %v10297 = vsel %vm1354, %v10262, 0
        %v10300 = vsel %vm1354, %v10263, 0
        %v10303 = vsel %vm1354, %v10264, 0
        %v10306 = vsel %vm1354, %v10265, 0
        %v10309 = vsel %vm1354, %v10266, 0
        %v10312 = vsel %vm1354, %v10267, 0
        %v10315 = vsel %vm1354, %v10268, 0
        %v10318 = vsel %vm1354, %v10269, 0
        %v10321 = vsel %vm1354, %v10270, 0
        %v10324 = vsel %vm1354, %v10271, 0
        %v10327 = vsel %vm1354, %v10272, 0
        %v10330 = vsel %vm1354, %v10273, 0
        %v10333 = vsel %vm1354, %v10274, 0
        %10335 = vmatpush.bf16.msra.mxu0 0
        %10336 = vmatpush.bf16.msra.mxu0 0
        %10337 = vmatpush.bf16.msra.mxu0 0
        %10338 = vmatpush.bf16.msra.mxu0 0
        %10339 = vmatpush.bf16.msra.mxu0 0
        %10340 = vmatpush.bf16.msra.mxu0 0
        %10341 = vmatpush.bf16.msra.mxu0 %v10284
        %10342 = vmatpush.bf16.msra.mxu0 %v10283
        %10343 = vmatmul.bf16.gmra.mxu0 %v10288
        %v10344 = vpop.f32.mrf.mxu0
        %v10345 = vadd.f32 0.0, %v10344
        %v10346 = vpop.f32.mrf.mxu0
        %v10347 = vadd.f32 0.0, %v10346
        %10348 = vmatmul.bf16.gmra.mxu0 %v10291
        %v10349 = vpop.f32.mrf.mxu0
        %v10350 = vadd.f32 0.0, %v10349
        %v10351 = vpop.f32.mrf.mxu0
        %v10352 = vadd.f32 0.0, %v10351
        %10353 = vmatmul.bf16.gmra.mxu0 %v10294
        %v10354 = vpop.f32.mrf.mxu0
        %v10355 = vadd.f32 0.0, %v10354
        %v10356 = vpop.f32.mrf.mxu0
        %v10357 = vadd.f32 0.0, %v10356
        %10358 = vmatmul.bf16.gmra.mxu0 %v10297
        %v10359 = vpop.f32.mrf.mxu0
        %v10360 = vadd.f32 0.0, %v10359
        %v10361 = vpop.f32.mrf.mxu0
        %v10362 = vadd.f32 0.0, %v10361
        %10363 = vmatmul.bf16.gmra.mxu0 %v10300
        %v10364 = vpop.f32.mrf.mxu0
        %v10365 = vadd.f32 0.0, %v10364
        %v10366 = vpop.f32.mrf.mxu0
        %v10367 = vadd.f32 0.0, %v10366
        %10368 = vmatmul.bf16.gmra.mxu0 %v10303
        %v10369 = vpop.f32.mrf.mxu0
        %v10370 = vadd.f32 0.0, %v10369
        %v10371 = vpop.f32.mrf.mxu0
        %v10372 = vadd.f32 0.0, %v10371
        %10373 = vmatmul.bf16.gmra.mxu0 %v10306
        %v10374 = vpop.f32.mrf.mxu0
        %v10375 = vadd.f32 0.0, %v10374
        %v10376 = vpop.f32.mrf.mxu0
        %v10377 = vadd.f32 0.0, %v10376
        %10378 = vmatmul.bf16.gmra.mxu0 %v10309
        %v10379 = vpop.f32.mrf.mxu0
        %v10380 = vadd.f32 0.0, %v10379
        %v10381 = vpop.f32.mrf.mxu0
        %v10382 = vadd.f32 0.0, %v10381
        %10383 = vmatmul.bf16.gmra.mxu0 %v10312
        %v10384 = vpop.f32.mrf.mxu0
        %v10385 = vadd.f32 0.0, %v10384
        %v10386 = vpop.f32.mrf.mxu0
        %v10387 = vadd.f32 0.0, %v10386
        %10388 = vmatmul.bf16.gmra.mxu0 %v10315
        %v10389 = vpop.f32.mrf.mxu0
        %v10390 = vadd.f32 0.0, %v10389
        %v10391 = vpop.f32.mrf.mxu0
        %v10392 = vadd.f32 0.0, %v10391
        %10393 = vmatmul.bf16.gmra.mxu0 %v10318
        %v10394 = vpop.f32.mrf.mxu0
        %v10395 = vadd.f32 0.0, %v10394
        %v10396 = vpop.f32.mrf.mxu0
        %v10397 = vadd.f32 0.0, %v10396
        %10398 = vmatmul.bf16.gmra.mxu0 %v10321
        %v10399 = vpop.f32.mrf.mxu0
        %v10400 = vadd.f32 0.0, %v10399
        %v10401 = vpop.f32.mrf.mxu0
        %v10402 = vadd.f32 0.0, %v10401
        %10403 = vmatmul.bf16.gmra.mxu0 %v10324
        %v10404 = vpop.f32.mrf.mxu0
        %v10405 = vadd.f32 0.0, %v10404
        %v10406 = vpop.f32.mrf.mxu0
        %v10407 = vadd.f32 0.0, %v10406
        %10408 = vmatmul.bf16.gmra.mxu0 %v10327
        %v10409 = vpop.f32.mrf.mxu0
        %v10410 = vadd.f32 0.0, %v10409
        %v10411 = vpop.f32.mrf.mxu0
        %v10412 = vadd.f32 0.0, %v10411
        %10413 = vmatmul.bf16.gmra.mxu0 %v10330
        %v10414 = vpop.f32.mrf.mxu0
        %v10415 = vadd.f32 0.0, %v10414
        %v10416 = vpop.f32.mrf.mxu0
        %v10417 = vadd.f32 0.0, %v10416
        %10418 = vmatmul.bf16.gmra.mxu0 %v10333
        %v10419 = vpop.f32.mrf.mxu0
        %v10420 = vadd.f32 0.0, %v10419
        %v10421 = vpop.f32.mrf.mxu0
        %v10422 = vadd.f32 0.0, %v10421
        %10423 = vdwg.mxu0
        %v10424 = vadd.f32 %v9758, %v10345
        %v10425 = vadd.f32 %v9759, %v10347
        %v10426 = vadd.f32 %v9760, %v10350
        %v10427 = vadd.f32 %v9761, %v10352
        %v10428 = vadd.f32 %v9762, %v10355
        %v10429 = vadd.f32 %v9763, %v10357
        %v10430 = vadd.f32 %v9764, %v10360
        %v10431 = vadd.f32 %v9765, %v10362
        %v10432 = vadd.f32 %v9766, %v10365
        %v10433 = vadd.f32 %v9767, %v10367
        %v10434 = vadd.f32 %v9768, %v10370
        %v10435 = vadd.f32 %v9769, %v10372
        %v10436 = vadd.f32 %v9770, %v10375
        %v10437 = vadd.f32 %v9771, %v10377
        %v10438 = vadd.f32 %v9772, %v10380
        %v10439 = vadd.f32 %v9773, %v10382
        %v10440 = vadd.f32 %v9774, %v10385
        %v10441 = vadd.f32 %v9775, %v10387
        %v10442 = vadd.f32 %v9776, %v10390
        %v10443 = vadd.f32 %v9777, %v10392
        %v10444 = vadd.f32 %v9778, %v10395
        %v10445 = vadd.f32 %v9779, %v10397
        %v10446 = vadd.f32 %v9780, %v10400
        %v10447 = vadd.f32 %v9781, %v10402
        %v10448 = vadd.f32 %v9782, %v10405
        %v10449 = vadd.f32 %v9783, %v10407
        %v10450 = vadd.f32 %v9784, %v10410
        %v10451 = vadd.f32 %v9785, %v10412
        %v10452 = vadd.f32 %v9786, %v10415
        %v10453 = vadd.f32 %v9787, %v10417
        %v10454 = vadd.f32 %v9788, %v10420
        %v10455 = vadd.f32 %v9789, %v10422
        %s10456 = scalar_lea.vmem %s4, 2
        %v10457 = vld [vmem:[%s10456] sm:$0x3]
        %v10458 = vperm.slane %v10457, 0
        %v10459 = vmul.f32 %v10458, %v10424
        %v10460 = vmul.f32 %v10458, %v10425
        %v10461 = vmul.f32 %v10458, %v10426
        %v10462 = vmul.f32 %v10458, %v10427
        %v10463 = vmul.f32 %v10458, %v10428
        %v10464 = vmul.f32 %v10458, %v10429
        %v10465 = vmul.f32 %v10458, %v10430
        %v10466 = vmul.f32 %v10458, %v10431
        %v10467 = vmul.f32 %v10458, %v10432
        %v10468 = vmul.f32 %v10458, %v10433
        %v10469 = vmul.f32 %v10458, %v10434
        %v10470 = vmul.f32 %v10458, %v10435
        %v10471 = vmul.f32 %v10458, %v10436
        %v10472 = vmul.f32 %v10458, %v10437
        %v10473 = vmul.f32 %v10458, %v10438
        %v10474 = vmul.f32 %v10458, %v10439
        %v10475 = vmul.f32 %v10458, %v10440
        %v10476 = vmul.f32 %v10458, %v10441
        %v10477 = vmul.f32 %v10458, %v10442
        %v10478 = vmul.f32 %v10458, %v10443
        %v10479 = vmul.f32 %v10458, %v10444
        %v10480 = vmul.f32 %v10458, %v10445
        %v10481 = vmul.f32 %v10458, %v10446
        %v10482 = vmul.f32 %v10458, %v10447
        %v10483 = vmul.f32 %v10458, %v10448
        %v10484 = vmul.f32 %v10458, %v10449
        %v10485 = vmul.f32 %v10458, %v10450
        %v10486 = vmul.f32 %v10458, %v10451
        %v10487 = vmul.f32 %v10458, %v10452
        %v10488 = vmul.f32 %v10458, %v10453
        %v10489 = vmul.f32 %v10458, %v10454
        %v10490 = vmul.f32 %v10458, %v10455
        %v10491 = vperm.slane %v10457, 1
        %v10492 = vadd.f32 %v10459, %v10491
        %v10493 = vadd.f32 %v10460, %v10491
        %v10494 = vadd.f32 %v10461, %v10491
        %v10495 = vadd.f32 %v10462, %v10491
        %v10496 = vadd.f32 %v10463, %v10491
        %v10497 = vadd.f32 %v10464, %v10491
        %v10498 = vadd.f32 %v10465, %v10491
        %v10499 = vadd.f32 %v10466, %v10491
        %v10500 = vadd.f32 %v10467, %v10491
        %v10501 = vadd.f32 %v10468, %v10491
        %v10502 = vadd.f32 %v10469, %v10491
        %v10503 = vadd.f32 %v10470, %v10491
        %v10504 = vadd.f32 %v10471, %v10491
        %v10505 = vadd.f32 %v10472, %v10491
        %v10506 = vadd.f32 %v10473, %v10491
        %v10507 = vadd.f32 %v10474, %v10491
        %v10508 = vadd.f32 %v10475, %v10491
        %v10509 = vadd.f32 %v10476, %v10491
        %v10510 = vadd.f32 %v10477, %v10491
        %v10511 = vadd.f32 %v10478, %v10491
        %v10512 = vadd.f32 %v10479, %v10491
        %v10513 = vadd.f32 %v10480, %v10491
        %v10514 = vadd.f32 %v10481, %v10491
        %v10515 = vadd.f32 %v10482, %v10491
        %v10516 = vadd.f32 %v10483, %v10491
        %v10517 = vadd.f32 %v10484, %v10491
        %v10518 = vadd.f32 %v10485, %v10491
        %v10519 = vadd.f32 %v10486, %v10491
        %v10520 = vadd.f32 %v10487, %v10491
        %v10521 = vadd.f32 %v10488, %v10491
        %v10522 = vadd.f32 %v10489, %v10491
        %v10523 = vadd.f32 %v10490, %v10491
        %v10524 = vadd.f32 %v5558, %v10492
        %v10525 = vadd.f32 %v5559, %v10493
        %v10526 = vadd.f32 %v5560, %v10494
        %v10527 = vadd.f32 %v5561, %v10495
        %v10528 = vadd.f32 %v5562, %v10496
        %v10529 = vadd.f32 %v5563, %v10497
        %v10530 = vadd.f32 %v5564, %v10498
        %v10531 = vadd.f32 %v5565, %v10499
        %v10532 = vadd.f32 %v5566, %v10500
        %v10533 = vadd.f32 %v5567, %v10501
        %v10534 = vadd.f32 %v5568, %v10502
        %v10535 = vadd.f32 %v5569, %v10503
        %v10536 = vadd.f32 %v5570, %v10504
        %v10537 = vadd.f32 %v5571, %v10505
        %v10538 = vadd.f32 %v5572, %v10506
        %v10539 = vadd.f32 %v5573, %v10507
        %v10540 = vadd.f32 %v5574, %v10508
        %v10541 = vadd.f32 %v5575, %v10509
        %v10542 = vadd.f32 %v5576, %v10510
        %v10543 = vadd.f32 %v5577, %v10511
        %v10544 = vadd.f32 %v5578, %v10512
        %v10545 = vadd.f32 %v5579, %v10513
        %v10546 = vadd.f32 %v5580, %v10514
        %v10547 = vadd.f32 %v5581, %v10515
        %v10548 = vadd.f32 %v5582, %v10516
        %v10549 = vadd.f32 %v5583, %v10517
        %v10550 = vadd.f32 %v5584, %v10518
        %v10551 = vadd.f32 %v5585, %v10519
        %v10552 = vadd.f32 %v5586, %v10520
        %v10553 = vadd.f32 %v5587, %v10521
        %v10554 = vadd.f32 %v5588, %v10522
        %v10555 = vadd.f32 %v5589, %v10523
        %10556 = vxpose.xlu0.b32.start [1/16] %v10524, 128
        %10557 = vxpose.xlu0.b32.cont [2/16] %v10525, 128
        %10558 = vxpose.xlu0.b32.cont [3/16] %v10526, 128
        %10559 = vxpose.xlu0.b32.cont [4/16] %v10527, 128
        %10560 = vxpose.xlu0.b32.cont [5/16] %v10528, 128
        %10561 = vxpose.xlu0.b32.cont [6/16] %v10529, 128
        %10562 = vxpose.xlu0.b32.cont [7/16] %v10530, 128
        %10563 = vxpose.xlu0.b32.cont [8/16] %v10531, 128
        %10564 = vxpose.xlu0.b32.cont [9/16] %v10532, 128
        %10565 = vxpose.xlu0.b32.cont [10/16] %v10533, 128
        %10566 = vxpose.xlu0.b32.cont [11/16] %v10534, 128
        %10567 = vxpose.xlu0.b32.cont [12/16] %v10535, 128
        %10568 = vxpose.xlu0.b32.cont [13/16] %v10536, 128
        %10569 = vxpose.xlu0.b32.cont [14/16] %v10537, 128
        %10570 = vxpose.xlu0.b32.cont [15/16] %v10538, 128
        %10571 = vxpose.xlu0.b32.end [16/16] %v10539, 128
        %v10572 = vpop.trf.xlu0
        %v10573 = vpop.trf.xlu0
        %v10574 = vpop.trf.xlu0
        %v10575 = vpop.trf.xlu0
        %v10576 = vpop.trf.xlu0
        %v10577 = vpop.trf.xlu0
        %v10578 = vpop.trf.xlu0
        %v10579 = vpop.trf.xlu0
        %v10580 = vpop.trf.xlu0
        %v10581 = vpop.trf.xlu0
        %v10582 = vpop.trf.xlu0
        %v10583 = vpop.trf.xlu0
        %v10584 = vpop.trf.xlu0
        %v10585 = vpop.trf.xlu0
        %v10586 = vpop.trf.xlu0
        %v10587 = vpop.trf.xlu0
        %10588 = vxpose.xlu0.b32.start [1/16] %v10540, 128
        %10589 = vxpose.xlu0.b32.cont [2/16] %v10541, 128
        %10590 = vxpose.xlu0.b32.cont [3/16] %v10542, 128
        %10591 = vxpose.xlu0.b32.cont [4/16] %v10543, 128
        %10592 = vxpose.xlu0.b32.cont [5/16] %v10544, 128
        %10593 = vxpose.xlu0.b32.cont [6/16] %v10545, 128
        %10594 = vxpose.xlu0.b32.cont [7/16] %v10546, 128
        %10595 = vxpose.xlu0.b32.cont [8/16] %v10547, 128
        %10596 = vxpose.xlu0.b32.cont [9/16] %v10548, 128
        %10597 = vxpose.xlu0.b32.cont [10/16] %v10549, 128
        %10598 = vxpose.xlu0.b32.cont [11/16] %v10550, 128
        %10599 = vxpose.xlu0.b32.cont [12/16] %v10551, 128
        %10600 = vxpose.xlu0.b32.cont [13/16] %v10552, 128
        %10601 = vxpose.xlu0.b32.cont [14/16] %v10553, 128
        %10602 = vxpose.xlu0.b32.cont [15/16] %v10554, 128
        %10603 = vxpose.xlu0.b32.end [16/16] %v10555, 128
        %v10604 = vpop.trf.xlu0
        %v10605 = vpop.trf.xlu0
        %v10606 = vpop.trf.xlu0
        %v10607 = vpop.trf.xlu0
        %v10608 = vpop.trf.xlu0
        %v10609 = vpop.trf.xlu0
        %v10610 = vpop.trf.xlu0
        %v10611 = vpop.trf.xlu0
        %v10612 = vpop.trf.xlu0
        %v10613 = vpop.trf.xlu0
        %v10614 = vpop.trf.xlu0
        %v10615 = vpop.trf.xlu0
        %v10616 = vpop.trf.xlu0
        %v10617 = vpop.trf.xlu0
        %v10618 = vpop.trf.xlu0
        %v10619 = vpop.trf.xlu0
        %10620 = vst [vmem:[%s282] sm:$0xff] %v10572
        %10621 = vst [vmem:[%s282 + $0x8] sm:$0xff] %v10604
        %10622 = vst [vmem:[%s282 + $0x10] sm:$0xff] %v10573
        %10623 = vst [vmem:[%s282 + $0x18] sm:$0xff] %v10605
        %10624 = vst [vmem:[%s282 + $0x20] sm:$0xff] %v10574
        %10625 = vst [vmem:[%s282 + $0x28] sm:$0xff] %v10606
        %10626 = vst [vmem:[%s282 + $0x30] sm:$0xff] %v10575
        %10627 = vst [vmem:[%s282 + $0x38] sm:$0xff] %v10607
        %v10628 = vpack.c.bf16 %v10524, %v10524
        %v10629 = vpack.c.bf16 %v10525, %v10525
        %v10630 = vpack.c.bf16 %v10526, %v10526
        %v10631 = vpack.c.bf16 %v10527, %v10527
        %v10632 = vpack.c.bf16 %v10528, %v10528
        %v10633 = vpack.c.bf16 %v10529, %v10529
        %v10634 = vpack.c.bf16 %v10530, %v10530
        %v10635 = vpack.c.bf16 %v10531, %v10531
        %v10636 = vpack.c.bf16 %v10532, %v10532
        %v10637 = vpack.c.bf16 %v10533, %v10533
        %v10638 = vpack.c.bf16 %v10534, %v10534
        %v10639 = vpack.c.bf16 %v10535, %v10535
        %v10640 = vpack.c.bf16 %v10536, %v10536
        %v10641 = vpack.c.bf16 %v10537, %v10537
        %v10642 = vpack.c.bf16 %v10538, %v10538
        %v10643 = vpack.c.bf16 %v10539, %v10539
        %v10644 = vpack.c.bf16 %v10540, %v10540
        %v10645 = vpack.c.bf16 %v10541, %v10541
        %v10646 = vpack.c.bf16 %v10542, %v10542
        %v10647 = vpack.c.bf16 %v10543, %v10543
        %v10648 = vpack.c.bf16 %v10544, %v10544
        %v10649 = vpack.c.bf16 %v10545, %v10545
        %v10650 = vpack.c.bf16 %v10546, %v10546
        %v10651 = vpack.c.bf16 %v10547, %v10547
        %v10652 = vpack.c.bf16 %v10548, %v10548
        %v10653 = vpack.c.bf16 %v10549, %v10549
        %v10654 = vpack.c.bf16 %v10550, %v10550
        %v10655 = vpack.c.bf16 %v10551, %v10551
        %v10656 = vpack.c.bf16 %v10552, %v10552
        %v10657 = vpack.c.bf16 %v10553, %v10553
        %v10658 = vpack.c.bf16 %v10554, %v10554
        %v10659 = vpack.c.bf16 %v10555, %v10555
        %10660 = vst.msk [vmem:[%s299] sm:$0xf] %vm562, %v10628
        %10661 = vst.msk [vmem:[%s299 + $0x4] sm:$0xf] %vm562, %v10629
        %10662 = vst.msk [vmem:[%s299 + $0x8] sm:$0xf] %vm562, %v10630
        %10663 = vst.msk [vmem:[%s299 + $0xc] sm:$0xf] %vm562, %v10631
        %10664 = vst.msk [vmem:[%s299 + $0x10] sm:$0xf] %vm562, %v10632
        %10665 = vst.msk [vmem:[%s299 + $0x14] sm:$0xf] %vm562, %v10633
        %10666 = vst.msk [vmem:[%s299 + $0x18] sm:$0xf] %vm562, %v10634
        %10667 = vst.msk [vmem:[%s299 + $0x1c] sm:$0xf] %vm562, %v10635
        %10668 = vst.msk [vmem:[%s299 + $0x20] sm:$0xf] %vm562, %v10636
        %10669 = vst.msk [vmem:[%s299 + $0x24] sm:$0xf] %vm562, %v10637
        %10670 = vst.msk [vmem:[%s299 + $0x28] sm:$0xf] %vm562, %v10638
        %10671 = vst.msk [vmem:[%s299 + $0x2c] sm:$0xf] %vm562, %v10639
        %10672 = vst.msk [vmem:[%s299 + $0x30] sm:$0xf] %vm562, %v10640
        %10673 = vst.msk [vmem:[%s299 + $0x34] sm:$0xf] %vm562, %v10641
        %10674 = vst.msk [vmem:[%s299 + $0x38] sm:$0xf] %vm562, %v10642
        %10675 = vst.msk [vmem:[%s299 + $0x3c] sm:$0xf] %vm562, %v10643
        %10676 = vst.msk [vmem:[%s299 + $0x40] sm:$0xf] %vm562, %v10644
        %10677 = vst.msk [vmem:[%s299 + $0x44] sm:$0xf] %vm562, %v10645
        %10678 = vst.msk [vmem:[%s299 + $0x48] sm:$0xf] %vm562, %v10646
        %10679 = vst.msk [vmem:[%s299 + $0x4c] sm:$0xf] %vm562, %v10647
        %10680 = vst.msk [vmem:[%s299 + $0x50] sm:$0xf] %vm562, %v10648
        %10681 = vst.msk [vmem:[%s299 + $0x54] sm:$0xf] %vm562, %v10649
        %10682 = vst.msk [vmem:[%s299 + $0x58] sm:$0xf] %vm562, %v10650
        %10683 = vst.msk [vmem:[%s299 + $0x5c] sm:$0xf] %vm562, %v10651
        %10684 = vst.msk [vmem:[%s299 + $0x60] sm:$0xf] %vm562, %v10652
        %10685 = vst.msk [vmem:[%s299 + $0x64] sm:$0xf] %vm562, %v10653
        %10686 = vst.msk [vmem:[%s299 + $0x68] sm:$0xf] %vm562, %v10654
        %10687 = vst.msk [vmem:[%s299 + $0x6c] sm:$0xf] %vm562, %v10655
        %10688 = vst.msk [vmem:[%s299 + $0x70] sm:$0xf] %vm562, %v10656
        %10689 = vst.msk [vmem:[%s299 + $0x74] sm:$0xf] %vm562, %v10657
        %10690 = vst.msk [vmem:[%s299 + $0x78] sm:$0xf] %vm562, %v10658
        %10691 = vst.msk [vmem:[%s299 + $0x7c] sm:$0xf] %vm562, %v10659
        %s10692 = sand.u32 %s143, 1
        %s10693 = scalar_lea.sflag [#allocation4], %s10692
        %s10694 = sand.u32 %s143, 1
        %s10695 = smul.addr %s10694, 64
        %s10696 = scalar_lea.vmem [#allocation3], %s10695
        %s10697 = sand.u32 %s169, 1
        %s10698 = scalar_lea.sflag [#allocation6], %s10697
        %s10699 = sand.u32 %s169, 1
        %s10700 = smul.addr %s10699, 64
        %s10701 = scalar_lea.vmem [#allocation5], %s10700
        %p10702 = scmp.lt.s32.totalorder %s25, 1
        %s10703 = scalar_select %p10702, %s25, 1
        %s10704 = smul.addr %s10703, 32
        %s10705 = smul.addr %s10704, 4
        %s10706 = scalar_lea.vmem %s7, %s10705
        // Predicated region
        $region41: #{tpu_custom_call.1} parent=39 // pred_check
          %p10707 = pneg %p153
        $region42: #{tpu_custom_call.1} parent=39 // pred_check_branch
          %10709 = sbr.rel (%p10707) target = $region44
        $region43: #{tpu_custom_call.1} parent=39 // pred_region
          %10711 = vsyncadd %s10693, 0
          %s10712 = smul.addr %s25, 8
          %s10713 = smul.addr %s10712, 8
          %s10714 = scalar_lea.hbm %s5, %s10713
          %s10715 = sshll.u32 %s10696, 4
          %s10716 = int_to_ptr.vmem [resolvable:$true] %s10715
          %s10717 = sshll.u32 %s10714, 4
          %s10718 = int_to_ptr.hbm [resolvable:$true] %s10717
          %10723 = dma.vmem_to_hbm [thread:$0]  %s10716, 1024, %s10718, %s10693, 256, 256, 16
        $region44: #{tpu_custom_call.1} parent=39 // pred_fallthru
          _
        // Predicated region
        $region45: #{tpu_custom_call.1} parent=39 // pred_check
          %p10724 = pneg %p179
        $region46: #{tpu_custom_call.1} parent=39 // pred_check_branch
          %10726 = sbr.rel (%p10724) target = $region48
        $region47: #{tpu_custom_call.1} parent=39 // pred_region
          %10728 = vsyncadd %s10698, 0
          %s10729 = smul.addr %s25, 8
          %s10730 = smul.addr %s10729, 8
          %s10731 = scalar_lea.hbm %s6, %s10730
          %s10732 = sshll.u32 %s10701, 4
          %s10733 = int_to_ptr.vmem [resolvable:$true] %s10732
          %s10734 = sshll.u32 %s10731, 4
          %s10735 = int_to_ptr.hbm [resolvable:$true] %s10734
          %10740 = dma.vmem_to_hbm [thread:$0]  %s10733, 1024, %s10735, %s10698, 256, 256, 16
        $region48: #{tpu_custom_call.1} parent=39 // pred_fallthru
          _
        // Predicated region
        $region49: #{tpu_custom_call.1} parent=39 // pred_check
          %p10741 = pneg %p205
        $region50: #{tpu_custom_call.1} parent=39 // pred_check_branch
          %10743 = sbr.rel (%p10741) target = $region52
        $region51: #{tpu_custom_call.1} parent=39 // pred_region
          _
        $region52: #{tpu_custom_call.1} parent=39 // pred_fallthru
          _
      $region40: #{tpu_custom_call.1} parent=5 // pred_fallthru
        _
      %p10744 = scmp.le.s32.totalorder 2, %s20
      // Predicated region
      $region53: #{tpu_custom_call.1} parent=5 // pred_check
        %p10745 = pneg %p10744
      $region54: #{tpu_custom_call.1} parent=5 // pred_check_branch
        %10747 = sbr.rel (%p10745) target = $region56
      $region55: #{tpu_custom_call.1} parent=5 // pred_region
        %s10748 = ssub.s32 %s20, 2
        // Predicated region
        $region57: #{tpu_custom_call.1} parent=55 // pred_check
          %p10749 = pneg %p159
        $region58: #{tpu_custom_call.1} parent=55 // pred_check_branch
          %10751 = sbr.rel (%p10749) target = $region60
        $region59: #{tpu_custom_call.1} parent=55 // pred_region
          %s10752 = sand.u32 %s144, 1
          %s10753 = scalar_lea.sflag [#allocation4], %s10752
          %s10754 = sand.u32 %s144, 1
          %s10755 = smul.addr %s10754, 64
          %s10756 = scalar_lea.vmem [#allocation3], %s10755
          %10758 = dma.done %s10753, 1024
        $region60: #{tpu_custom_call.1} parent=55 // pred_fallthru
          _
        // Predicated region
        $region61: #{tpu_custom_call.1} parent=55 // pred_check
          %p10759 = pneg %p185
        $region62: #{tpu_custom_call.1} parent=55 // pred_check_branch
          %10761 = sbr.rel (%p10759) target = $region64
        $region63: #{tpu_custom_call.1} parent=55 // pred_region
          %s10762 = sand.u32 %s170, 1
          %s10763 = scalar_lea.sflag [#allocation6], %s10762
          %s10764 = sand.u32 %s170, 1
          %s10765 = smul.addr %s10764, 64
          %s10766 = scalar_lea.vmem [#allocation5], %s10765
          %10768 = dma.done %s10763, 1024
        $region64: #{tpu_custom_call.1} parent=55 // pred_fallthru
          _
        // Predicated region
        $region65: #{tpu_custom_call.1} parent=55 // pred_check
          %p10769 = pneg %p211
        $region66: #{tpu_custom_call.1} parent=55 // pred_check_branch
          %10771 = sbr.rel (%p10769) target = $region68
        $region67: #{tpu_custom_call.1} parent=55 // pred_region
          %p10772 = scmp.lt.s32.totalorder %s26, 1
          %s10773 = scalar_select %p10772, %s26, 1
          %s10774 = smul.addr %s10773, 32
          %s10775 = smul.addr %s10774, 4
          %s10776 = scalar_lea.vmem %s7, %s10775
        $region68: #{tpu_custom_call.1} parent=55 // pred_fallthru
          _
      $region56: #{tpu_custom_call.1} parent=5 // pred_fallthru
        _
    $region6: #{tpu_custom_call.1} parent=1 // loop_footer
      %s24 = sadd.s32 1, %s20
    $region7: #{tpu_custom_call.1} parent=1 // loop_footer_branch
      %19 = sbr.rel target = $region3
    $region8: #{tpu_custom_call.1} parent=1 // loop_exit
      _
    %10777 = vsyncpa [#allocation4], 1
    %s10778 = scalar_lea.sflag [#allocation4], 1
    %10779 = vsyncpa %s10778, 1
    %10780 = vsyncpa [#allocation6], 1
    %s10781 = scalar_lea.sflag [#allocation6], 1
    %10782 = vsyncpa %s10781, 1

</llo_original>
